<compile_context>
chip_gen: v7x
topology: tpu7x:2x2x1
jax: 0.10.0
libtpu: 0.0.40
codegen_flags: <defaults>
</compile_context>

<pallas_src>
import functools
import math

import jax
import jax.numpy as jnp
import numpy as np
from jax.experimental import pallas as pl
from jax.experimental.pallas import tpu as pltpu

_VMEM_LIMIT = 32 * 1024 * 1024  # explicit scoped-VMEM budget for every pallas_call


def _pick_tile(dim, target, align):
    """Largest multiple of `align` that divides `dim` and is <= target (falls back to dim)."""
    t = min(dim, max(target, align))
    t = (t // align) * align
    while t > 0:
        if dim % t == 0:
            return t
        t -= align
    return dim


# ----------------------------------------------------------------------------
# Kernel 1: tiled MXU matmul (+bias) for the per-layer input projection
#           gates_x = x_flat @ W_ih_cat + (b_ih + b_hh)   for both directions at once
# ----------------------------------------------------------------------------
def _matmul_bias_kernel(a_ref, w_ref, b_ref, o_ref, acc_ref, *, mxu_dtype):
    @pl.when(pl.program_id(2) == 0)
    def _():
        acc_ref[...] = jnp.zeros_like(acc_ref)

    acc_ref[...] += jnp.dot(a_ref[...].astype(mxu_dtype), w_ref[...].astype(mxu_dtype),
                            preferred_element_type=jnp.float32)

    @pl.when(pl.program_id(2) == pl.num_programs(2) - 1)
    def _():
        o_ref[...] = (acc_ref[...] + b_ref[...]).astype(o_ref.dtype)


def _tiled_matmul_bias(a, w, b, *, mxu_dtype):
    M, K = a.shape
    N = w.shape[1]
    tm = _pick_tile(M, 512, 8)
    tn = _pick_tile(N, 512, 128)
    tk = _pick_tile(K, 512, 128)
    grid = (M // tm, N // tn, K // tk)
    return pl.pallas_call(
        functools.partial(_matmul_bias_kernel, mxu_dtype=mxu_dtype),
        out_shape=jax.ShapeDtypeStruct((M, N), jnp.float32),
        grid=grid,
        in_specs=[pl.BlockSpec((tm, tk), lambda i, j, k: (i, k)),
                  pl.BlockSpec((tk, tn), lambda i, j, k: (k, j)),
                  pl.BlockSpec((1, tn), lambda i, j, k: (0, j))],
        out_specs=pl.BlockSpec((tm, tn), lambda i, j, k: (i, j)),
        scratch_shapes=[pltpu.VMEM((tm, tn), jnp.float32)],
        compiler_params=pltpu.CompilerParams(
            dimension_semantics=("parallel", "parallel", "arbitrary"),
            vmem_limit_bytes=_VMEM_LIMIT),
        cost_estimate=pl.CostEstimate(flops=2 * M * N * K, transcendentals=0,
                                      bytes_accessed=4 * (M * K + K * N + M * N + N)),
    )(a, w, b.reshape(1, N))


# ----------------------------------------------------------------------------
# Kernel 2: fused bidirectional LSTM recurrence (both directions, one in-kernel time loop).
#   gx_ref : (T, Bt, 8H) precomputed input projection, column layout [fwd i f g o | bwd i f g o]
#   whh_ref: (2H, 8H) block-diagonal recurrent weights (rows [h_fwd | h_bwd])
#   len_ref: (Bt, 1) int32 sequence lengths
#   out_ref: (T, Bt, 2H) outputs [fwd | bwd], zero outside each sample's length
#            (== pad_packed_sequence(padding_value=0) of a packed biLSTM).
# Grid is over batch tiles ("parallel"); h/c are carried as loop values (vregs).
# ----------------------------------------------------------------------------
def _bilstm_recurrence_kernel(gx_ref, whh_ref, len_ref, out_ref, *, mxu_dtype, unroll):
    T, Bt, H8 = gx_ref.shape
    H = H8 // 8
    H2 = 2 * H
    H4 = 4 * H

    # Loop-invariant values hoisted out of the recurrence (incl. the bf16 weight cast).
    len_v = len_ref[...]                                   # (Bt, 1) int32
    whh = whh_ref[...].astype(mxu_dtype)                   # (2H, 8H)

    def act(g4, c):
        # g4: (Bt, 4H), PyTorch gate order [i | f | g | o]; every slice is 128-lane aligned.
        i_g = jax.nn.sigmoid(g4[:, 0 * H:1 * H])
        f_g = jax.nn.sigmoid(g4[:, 1 * H:2 * H])
        g_g = jnp.tanh(g4[:, 2 * H:3 * H])
        o_g = jax.nn.sigmoid(g4[:, 3 * H:4 * H])
        c_new = f_g * c + i_g * g_g
        h_new = o_g * jnp.tanh(c_new)
        return h_new, c_new

    def step(s, carry):
        h_f, c_f, h_b, c_b = carry                         # each (Bt, H)
        t_f = s
        t_b = (T - 1) - s
        # [fwd 4H | bwd 4H] layout: two half-width loads, no per-step select.
        gx_f = gx_ref[t_f, :, 0:H4]                        # (Bt, 4H)
        gx_b = gx_ref[t_b, :, H4:H8]                       # (Bt, 4H)
        # one MXU push covers both directions' recurrent term (256-contraction block-diag).
        h_cat = jnp.concatenate([h_f, h_b], axis=-1).astype(mxu_dtype)        # (Bt, 2H)
        rec = jnp.dot(h_cat, whh, preferred_element_type=jnp.float32)         # (Bt, 8H)

        hf_new, cf_new = act(gx_f + rec[:, 0:H4], c_f)
        hb_new, cb_new = act(gx_b + rec[:, H4:H8], c_b)

        # packed-sequence masking: freeze state outside each sample's length.
        valid_f = len_v > t_f                              # (Bt, 1)
        valid_b = len_v > t_b
        h_f = jnp.where(valid_f, hf_new, h_f)
        c_f = jnp.where(valid_f, cf_new, c_f)
        h_b = jnp.where(valid_b, hb_new, h_b)
        c_b = jnp.where(valid_b, cb_new, c_b)

        # emit into the lane-dense (T, Bt, 2H) block (written back to HBM once per B-tile).
        out_ref[t_f, :, 0:H] = jnp.where(valid_f, hf_new, 0.0)
        out_ref[t_b, :, H:H2] = jnp.where(valid_b, hb_new, 0.0)
        return h_f, c_f, h_b, c_b

    z = jnp.zeros((Bt, H), jnp.float32)
    jax.lax.fori_loop(0, T, step, (z, z, z, z), unroll=unroll)


def _bilstm_recurrence(gx, w_hh_bd, len2d, *, mxu_dtype):
    T, B, H8 = gx.shape
    H = H8 // 8
    # Batch tile sized so double-buffered gx + out blocks stay under an explicit VMEM budget
    # (relevant for v7x's 64 MiB physical VMEM at real ELMo sizes).
    bytes_per_row = T * (H8 + 2 * H) * 4
    max_bt = max(8, (20 * 1024 * 1024 // (2 * bytes_per_row)) // 8 * 8)
    Bt = _pick_tile(B, min(B, max_bt), 8)
    grid = (B // Bt,)
    return pl.pallas_call(
        functools.partial(_bilstm_recurrence_kernel, mxu_dtype=mxu_dtype, unroll=min(T, 8)),
        out_shape=jax.ShapeDtypeStruct((T, B, 2 * H), jnp.float32),
        grid=grid,
        in_specs=[pl.BlockSpec((T, Bt, H8), lambda b: (0, b, 0)),
                  pl.BlockSpec((2 * H, H8), lambda b: (0, 0)),
                  pl.BlockSpec((Bt, 1), lambda b: (b, 0))],
        out_specs=pl.BlockSpec((T, Bt, 2 * H), lambda b: (0, b, 0)),
        compiler_params=pltpu.CompilerParams(
            dimension_semantics=("parallel",),
            vmem_limit_bytes=_VMEM_LIMIT),
        cost_estimate=pl.CostEstimate(
            flops=2 * T * B * 2 * H * H8 + 10 * T * B * 2 * H,
            transcendentals=5 * T * B * 2 * H,
            bytes_accessed=4 * (T * B * H8 + T * B * 2 * H + 2 * H * H8 + B)),
    )(gx, w_hh_bd, len2d)


# ----------------------------------------------------------------------------
# Kernel 3: fused head = dense (Linear) + softmax/argmax + CrossEntropyLoss
#           (reduction='mean', ignore_index=padding_idx), tiled over rows and vocab.
#           Online max / logsumexp / first-occurrence argmax carried in VMEM scratch across
#           the "arbitrary" vocab axis; logits are never written to HBM.
# ----------------------------------------------------------------------------
def _head_kernel(enc_ref, w_ref, b_ref, tgt_ref, loss_ref, pred_ref,
                 m_scr, l_scr, amax_v, amax_i, tlogit, lsum, lcnt,
                 *, padding_idx, mxu_dtype):
    i = pl.program_id(0)
    j = pl.program_id(1)
    n_i = pl.num_programs(0)
    n_j = pl.num_programs(1)
    tn, _ = enc_ref.shape
    tv = w_ref.shape[1]

    @pl.when(jnp.logical_and(i == 0, j == 0))
    def _():
        lsum[...] = jnp.zeros_like(lsum)
        lcnt[...] = jnp.zeros_like(lcnt)

    @pl.when(j == 0)
    def _():
        m_scr[...] = jnp.full_like(m_scr, -jnp.inf)
        l_scr[...] = jnp.zeros_like(l_scr)
        amax_v[...] = jnp.full_like(amax_v, -jnp.inf)
        amax_i[...] = jnp.zeros_like(amax_i)
        tlogit[...] = jnp.zeros_like(tlogit)

    logits = (jnp.dot(enc_ref[...].astype(mxu_dtype), w_ref[...].astype(mxu_dtype),
                      preferred_element_type=jnp.float32) + b_ref[...])          # (tn, tv)

    col = jax.lax.broadcasted_iota(jnp.int32, (tn, tv), 1) + j * tv              # global class id
    tile_max = jnp.max(logits, axis=-1, keepdims=True)                           # (tn, 1)
    # first-occurrence argmax within the tile; strict '>' across tiles keeps the earliest index,
    # matching torch/jnp argmax tie-breaking.
    tile_arg = jnp.min(jnp.where(logits == tile_max, col, jnp.iinfo(jnp.int32).max),
                       axis=-1, keepdims=True)
    better = tile_max > amax_v[...]
    amax_i[...] = jnp.where(better, tile_arg, amax_i[...]).astype(jnp.int32)
    amax_v[...] = jnp.where(better, tile_max, amax_v[...])

    # online logsumexp
    m_new = jnp.maximum(m_scr[...], tile_max)
    l_scr[...] = (l_scr[...] * jnp.exp(m_scr[...] - m_new)
                  + jnp.sum(jnp.exp(logits - m_new), axis=-1, keepdims=True))
    m_scr[...] = m_new

    tgt = tgt_ref[...]                                                           # (tn, 1) int32
    tlogit[...] += jnp.sum(jnp.where(col == tgt, logits, 0.0), axis=-1, keepdims=True)

    @pl.when(j == n_j - 1)
    def _():
        pred_ref[...] = amax_i[...]
        per_tok = (m_scr[...] + jnp.log(l_scr[...])) - tlogit[...]               # (tn, 1)
        keep = (tgt != padding_idx).astype(jnp.float32)
        lsum[...] += jnp.sum(per_tok * keep, axis=(0, 1), keepdims=True)
        lcnt[...] += jnp.sum(keep, axis=(0, 1), keepdims=True)

    @pl.when(jnp.logical_and(i == n_i - 1, j == n_j - 1))
    def _():
        # Unguarded division matches torch (all-ignored targets -> NaN, like CrossEntropyLoss).
        loss_ref[...] = lsum[...] / lcnt[...]


def _head(enc_flat, w, b, tgt, *, padding_idx, mxu_dtype):
    N, D = enc_flat.shape
    V = w.shape[1]
    tn = _pick_tile(N, 256, 8)
    tv = _pick_tile(V, 512, 128)
    grid = (N // tn, V // tv)
    return pl.pallas_call(
        functools.partial(_head_kernel, padding_idx=padding_idx, mxu_dtype=mxu_dtype),
        out_shape=(jax.ShapeDtypeStruct((1, 1), jnp.float32),
                   jax.ShapeDtypeStruct((N, 1), jnp.int32)),
        grid=grid,
        in_specs=[pl.BlockSpec((tn, D), lambda i, j: (i, 0)),
                  pl.BlockSpec((D, tv), lambda i, j: (0, j)),
                  pl.BlockSpec((1, tv), lambda i, j: (0, j)),
                  pl.BlockSpec((tn, 1), lambda i, j: (i, 0))],
        out_specs=(pl.BlockSpec((1, 1), lambda i, j: (0, 0)),
                   pl.BlockSpec((tn, 1), lambda i, j: (i, 0))),
        scratch_shapes=[pltpu.VMEM((tn, 1), jnp.float32),   # running max
                        pltpu.VMEM((tn, 1), jnp.float32),   # running sum-exp
                        pltpu.VMEM((tn, 1), jnp.float32),   # running argmax value
                        pltpu.VMEM((tn, 1), jnp.int32),     # running argmax index
                        pltpu.VMEM((tn, 1), jnp.float32),   # target logit
                        pltpu.VMEM((1, 1), jnp.float32),    # loss sum
                        pltpu.VMEM((1, 1), jnp.float32)],   # non-ignored count
        compiler_params=pltpu.CompilerParams(
            dimension_semantics=("arbitrary", "arbitrary"),
            vmem_limit_bytes=_VMEM_LIMIT),
        cost_estimate=pl.CostEstimate(flops=2 * N * D * V, transcendentals=N * V,
                                      bytes_accessed=4 * (N * D + D * V + V + 2 * N) + 4),
    )(enc_flat, w, b.reshape(1, V), tgt)


# ----------------------------------------------------------------------------
# Weight-layout prep (run ONCE, outside the jitted forward).
# PyTorch per-direction shapes: w_ih (4H, E), w_hh (4H, H), b_ih/b_hh (4H,), gate order i,f,g,o.
# Fused column layout: [fwd: i f g o | bwd: i f g o], block-diagonal W_hh over [h_fwd | h_bwd].
# ----------------------------------------------------------------------------
def _fuse_direction_params(fwd, bwd):
    w_ih_f, w_hh_f, b_ih_f, b_hh_f = fwd
    w_ih_b, w_hh_b, b_ih_b, b_hh_b = bwd
    H = w_hh_f.shape[1]
    H4 = 4 * H
    w_ih_cat = jnp.concatenate([w_ih_f.T, w_ih_b.T], axis=1)                       # (E, 8H)
    bias = jnp.concatenate([b_ih_f + b_hh_f, b_ih_b + b_hh_b])[None, :]            # (1, 8H)
    z = jnp.zeros((H, H4), jnp.float32)
    w_hh_bd = jnp.concatenate([jnp.concatenate([w_hh_f.T, z], axis=1),
                               jnp.concatenate([z, w_hh_b.T], axis=1)], axis=0)    # (2H, 8H)
    return w_ih_cat, w_hh_bd, bias


def prepare_params(params):
    """Build kernel-ready weight layouts once; the jitted forward consumes these directly."""
    lstm_prepared = tuple(_fuse_direction_params(f, b) for f, b in params["lstm"])
    return {"embedding": params["embedding"],
            "lstm": lstm_prepared,
            "dense_w_t": jnp.transpose(params["dense_w"]),    # (D, V)
            "dense_b": params["dense_b"]}


# ----------------------------------------------------------------------------
# Forward pass (== SubwordElmo.forward, eval mode, topk=1, targets provided)
# ----------------------------------------------------------------------------
def subword_elmo_forward(prep, batch_elmo_inp, targets, aux_word_embs=None, *,
                         padding_idx, mxu_dtype=jnp.float32):
    B, T = batch_elmo_inp.shape
    # Pad batch to a multiple of 8 rows so every MXU matmul is at least sublane-full; padded
    # rows have length 0 and target == padding_idx, so they contribute nothing.
    B_pad = max(8, ((B + 7) // 8) * 8)
    if B_pad != B:
        tokens = jnp.pad(batch_elmo_inp, ((0, B_pad - B), (0, 0)), constant_values=padding_idx)
        tgts = jnp.pad(targets, ((0, B_pad - B), (0, 0)), constant_values=padding_idx)
    else:
        tokens, tgts = batch_elmo_inp, targets

    lengths = jnp.sum((tokens != padding_idx).astype(jnp.int32), axis=1)     # (B_pad,)
    len2d = lengths.reshape(B_pad, 1)

    # --- ELMo-like encoder (stand-in; see TODO at top) -----------------------
    x = jnp.take(prep["embedding"], tokens, axis=0)                          # (B_pad, T, E)
    x = jnp.transpose(x, (1, 0, 2)).astype(jnp.float32)                      # (T, B_pad, E)

    for w_ih_cat, w_hh_bd, bias in prep["lstm"]:
        E = x.shape[-1]
        H8 = w_ih_cat.shape[1]
        # (1) one tiled MXU matmul for both directions' input projections (+fused bias)
        gx = _tiled_matmul_bias(x.reshape(T * B_pad, E), w_ih_cat, bias, mxu_dtype=mxu_dtype)
        # (2) fused fwd+bwd recurrence, single in-kernel time loop per batch tile
        x = _bilstm_recurrence(gx.reshape(T, B_pad, H8), w_hh_bd, len2d, mxu_dtype=mxu_dtype)

    # Encodings stay time-major into the head (CE-mean / argmax are order-invariant);
    # dropout(p=0.4) is identity in eval mode.
    D = x.shape[-1]
    enc_flat = x.reshape(T * B_pad, D)                                       # (T*B_pad, D)
    if aux_word_embs is not None:
        # TODO(synk): aux_word_embs path unused in the reference config; minimal support only.
        aux = jnp.pad(aux_word_embs, ((0, B_pad - B), (0, 0), (0, 0)))
        enc_flat = jnp.concatenate(
            [enc_flat, jnp.transpose(aux, (1, 0, 2)).reshape(T * B_pad, -1)], axis=-1)

    tgt_tm = jnp.transpose(tgts).reshape(T * B_pad, 1).astype(jnp.int32)     # time-major targets
    loss, preds_flat = _head(enc_flat, prep["dense_w_t"], prep["dense_b"], tgt_tm,
                             padding_idx=padding_idx, mxu_dtype=mxu_dtype)
    preds = jnp.transpose(preds_flat.reshape(T, B_pad))[:B]                  # (B, T)
    return loss[0, 0], preds


# ----------------------------------------------------------------------------
# Parameter init (deterministic; mimics nn.Embedding / nn.LSTM / nn.Linear shapes)
# ----------------------------------------------------------------------------
def init_params(key, *, vocab_size, emb_dim, hidden, num_layers, output_dim, padding_idx):
    k_emb, k_dw, k_db, key = jax.random.split(key, 4)
    emb = jax.random.normal(k_emb, (vocab_size, emb_dim), jnp.float32)
    emb = emb.at[padding_idx].set(0.0)

    bound = 1.0 / math.sqrt(hidden)
    layers = []
    in_dim = emb_dim
    for _ in range(num_layers):
        dirs = []
        for _ in range(2):  # bidirectional
            key, k1, k2, k3, k4 = jax.random.split(key, 5)
            w_ih = jax.random.uniform(k1, (4 * hidden, in_dim), jnp.float32, -bound, bound)
            w_hh = jax.random.uniform(k2, (4 * hidden, hidden), jnp.float32, -bound, bound)
            b_ih = jax.random.uniform(k3, (4 * hidden,), jnp.float32, -bound, bound)
            b_hh = jax.random.uniform(k4, (4 * hidden,), jnp.float32, -bound, bound)
            dirs.append((w_ih, w_hh, b_ih, b_hh))
        layers.append(tuple(dirs))
        in_dim = 2 * hidden

    elmo_dim = 2 * hidden   # stand-in for self.elmomodule_outdim (real ELMo: 1024)
    dbound = 1.0 / math.sqrt(elmo_dim)
    dense_w = jax.random.uniform(k_dw, (output_dim, elmo_dim), jnp.float32, -dbound, dbound)
    dense_b = jax.random.uniform(k_db, (output_dim,), jnp.float32, -dbound, dbound)
    return {"embedding": emb, "lstm": layers, "dense_w": dense_w, "dense_b": dense_b}


# ----------------------------------------------------------------------------
# Pure-JAX reference (per-direction lax.scan LSTMs + XLA dense/softmax/CE)
# ----------------------------------------------------------------------------
def reference_forward(params, batch_elmo_inp, targets, *, padding_idx):
    B, T = batch_elmo_inp.shape
    lengths = jnp.sum((batch_elmo_inp != padding_idx).astype(jnp.int32), axis=1)
    x = jnp.take(params["embedding"], batch_elmo_inp, axis=0)
    x = jnp.transpose(x, (1, 0, 2)).astype(jnp.float32)             # (T, B, E)

    def run_dir(x, w_ih, w_hh, b_ih, b_hh, reverse):
        H = w_hh.shape[1]

        def step(carry, inp):
            h, c = carry
            x_t, t = inp
            gates = x_t @ w_ih.T + h @ w_hh.T + b_ih + b_hh
            i = jax.nn.sigmoid(gates[:, :H])
            f = jax.nn.sigmoid(gates[:, H:2 * H])
            g = jnp.tanh(gates[:, 2 * H:3 * H])
            o = jax.nn.sigmoid(gates[:, 3 * H:])
            c_new = f * c + i * g
            h_new = o * jnp.tanh(c_new)
            valid = (lengths > t)[:, None]
            h = jnp.where(valid, h_new, h)
            c = jnp.where(valid, c_new, c)
            return (h, c), jnp.where(valid, h_new, 0.0)

        ts = jnp.arange(T)
        xs = (x[::-1], ts[::-1]) if reverse else (x, ts)
        (_, _), outs = jax.lax.scan(step, (jnp.zeros((B, H)), jnp.zeros((B, H))), xs)
        return outs[::-1] if reverse else outs

    for fwd_p, bwd_p in params["lstm"]:
        out_f = run_dir(x, *fwd_p, reverse=False)
        out_b = run_dir(x, *bwd_p, reverse=True)
        x = jnp.concatenate([out_f, out_b], axis=-1)

    enc = jnp.transpose(x, (1, 0, 2))                               # (B, T, D)
    logits = enc @ params["dense_w"].T + params["dense_b"]
    preds = jnp.argmax(logits, axis=-1)
    logp = jax.nn.log_softmax(logits, axis=-1)
    nll = -jnp.take_along_axis(logp, targets[..., None], axis=-1)[..., 0]
    keep = (targets != padding_idx).astype(jnp.float32)
    loss = jnp.sum(nll * keep) / jnp.sum(keep)
    return loss, preds


if __name__ == "__main__":
    B, T = 2, 8
    VOCAB, EMB = 50, 128
    HIDDEN, LAYERS = 128, 2          # ELMo-like encoder outdim = 2*HIDDEN = 256 (real ELMo: 1024)
    OUTPUT_DIM = 128                 # vocabulary of the dense head (lane-aligned)
    PAD = 0

    key = jax.random.PRNGKey(0)
    k_par, k_tok, k_tgt = jax.random.split(key, 3)
    params = init_params(k_par, vocab_size=VOCAB, emb_dim=EMB, hidden=HIDDEN,
                         num_layers=LAYERS, output_dim=OUTPUT_DIM, padding_idx=PAD)

    lengths = jnp.array([8, 5], dtype=jnp.int32)
    valid = jnp.arange(T)[None, :] < lengths[:, None]
    tokens = jnp.where(valid, jax.random.randint(k_tok, (B, T), 1, VOCAB, dtype=jnp.int32), PAD)
    targets = jnp.where(valid, jax.random.randint(k_tgt, (B, T), 1, OUTPUT_DIM, dtype=jnp.int32), PAD)

    # Fused weight layouts built once, outside the jitted forward.
    prep = prepare_params(params)

    # f32 MXU path: bit-comparable to the pure-JAX reference.
    fwd_f32 = jax.jit(functools.partial(subword_elmo_forward, padding_idx=PAD))
    loss, preds = jax.block_until_ready(fwd_f32(prep, tokens, targets))
    assert preds.shape == (B, T), preds.shape

    loss_ref, preds_ref = reference_forward(params, tokens, targets, padding_idx=PAD)
    np.testing.assert_allclose(np.asarray(loss), np.asarray(loss_ref), rtol=1e-4, atol=1e-5)
    np.testing.assert_array_equal(np.asarray(preds), np.asarray(preds_ref))

    # bf16 MXU-operand fast path (the v6e/v7x recommendation); elementwise math stays f32.
    fwd_bf16 = jax.jit(functools.partial(subword_elmo_forward, padding_idx=PAD,
                                         mxu_dtype=jnp.bfloat16))
    loss_bf16, _ = jax.block_until_ready(fwd_bf16(prep, tokens, targets))
    np.testing.assert_allclose(np.asarray(loss_bf16), np.asarray(loss_ref), rtol=5e-2, atol=5e-2)

    print("KERNEL_OK")
</pallas_src>

<mosaic_0001>
module attributes {stable_mosaic.version = 11 : i64} {
  func.func @_matmul_bias_kernel(%arg0: i32, %arg1: i32, %arg2: i32, %arg3: memref<64x128xf32, #tpu.memory_space<vmem>>, %arg4: memref<128x512xf32, #tpu.memory_space<vmem>>, %arg5: memref<1x512xf32, #tpu.memory_space<vmem>>, %arg6: memref<64x512xf32, #tpu.memory_space<vmem>>, %arg7: memref<64x512xf32, #tpu.memory_space<vmem>>) attributes {dimension_semantics = [#tpu.dimension_semantics<parallel>, #tpu.dimension_semantics<parallel>, #tpu.dimension_semantics<arbitrary>], iteration_bounds = array<i64: 1, 2, 1>, scalar_prefetch = 0 : i64, scratch_operands = 1 : i64, tpu.core_type = #tpu.core_type<tc>, window_params = [{transform_indices = @transform_0, window_bounds = array<i64: 64, 128>}, {transform_indices = @transform_1, window_bounds = array<i64: 128, 512>}, {transform_indices = @transform_2, window_bounds = array<i64: 1, 512>}, {transform_indices = @transform_3, window_bounds = array<i64: 64, 512>}]} {
    %c0_i32 = arith.constant 0 : i32
    %0 = arith.cmpi eq, %arg2, %c0_i32 : i32
    %1 = arith.extui %0 : i1 to i32
    %c0_i32_0 = arith.constant 0 : i32
    %2 = arith.cmpi ne, %1, %c0_i32_0 : i32
    scf.if %2 {
      %cst_10 = arith.constant 0.000000e+00 : f32
      %12 = vector.broadcast %cst_10 : f32 to vector<64x512xf32>
      %c0_11 = arith.constant 0 : index
      %c0_12 = arith.constant 0 : index
      %13 = vector.load %arg7[%c0_11, %c0_12] : memref<64x512xf32, #tpu.memory_space<vmem>>, vector<64x512xf32>
      tpu.vector_store %arg7[%c0_11, %c0_12], %12 {strides = array<i32>} : memref<64x512xf32, #tpu.memory_space<vmem>>, vector<64x512xf32>,
    } else {
    }
    %c0 = arith.constant 0 : index
    %c0_1 = arith.constant 0 : index
    %3 = vector.load %arg7[%c0, %c0_1] : memref<64x512xf32, #tpu.memory_space<vmem>>, vector<64x512xf32>
    %c0_2 = arith.constant 0 : index
    %c0_3 = arith.constant 0 : index
    %4 = vector.load %arg3[%c0_2, %c0_3] : memref<64x128xf32, #tpu.memory_space<vmem>>, vector<64x128xf32>
    %c0_4 = arith.constant 0 : index
    %c0_5 = arith.constant 0 : index
    %5 = vector.load %arg4[%c0_4, %c0_5] : memref<128x512xf32, #tpu.memory_space<vmem>>, vector<128x512xf32>
    %cst = arith.constant dense<0.000000e+00> : vector<64x512xf32>
    %6 = tpu.matmul %4, %5, %cst {dimension_numbers = #tpu.dot_dimension_numbers<[1], [0], [0], [1], [0, 0, 1, 1], [], []>} : vector<64x128xf32>, vector<128x512xf32>, vector<64x512xf32> -> vector<64x512xf32>
    %7 = arith.addf %3, %6 : vector<64x512xf32>
    %c0_6 = arith.constant 0 : index
    %c0_7 = arith.constant 0 : index
    %8 = vector.load %arg7[%c0_6, %c0_7] : memref<64x512xf32, #tpu.memory_space<vmem>>, vector<64x512xf32>
    tpu.vector_store %arg7[%c0_6, %c0_7], %7 {strides = array<i32>} : memref<64x512xf32, #tpu.memory_space<vmem>>, vector<64x512xf32>,
    %c0_i32_8 = arith.constant 0 : i32
    %9 = arith.cmpi eq, %arg2, %c0_i32_8 : i32
    %10 = arith.extui %9 : i1 to i32
    %c0_i32_9 = arith.constant 0 : i32
    %11 = arith.cmpi ne, %10, %c0_i32_9 : i32
    scf.if %11 {
      %c0_10 = arith.constant 0 : index
      %c0_11 = arith.constant 0 : index
      %12 = vector.load %arg7[%c0_10, %c0_11] : memref<64x512xf32, #tpu.memory_space<vmem>>, vector<64x512xf32>
      %c0_12 = arith.constant 0 : index
      %c0_13 = arith.constant 0 : index
      %13 = vector.load %arg5[%c0_12, %c0_13] : memref<1x512xf32, #tpu.memory_space<vmem>>, vector<1x512xf32>
      %14 = vector.broadcast %13 : vector<1x512xf32> to vector<64x512xf32>
      %15 = arith.addf %12, %14 : vector<64x512xf32>
      %c0_14 = arith.constant 0 : index
      %c0_15 = arith.constant 0 : index
      %16 = vector.load %arg6[%c0_14, %c0_15] : memref<64x512xf32, #tpu.memory_space<vmem>>, vector<64x512xf32>
      tpu.vector_store %arg6[%c0_14, %c0_15], %15 {strides = array<i32>} : memref<64x512xf32, #tpu.memory_space<vmem>>, vector<64x512xf32>,
    } else {
    }
    return
  }
  func.func @transform_0(%arg0: i32, %arg1: i32, %arg2: i32) -> (i32, i32) {
    %c0_i32 = arith.constant 0 : i32
    return %arg0, %arg2 : i32, i32
  }
  func.func @transform_1(%arg0: i32, %arg1: i32, %arg2: i32) -> (i32, i32) {
    %c0_i32 = arith.constant 0 : i32
    return %arg2, %arg1 : i32, i32
  }
  func.func @transform_2(%arg0: i32, %arg1: i32, %arg2: i32) -> (i32, i32) {
    %c0_i32 = arith.constant 0 : i32
    %c0_i32_0 = arith.constant 0 : i32
    return %c0_i32, %arg1 : i32, i32
  }
  func.func @transform_3(%arg0: i32, %arg1: i32, %arg2: i32) -> (i32, i32) {
    %c0_i32 = arith.constant 0 : i32
    return %arg0, %arg1 : i32, i32
  }
}

module attributes {stable_mosaic.version = 11 : i64} {
  func.func @_matmul_bias_kernel(%arg0: i32, %arg1: i32, %arg2: i32, %arg3: memref<64x256xf32, #tpu.memory_space<vmem>>, %arg4: memref<256x512xf32, #tpu.memory_space<vmem>>, %arg5: memref<1x512xf32, #tpu.memory_space<vmem>>, %arg6: memref<64x512xf32, #tpu.memory_space<vmem>>, %arg7: memref<64x512xf32, #tpu.memory_space<vmem>>) attributes {dimension_semantics = [#tpu.dimension_semantics<parallel>, #tpu.dimension_semantics<parallel>, #tpu.dimension_semantics<arbitrary>], iteration_bounds = array<i64: 1, 2, 1>, scalar_prefetch = 0 : i64, scratch_operands = 1 : i64, tpu.core_type = #tpu.core_type<tc>, window_params = [{transform_indices = @transform_0, window_bounds = array<i64: 64, 256>}, {transform_indices = @transform_1, window_bounds = array<i64: 256, 512>}, {transform_indices = @transform_2, window_bounds = array<i64: 1, 512>}, {transform_indices = @transform_3, window_bounds = array<i64: 64, 512>}]} {
    %c0_i32 = arith.constant 0 : i32
    %0 = arith.cmpi eq, %arg2, %c0_i32 : i32
    %1 = arith.extui %0 : i1 to i32
    %c0_i32_0 = arith.constant 0 : i32
    %2 = arith.cmpi ne, %1, %c0_i32_0 : i32
    scf.if %2 {
      %cst_10 = arith.constant 0.000000e+00 : f32
      %12 = vector.broadcast %cst_10 : f32 to vector<64x512xf32>
      %c0_11 = arith.constant 0 : index
      %c0_12 = arith.constant 0 : index
      %13 = vector.load %arg7[%c0_11, %c0_12] : memref<64x512xf32, #tpu.memory_space<vmem>>, vector<64x512xf32>
      tpu.vector_store %arg7[%c0_11, %c0_12], %12 {strides = array<i32>} : memref<64x512xf32, #tpu.memory_space<vmem>>, vector<64x512xf32>,
    } else {
    }
    %c0 = arith.constant 0 : index
    %c0_1 = arith.constant 0 : index
    %3 = vector.load %arg7[%c0, %c0_1] : memref<64x512xf32, #tpu.memory_space<vmem>>, vector<64x512xf32>
    %c0_2 = arith.constant 0 : index
    %c0_3 = arith.constant 0 : index
    %4 = vector.load %arg3[%c0_2, %c0_3] : memref<64x256xf32, #tpu.memory_space<vmem>>, vector<64x256xf32>
    %c0_4 = arith.constant 0 : index
    %c0_5 = arith.constant 0 : index
    %5 = vector.load %arg4[%c0_4, %c0_5] : memref<256x512xf32, #tpu.memory_space<vmem>>, vector<256x512xf32>
    %cst = arith.constant dense<0.000000e+00> : vector<64x512xf32>
    %6 = tpu.matmul %4, %5, %cst {dimension_numbers = #tpu.dot_dimension_numbers<[1], [0], [0], [1], [0, 0, 1, 1], [], []>} : vector<64x256xf32>, vector<256x512xf32>, vector<64x512xf32> -> vector<64x512xf32>
    %7 = arith.addf %3, %6 : vector<64x512xf32>
    %c0_6 = arith.constant 0 : index
    %c0_7 = arith.constant 0 : index
    %8 = vector.load %arg7[%c0_6, %c0_7] : memref<64x512xf32, #tpu.memory_space<vmem>>, vector<64x512xf32>
    tpu.vector_store %arg7[%c0_6, %c0_7], %7 {strides = array<i32>} : memref<64x512xf32, #tpu.memory_space<vmem>>, vector<64x512xf32>,
    %c0_i32_8 = arith.constant 0 : i32
    %9 = arith.cmpi eq, %arg2, %c0_i32_8 : i32
    %10 = arith.extui %9 : i1 to i32
    %c0_i32_9 = arith.constant 0 : i32
    %11 = arith.cmpi ne, %10, %c0_i32_9 : i32
    scf.if %11 {
      %c0_10 = arith.constant 0 : index
      %c0_11 = arith.constant 0 : index
      %12 = vector.load %arg7[%c0_10, %c0_11] : memref<64x512xf32, #tpu.memory_space<vmem>>, vector<64x512xf32>
      %c0_12 = arith.constant 0 : index
      %c0_13 = arith.constant 0 : index
      %13 = vector.load %arg5[%c0_12, %c0_13] : memref<1x512xf32, #tpu.memory_space<vmem>>, vector<1x512xf32>
      %14 = vector.broadcast %13 : vector<1x512xf32> to vector<64x512xf32>
      %15 = arith.addf %12, %14 : vector<64x512xf32>
      %c0_14 = arith.constant 0 : index
      %c0_15 = arith.constant 0 : index
      %16 = vector.load %arg6[%c0_14, %c0_15] : memref<64x512xf32, #tpu.memory_space<vmem>>, vector<64x512xf32>
      tpu.vector_store %arg6[%c0_14, %c0_15], %15 {strides = array<i32>} : memref<64x512xf32, #tpu.memory_space<vmem>>, vector<64x512xf32>,
    } else {
    }
    return
  }
  func.func @transform_0(%arg0: i32, %arg1: i32, %arg2: i32) -> (i32, i32) {
    %c0_i32 = arith.constant 0 : i32
    return %arg0, %arg2 : i32, i32
  }
  func.func @transform_1(%arg0: i32, %arg1: i32, %arg2: i32) -> (i32, i32) {
    %c0_i32 = arith.constant 0 : i32
    return %arg2, %arg1 : i32, i32
  }
  func.func @transform_2(%arg0: i32, %arg1: i32, %arg2: i32) -> (i32, i32) {
    %c0_i32 = arith.constant 0 : i32
    %c0_i32_0 = arith.constant 0 : i32
    return %c0_i32, %arg1 : i32, i32
  }
  func.func @transform_3(%arg0: i32, %arg1: i32, %arg2: i32) -> (i32, i32) {
    %c0_i32 = arith.constant 0 : i32
    return %arg0, %arg1 : i32, i32
  }
}

module attributes {stable_mosaic.version = 11 : i64} {
  func.func @_bilstm_recurrence_kernel(%arg0: i32, %arg1: memref<8x8x1024xf32, #tpu.memory_space<vmem>>, %arg2: memref<256x1024xf32, #tpu.memory_space<vmem>>, %arg3: memref<8x1xi32, #tpu.memory_space<vmem>>, %arg4: memref<8x8x256xf32, #tpu.memory_space<vmem>>) attributes {dimension_semantics = [#tpu.dimension_semantics<parallel>], iteration_bounds = array<i64: 1>, scalar_prefetch = 0 : i64, scratch_operands = 0 : i64, tpu.core_type = #tpu.core_type<tc>, window_params = [{transform_indices = @transform_0, window_bounds = array<i64: 8, 8, 1024>}, {pipeline_mode = #tpu.pipeline_mode<synchronous>, transform_indices = @transform_1, window_bounds = array<i64: 256, 1024>}, {transform_indices = @transform_2, window_bounds = array<i64: 8, 1>}, {transform_indices = @transform_3, window_bounds = array<i64: 8, 8, 256>}]} {
    %c0 = arith.constant 0 : index
    %c0_0 = arith.constant 0 : index
    %0 = vector.load %arg3[%c0, %c0_0] : memref<8x1xi32, #tpu.memory_space<vmem>>, vector<8x1xi32>
    %c0_1 = arith.constant 0 : index
    %c0_2 = arith.constant 0 : index
    %1 = vector.load %arg2[%c0_1, %c0_2] : memref<256x1024xf32, #tpu.memory_space<vmem>>, vector<256x1024xf32>
    %cst = arith.constant 0.000000e+00 : f32
    %2 = vector.broadcast %cst : f32 to vector<8x128xf32>
    %c0_i32 = arith.constant 0 : i32
    %c7_i32 = arith.constant 7 : i32
    %3 = arith.subi %c7_i32, %c0_i32 : i32
    %4 = arith.index_cast %c0_i32 : i32 to index
    %c0_3 = arith.constant 0 : index
    %c0_4 = arith.constant 0 : index
    %5 = vector.load %arg1[%4, %c0_3, %c0_4] : memref<8x8x1024xf32, #tpu.memory_space<vmem>>, vector<1x8x512xf32>
    %6 = vector.shape_cast %5 : vector<1x8x512xf32> to vector<8x512xf32>
    %7 = arith.index_cast %3 : i32 to index
    %c0_5 = arith.constant 0 : index
    %c512 = arith.constant 512 : index
    %8 = vector.load %arg1[%7, %c0_5, %c512] : memref<8x8x1024xf32, #tpu.memory_space<vmem>>, vector<1x8x512xf32>
    %9 = vector.shape_cast %8 : vector<1x8x512xf32> to vector<8x512xf32>
    %10 = tpu.concatenate %2, %2 in 1 : vector<8x128xf32>, vector<8x128xf32> -> vector<8x256xf32>
    %cst_6 = arith.constant dense<0.000000e+00> : vector<8x1024xf32>
    %11 = tpu.matmul %10, %1, %cst_6 {dimension_numbers = #tpu.dot_dimension_numbers<[1], [0], [0], [1], [0, 0, 1, 1], [], []>} : vector<8x256xf32>, vector<256x1024xf32>, vector<8x1024xf32> -> vector<8x1024xf32>
    %12 = vector.extract_strided_slice %11 {offsets = [0, 0], sizes = [8, 512], strides = [1, 1]} : vector<8x1024xf32> to vector<8x512xf32>
    %13 = arith.addf %6, %12 : vector<8x512xf32>
    %14 = vector.extract_strided_slice %13 {offsets = [0, 0], sizes = [8, 128], strides = [1, 1]} : vector<8x512xf32> to vector<8x128xf32>
    %15 = arith.negf %14 : vector<8x128xf32>
    %16 = math.exp %15 : vector<8x128xf32>
    %cst_7 = arith.constant 1.000000e+00 : f32
    %17 = vector.broadcast %cst_7 : f32 to vector<8x128xf32>
    %18 = arith.addf %17, %16 : vector<8x128xf32>
    %19 = arith.divf %17, %18 : vector<8x128xf32>
    %20 = vector.extract_strided_slice %13 {offsets = [0, 128], sizes = [8, 128], strides = [1, 1]} : vector<8x512xf32> to vector<8x128xf32>
    %21 = arith.negf %20 : vector<8x128xf32>
    %22 = math.exp %21 : vector<8x128xf32>
    %cst_8 = arith.constant 1.000000e+00 : f32
    %23 = vector.broadcast %cst_8 : f32 to vector<8x128xf32>
    %24 = arith.addf %23, %22 : vector<8x128xf32>
    %25 = arith.divf %23, %24 : vector<8x128xf32>
    %26 = vector.extract_strided_slice %13 {offsets = [0, 256], sizes = [8, 128], strides = [1, 1]} : vector<8x512xf32> to vector<8x128xf32>
    %27 = math.tanh %26 : vector<8x128xf32>
    %28 = vector.extract_strided_slice %13 {offsets = [0, 384], sizes = [8, 128], strides = [1, 1]} : vector<8x512xf32> to vector<8x128xf32>
    %29 = arith.negf %28 : vector<8x128xf32>
    %30 = math.exp %29 : vector<8x128xf32>
    %cst_9 = arith.constant 1.000000e+00 : f32
    %31 = vector.broadcast %cst_9 : f32 to vector<8x128xf32>
    %32 = arith.addf %31, %30 : vector<8x128xf32>
    %33 = arith.divf %31, %32 : vector<8x128xf32>
    %34 = arith.mulf %25, %2 : vector<8x128xf32>
    %35 = arith.mulf %19, %27 : vector<8x128xf32>
    %36 = arith.addf %34, %35 : vector<8x128xf32>
    %37 = math.tanh %36 : vector<8x128xf32>
    %38 = arith.mulf %33, %37 : vector<8x128xf32>
    %39 = vector.extract_strided_slice %11 {offsets = [0, 512], sizes = [8, 512], strides = [1, 1]} : vector<8x1024xf32> to vector<8x512xf32>
    %40 = arith.addf %9, %39 : vector<8x512xf32>
    %41 = vector.extract_strided_slice %40 {offsets = [0, 0], sizes = [8, 128], strides = [1, 1]} : vector<8x512xf32> to vector<8x128xf32>
    %42 = arith.negf %41 : vector<8x128xf32>
    %43 = math.exp %42 : vector<8x128xf32>
    %cst_10 = arith.constant 1.000000e+00 : f32
    %44 = vector.broadcast %cst_10 : f32 to vector<8x128xf32>
    %45 = arith.addf %44, %43 : vector<8x128xf32>
    %46 = arith.divf %44, %45 : vector<8x128xf32>
    %47 = vector.extract_strided_slice %40 {offsets = [0, 128], sizes = [8, 128], strides = [1, 1]} : vector<8x512xf32> to vector<8x128xf32>
    %48 = arith.negf %47 : vector<8x128xf32>
    %49 = math.exp %48 : vector<8x128xf32>
    %cst_11 = arith.constant 1.000000e+00 : f32
    %50 = vector.broadcast %cst_11 : f32 to vector<8x128xf32>
    %51 = arith.addf %50, %49 : vector<8x128xf32>
    %52 = arith.divf %50, %51 : vector<8x128xf32>
    %53 = vector.extract_strided_slice %40 {offsets = [0, 256], sizes = [8, 128], strides = [1, 1]} : vector<8x512xf32> to vector<8x128xf32>
    %54 = math.tanh %53 : vector<8x128xf32>
    %55 = vector.extract_strided_slice %40 {offsets = [0, 384], sizes = [8, 128], strides = [1, 1]} : vector<8x512xf32> to vector<8x128xf32>
    %56 = arith.negf %55 : vector<8x128xf32>
    %57 = math.exp %56 : vector<8x128xf32>
    %cst_12 = arith.constant 1.000000e+00 : f32
    %58 = vector.broadcast %cst_12 : f32 to vector<8x128xf32>
    %59 = arith.addf %58, %57 : vector<8x128xf32>
    %60 = arith.divf %58, %59 : vector<8x128xf32>
    %61 = arith.mulf %52, %2 : vector<8x128xf32>
    %62 = arith.mulf %46, %54 : vector<8x128xf32>
    %63 = arith.addf %61, %62 : vector<8x128xf32>
    %64 = math.tanh %63 : vector<8x128xf32>
    %65 = arith.mulf %60, %64 : vector<8x128xf32>
    %66 = vector.broadcast %c0_i32 : i32 to vector<8x1xi32>
    %67 = arith.cmpi sgt, %0, %66 : vector<8x1xi32>
    %68 = vector.broadcast %3 : i32 to vector<8x1xi32>
    %69 = arith.cmpi sgt, %0, %68 : vector<8x1xi32>
    %70 = vector.shape_cast %67 : vector<8x1xi1> to vector<8x1xi1>
    %71 = vector.broadcast %70 : vector<8x1xi1> to vector<8x128xi1>
    %72 = arith.select %71, %38, %2 : vector<8x128xi1>, vector<8x128xf32>
    %73 = vector.shape_cast %67 : vector<8x1xi1> to vector<8x1xi1>
    %74 = vector.broadcast %73 : vector<8x1xi1> to vector<8x128xi1>
    %75 = arith.select %74, %36, %2 : vector<8x128xi1>, vector<8x128xf32>
    %76 = vector.shape_cast %69 : vector<8x1xi1> to vector<8x1xi1>
    %77 = vector.broadcast %76 : vector<8x1xi1> to vector<8x128xi1>
    %78 = arith.select %77, %65, %2 : vector<8x128xi1>, vector<8x128xf32>
    %79 = vector.shape_cast %69 : vector<8x1xi1> to vector<8x1xi1>
    %80 = vector.broadcast %79 : vector<8x1xi1> to vector<8x128xi1>
    %81 = arith.select %80, %63, %2 : vector<8x128xi1>, vector<8x128xf32>
    %cst_13 = arith.constant 0.000000e+00 : f32
    %82 = vector.shape_cast %67 : vector<8x1xi1> to vector<8x1xi1>
    %83 = vector.broadcast %82 : vector<8x1xi1> to vector<8x128xi1>
    %84 = vector.broadcast %cst_13 : f32 to vector<8x128xf32>
    %85 = arith.select %83, %38, %84 : vector<8x128xi1>, vector<8x128xf32>
    %86 = arith.index_cast %c0_i32 : i32 to index
    %c0_14 = arith.constant 0 : index
    %c0_15 = arith.constant 0 : index
    %87 = vector.load %arg4[%86, %c0_14, %c0_15] : memref<8x8x256xf32, #tpu.memory_space<vmem>>, vector<1x8x128xf32>
    %88 = vector.shape_cast %87 : vector<1x8x128xf32> to vector<8x128xf32>
    %89 = vector.shape_cast %85 : vector<8x128xf32> to vector<1x8x128xf32>
    tpu.vector_store %arg4[%86, %c0_14, %c0_15], %89 {strides = array<i32>} : memref<8x8x256xf32, #tpu.memory_space<vmem>>, vector<1x8x128xf32>,
    %cst_16 = arith.constant 0.000000e+00 : f32
    %90 = vector.shape_cast %69 : vector<8x1xi1> to vector<8x1xi1>
    %91 = vector.broadcast %90 : vector<8x1xi1> to vector<8x128xi1>
    %92 = vector.broadcast %cst_16 : f32 to vector<8x128xf32>
    %93 = arith.select %91, %65, %92 : vector<8x128xi1>, vector<8x128xf32>
    %94 = arith.index_cast %3 : i32 to index
    %c0_17 = arith.constant 0 : index
    %c128 = arith.constant 128 : index
    %95 = vector.load %arg4[%94, %c0_17, %c128] : memref<8x8x256xf32, #tpu.memory_space<vmem>>, vector<1x8x128xf32>
    %96 = vector.shape_cast %95 : vector<1x8x128xf32> to vector<8x128xf32>
    %97 = vector.shape_cast %93 : vector<8x128xf32> to vector<1x8x128xf32>
    tpu.vector_store %arg4[%94, %c0_17, %c128], %97 {strides = array<i32>} : memref<8x8x256xf32, #tpu.memory_space<vmem>>, vector<1x8x128xf32>,
    %c1_i32 = arith.constant 1 : i32
    %c7_i32_18 = arith.constant 7 : i32
    %98 = arith.subi %c7_i32_18, %c1_i32 : i32
    %99 = arith.index_cast %c1_i32 : i32 to index
    %c0_19 = arith.constant 0 : index
    %c0_20 = arith.constant 0 : index
    %100 = vector.load %arg1[%99, %c0_19, %c0_20] : memref<8x8x1024xf32, #tpu.memory_space<vmem>>, vector<1x8x512xf32>
    %101 = vector.shape_cast %100 : vector<1x8x512xf32> to vector<8x512xf32>
    %102 = arith.index_cast %98 : i32 to index
    %c0_21 = arith.constant 0 : index
    %c512_22 = arith.constant 512 : index
    %103 = vector.load %arg1[%102, %c0_21, %c512_22] : memref<8x8x1024xf32, #tpu.memory_space<vmem>>, vector<1x8x512xf32>
    %104 = vector.shape_cast %103 : vector<1x8x512xf32> to vector<8x512xf32>
    %105 = tpu.concatenate %72, %78 in 1 : vector<8x128xf32>, vector<8x128xf32> -> vector<8x256xf32>
    %cst_23 = arith.constant dense<0.000000e+00> : vector<8x1024xf32>
    %106 = tpu.matmul %105, %1, %cst_23 {dimension_numbers = #tpu.dot_dimension_numbers<[1], [0], [0], [1], [0, 0, 1, 1], [], []>} : vector<8x256xf32>, vector<256x1024xf32>, vector<8x1024xf32> -> vector<8x1024xf32>
    %107 = vector.extract_strided_slice %106 {offsets = [0, 0], sizes = [8, 512], strides = [1, 1]} : vector<8x1024xf32> to vector<8x512xf32>
    %108 = arith.addf %101, %107 : vector<8x512xf32>
    %109 = vector.extract_strided_slice %108 {offsets = [0, 0], sizes = [8, 128], strides = [1, 1]} : vector<8x512xf32> to vector<8x128xf32>
    %110 = arith.negf %109 : vector<8x128xf32>
    %111 = math.exp %110 : vector<8x128xf32>
    %cst_24 = arith.constant 1.000000e+00 : f32
    %112 = vector.broadcast %cst_24 : f32 to vector<8x128xf32>
    %113 = arith.addf %112, %111 : vector<8x128xf32>
    %114 = arith.divf %112, %113 : vector<8x128xf32>
    %115 = vector.extract_strided_slice %108 {offsets = [0, 128], sizes = [8, 128], strides = [1, 1]} : vector<8x512xf32> to vector<8x128xf32>
    %116 = arith.negf %115 : vector<8x128xf32>
    %117 = math.exp %116 : vector<8x128xf32>
    %cst_25 = arith.constant 1.000000e+00 : f32
    %118 = vector.broadcast %cst_25 : f32 to vector<8x128xf32>
    %119 = arith.addf %118, %117 : vector<8x128xf32>
    %120 = arith.divf %118, %119 : vector<8x128xf32>
    %121 = vector.extract_strided_slice %108 {offsets = [0, 256], sizes = [8, 128], strides = [1, 1]} : vector<8x512xf32> to vector<8x128xf32>
    %122 = math.tanh %121 : vector<8x128xf32>
    %123 = vector.extract_strided_slice %108 {offsets = [0, 384], sizes = [8, 128], strides = [1, 1]} : vector<8x512xf32> to vector<8x128xf32>
    %124 = arith.negf %123 : vector<8x128xf32>
    %125 = math.exp %124 : vector<8x128xf32>
    %cst_26 = arith.constant 1.000000e+00 : f32
    %126 = vector.broadcast %cst_26 : f32 to vector<8x128xf32>
    %127 = arith.addf %126, %125 : vector<8x128xf32>
    %128 = arith.divf %126, %127 : vector<8x128xf32>
    %129 = arith.mulf %120, %75 : vector<8x128xf32>
    %130 = arith.mulf %114, %122 : vector<8x128xf32>
    %131 = arith.addf %129, %130 : vector<8x128xf32>
    %132 = math.tanh %131 : vector<8x128xf32>
    %133 = arith.mulf %128, %132 : vector<8x128xf32>
    %134 = vector.extract_strided_slice %106 {offsets = [0, 512], sizes = [8, 512], strides = [1, 1]} : vector<8x1024xf32> to vector<8x512xf32>
    %135 = arith.addf %104, %134 : vector<8x512xf32>
    %136 = vector.extract_strided_slice %135 {offsets = [0, 0], sizes = [8, 128], strides = [1, 1]} : vector<8x512xf32> to vector<8x128xf32>
    %137 = arith.negf %136 : vector<8x128xf32>
    %138 = math.exp %137 : vector<8x128xf32>
    %cst_27 = arith.constant 1.000000e+00 : f32
    %139 = vector.broadcast %cst_27 : f32 to vector<8x128xf32>
    %140 = arith.addf %139, %138 : vector<8x128xf32>
    %141 = arith.divf %139, %140 : vector<8x128xf32>
    %142 = vector.extract_strided_slice %135 {offsets = [0, 128], sizes = [8, 128], strides = [1, 1]} : vector<8x512xf32> to vector<8x128xf32>
    %143 = arith.negf %142 : vector<8x128xf32>
    %144 = math.exp %143 : vector<8x128xf32>
    %cst_28 = arith.constant 1.000000e+00 : f32
    %145 = vector.broadcast %cst_28 : f32 to vector<8x128xf32>
    %146 = arith.addf %145, %144 : vector<8x128xf32>
    %147 = arith.divf %145, %146 : vector<8x128xf32>
    %148 = vector.extract_strided_slice %135 {offsets = [0, 256], sizes = [8, 128], strides = [1, 1]} : vector<8x512xf32> to vector<8x128xf32>
    %149 = math.tanh %148 : vector<8x128xf32>
    %150 = vector.extract_strided_slice %135 {offsets = [0, 384], sizes = [8, 128], strides = [1, 1]} : vector<8x512xf32> to vector<8x128xf32>
    %151 = arith.negf %150 : vector<8x128xf32>
    %152 = math.exp %151 : vector<8x128xf32>
    %cst_29 = arith.constant 1.000000e+00 : f32
    %153 = vector.broadcast %cst_29 : f32 to vector<8x128xf32>
    %154 = arith.addf %153, %152 : vector<8x128xf32>
    %155 = arith.divf %153, %154 : vector<8x128xf32>
    %156 = arith.mulf %147, %81 : vector<8x128xf32>
    %157 = arith.mulf %141, %149 : vector<8x128xf32>
    %158 = arith.addf %156, %157 : vector<8x128xf32>
    %159 = math.tanh %158 : vector<8x128xf32>
    %160 = arith.mulf %155, %159 : vector<8x128xf32>
    %161 = vector.broadcast %c1_i32 : i32 to vector<8x1xi32>
    %162 = arith.cmpi sgt, %0, %161 : vector<8x1xi32>
    %163 = vector.broadcast %98 : i32 to vector<8x1xi32>
    %164 = arith.cmpi sgt, %0, %163 : vector<8x1xi32>
    %165 = vector.shape_cast %162 : vector<8x1xi1> to vector<8x1xi1>
    %166 = vector.broadcast %165 : vector<8x1xi1> to vector<8x128xi1>
    %167 = arith.select %166, %133, %72 : vector<8x128xi1>, vector<8x128xf32>
    %168 = vector.shape_cast %162 : vector<8x1xi1> to vector<8x1xi1>
    %169 = vector.broadcast %168 : vector<8x1xi1> to vector<8x128xi1>
    %170 = arith.select %169, %131, %75 : vector<8x128xi1>, vector<8x128xf32>
    %171 = vector.shape_cast %164 : vector<8x1xi1> to vector<8x1xi1>
    %172 = vector.broadcast %171 : vector<8x1xi1> to vector<8x128xi1>
    %173 = arith.select %172, %160, %78 : vector<8x128xi1>, vector<8x128xf32>
    %174 = vector.shape_cast %164 : vector<8x1xi1> to vector<8x1xi1>
    %175 = vector.broadcast %174 : vector<8x1xi1> to vector<8x128xi1>
    %176 = arith.select %175, %158, %81 : vector<8x128xi1>, vector<8x128xf32>
    %cst_30 = arith.constant 0.000000e+00 : f32
    %177 = vector.shape_cast %162 : vector<8x1xi1> to vector<8x1xi1>
    %178 = vector.broadcast %177 : vector<8x1xi1> to vector<8x128xi1>
    %179 = vector.broadcast %cst_30 : f32 to vector<8x128xf32>
    %180 = arith.select %178, %133, %179 : vector<8x128xi1>, vector<8x128xf32>
    %181 = arith.index_cast %c1_i32 : i32 to index
    %c0_31 = arith.constant 0 : index
    %c0_32 = arith.constant 0 : index
    %182 = vector.load %arg4[%181, %c0_31, %c0_32] : memref<8x8x256xf32, #tpu.memory_space<vmem>>, vector<1x8x128xf32>
    %183 = vector.shape_cast %182 : vector<1x8x128xf32> to vector<8x128xf32>
    %184 = vector.shape_cast %180 : vector<8x128xf32> to vector<1x8x128xf32>
    tpu.vector_store %arg4[%181, %c0_31, %c0_32], %184 {strides = array<i32>} : memref<8x8x256xf32, #tpu.memory_space<vmem>>, vector<1x8x128xf32>,
    %cst_33 = arith.constant 0.000000e+00 : f32
    %185 = vector.shape_cast %164 : vector<8x1xi1> to vector<8x1xi1>
    %186 = vector.broadcast %185 : vector<8x1xi1> to vector<8x128xi1>
    %187 = vector.broadcast %cst_33 : f32 to vector<8x128xf32>
    %188 = arith.select %186, %160, %187 : vector<8x128xi1>, vector<8x128xf32>
    %189 = arith.index_cast %98 : i32 to index
    %c0_34 = arith.constant 0 : index
    %c128_35 = arith.constant 128 : index
    %190 = vector.load %arg4[%189, %c0_34, %c128_35] : memref<8x8x256xf32, #tpu.memory_space<vmem>>, vector<1x8x128xf32>
    %191 = vector.shape_cast %190 : vector<1x8x128xf32> to vector<8x128xf32>
    %192 = vector.shape_cast %188 : vector<8x128xf32> to vector<1x8x128xf32>
    tpu.vector_store %arg4[%189, %c0_34, %c128_35], %192 {strides = array<i32>} : memref<8x8x256xf32, #tpu.memory_space<vmem>>, vector<1x8x128xf32>,
    %c2_i32 = arith.constant 2 : i32
    %c7_i32_36 = arith.constant 7 : i32
    %193 = arith.subi %c7_i32_36, %c2_i32 : i32
    %194 = arith.index_cast %c2_i32 : i32 to index
    %c0_37 = arith.constant 0 : index
    %c0_38 = arith.constant 0 : index
    %195 = vector.load %arg1[%194, %c0_37, %c0_38] : memref<8x8x1024xf32, #tpu.memory_space<vmem>>, vector<1x8x512xf32>
    %196 = vector.shape_cast %195 : vector<1x8x512xf32> to vector<8x512xf32>
    %197 = arith.index_cast %193 : i32 to index
    %c0_39 = arith.constant 0 : index
    %c512_40 = arith.constant 512 : index
    %198 = vector.load %arg1[%197, %c0_39, %c512_40] : memref<8x8x1024xf32, #tpu.memory_space<vmem>>, vector<1x8x512xf32>
    %199 = vector.shape_cast %198 : vector<1x8x512xf32> to vector<8x512xf32>
    %200 = tpu.concatenate %167, %173 in 1 : vector<8x128xf32>, vector<8x128xf32> -> vector<8x256xf32>
    %cst_41 = arith.constant dense<0.000000e+00> : vector<8x1024xf32>
    %201 = tpu.matmul %200, %1, %cst_41 {dimension_numbers = #tpu.dot_dimension_numbers<[1], [0], [0], [1], [0, 0, 1, 1], [], []>} : vector<8x256xf32>, vector<256x1024xf32>, vector<8x1024xf32> -> vector<8x1024xf32>
    %202 = vector.extract_strided_slice %201 {offsets = [0, 0], sizes = [8, 512], strides = [1, 1]} : vector<8x1024xf32> to vector<8x512xf32>
    %203 = arith.addf %196, %202 : vector<8x512xf32>
    %204 = vector.extract_strided_slice %203 {offsets = [0, 0], sizes = [8, 128], strides = [1, 1]} : vector<8x512xf32> to vector<8x128xf32>
    %205 = arith.negf %204 : vector<8x128xf32>
    %206 = math.exp %205 : vector<8x128xf32>
    %cst_42 = arith.constant 1.000000e+00 : f32
    %207 = vector.broadcast %cst_42 : f32 to vector<8x128xf32>
    %208 = arith.addf %207, %206 : vector<8x128xf32>
    %209 = arith.divf %207, %208 : vector<8x128xf32>
    %210 = vector.extract_strided_slice %203 {offsets = [0, 128], sizes = [8, 128], strides = [1, 1]} : vector<8x512xf32> to vector<8x128xf32>
    %211 = arith.negf %210 : vector<8x128xf32>
    %212 = math.exp %211 : vector<8x128xf32>
    %cst_43 = arith.constant 1.000000e+00 : f32
    %213 = vector.broadcast %cst_43 : f32 to vector<8x128xf32>
    %214 = arith.addf %213, %212 : vector<8x128xf32>
    %215 = arith.divf %213, %214 : vector<8x128xf32>
    %216 = vector.extract_strided_slice %203 {offsets = [0, 256], sizes = [8, 128], strides = [1, 1]} : vector<8x512xf32> to vector<8x128xf32>
    %217 = math.tanh %216 : vector<8x128xf32>
    %218 = vector.extract_strided_slice %203 {offsets = [0, 384], sizes = [8, 128], strides = [1, 1]} : vector<8x512xf32> to vector<8x128xf32>
    %219 = arith.negf %218 : vector<8x128xf32>
    %220 = math.exp %219 : vector<8x128xf32>
    %cst_44 = arith.constant 1.000000e+00 : f32
    %221 = vector.broadcast %cst_44 : f32 to vector<8x128xf32>
    %222 = arith.addf %221, %220 : vector<8x128xf32>
    %223 = arith.divf %221, %222 : vector<8x128xf32>
    %224 = arith.mulf %215, %170 : vector<8x128xf32>
    %225 = arith.mulf %209, %217 : vector<8x128xf32>
    %226 = arith.addf %224, %225 : vector<8x128xf32>
    %227 = math.tanh %226 : vector<8x128xf32>
    %228 = arith.mulf %223, %227 : vector<8x128xf32>
    %229 = vector.extract_strided_slice %201 {offsets = [0, 512], sizes = [8, 512], strides = [1, 1]} : vector<8x1024xf32> to vector<8x512xf32>
    %230 = arith.addf %199, %229 : vector<8x512xf32>
    %231 = vector.extract_strided_slice %230 {offsets = [0, 0], sizes = [8, 128], strides = [1, 1]} : vector<8x512xf32> to vector<8x128xf32>
    %232 = arith.negf %231 : vector<8x128xf32>
    %233 = math.exp %232 : vector<8x128xf32>
    %cst_45 = arith.constant 1.000000e+00 : f32
    %234 = vector.broadcast %cst_45 : f32 to vector<8x128xf32>
    %235 = arith.addf %234, %233 : vector<8x128xf32>
    %236 = arith.divf %234, %235 : vector<8x128xf32>
    %237 = vector.extract_strided_slice %230 {offsets = [0, 128], sizes = [8, 128], strides = [1, 1]} : vector<8x512xf32> to vector<8x128xf32>
    %238 = arith.negf %237 : vector<8x128xf32>
    %239 = math.exp %238 : vector<8x128xf32>
    %cst_46 = arith.constant 1.000000e+00 : f32
    %240 = vector.broadcast %cst_46 : f32 to vector<8x128xf32>
    %241 = arith.addf %240, %239 : vector<8x128xf32>
    %242 = arith.divf %240, %241 : vector<8x128xf32>
    %243 = vector.extract_strided_slice %230 {offsets = [0, 256], sizes = [8, 128], strides = [1, 1]} : vector<8x512xf32> to vector<8x128xf32>
    %244 = math.tanh %243 : vector<8x128xf32>
    %245 = vector.extract_strided_slice %230 {offsets = [0, 384], sizes = [8, 128], strides = [1, 1]} : vector<8x512xf32> to vector<8x128xf32>
    %246 = arith.negf %245 : vector<8x128xf32>
    %247 = math.exp %246 : vector<8x128xf32>
    %cst_47 = arith.constant 1.000000e+00 : f32
    %248 = vector.broadcast %cst_47 : f32 to vector<8x128xf32>
    %249 = arith.addf %248, %247 : vector<8x128xf32>
    %250 = arith.divf %248, %249 : vector<8x128xf32>
    %251 = arith.mulf %242, %176 : vector<8x128xf32>
    %252 = arith.mulf %236, %244 : vector<8x128xf32>
    %253 = arith.addf %251, %252 : vector<8x128xf32>
    %254 = math.tanh %253 : vector<8x128xf32>
    %255 = arith.mulf %250, %254 : vector<8x128xf32>
    %256 = vector.broadcast %c2_i32 : i32 to vector<8x1xi32>
    %257 = arith.cmpi sgt, %0, %256 : vector<8x1xi32>
    %258 = vector.broadcast %193 : i32 to vector<8x1xi32>
    %259 = arith.cmpi sgt, %0, %258 : vector<8x1xi32>
    %260 = vector.shape_cast %257 : vector<8x1xi1> to vector<8x1xi1>
    %261 = vector.broadcast %260 : vector<8x1xi1> to vector<8x128xi1>
    %262 = arith.select %261, %228, %167 : vector<8x128xi1>, vector<8x128xf32>
    %263 = vector.shape_cast %257 : vector<8x1xi1> to vector<8x1xi1>
    %264 = vector.broadcast %263 : vector<8x1xi1> to vector<8x128xi1>
    %265 = arith.select %264, %226, %170 : vector<8x128xi1>, vector<8x128xf32>
    %266 = vector.shape_cast %259 : vector<8x1xi1> to vector<8x1xi1>
    %267 = vector.broadcast %266 : vector<8x1xi1> to vector<8x128xi1>
    %268 = arith.select %267, %255, %173 : vector<8x128xi1>, vector<8x128xf32>
    %269 = vector.shape_cast %259 : vector<8x1xi1> to vector<8x1xi1>
    %270 = vector.broadcast %269 : vector<8x1xi1> to vector<8x128xi1>
    %271 = arith.select %270, %253, %176 : vector<8x128xi1>, vector<8x128xf32>
    %cst_48 = arith.constant 0.000000e+00 : f32
    %272 = vector.shape_cast %257 : vector<8x1xi1> to vector<8x1xi1>
    %273 = vector.broadcast %272 : vector<8x1xi1> to vector<8x128xi1>
    %274 = vector.broadcast %cst_48 : f32 to vector<8x128xf32>
    %275 = arith.select %273, %228, %274 : vector<8x128xi1>, vector<8x128xf32>
    %276 = arith.index_cast %c2_i32 : i32 to index
    %c0_49 = arith.constant 0 : index
    %c0_50 = arith.constant 0 : index
    %277 = vector.load %arg4[%276, %c0_49, %c0_50] : memref<8x8x256xf32, #tpu.memory_space<vmem>>, vector<1x8x128xf32>
    %278 = vector.shape_cast %277 : vector<1x8x128xf32> to vector<8x128xf32>
    %279 = vector.shape_cast %275 : vector<8x128xf32> to vector<1x8x128xf32>
    tpu.vector_store %arg4[%276, %c0_49, %c0_50], %279 {strides = array<i32>} : memref<8x8x256xf32, #tpu.memory_space<vmem>>, vector<1x8x128xf32>,
    %cst_51 = arith.constant 0.000000e+00 : f32
    %280 = vector.shape_cast %259 : vector<8x1xi1> to vector<8x1xi1>
    %281 = vector.broadcast %280 : vector<8x1xi1> to vector<8x128xi1>
    %282 = vector.broadcast %cst_51 : f32 to vector<8x128xf32>
    %283 = arith.select %281, %255, %282 : vector<8x128xi1>, vector<8x128xf32>
    %284 = arith.index_cast %193 : i32 to index
    %c0_52 = arith.constant 0 : index
    %c128_53 = arith.constant 128 : index
    %285 = vector.load %arg4[%284, %c0_52, %c128_53] : memref<8x8x256xf32, #tpu.memory_space<vmem>>, vector<1x8x128xf32>
    %286 = vector.shape_cast %285 : vector<1x8x128xf32> to vector<8x128xf32>
    %287 = vector.shape_cast %283 : vector<8x128xf32> to vector<1x8x128xf32>
    tpu.vector_store %arg4[%284, %c0_52, %c128_53], %287 {strides = array<i32>} : memref<8x8x256xf32, #tpu.memory_space<vmem>>, vector<1x8x128xf32>,
    %c3_i32 = arith.constant 3 : i32
    %c7_i32_54 = arith.constant 7 : i32
    %288 = arith.subi %c7_i32_54, %c3_i32 : i32
    %289 = arith.index_cast %c3_i32 : i32 to index
    %c0_55 = arith.constant 0 : index
    %c0_56 = arith.constant 0 : index
    %290 = vector.load %arg1[%289, %c0_55, %c0_56] : memref<8x8x1024xf32, #tpu.memory_space<vmem>>, vector<1x8x512xf32>
    %291 = vector.shape_cast %290 : vector<1x8x512xf32> to vector<8x512xf32>
    %292 = arith.index_cast %288 : i32 to index
    %c0_57 = arith.constant 0 : index
    %c512_58 = arith.constant 512 : index
    %293 = vector.load %arg1[%292, %c0_57, %c512_58] : memref<8x8x1024xf32, #tpu.memory_space<vmem>>, vector<1x8x512xf32>
    %294 = vector.shape_cast %293 : vector<1x8x512xf32> to vector<8x512xf32>
    %295 = tpu.concatenate %262, %268 in 1 : vector<8x128xf32>, vector<8x128xf32> -> vector<8x256xf32>
    %cst_59 = arith.constant dense<0.000000e+00> : vector<8x1024xf32>
    %296 = tpu.matmul %295, %1, %cst_59 {dimension_numbers = #tpu.dot_dimension_numbers<[1], [0], [0], [1], [0, 0, 1, 1], [], []>} : vector<8x256xf32>, vector<256x1024xf32>, vector<8x1024xf32> -> vector<8x1024xf32>
    %297 = vector.extract_strided_slice %296 {offsets = [0, 0], sizes = [8, 512], strides = [1, 1]} : vector<8x1024xf32> to vector<8x512xf32>
    %298 = arith.addf %291, %297 : vector<8x512xf32>
    %299 = vector.extract_strided_slice %298 {offsets = [0, 0], sizes = [8, 128], strides = [1, 1]} : vector<8x512xf32> to vector<8x128xf32>
    %300 = arith.negf %299 : vector<8x128xf32>
    %301 = math.exp %300 : vector<8x128xf32>
    %cst_60 = arith.constant 1.000000e+00 : f32
    %302 = vector.broadcast %cst_60 : f32 to vector<8x128xf32>
    %303 = arith.addf %302, %301 : vector<8x128xf32>
    %304 = arith.divf %302, %303 : vector<8x128xf32>
    %305 = vector.extract_strided_slice %298 {offsets = [0, 128], sizes = [8, 128], strides = [1, 1]} : vector<8x512xf32> to vector<8x128xf32>
    %306 = arith.negf %305 : vector<8x128xf32>
    %307 = math.exp %306 : vector<8x128xf32>
    %cst_61 = arith.constant 1.000000e+00 : f32
    %308 = vector.broadcast %cst_61 : f32 to vector<8x128xf32>
    %309 = arith.addf %308, %307 : vector<8x128xf32>
    %310 = arith.divf %308, %309 : vector<8x128xf32>
    %311 = vector.extract_strided_slice %298 {offsets = [0, 256], sizes = [8, 128], strides = [1, 1]} : vector<8x512xf32> to vector<8x128xf32>
    %312 = math.tanh %311 : vector<8x128xf32>
    %313 = vector.extract_strided_slice %298 {offsets = [0, 384], sizes = [8, 128], strides = [1, 1]} : vector<8x512xf32> to vector<8x128xf32>
    %314 = arith.negf %313 : vector<8x128xf32>
    %315 = math.exp %314 : vector<8x128xf32>
    %cst_62 = arith.constant 1.000000e+00 : f32
    %316 = vector.broadcast %cst_62 : f32 to vector<8x128xf32>
    %317 = arith.addf %316, %315 : vector<8x128xf32>
    %318 = arith.divf %316, %317 : vector<8x128xf32>
    %319 = arith.mulf %310, %265 : vector<8x128xf32>
    %320 = arith.mulf %304, %312 : vector<8x128xf32>
    %321 = arith.addf %319, %320 : vector<8x128xf32>
    %322 = math.tanh %321 : vector<8x128xf32>
    %323 = arith.mulf %318, %322 : vector<8x128xf32>
    %324 = vector.extract_strided_slice %296 {offsets = [0, 512], sizes = [8, 512], strides = [1, 1]} : vector<8x1024xf32> to vector<8x512xf32>
    %325 = arith.addf %294, %324 : vector<8x512xf32>
    %326 = vector.extract_strided_slice %325 {offsets = [0, 0], sizes = [8, 128], strides = [1, 1]} : vector<8x512xf32> to vector<8x128xf32>
    %327 = arith.negf %326 : vector<8x128xf32>
    %328 = math.exp %327 : vector<8x128xf32>
    %cst_63 = arith.constant 1.000000e+00 : f32
    %329 = vector.broadcast %cst_63 : f32 to vector<8x128xf32>
    %330 = arith.addf %329, %328 : vector<8x128xf32>
    %331 = arith.divf %329, %330 : vector<8x128xf32>
    %332 = vector.extract_strided_slice %325 {offsets = [0, 128], sizes = [8, 128], strides = [1, 1]} : vector<8x512xf32> to vector<8x128xf32>
    %333 = arith.negf %332 : vector<8x128xf32>
    %334 = math.exp %333 : vector<8x128xf32>
    %cst_64 = arith.constant 1.000000e+00 : f32
    %335 = vector.broadcast %cst_64 : f32 to vector<8x128xf32>
    %336 = arith.addf %335, %334 : vector<8x128xf32>
    %337 = arith.divf %335, %336 : vector<8x128xf32>
    %338 = vector.extract_strided_slice %325 {offsets = [0, 256], sizes = [8, 128], strides = [1, 1]} : vector<8x512xf32> to vector<8x128xf32>
    %339 = math.tanh %338 : vector<8x128xf32>
    %340 = vector.extract_strided_slice %325 {offsets = [0, 384], sizes = [8, 128], strides = [1, 1]} : vector<8x512xf32> to vector<8x128xf32>
    %341 = arith.negf %340 : vector<8x128xf32>
    %342 = math.exp %341 : vector<8x128xf32>
    %cst_65 = arith.constant 1.000000e+00 : f32
    %343 = vector.broadcast %cst_65 : f32 to vector<8x128xf32>
    %344 = arith.addf %343, %342 : vector<8x128xf32>
    %345 = arith.divf %343, %344 : vector<8x128xf32>
    %346 = arith.mulf %337, %271 : vector<8x128xf32>
    %347 = arith.mulf %331, %339 : vector<8x128xf32>
    %348 = arith.addf %346, %347 : vector<8x128xf32>
    %349 = math.tanh %348 : vector<8x128xf32>
    %350 = arith.mulf %345, %349 : vector<8x128xf32>
    %351 = vector.broadcast %c3_i32 : i32 to vector<8x1xi32>
    %352 = arith.cmpi sgt, %0, %351 : vector<8x1xi32>
    %353 = vector.broadcast %288 : i32 to vector<8x1xi32>
    %354 = arith.cmpi sgt, %0, %353 : vector<8x1xi32>
    %355 = vector.shape_cast %352 : vector<8x1xi1> to vector<8x1xi1>
    %356 = vector.broadcast %355 : vector<8x1xi1> to vector<8x128xi1>
    %357 = arith.select %356, %323, %262 : vector<8x128xi1>, vector<8x128xf32>
    %358 = vector.shape_cast %352 : vector<8x1xi1> to vector<8x1xi1>
    %359 = vector.broadcast %358 : vector<8x1xi1> to vector<8x128xi1>
    %360 = arith.select %359, %321, %265 : vector<8x128xi1>, vector<8x128xf32>
    %361 = vector.shape_cast %354 : vector<8x1xi1> to vector<8x1xi1>
    %362 = vector.broadcast %361 : vector<8x1xi1> to vector<8x128xi1>
    %363 = arith.select %362, %350, %268 : vector<8x128xi1>, vector<8x128xf32>
    %364 = vector.shape_cast %354 : vector<8x1xi1> to vector<8x1xi1>
    %365 = vector.broadcast %364 : vector<8x1xi1> to vector<8x128xi1>
    %366 = arith.select %365, %348, %271 : vector<8x128xi1>, vector<8x128xf32>
    %cst_66 = arith.constant 0.000000e+00 : f32
    %367 = vector.shape_cast %352 : vector<8x1xi1> to vector<8x1xi1>
    %368 = vector.broadcast %367 : vector<8x1xi1> to vector<8x128xi1>
    %369 = vector.broadcast %cst_66 : f32 to vector<8x128xf32>
    %370 = arith.select %368, %323, %369 : vector<8x128xi1>, vector<8x128xf32>
    %371 = arith.index_cast %c3_i32 : i32 to index
    %c0_67 = arith.constant 0 : index
    %c0_68 = arith.constant 0 : index
    %372 = vector.load %arg4[%371, %c0_67, %c0_68] : memref<8x8x256xf32, #tpu.memory_space<vmem>>, vector<1x8x128xf32>
    %373 = vector.shape_cast %372 : vector<1x8x128xf32> to vector<8x128xf32>
    %374 = vector.shape_cast %370 : vector<8x128xf32> to vector<1x8x128xf32>
    tpu.vector_store %arg4[%371, %c0_67, %c0_68], %374 {strides = array<i32>} : memref<8x8x256xf32, #tpu.memory_space<vmem>>, vector<1x8x128xf32>,
    %cst_69 = arith.constant 0.000000e+00 : f32
    %375 = vector.shape_cast %354 : vector<8x1xi1> to vector<8x1xi1>
    %376 = vector.broadcast %375 : vector<8x1xi1> to vector<8x128xi1>
    %377 = vector.broadcast %cst_69 : f32 to vector<8x128xf32>
    %378 = arith.select %376, %350, %377 : vector<8x128xi1>, vector<8x128xf32>
    %379 = arith.index_cast %288 : i32 to index
    %c0_70 = arith.constant 0 : index
    %c128_71 = arith.constant 128 : index
    %380 = vector.load %arg4[%379, %c0_70, %c128_71] : memref<8x8x256xf32, #tpu.memory_space<vmem>>, vector<1x8x128xf32>
    %381 = vector.shape_cast %380 : vector<1x8x128xf32> to vector<8x128xf32>
    %382 = vector.shape_cast %378 : vector<8x128xf32> to vector<1x8x128xf32>
    tpu.vector_store %arg4[%379, %c0_70, %c128_71], %382 {strides = array<i32>} : memref<8x8x256xf32, #tpu.memory_space<vmem>>, vector<1x8x128xf32>,
    %c4_i32 = arith.constant 4 : i32
    %c7_i32_72 = arith.constant 7 : i32
    %383 = arith.subi %c7_i32_72, %c4_i32 : i32
    %384 = arith.index_cast %c4_i32 : i32 to index
    %c0_73 = arith.constant 0 : index
    %c0_74 = arith.constant 0 : index
    %385 = vector.load %arg1[%384, %c0_73, %c0_74] : memref<8x8x1024xf32, #tpu.memory_space<vmem>>, vector<1x8x512xf32>
    %386 = vector.shape_cast %385 : vector<1x8x512xf32> to vector<8x512xf32>
    %387 = arith.index_cast %383 : i32 to index
    %c0_75 = arith.constant 0 : index
    %c512_76 = arith.constant 512 : index
    %388 = vector.load %arg1[%387, %c0_75, %c512_76] : memref<8x8x1024xf32, #tpu.memory_space<vmem>>, vector<1x8x512xf32>
    %389 = vector.shape_cast %388 : vector<1x8x512xf32> to vector<8x512xf32>
    %390 = tpu.concatenate %357, %363 in 1 : vector<8x128xf32>, vector<8x128xf32> -> vector<8x256xf32>
    %cst_77 = arith.constant dense<0.000000e+00> : vector<8x1024xf32>
    %391 = tpu.matmul %390, %1, %cst_77 {dimension_numbers = #tpu.dot_dimension_numbers<[1], [0], [0], [1], [0, 0, 1, 1], [], []>} : vector<8x256xf32>, vector<256x1024xf32>, vector<8x1024xf32> -> vector<8x1024xf32>
    %392 = vector.extract_strided_slice %391 {offsets = [0, 0], sizes = [8, 512], strides = [1, 1]} : vector<8x1024xf32> to vector<8x512xf32>
    %393 = arith.addf %386, %392 : vector<8x512xf32>
    %394 = vector.extract_strided_slice %393 {offsets = [0, 0], sizes = [8, 128], strides = [1, 1]} : vector<8x512xf32> to vector<8x128xf32>
    %395 = arith.negf %394 : vector<8x128xf32>
    %396 = math.exp %395 : vector<8x128xf32>
    %cst_78 = arith.constant 1.000000e+00 : f32
    %397 = vector.broadcast %cst_78 : f32 to vector<8x128xf32>
    %398 = arith.addf %397, %396 : vector<8x128xf32>
    %399 = arith.divf %397, %398 : vector<8x128xf32>
    %400 = vector.extract_strided_slice %393 {offsets = [0, 128], sizes = [8, 128], strides = [1, 1]} : vector<8x512xf32> to vector<8x128xf32>
    %401 = arith.negf %400 : vector<8x128xf32>
    %402 = math.exp %401 : vector<8x128xf32>
    %cst_79 = arith.constant 1.000000e+00 : f32
    %403 = vector.broadcast %cst_79 : f32 to vector<8x128xf32>
    %404 = arith.addf %403, %402 : vector<8x128xf32>
    %405 = arith.divf %403, %404 : vector<8x128xf32>
    %406 = vector.extract_strided_slice %393 {offsets = [0, 256], sizes = [8, 128], strides = [1, 1]} : vector<8x512xf32> to vector<8x128xf32>
    %407 = math.tanh %406 : vector<8x128xf32>
    %408 = vector.extract_strided_slice %393 {offsets = [0, 384], sizes = [8, 128], strides = [1, 1]} : vector<8x512xf32> to vector<8x128xf32>
    %409 = arith.negf %408 : vector<8x128xf32>
    %410 = math.exp %409 : vector<8x128xf32>
    %cst_80 = arith.constant 1.000000e+00 : f32
    %411 = vector.broadcast %cst_80 : f32 to vector<8x128xf32>
    %412 = arith.addf %411, %410 : vector<8x128xf32>
    %413 = arith.divf %411, %412 : vector<8x128xf32>
    %414 = arith.mulf %405, %360 : vector<8x128xf32>
    %415 = arith.mulf %399, %407 : vector<8x128xf32>
    %416 = arith.addf %414, %415 : vector<8x128xf32>
    %417 = math.tanh %416 : vector<8x128xf32>
    %418 = arith.mulf %413, %417 : vector<8x128xf32>
    %419 = vector.extract_strided_slice %391 {offsets = [0, 512], sizes = [8, 512], strides = [1, 1]} : vector<8x1024xf32> to vector<8x512xf32>
    %420 = arith.addf %389, %419 : vector<8x512xf32>
    %421 = vector.extract_strided_slice %420 {offsets = [0, 0], sizes = [8, 128], strides = [1, 1]} : vector<8x512xf32> to vector<8x128xf32>
    %422 = arith.negf %421 : vector<8x128xf32>
    %423 = math.exp %422 : vector<8x128xf32>
    %cst_81 = arith.constant 1.000000e+00 : f32
    %424 = vector.broadcast %cst_81 : f32 to vector<8x128xf32>
    %425 = arith.addf %424, %423 : vector<8x128xf32>
    %426 = arith.divf %424, %425 : vector<8x128xf32>
    %427 = vector.extract_strided_slice %420 {offsets = [0, 128], sizes = [8, 128], strides = [1, 1]} : vector<8x512xf32> to vector<8x128xf32>
    %428 = arith.negf %427 : vector<8x128xf32>
    %429 = math.exp %428 : vector<8x128xf32>
    %cst_82 = arith.constant 1.000000e+00 : f32
    %430 = vector.broadcast %cst_82 : f32 to vector<8x128xf32>
    %431 = arith.addf %430, %429 : vector<8x128xf32>
    %432 = arith.divf %430, %431 : vector<8x128xf32>
    %433 = vector.extract_strided_slice %420 {offsets = [0, 256], sizes = [8, 128], strides = [1, 1]} : vector<8x512xf32> to vector<8x128xf32>
    %434 = math.tanh %433 : vector<8x128xf32>
    %435 = vector.extract_strided_slice %420 {offsets = [0, 384], sizes = [8, 128], strides = [1, 1]} : vector<8x512xf32> to vector<8x128xf32>
    %436 = arith.negf %435 : vector<8x128xf32>
    %437 = math.exp %436 : vector<8x128xf32>
    %cst_83 = arith.constant 1.000000e+00 : f32
    %438 = vector.broadcast %cst_83 : f32 to vector<8x128xf32>
    %439 = arith.addf %438, %437 : vector<8x128xf32>
    %440 = arith.divf %438, %439 : vector<8x128xf32>
    %441 = arith.mulf %432, %366 : vector<8x128xf32>
    %442 = arith.mulf %426, %434 : vector<8x128xf32>
    %443 = arith.addf %441, %442 : vector<8x128xf32>
    %444 = math.tanh %443 : vector<8x128xf32>
    %445 = arith.mulf %440, %444 : vector<8x128xf32>
    %446 = vector.broadcast %c4_i32 : i32 to vector<8x1xi32>
    %447 = arith.cmpi sgt, %0, %446 : vector<8x1xi32>
    %448 = vector.broadcast %383 : i32 to vector<8x1xi32>
    %449 = arith.cmpi sgt, %0, %448 : vector<8x1xi32>
    %450 = vector.shape_cast %447 : vector<8x1xi1> to vector<8x1xi1>
    %451 = vector.broadcast %450 : vector<8x1xi1> to vector<8x128xi1>
    %452 = arith.select %451, %418, %357 : vector<8x128xi1>, vector<8x128xf32>
    %453 = vector.shape_cast %447 : vector<8x1xi1> to vector<8x1xi1>
    %454 = vector.broadcast %453 : vector<8x1xi1> to vector<8x128xi1>
    %455 = arith.select %454, %416, %360 : vector<8x128xi1>, vector<8x128xf32>
    %456 = vector.shape_cast %449 : vector<8x1xi1> to vector<8x1xi1>
    %457 = vector.broadcast %456 : vector<8x1xi1> to vector<8x128xi1>
    %458 = arith.select %457, %445, %363 : vector<8x128xi1>, vector<8x128xf32>
    %459 = vector.shape_cast %449 : vector<8x1xi1> to vector<8x1xi1>
    %460 = vector.broadcast %459 : vector<8x1xi1> to vector<8x128xi1>
    %461 = arith.select %460, %443, %366 : vector<8x128xi1>, vector<8x128xf32>
    %cst_84 = arith.constant 0.000000e+00 : f32
    %462 = vector.shape_cast %447 : vector<8x1xi1> to vector<8x1xi1>
    %463 = vector.broadcast %462 : vector<8x1xi1> to vector<8x128xi1>
    %464 = vector.broadcast %cst_84 : f32 to vector<8x128xf32>
    %465 = arith.select %463, %418, %464 : vector<8x128xi1>, vector<8x128xf32>
    %466 = arith.index_cast %c4_i32 : i32 to index
    %c0_85 = arith.constant 0 : index
    %c0_86 = arith.constant 0 : index
    %467 = vector.load %arg4[%466, %c0_85, %c0_86] : memref<8x8x256xf32, #tpu.memory_space<vmem>>, vector<1x8x128xf32>
    %468 = vector.shape_cast %467 : vector<1x8x128xf32> to vector<8x128xf32>
    %469 = vector.shape_cast %465 : vector<8x128xf32> to vector<1x8x128xf32>
    tpu.vector_store %arg4[%466, %c0_85, %c0_86], %469 {strides = array<i32>} : memref<8x8x256xf32, #tpu.memory_space<vmem>>, vector<1x8x128xf32>,
    %cst_87 = arith.constant 0.000000e+00 : f32
    %470 = vector.shape_cast %449 : vector<8x1xi1> to vector<8x1xi1>
    %471 = vector.broadcast %470 : vector<8x1xi1> to vector<8x128xi1>
    %472 = vector.broadcast %cst_87 : f32 to vector<8x128xf32>
    %473 = arith.select %471, %445, %472 : vector<8x128xi1>, vector<8x128xf32>
    %474 = arith.index_cast %383 : i32 to index
    %c0_88 = arith.constant 0 : index
    %c128_89 = arith.constant 128 : index
    %475 = vector.load %arg4[%474, %c0_88, %c128_89] : memref<8x8x256xf32, #tpu.memory_space<vmem>>, vector<1x8x128xf32>
    %476 = vector.shape_cast %475 : vector<1x8x128xf32> to vector<8x128xf32>
    %477 = vector.shape_cast %473 : vector<8x128xf32> to vector<1x8x128xf32>
    tpu.vector_store %arg4[%474, %c0_88, %c128_89], %477 {strides = array<i32>} : memref<8x8x256xf32, #tpu.memory_space<vmem>>, vector<1x8x128xf32>,
    %c5_i32 = arith.constant 5 : i32
    %c7_i32_90 = arith.constant 7 : i32
    %478 = arith.subi %c7_i32_90, %c5_i32 : i32
    %479 = arith.index_cast %c5_i32 : i32 to index
    %c0_91 = arith.constant 0 : index
    %c0_92 = arith.constant 0 : index
    %480 = vector.load %arg1[%479, %c0_91, %c0_92] : memref<8x8x1024xf32, #tpu.memory_space<vmem>>, vector<1x8x512xf32>
    %481 = vector.shape_cast %480 : vector<1x8x512xf32> to vector<8x512xf32>
    %482 = arith.index_cast %478 : i32 to index
    %c0_93 = arith.constant 0 : index
    %c512_94 = arith.constant 512 : index
    %483 = vector.load %arg1[%482, %c0_93, %c512_94] : memref<8x8x1024xf32, #tpu.memory_space<vmem>>, vector<1x8x512xf32>
    %484 = vector.shape_cast %483 : vector<1x8x512xf32> to vector<8x512xf32>
    %485 = tpu.concatenate %452, %458 in 1 : vector<8x128xf32>, vector<8x128xf32> -> vector<8x256xf32>
    %cst_95 = arith.constant dense<0.000000e+00> : vector<8x1024xf32>
    %486 = tpu.matmul %485, %1, %cst_95 {dimension_numbers = #tpu.dot_dimension_numbers<[1], [0], [0], [1], [0, 0, 1, 1], [], []>} : vector<8x256xf32>, vector<256x1024xf32>, vector<8x1024xf32> -> vector<8x1024xf32>
    %487 = vector.extract_strided_slice %486 {offsets = [0, 0], sizes = [8, 512], strides = [1, 1]} : vector<8x1024xf32> to vector<8x512xf32>
    %488 = arith.addf %481, %487 : vector<8x512xf32>
    %489 = vector.extract_strided_slice %488 {offsets = [0, 0], sizes = [8, 128], strides = [1, 1]} : vector<8x512xf32> to vector<8x128xf32>
    %490 = arith.negf %489 : vector<8x128xf32>
    %491 = math.exp %490 : vector<8x128xf32>
    %cst_96 = arith.constant 1.000000e+00 : f32
    %492 = vector.broadcast %cst_96 : f32 to vector<8x128xf32>
    %493 = arith.addf %492, %491 : vector<8x128xf32>
    %494 = arith.divf %492, %493 : vector<8x128xf32>
    %495 = vector.extract_strided_slice %488 {offsets = [0, 128], sizes = [8, 128], strides = [1, 1]} : vector<8x512xf32> to vector<8x128xf32>
    %496 = arith.negf %495 : vector<8x128xf32>
    %497 = math.exp %496 : vector<8x128xf32>
    %cst_97 = arith.constant 1.000000e+00 : f32
    %498 = vector.broadcast %cst_97 : f32 to vector<8x128xf32>
    %499 = arith.addf %498, %497 : vector<8x128xf32>
    %500 = arith.divf %498, %499 : vector<8x128xf32>
    %501 = vector.extract_strided_slice %488 {offsets = [0, 256], sizes = [8, 128], strides = [1, 1]} : vector<8x512xf32> to vector<8x128xf32>
    %502 = math.tanh %501 : vector<8x128xf32>
    %503 = vector.extract_strided_slice %488 {offsets = [0, 384], sizes = [8, 128], strides = [1, 1]} : vector<8x512xf32> to vector<8x128xf32>
    %504 = arith.negf %503 : vector<8x128xf32>
    %505 = math.exp %504 : vector<8x128xf32>
    %cst_98 = arith.constant 1.000000e+00 : f32
    %506 = vector.broadcast %cst_98 : f32 to vector<8x128xf32>
    %507 = arith.addf %506, %505 : vector<8x128xf32>
    %508 = arith.divf %506, %507 : vector<8x128xf32>
    %509 = arith.mulf %500, %455 : vector<8x128xf32>
    %510 = arith.mulf %494, %502 : vector<8x128xf32>
    %511 = arith.addf %509, %510 : vector<8x128xf32>
    %512 = math.tanh %511 : vector<8x128xf32>
    %513 = arith.mulf %508, %512 : vector<8x128xf32>
    %514 = vector.extract_strided_slice %486 {offsets = [0, 512], sizes = [8, 512], strides = [1, 1]} : vector<8x1024xf32> to vector<8x512xf32>
    %515 = arith.addf %484, %514 : vector<8x512xf32>
    %516 = vector.extract_strided_slice %515 {offsets = [0, 0], sizes = [8, 128], strides = [1, 1]} : vector<8x512xf32> to vector<8x128xf32>
    %517 = arith.negf %516 : vector<8x128xf32>
    %518 = math.exp %517 : vector<8x128xf32>
    %cst_99 = arith.constant 1.000000e+00 : f32
    %519 = vector.broadcast %cst_99 : f32 to vector<8x128xf32>
    %520 = arith.addf %519, %518 : vector<8x128xf32>
    %521 = arith.divf %519, %520 : vector<8x128xf32>
    %522 = vector.extract_strided_slice %515 {offsets = [0, 128], sizes = [8, 128], strides = [1, 1]} : vector<8x512xf32> to vector<8x128xf32>
    %523 = arith.negf %522 : vector<8x128xf32>
    %524 = math.exp %523 : vector<8x128xf32>
    %cst_100 = arith.constant 1.000000e+00 : f32
    %525 = vector.broadcast %cst_100 : f32 to vector<8x128xf32>
    %526 = arith.addf %525, %524 : vector<8x128xf32>
    %527 = arith.divf %525, %526 : vector<8x128xf32>
    %528 = vector.extract_strided_slice %515 {offsets = [0, 256], sizes = [8, 128], strides = [1, 1]} : vector<8x512xf32> to vector<8x128xf32>
    %529 = math.tanh %528 : vector<8x128xf32>
    %530 = vector.extract_strided_slice %515 {offsets = [0, 384], sizes = [8, 128], strides = [1, 1]} : vector<8x512xf32> to vector<8x128xf32>
    %531 = arith.negf %530 : vector<8x128xf32>
    %532 = math.exp %531 : vector<8x128xf32>
    %cst_101 = arith.constant 1.000000e+00 : f32
    %533 = vector.broadcast %cst_101 : f32 to vector<8x128xf32>
    %534 = arith.addf %533, %532 : vector<8x128xf32>
    %535 = arith.divf %533, %534 : vector<8x128xf32>
    %536 = arith.mulf %527, %461 : vector<8x128xf32>
    %537 = arith.mulf %521, %529 : vector<8x128xf32>
    %538 = arith.addf %536, %537 : vector<8x128xf32>
    %539 = math.tanh %538 : vector<8x128xf32>
    %540 = arith.mulf %535, %539 : vector<8x128xf32>
    %541 = vector.broadcast %c5_i32 : i32 to vector<8x1xi32>
    %542 = arith.cmpi sgt, %0, %541 : vector<8x1xi32>
    %543 = vector.broadcast %478 : i32 to vector<8x1xi32>
    %544 = arith.cmpi sgt, %0, %543 : vector<8x1xi32>
    %545 = vector.shape_cast %542 : vector<8x1xi1> to vector<8x1xi1>
    %546 = vector.broadcast %545 : vector<8x1xi1> to vector<8x128xi1>
    %547 = arith.select %546, %513, %452 : vector<8x128xi1>, vector<8x128xf32>
    %548 = vector.shape_cast %542 : vector<8x1xi1> to vector<8x1xi1>
    %549 = vector.broadcast %548 : vector<8x1xi1> to vector<8x128xi1>
    %550 = arith.select %549, %511, %455 : vector<8x128xi1>, vector<8x128xf32>
    %551 = vector.shape_cast %544 : vector<8x1xi1> to vector<8x1xi1>
    %552 = vector.broadcast %551 : vector<8x1xi1> to vector<8x128xi1>
    %553 = arith.select %552, %540, %458 : vector<8x128xi1>, vector<8x128xf32>
    %554 = vector.shape_cast %544 : vector<8x1xi1> to vector<8x1xi1>
    %555 = vector.broadcast %554 : vector<8x1xi1> to vector<8x128xi1>
    %556 = arith.select %555, %538, %461 : vector<8x128xi1>, vector<8x128xf32>
    %cst_102 = arith.constant 0.000000e+00 : f32
    %557 = vector.shape_cast %542 : vector<8x1xi1> to vector<8x1xi1>
    %558 = vector.broadcast %557 : vector<8x1xi1> to vector<8x128xi1>
    %559 = vector.broadcast %cst_102 : f32 to vector<8x128xf32>
    %560 = arith.select %558, %513, %559 : vector<8x128xi1>, vector<8x128xf32>
    %561 = arith.index_cast %c5_i32 : i32 to index
    %c0_103 = arith.constant 0 : index
    %c0_104 = arith.constant 0 : index
    %562 = vector.load %arg4[%561, %c0_103, %c0_104] : memref<8x8x256xf32, #tpu.memory_space<vmem>>, vector<1x8x128xf32>
    %563 = vector.shape_cast %562 : vector<1x8x128xf32> to vector<8x128xf32>
    %564 = vector.shape_cast %560 : vector<8x128xf32> to vector<1x8x128xf32>
    tpu.vector_store %arg4[%561, %c0_103, %c0_104], %564 {strides = array<i32>} : memref<8x8x256xf32, #tpu.memory_space<vmem>>, vector<1x8x128xf32>,
    %cst_105 = arith.constant 0.000000e+00 : f32
    %565 = vector.shape_cast %544 : vector<8x1xi1> to vector<8x1xi1>
    %566 = vector.broadcast %565 : vector<8x1xi1> to vector<8x128xi1>
    %567 = vector.broadcast %cst_105 : f32 to vector<8x128xf32>
    %568 = arith.select %566, %540, %567 : vector<8x128xi1>, vector<8x128xf32>
    %569 = arith.index_cast %478 : i32 to index
    %c0_106 = arith.constant 0 : index
    %c128_107 = arith.constant 128 : index
    %570 = vector.load %arg4[%569, %c0_106, %c128_107] : memref<8x8x256xf32, #tpu.memory_space<vmem>>, vector<1x8x128xf32>
    %571 = vector.shape_cast %570 : vector<1x8x128xf32> to vector<8x128xf32>
    %572 = vector.shape_cast %568 : vector<8x128xf32> to vector<1x8x128xf32>
    tpu.vector_store %arg4[%569, %c0_106, %c128_107], %572 {strides = array<i32>} : memref<8x8x256xf32, #tpu.memory_space<vmem>>, vector<1x8x128xf32>,
    %c6_i32 = arith.constant 6 : i32
    %c7_i32_108 = arith.constant 7 : i32
    %573 = arith.subi %c7_i32_108, %c6_i32 : i32
    %574 = arith.index_cast %c6_i32 : i32 to index
    %c0_109 = arith.constant 0 : index
    %c0_110 = arith.constant 0 : index
    %575 = vector.load %arg1[%574, %c0_109, %c0_110] : memref<8x8x1024xf32, #tpu.memory_space<vmem>>, vector<1x8x512xf32>
    %576 = vector.shape_cast %575 : vector<1x8x512xf32> to vector<8x512xf32>
    %577 = arith.index_cast %573 : i32 to index
    %c0_111 = arith.constant 0 : index
    %c512_112 = arith.constant 512 : index
    %578 = vector.load %arg1[%577, %c0_111, %c512_112] : memref<8x8x1024xf32, #tpu.memory_space<vmem>>, vector<1x8x512xf32>
    %579 = vector.shape_cast %578 : vector<1x8x512xf32> to vector<8x512xf32>
    %580 = tpu.concatenate %547, %553 in 1 : vector<8x128xf32>, vector<8x128xf32> -> vector<8x256xf32>
    %cst_113 = arith.constant dense<0.000000e+00> : vector<8x1024xf32>
    %581 = tpu.matmul %580, %1, %cst_113 {dimension_numbers = #tpu.dot_dimension_numbers<[1], [0], [0], [1], [0, 0, 1, 1], [], []>} : vector<8x256xf32>, vector<256x1024xf32>, vector<8x1024xf32> -> vector<8x1024xf32>
    %582 = vector.extract_strided_slice %581 {offsets = [0, 0], sizes = [8, 512], strides = [1, 1]} : vector<8x1024xf32> to vector<8x512xf32>
    %583 = arith.addf %576, %582 : vector<8x512xf32>
    %584 = vector.extract_strided_slice %583 {offsets = [0, 0], sizes = [8, 128], strides = [1, 1]} : vector<8x512xf32> to vector<8x128xf32>
    %585 = arith.negf %584 : vector<8x128xf32>
    %586 = math.exp %585 : vector<8x128xf32>
    %cst_114 = arith.constant 1.000000e+00 : f32
    %587 = vector.broadcast %cst_114 : f32 to vector<8x128xf32>
    %588 = arith.addf %587, %586 : vector<8x128xf32>
    %589 = arith.divf %587, %588 : vector<8x128xf32>
    %590 = vector.extract_strided_slice %583 {offsets = [0, 128], sizes = [8, 128], strides = [1, 1]} : vector<8x512xf32> to vector<8x128xf32>
    %591 = arith.negf %590 : vector<8x128xf32>
    %592 = math.exp %591 : vector<8x128xf32>
    %cst_115 = arith.constant 1.000000e+00 : f32
    %593 = vector.broadcast %cst_115 : f32 to vector<8x128xf32>
    %594 = arith.addf %593, %592 : vector<8x128xf32>
    %595 = arith.divf %593, %594 : vector<8x128xf32>
    %596 = vector.extract_strided_slice %583 {offsets = [0, 256], sizes = [8, 128], strides = [1, 1]} : vector<8x512xf32> to vector<8x128xf32>
    %597 = math.tanh %596 : vector<8x128xf32>
    %598 = vector.extract_strided_slice %583 {offsets = [0, 384], sizes = [8, 128], strides = [1, 1]} : vector<8x512xf32> to vector<8x128xf32>
    %599 = arith.negf %598 : vector<8x128xf32>
    %600 = math.exp %599 : vector<8x128xf32>
    %cst_116 = arith.constant 1.000000e+00 : f32
    %601 = vector.broadcast %cst_116 : f32 to vector<8x128xf32>
    %602 = arith.addf %601, %600 : vector<8x128xf32>
    %603 = arith.divf %601, %602 : vector<8x128xf32>
    %604 = arith.mulf %595, %550 : vector<8x128xf32>
    %605 = arith.mulf %589, %597 : vector<8x128xf32>
    %606 = arith.addf %604, %605 : vector<8x128xf32>
    %607 = math.tanh %606 : vector<8x128xf32>
    %608 = arith.mulf %603, %607 : vector<8x128xf32>
    %609 = vector.extract_strided_slice %581 {offsets = [0, 512], sizes = [8, 512], strides = [1, 1]} : vector<8x1024xf32> to vector<8x512xf32>
    %610 = arith.addf %579, %609 : vector<8x512xf32>
    %611 = vector.extract_strided_slice %610 {offsets = [0, 0], sizes = [8, 128], strides = [1, 1]} : vector<8x512xf32> to vector<8x128xf32>
    %612 = arith.negf %611 : vector<8x128xf32>
    %613 = math.exp %612 : vector<8x128xf32>
    %cst_117 = arith.constant 1.000000e+00 : f32
    %614 = vector.broadcast %cst_117 : f32 to vector<8x128xf32>
    %615 = arith.addf %614, %613 : vector<8x128xf32>
    %616 = arith.divf %614, %615 : vector<8x128xf32>
    %617 = vector.extract_strided_slice %610 {offsets = [0, 128], sizes = [8, 128], strides = [1, 1]} : vector<8x512xf32> to vector<8x128xf32>
    %618 = arith.negf %617 : vector<8x128xf32>
    %619 = math.exp %618 : vector<8x128xf32>
    %cst_118 = arith.constant 1.000000e+00 : f32
    %620 = vector.broadcast %cst_118 : f32 to vector<8x128xf32>
    %621 = arith.addf %620, %619 : vector<8x128xf32>
    %622 = arith.divf %620, %621 : vector<8x128xf32>
    %623 = vector.extract_strided_slice %610 {offsets = [0, 256], sizes = [8, 128], strides = [1, 1]} : vector<8x512xf32> to vector<8x128xf32>
    %624 = math.tanh %623 : vector<8x128xf32>
    %625 = vector.extract_strided_slice %610 {offsets = [0, 384], sizes = [8, 128], strides = [1, 1]} : vector<8x512xf32> to vector<8x128xf32>
    %626 = arith.negf %625 : vector<8x128xf32>
    %627 = math.exp %626 : vector<8x128xf32>
    %cst_119 = arith.constant 1.000000e+00 : f32
    %628 = vector.broadcast %cst_119 : f32 to vector<8x128xf32>
    %629 = arith.addf %628, %627 : vector<8x128xf32>
    %630 = arith.divf %628, %629 : vector<8x128xf32>
    %631 = arith.mulf %622, %556 : vector<8x128xf32>
    %632 = arith.mulf %616, %624 : vector<8x128xf32>
    %633 = arith.addf %631, %632 : vector<8x128xf32>
    %634 = math.tanh %633 : vector<8x128xf32>
    %635 = arith.mulf %630, %634 : vector<8x128xf32>
    %636 = vector.broadcast %c6_i32 : i32 to vector<8x1xi32>
    %637 = arith.cmpi sgt, %0, %636 : vector<8x1xi32>
    %638 = vector.broadcast %573 : i32 to vector<8x1xi32>
    %639 = arith.cmpi sgt, %0, %638 : vector<8x1xi32>
    %640 = vector.shape_cast %637 : vector<8x1xi1> to vector<8x1xi1>
    %641 = vector.broadcast %640 : vector<8x1xi1> to vector<8x128xi1>
    %642 = arith.select %641, %608, %547 : vector<8x128xi1>, vector<8x128xf32>
    %643 = vector.shape_cast %637 : vector<8x1xi1> to vector<8x1xi1>
    %644 = vector.broadcast %643 : vector<8x1xi1> to vector<8x128xi1>
    %645 = arith.select %644, %606, %550 : vector<8x128xi1>, vector<8x128xf32>
    %646 = vector.shape_cast %639 : vector<8x1xi1> to vector<8x1xi1>
    %647 = vector.broadcast %646 : vector<8x1xi1> to vector<8x128xi1>
    %648 = arith.select %647, %635, %553 : vector<8x128xi1>, vector<8x128xf32>
    %649 = vector.shape_cast %639 : vector<8x1xi1> to vector<8x1xi1>
    %650 = vector.broadcast %649 : vector<8x1xi1> to vector<8x128xi1>
    %651 = arith.select %650, %633, %556 : vector<8x128xi1>, vector<8x128xf32>
    %cst_120 = arith.constant 0.000000e+00 : f32
    %652 = vector.shape_cast %637 : vector<8x1xi1> to vector<8x1xi1>
    %653 = vector.broadcast %652 : vector<8x1xi1> to vector<8x128xi1>
    %654 = vector.broadcast %cst_120 : f32 to vector<8x128xf32>
    %655 = arith.select %653, %608, %654 : vector<8x128xi1>, vector<8x128xf32>
    %656 = arith.index_cast %c6_i32 : i32 to index
    %c0_121 = arith.constant 0 : index
    %c0_122 = arith.constant 0 : index
    %657 = vector.load %arg4[%656, %c0_121, %c0_122] : memref<8x8x256xf32, #tpu.memory_space<vmem>>, vector<1x8x128xf32>
    %658 = vector.shape_cast %657 : vector<1x8x128xf32> to vector<8x128xf32>
    %659 = vector.shape_cast %655 : vector<8x128xf32> to vector<1x8x128xf32>
    tpu.vector_store %arg4[%656, %c0_121, %c0_122], %659 {strides = array<i32>} : memref<8x8x256xf32, #tpu.memory_space<vmem>>, vector<1x8x128xf32>,
    %cst_123 = arith.constant 0.000000e+00 : f32
    %660 = vector.shape_cast %639 : vector<8x1xi1> to vector<8x1xi1>
    %661 = vector.broadcast %660 : vector<8x1xi1> to vector<8x128xi1>
    %662 = vector.broadcast %cst_123 : f32 to vector<8x128xf32>
    %663 = arith.select %661, %635, %662 : vector<8x128xi1>, vector<8x128xf32>
    %664 = arith.index_cast %573 : i32 to index
    %c0_124 = arith.constant 0 : index
    %c128_125 = arith.constant 128 : index
    %665 = vector.load %arg4[%664, %c0_124, %c128_125] : memref<8x8x256xf32, #tpu.memory_space<vmem>>, vector<1x8x128xf32>
    %666 = vector.shape_cast %665 : vector<1x8x128xf32> to vector<8x128xf32>
    %667 = vector.shape_cast %663 : vector<8x128xf32> to vector<1x8x128xf32>
    tpu.vector_store %arg4[%664, %c0_124, %c128_125], %667 {strides = array<i32>} : memref<8x8x256xf32, #tpu.memory_space<vmem>>, vector<1x8x128xf32>,
    %c7_i32_126 = arith.constant 7 : i32
    %c7_i32_127 = arith.constant 7 : i32
    %668 = arith.subi %c7_i32_127, %c7_i32_126 : i32
    %669 = arith.index_cast %c7_i32_126 : i32 to index
    %c0_128 = arith.constant 0 : index
    %c0_129 = arith.constant 0 : index
    %670 = vector.load %arg1[%669, %c0_128, %c0_129] : memref<8x8x1024xf32, #tpu.memory_space<vmem>>, vector<1x8x512xf32>
    %671 = vector.shape_cast %670 : vector<1x8x512xf32> to vector<8x512xf32>
    %672 = arith.index_cast %668 : i32 to index
    %c0_130 = arith.constant 0 : index
    %c512_131 = arith.constant 512 : index
    %673 = vector.load %arg1[%672, %c0_130, %c512_131] : memref<8x8x1024xf32, #tpu.memory_space<vmem>>, vector<1x8x512xf32>
    %674 = vector.shape_cast %673 : vector<1x8x512xf32> to vector<8x512xf32>
    %675 = tpu.concatenate %642, %648 in 1 : vector<8x128xf32>, vector<8x128xf32> -> vector<8x256xf32>
    %cst_132 = arith.constant dense<0.000000e+00> : vector<8x1024xf32>
    %676 = tpu.matmul %675, %1, %cst_132 {dimension_numbers = #tpu.dot_dimension_numbers<[1], [0], [0], [1], [0, 0, 1, 1], [], []>} : vector<8x256xf32>, vector<256x1024xf32>, vector<8x1024xf32> -> vector<8x1024xf32>
    %677 = vector.extract_strided_slice %676 {offsets = [0, 0], sizes = [8, 512], strides = [1, 1]} : vector<8x1024xf32> to vector<8x512xf32>
    %678 = arith.addf %671, %677 : vector<8x512xf32>
    %679 = vector.extract_strided_slice %678 {offsets = [0, 0], sizes = [8, 128], strides = [1, 1]} : vector<8x512xf32> to vector<8x128xf32>
    %680 = arith.negf %679 : vector<8x128xf32>
    %681 = math.exp %680 : vector<8x128xf32>
    %cst_133 = arith.constant 1.000000e+00 : f32
    %682 = vector.broadcast %cst_133 : f32 to vector<8x128xf32>
    %683 = arith.addf %682, %681 : vector<8x128xf32>
    %684 = arith.divf %682, %683 : vector<8x128xf32>
    %685 = vector.extract_strided_slice %678 {offsets = [0, 128], sizes = [8, 128], strides = [1, 1]} : vector<8x512xf32> to vector<8x128xf32>
    %686 = arith.negf %685 : vector<8x128xf32>
    %687 = math.exp %686 : vector<8x128xf32>
    %cst_134 = arith.constant 1.000000e+00 : f32
    %688 = vector.broadcast %cst_134 : f32 to vector<8x128xf32>
    %689 = arith.addf %688, %687 : vector<8x128xf32>
    %690 = arith.divf %688, %689 : vector<8x128xf32>
    %691 = vector.extract_strided_slice %678 {offsets = [0, 256], sizes = [8, 128], strides = [1, 1]} : vector<8x512xf32> to vector<8x128xf32>
    %692 = math.tanh %691 : vector<8x128xf32>
    %693 = vector.extract_strided_slice %678 {offsets = [0, 384], sizes = [8, 128], strides = [1, 1]} : vector<8x512xf32> to vector<8x128xf32>
    %694 = arith.negf %693 : vector<8x128xf32>
    %695 = math.exp %694 : vector<8x128xf32>
    %cst_135 = arith.constant 1.000000e+00 : f32
    %696 = vector.broadcast %cst_135 : f32 to vector<8x128xf32>
    %697 = arith.addf %696, %695 : vector<8x128xf32>
    %698 = arith.divf %696, %697 : vector<8x128xf32>
    %699 = arith.mulf %690, %645 : vector<8x128xf32>
    %700 = arith.mulf %684, %692 : vector<8x128xf32>
    %701 = arith.addf %699, %700 : vector<8x128xf32>
    %702 = math.tanh %701 : vector<8x128xf32>
    %703 = arith.mulf %698, %702 : vector<8x128xf32>
    %704 = vector.extract_strided_slice %676 {offsets = [0, 512], sizes = [8, 512], strides = [1, 1]} : vector<8x1024xf32> to vector<8x512xf32>
    %705 = arith.addf %674, %704 : vector<8x512xf32>
    %706 = vector.extract_strided_slice %705 {offsets = [0, 0], sizes = [8, 128], strides = [1, 1]} : vector<8x512xf32> to vector<8x128xf32>
    %707 = arith.negf %706 : vector<8x128xf32>
    %708 = math.exp %707 : vector<8x128xf32>
    %cst_136 = arith.constant 1.000000e+00 : f32
    %709 = vector.broadcast %cst_136 : f32 to vector<8x128xf32>
    %710 = arith.addf %709, %708 : vector<8x128xf32>
    %711 = arith.divf %709, %710 : vector<8x128xf32>
    %712 = vector.extract_strided_slice %705 {offsets = [0, 128], sizes = [8, 128], strides = [1, 1]} : vector<8x512xf32> to vector<8x128xf32>
    %713 = arith.negf %712 : vector<8x128xf32>
    %714 = math.exp %713 : vector<8x128xf32>
    %cst_137 = arith.constant 1.000000e+00 : f32
    %715 = vector.broadcast %cst_137 : f32 to vector<8x128xf32>
    %716 = arith.addf %715, %714 : vector<8x128xf32>
    %717 = arith.divf %715, %716 : vector<8x128xf32>
    %718 = vector.extract_strided_slice %705 {offsets = [0, 256], sizes = [8, 128], strides = [1, 1]} : vector<8x512xf32> to vector<8x128xf32>
    %719 = math.tanh %718 : vector<8x128xf32>
    %720 = vector.extract_strided_slice %705 {offsets = [0, 384], sizes = [8, 128], strides = [1, 1]} : vector<8x512xf32> to vector<8x128xf32>
    %721 = arith.negf %720 : vector<8x128xf32>
    %722 = math.exp %721 : vector<8x128xf32>
    %cst_138 = arith.constant 1.000000e+00 : f32
    %723 = vector.broadcast %cst_138 : f32 to vector<8x128xf32>
    %724 = arith.addf %723, %722 : vector<8x128xf32>
    %725 = arith.divf %723, %724 : vector<8x128xf32>
    %726 = arith.mulf %717, %651 : vector<8x128xf32>
    %727 = arith.mulf %711, %719 : vector<8x128xf32>
    %728 = arith.addf %726, %727 : vector<8x128xf32>
    %729 = math.tanh %728 : vector<8x128xf32>
    %730 = arith.mulf %725, %729 : vector<8x128xf32>
    %731 = vector.broadcast %c7_i32_126 : i32 to vector<8x1xi32>
    %732 = arith.cmpi sgt, %0, %731 : vector<8x1xi32>
    %733 = vector.broadcast %668 : i32 to vector<8x1xi32>
    %734 = arith.cmpi sgt, %0, %733 : vector<8x1xi32>
    %735 = vector.shape_cast %732 : vector<8x1xi1> to vector<8x1xi1>
    %736 = vector.broadcast %735 : vector<8x1xi1> to vector<8x128xi1>
    %737 = arith.select %736, %703, %642 : vector<8x128xi1>, vector<8x128xf32>
    %738 = vector.shape_cast %732 : vector<8x1xi1> to vector<8x1xi1>
    %739 = vector.broadcast %738 : vector<8x1xi1> to vector<8x128xi1>
    %740 = arith.select %739, %701, %645 : vector<8x128xi1>, vector<8x128xf32>
    %741 = vector.shape_cast %734 : vector<8x1xi1> to vector<8x1xi1>
    %742 = vector.broadcast %741 : vector<8x1xi1> to vector<8x128xi1>
    %743 = arith.select %742, %730, %648 : vector<8x128xi1>, vector<8x128xf32>
    %744 = vector.shape_cast %734 : vector<8x1xi1> to vector<8x1xi1>
    %745 = vector.broadcast %744 : vector<8x1xi1> to vector<8x128xi1>
    %746 = arith.select %745, %728, %651 : vector<8x128xi1>, vector<8x128xf32>
    %cst_139 = arith.constant 0.000000e+00 : f32
    %747 = vector.shape_cast %732 : vector<8x1xi1> to vector<8x1xi1>
    %748 = vector.broadcast %747 : vector<8x1xi1> to vector<8x128xi1>
    %749 = vector.broadcast %cst_139 : f32 to vector<8x128xf32>
    %750 = arith.select %748, %703, %749 : vector<8x128xi1>, vector<8x128xf32>
    %751 = arith.index_cast %c7_i32_126 : i32 to index
    %c0_140 = arith.constant 0 : index
    %c0_141 = arith.constant 0 : index
    %752 = vector.load %arg4[%751, %c0_140, %c0_141] : memref<8x8x256xf32, #tpu.memory_space<vmem>>, vector<1x8x128xf32>
    %753 = vector.shape_cast %752 : vector<1x8x128xf32> to vector<8x128xf32>
    %754 = vector.shape_cast %750 : vector<8x128xf32> to vector<1x8x128xf32>
    tpu.vector_store %arg4[%751, %c0_140, %c0_141], %754 {strides = array<i32>} : memref<8x8x256xf32, #tpu.memory_space<vmem>>, vector<1x8x128xf32>,
    %cst_142 = arith.constant 0.000000e+00 : f32
    %755 = vector.shape_cast %734 : vector<8x1xi1> to vector<8x1xi1>
    %756 = vector.broadcast %755 : vector<8x1xi1> to vector<8x128xi1>
    %757 = vector.broadcast %cst_142 : f32 to vector<8x128xf32>
    %758 = arith.select %756, %730, %757 : vector<8x128xi1>, vector<8x128xf32>
    %759 = arith.index_cast %668 : i32 to index
    %c0_143 = arith.constant 0 : index
    %c128_144 = arith.constant 128 : index
    %760 = vector.load %arg4[%759, %c0_143, %c128_144] : memref<8x8x256xf32, #tpu.memory_space<vmem>>, vector<1x8x128xf32>
    %761 = vector.shape_cast %760 : vector<1x8x128xf32> to vector<8x128xf32>
    %762 = vector.shape_cast %758 : vector<8x128xf32> to vector<1x8x128xf32>
    tpu.vector_store %arg4[%759, %c0_143, %c128_144], %762 {strides = array<i32>} : memref<8x8x256xf32, #tpu.memory_space<vmem>>, vector<1x8x128xf32>,
    %c8_i32 = arith.constant 8 : i32
    return
  }
  func.func @transform_0(%arg0: i32) -> (i32, i32, i32) {
    %c0_i32 = arith.constant 0 : i32
    %c0_i32_0 = arith.constant 0 : i32
    %c0_i32_1 = arith.constant 0 : i32
    return %c0_i32, %arg0, %c0_i32_0 : i32, i32, i32
  }
  func.func @transform_1(%arg0: i32) -> (i32, i32) {
    %c0_i32 = arith.constant 0 : i32
    %c0_i32_0 = arith.constant 0 : i32
    %c0_i32_1 = arith.constant 0 : i32
    return %c0_i32, %c0_i32_0 : i32, i32
  }
  func.func @transform_2(%arg0: i32) -> (i32, i32) {
    %c0_i32 = arith.constant 0 : i32
    %c0_i32_0 = arith.constant 0 : i32
    return %arg0, %c0_i32 : i32, i32
  }
  func.func @transform_3(%arg0: i32) -> (i32, i32, i32) {
    %c0_i32 = arith.constant 0 : i32
    %c0_i32_0 = arith.constant 0 : i32
    %c0_i32_1 = arith.constant 0 : i32
    return %c0_i32, %arg0, %c0_i32_0 : i32, i32, i32
  }
}

module attributes {stable_mosaic.version = 11 : i64} {
  func.func @_head_kernel(%arg0: i32, %arg1: i32, %arg2: memref<64x256xf32, #tpu.memory_space<vmem>>, %arg3: memref<256x128xf32, #tpu.memory_space<vmem>>, %arg4: memref<1x128xf32, #tpu.memory_space<vmem>>, %arg5: memref<64x1xi32, #tpu.memory_space<vmem>>, %arg6: memref<1x1xf32, #tpu.memory_space<vmem>>, %arg7: memref<64x1xi32, #tpu.memory_space<vmem>>, %arg8: memref<64x1xf32, #tpu.memory_space<vmem>>, %arg9: memref<64x1xf32, #tpu.memory_space<vmem>>, %arg10: memref<64x1xf32, #tpu.memory_space<vmem>>, %arg11: memref<64x1xi32, #tpu.memory_space<vmem>>, %arg12: memref<64x1xf32, #tpu.memory_space<vmem>>, %arg13: memref<1x1xf32, #tpu.memory_space<vmem>>, %arg14: memref<1x1xf32, #tpu.memory_space<vmem>>) attributes {dimension_semantics = [#tpu.dimension_semantics<arbitrary>, #tpu.dimension_semantics<arbitrary>], iteration_bounds = array<i64: 1, 1>, scalar_prefetch = 0 : i64, scratch_operands = 7 : i64, tpu.core_type = #tpu.core_type<tc>, window_params = [{transform_indices = @transform_0, window_bounds = array<i64: 64, 256>}, {transform_indices = @transform_1, window_bounds = array<i64: 256, 128>}, {transform_indices = @transform_2, window_bounds = array<i64: 1, 128>}, {transform_indices = @transform_3, window_bounds = array<i64: 64, 1>}, {pipeline_mode = #tpu.pipeline_mode<synchronous>, transform_indices = @transform_4, window_bounds = array<i64: 1, 1>}, {transform_indices = @transform_5, window_bounds = array<i64: 64, 1>}]} {
    %c0_i32 = arith.constant 0 : i32
    %0 = arith.cmpi eq, %arg0, %c0_i32 : i32
    %c0_i32_0 = arith.constant 0 : i32
    %1 = arith.cmpi eq, %arg1, %c0_i32_0 : i32
    %2 = arith.andi %0, %1 : i1
    %3 = arith.extui %2 : i1 to i32
    %c0_i32_1 = arith.constant 0 : i32
    %4 = arith.cmpi ne, %3, %c0_i32_1 : i32
    scf.if %4 {
      %cst_45 = arith.constant 0.000000e+00 : f32
      %67 = vector.broadcast %cst_45 : f32 to vector<1x1xf32>
      %c0_46 = arith.constant 0 : index
      %c0_47 = arith.constant 0 : index
      %68 = vector.load %arg13[%c0_46, %c0_47] : memref<1x1xf32, #tpu.memory_space<vmem>>, vector<1x1xf32>
      tpu.vector_store %arg13[%c0_46, %c0_47], %67 {strides = array<i32>} : memref<1x1xf32, #tpu.memory_space<vmem>>, vector<1x1xf32>,
      %cst_48 = arith.constant 0.000000e+00 : f32
      %69 = vector.broadcast %cst_48 : f32 to vector<1x1xf32>
      %c0_49 = arith.constant 0 : index
      %c0_50 = arith.constant 0 : index
      %70 = vector.load %arg14[%c0_49, %c0_50] : memref<1x1xf32, #tpu.memory_space<vmem>>, vector<1x1xf32>
      tpu.vector_store %arg14[%c0_49, %c0_50], %69 {strides = array<i32>} : memref<1x1xf32, #tpu.memory_space<vmem>>, vector<1x1xf32>,
    } else {
    }
    %c0_i32_2 = arith.constant 0 : i32
    %5 = arith.cmpi eq, %arg1, %c0_i32_2 : i32
    %6 = arith.extui %5 : i1 to i32
    %c0_i32_3 = arith.constant 0 : i32
    %7 = arith.cmpi ne, %6, %c0_i32_3 : i32
    scf.if %7 {
      %cst_45 = arith.constant 0xFF800000 : f32
      %67 = vector.broadcast %cst_45 : f32 to vector<64x1xf32>
      %c0_46 = arith.constant 0 : index
      %c0_47 = arith.constant 0 : index
      %68 = vector.load %arg8[%c0_46, %c0_47] : memref<64x1xf32, #tpu.memory_space<vmem>>, vector<64x1xf32>
      tpu.vector_store %arg8[%c0_46, %c0_47], %67 {strides = array<i32>} : memref<64x1xf32, #tpu.memory_space<vmem>>, vector<64x1xf32>,
      %cst_48 = arith.constant 0.000000e+00 : f32
      %69 = vector.broadcast %cst_48 : f32 to vector<64x1xf32>
      %c0_49 = arith.constant 0 : index
      %c0_50 = arith.constant 0 : index
      %70 = vector.load %arg9[%c0_49, %c0_50] : memref<64x1xf32, #tpu.memory_space<vmem>>, vector<64x1xf32>
      tpu.vector_store %arg9[%c0_49, %c0_50], %69 {strides = array<i32>} : memref<64x1xf32, #tpu.memory_space<vmem>>, vector<64x1xf32>,
      %cst_51 = arith.constant 0xFF800000 : f32
      %71 = vector.broadcast %cst_51 : f32 to vector<64x1xf32>
      %c0_52 = arith.constant 0 : index
      %c0_53 = arith.constant 0 : index
      %72 = vector.load %arg10[%c0_52, %c0_53] : memref<64x1xf32, #tpu.memory_space<vmem>>, vector<64x1xf32>
      tpu.vector_store %arg10[%c0_52, %c0_53], %71 {strides = array<i32>} : memref<64x1xf32, #tpu.memory_space<vmem>>, vector<64x1xf32>,
      %c0_i32_54 = arith.constant 0 : i32
      %73 = vector.broadcast %c0_i32_54 : i32 to vector<64x1xi32>
      %c0_55 = arith.constant 0 : index
      %c0_56 = arith.constant 0 : index
      %74 = vector.load %arg11[%c0_55, %c0_56] : memref<64x1xi32, #tpu.memory_space<vmem>>, vector<64x1xi32>
      tpu.vector_store %arg11[%c0_55, %c0_56], %73 {strides = array<i32>} : memref<64x1xi32, #tpu.memory_space<vmem>>, vector<64x1xi32>,
      %cst_57 = arith.constant 0.000000e+00 : f32
      %75 = vector.broadcast %cst_57 : f32 to vector<64x1xf32>
      %c0_58 = arith.constant 0 : index
      %c0_59 = arith.constant 0 : index
      %76 = vector.load %arg12[%c0_58, %c0_59] : memref<64x1xf32, #tpu.memory_space<vmem>>, vector<64x1xf32>
      tpu.vector_store %arg12[%c0_58, %c0_59], %75 {strides = array<i32>} : memref<64x1xf32, #tpu.memory_space<vmem>>, vector<64x1xf32>,
    } else {
    }
    %c0 = arith.constant 0 : index
    %c0_4 = arith.constant 0 : index
    %8 = vector.load %arg2[%c0, %c0_4] : memref<64x256xf32, #tpu.memory_space<vmem>>, vector<64x256xf32>
    %c0_5 = arith.constant 0 : index
    %c0_6 = arith.constant 0 : index
    %9 = vector.load %arg3[%c0_5, %c0_6] : memref<256x128xf32, #tpu.memory_space<vmem>>, vector<256x128xf32>
    %cst = arith.constant dense<0.000000e+00> : vector<64x128xf32>
    %10 = tpu.matmul %8, %9, %cst {dimension_numbers = #tpu.dot_dimension_numbers<[1], [0], [0], [1], [0, 0, 1, 1], [], []>} : vector<64x256xf32>, vector<256x128xf32>, vector<64x128xf32> -> vector<64x128xf32>
    %c0_7 = arith.constant 0 : index
    %c0_8 = arith.constant 0 : index
    %11 = vector.load %arg4[%c0_7, %c0_8] : memref<1x128xf32, #tpu.memory_space<vmem>>, vector<1x128xf32>
    %12 = vector.broadcast %11 : vector<1x128xf32> to vector<64x128xf32>
    %13 = arith.addf %10, %12 : vector<64x128xf32>
    %14 = tpu.iota {dimensions = array<i32: 1>} : vector<64x128xi32>
    %c128_i32 = arith.constant 128 : i32
    %15 = arith.muli %arg1, %c128_i32 : i32
    %16 = vector.broadcast %15 : i32 to vector<64x128xi32>
    %17 = arith.addi %14, %16 : vector<64x128xi32>
    %cst_9 = arith.constant dense<0xFF800000> : vector<64xf32>
    %18 = vector.multi_reduction <maximumf>, %13, %cst_9 [1] : vector<64x128xf32> to vector<64xf32>
    %19 = vector.shape_cast %18 : vector<64xf32> to vector<64x1xf32>
    %20 = vector.broadcast %19 : vector<64x1xf32> to vector<64x128xf32>
    %21 = arith.cmpf oeq, %13, %20 : vector<64x128xf32>
    %c2147483647_i32 = arith.constant 2147483647 : i32
    %22 = vector.broadcast %c2147483647_i32 : i32 to vector<64x128xi32>
    %23 = arith.select %21, %17, %22 : vector<64x128xi1>, vector<64x128xi32>
    %cst_10 = arith.constant dense<2147483647> : vector<64xi32>
    %24 = vector.multi_reduction <minsi>, %23, %cst_10 [1] : vector<64x128xi32> to vector<64xi32>
    %25 = vector.shape_cast %24 : vector<64xi32> to vector<64x1xi32>
    %c0_11 = arith.constant 0 : index
    %c0_12 = arith.constant 0 : index
    %26 = vector.load %arg10[%c0_11, %c0_12] : memref<64x1xf32, #tpu.memory_space<vmem>>, vector<64x1xf32>
    %27 = arith.cmpf ogt, %19, %26 : vector<64x1xf32>
    %c0_13 = arith.constant 0 : index
    %c0_14 = arith.constant 0 : index
    %28 = vector.load %arg11[%c0_13, %c0_14] : memref<64x1xi32, #tpu.memory_space<vmem>>, vector<64x1xi32>
    %29 = arith.select %27, %25, %28 : vector<64x1xi1>, vector<64x1xi32>
    %c0_15 = arith.constant 0 : index
    %c0_16 = arith.constant 0 : index
    %30 = vector.load %arg11[%c0_15, %c0_16] : memref<64x1xi32, #tpu.memory_space<vmem>>, vector<64x1xi32>
    tpu.vector_store %arg11[%c0_15, %c0_16], %29 {strides = array<i32>} : memref<64x1xi32, #tpu.memory_space<vmem>>, vector<64x1xi32>,
    %c0_17 = arith.constant 0 : index
    %c0_18 = arith.constant 0 : index
    %31 = vector.load %arg10[%c0_17, %c0_18] : memref<64x1xf32, #tpu.memory_space<vmem>>, vector<64x1xf32>
    %32 = arith.select %27, %19, %31 : vector<64x1xi1>, vector<64x1xf32>
    %c0_19 = arith.constant 0 : index
    %c0_20 = arith.constant 0 : index
    %33 = vector.load %arg10[%c0_19, %c0_20] : memref<64x1xf32, #tpu.memory_space<vmem>>, vector<64x1xf32>
    tpu.vector_store %arg10[%c0_19, %c0_20], %32 {strides = array<i32>} : memref<64x1xf32, #tpu.memory_space<vmem>>, vector<64x1xf32>,
    %c0_21 = arith.constant 0 : index
    %c0_22 = arith.constant 0 : index
    %34 = vector.load %arg8[%c0_21, %c0_22] : memref<64x1xf32, #tpu.memory_space<vmem>>, vector<64x1xf32>
    %35 = arith.maximumf %34, %19 : vector<64x1xf32>
    %c0_23 = arith.constant 0 : index
    %c0_24 = arith.constant 0 : index
    %36 = vector.load %arg9[%c0_23, %c0_24] : memref<64x1xf32, #tpu.memory_space<vmem>>, vector<64x1xf32>
    %c0_25 = arith.constant 0 : index
    %c0_26 = arith.constant 0 : index
    %37 = vector.load %arg8[%c0_25, %c0_26] : memref<64x1xf32, #tpu.memory_space<vmem>>, vector<64x1xf32>
    %38 = arith.subf %37, %35 : vector<64x1xf32>
    %39 = math.exp %38 : vector<64x1xf32>
    %40 = arith.mulf %36, %39 : vector<64x1xf32>
    %41 = vector.broadcast %35 : vector<64x1xf32> to vector<64x128xf32>
    %42 = arith.subf %13, %41 : vector<64x128xf32>
    %43 = math.exp %42 : vector<64x128xf32>
    %cst_27 = arith.constant dense<0.000000e+00> : vector<64xf32>
    %44 = vector.multi_reduction <add>, %43, %cst_27 [1] : vector<64x128xf32> to vector<64xf32>
    %45 = vector.shape_cast %44 : vector<64xf32> to vector<64x1xf32>
    %46 = arith.addf %40, %45 : vector<64x1xf32>
    %c0_28 = arith.constant 0 : index
    %c0_29 = arith.constant 0 : index
    %47 = vector.load %arg9[%c0_28, %c0_29] : memref<64x1xf32, #tpu.memory_space<vmem>>, vector<64x1xf32>
    tpu.vector_store %arg9[%c0_28, %c0_29], %46 {strides = array<i32>} : memref<64x1xf32, #tpu.memory_space<vmem>>, vector<64x1xf32>,
    %c0_30 = arith.constant 0 : index
    %c0_31 = arith.constant 0 : index
    %48 = vector.load %arg8[%c0_30, %c0_31] : memref<64x1xf32, #tpu.memory_space<vmem>>, vector<64x1xf32>
    tpu.vector_store %arg8[%c0_30, %c0_31], %35 {strides = array<i32>} : memref<64x1xf32, #tpu.memory_space<vmem>>, vector<64x1xf32>,
    %c0_32 = arith.constant 0 : index
    %c0_33 = arith.constant 0 : index
    %49 = vector.load %arg5[%c0_32, %c0_33] : memref<64x1xi32, #tpu.memory_space<vmem>>, vector<64x1xi32>
    %c0_34 = arith.constant 0 : index
    %c0_35 = arith.constant 0 : index
    %50 = vector.load %arg12[%c0_34, %c0_35] : memref<64x1xf32, #tpu.memory_space<vmem>>, vector<64x1xf32>
    %51 = vector.broadcast %49 : vector<64x1xi32> to vector<64x128xi32>
    %52 = arith.cmpi eq, %17, %51 : vector<64x128xi32>
    %cst_36 = arith.constant 0.000000e+00 : f32
    %53 = vector.broadcast %cst_36 : f32 to vector<64x128xf32>
    %54 = arith.select %52, %13, %53 : vector<64x128xi1>, vector<64x128xf32>
    %cst_37 = arith.constant dense<0.000000e+00> : vector<64xf32>
    %55 = vector.multi_reduction <add>, %54, %cst_37 [1] : vector<64x128xf32> to vector<64xf32>
    %56 = vector.shape_cast %55 : vector<64xf32> to vector<64x1xf32>
    %57 = arith.addf %50, %56 : vector<64x1xf32>
    %c0_38 = arith.constant 0 : index
    %c0_39 = arith.constant 0 : index
    %58 = vector.load %arg12[%c0_38, %c0_39] : memref<64x1xf32, #tpu.memory_space<vmem>>, vector<64x1xf32>
    tpu.vector_store %arg12[%c0_38, %c0_39], %57 {strides = array<i32>} : memref<64x1xf32, #tpu.memory_space<vmem>>, vector<64x1xf32>,
    %c0_i32_40 = arith.constant 0 : i32
    %59 = arith.cmpi eq, %arg1, %c0_i32_40 : i32
    %60 = arith.extui %59 : i1 to i32
    %c0_i32_41 = arith.constant 0 : i32
    %61 = arith.cmpi ne, %60, %c0_i32_41 : i32
    scf.if %61 {
      %c0_45 = arith.constant 0 : index
      %c0_46 = arith.constant 0 : index
      %67 = vector.load %arg11[%c0_45, %c0_46] : memref<64x1xi32, #tpu.memory_space<vmem>>, vector<64x1xi32>
      %c0_47 = arith.constant 0 : index
      %c0_48 = arith.constant 0 : index
      %68 = vector.load %arg7[%c0_47, %c0_48] : memref<64x1xi32, #tpu.memory_space<vmem>>, vector<64x1xi32>
      tpu.vector_store %arg7[%c0_47, %c0_48], %67 {strides = array<i32>} : memref<64x1xi32, #tpu.memory_space<vmem>>, vector<64x1xi32>,
      %c0_49 = arith.constant 0 : index
      %c0_50 = arith.constant 0 : index
      %69 = vector.load %arg8[%c0_49, %c0_50] : memref<64x1xf32, #tpu.memory_space<vmem>>, vector<64x1xf32>
      %c0_51 = arith.constant 0 : index
      %c0_52 = arith.constant 0 : index
      %70 = vector.load %arg9[%c0_51, %c0_52] : memref<64x1xf32, #tpu.memory_space<vmem>>, vector<64x1xf32>
      %71 = math.log %70 : vector<64x1xf32>
      %72 = arith.addf %69, %71 : vector<64x1xf32>
      %c0_53 = arith.constant 0 : index
      %c0_54 = arith.constant 0 : index
      %73 = vector.load %arg12[%c0_53, %c0_54] : memref<64x1xf32, #tpu.memory_space<vmem>>, vector<64x1xf32>
      %74 = arith.subf %72, %73 : vector<64x1xf32>
      %c0_i32_55 = arith.constant 0 : i32
      %75 = vector.broadcast %c0_i32_55 : i32 to vector<64x1xi32>
      %76 = arith.cmpi ne, %49, %75 : vector<64x1xi32>
      %77 = arith.extui %76 : vector<64x1xi1> to vector<64x1xi32>
      %78 = arith.sitofp %77 : vector<64x1xi32> to vector<64x1xf32>
      %c0_56 = arith.constant 0 : index
      %c0_57 = arith.constant 0 : index
      %79 = vector.load %arg13[%c0_56, %c0_57] : memref<1x1xf32, #tpu.memory_space<vmem>>, vector<1x1xf32>
      %80 = arith.mulf %74, %78 : vector<64x1xf32>
      %81 = vector.shape_cast %80 : vector<64x1xf32> to vector<1x64x1xf32>
      %cst_58 = arith.constant dense<0.000000e+00> : vector<1xf32>
      %82 = vector.multi_reduction <add>, %81, %cst_58 [1, 2] : vector<1x64x1xf32> to vector<1xf32>
      %83 = vector.shape_cast %82 : vector<1xf32> to vector<1x1x1xf32>
      %84 = vector.extract %83[0, 0, 0] : f32 from vector<1x1x1xf32>
      %85 = vector.broadcast %84 : f32 to vector<1x1xf32>
      %86 = arith.addf %79, %85 : vector<1x1xf32>
      %c0_59 = arith.constant 0 : index
      %c0_60 = arith.constant 0 : index
      %87 = vector.load %arg13[%c0_59, %c0_60] : memref<1x1xf32, #tpu.memory_space<vmem>>, vector<1x1xf32>
      tpu.vector_store %arg13[%c0_59, %c0_60], %86 {strides = array<i32>} : memref<1x1xf32, #tpu.memory_space<vmem>>, vector<1x1xf32>,
      %c0_61 = arith.constant 0 : index
      %c0_62 = arith.constant 0 : index
      %88 = vector.load %arg14[%c0_61, %c0_62] : memref<1x1xf32, #tpu.memory_space<vmem>>, vector<1x1xf32>
      %89 = vector.shape_cast %78 : vector<64x1xf32> to vector<1x64x1xf32>
      %cst_63 = arith.constant dense<0.000000e+00> : vector<1xf32>
      %90 = vector.multi_reduction <add>, %89, %cst_63 [1, 2] : vector<1x64x1xf32> to vector<1xf32>
      %91 = vector.shape_cast %90 : vector<1xf32> to vector<1x1x1xf32>
      %92 = vector.extract %91[0, 0, 0] : f32 from vector<1x1x1xf32>
      %93 = vector.broadcast %92 : f32 to vector<1x1xf32>
      %94 = arith.addf %88, %93 : vector<1x1xf32>
      %c0_64 = arith.constant 0 : index
      %c0_65 = arith.constant 0 : index
      %95 = vector.load %arg14[%c0_64, %c0_65] : memref<1x1xf32, #tpu.memory_space<vmem>>, vector<1x1xf32>
      tpu.vector_store %arg14[%c0_64, %c0_65], %94 {strides = array<i32>} : memref<1x1xf32, #tpu.memory_space<vmem>>, vector<1x1xf32>,
    } else {
    }
    %c0_i32_42 = arith.constant 0 : i32
    %62 = arith.cmpi eq, %arg0, %c0_i32_42 : i32
    %c0_i32_43 = arith.constant 0 : i32
    %63 = arith.cmpi eq, %arg1, %c0_i32_43 : i32
    %64 = arith.andi %62, %63 : i1
    %65 = arith.extui %64 : i1 to i32
    %c0_i32_44 = arith.constant 0 : i32
    %66 = arith.cmpi ne, %65, %c0_i32_44 : i32
    scf.if %66 {
      %c0_45 = arith.constant 0 : index
      %c0_46 = arith.constant 0 : index
      %67 = vector.load %arg13[%c0_45, %c0_46] : memref<1x1xf32, #tpu.memory_space<vmem>>, vector<1x1xf32>
      %c0_47 = arith.constant 0 : index
      %c0_48 = arith.constant 0 : index
      %68 = vector.load %arg14[%c0_47, %c0_48] : memref<1x1xf32, #tpu.memory_space<vmem>>, vector<1x1xf32>
      %69 = arith.divf %67, %68 : vector<1x1xf32>
      %c0_49 = arith.constant 0 : index
      %c0_50 = arith.constant 0 : index
      %70 = vector.load %arg6[%c0_49, %c0_50] : memref<1x1xf32, #tpu.memory_space<vmem>>, vector<1x1xf32>
      tpu.vector_store %arg6[%c0_49, %c0_50], %69 {strides = array<i32>} : memref<1x1xf32, #tpu.memory_space<vmem>>, vector<1x1xf32>,
    } else {
    }
    return
  }
  func.func @transform_0(%arg0: i32, %arg1: i32) -> (i32, i32) {
    %c0_i32 = arith.constant 0 : i32
    %c0_i32_0 = arith.constant 0 : i32
    return %arg0, %c0_i32 : i32, i32
  }
  func.func @transform_1(%arg0: i32, %arg1: i32) -> (i32, i32) {
    %c0_i32 = arith.constant 0 : i32
    %c0_i32_0 = arith.constant 0 : i32
    return %c0_i32, %arg1 : i32, i32
  }
  func.func @transform_2(%arg0: i32, %arg1: i32) -> (i32, i32) {
    %c0_i32 = arith.constant 0 : i32
    %c0_i32_0 = arith.constant 0 : i32
    return %c0_i32, %arg1 : i32, i32
  }
  func.func @transform_3(%arg0: i32, %arg1: i32) -> (i32, i32) {
    %c0_i32 = arith.constant 0 : i32
    %c0_i32_0 = arith.constant 0 : i32
    return %arg0, %c0_i32 : i32, i32
  }
  func.func @transform_4(%arg0: i32, %arg1: i32) -> (i32, i32) {
    %c0_i32 = arith.constant 0 : i32
    %c0_i32_0 = arith.constant 0 : i32
    %c0_i32_1 = arith.constant 0 : i32
    return %c0_i32, %c0_i32_0 : i32, i32
  }
  func.func @transform_5(%arg0: i32, %arg1: i32) -> (i32, i32) {
    %c0_i32 = arith.constant 0 : i32
    %c0_i32_0 = arith.constant 0 : i32
    return %arg0, %c0_i32 : i32, i32
  }
}

</mosaic_0001>

<llo_original>
// kernel: subword_elmo_forward.5
$region0: #{subword_elmo_forward.5}
  #allocation0 [shape = 'u32[]', space=smem, size = 0x4, offset = 0x4, fixed_abs, tag = 'smem constant byte address 0x4 - core index']
  #allocation1 [shape = 'u32[144,128]{1,0:T(1,128)}', space=vmem, size = 0x12000, scoped, tag = 'internal scratch']
  #allocation2 [shape = 'f32[64,512]{1,0:T(8,128)}', space=vmem, size = 0x20000, scoped, tag = 'scratch operand']
  %s0 = inlined_call_operand.vmem [shape: f32[64,128], index: 0, kind: input, shape index: {}]
  %s1 = inlined_call_operand.hbm [shape: f32[128,1024], index: 1, kind: input, shape index: {}]
  %s2 = inlined_call_operand.hbm [shape: f32[1,1024], index: 2, kind: input, shape index: {}]
  %s3 = inlined_call_operand.vmem [shape: f32[64,1024], index: 3, kind: output, shape index: {}]
  %s4 = sld [smem:[#allocation0]]
  $region80: #{subword_elmo_forward.5} parent=0
    _
  %s6 = ssub.s32 1, %s4
  %s7 = scalar_select 0, %s6, %s4
  $region1: #{subword_elmo_forward.5} parent=0
    #allocation3 [shape = 'u8[524288]{0}', space=vmem, size = 0x80000, scoped, tag = 'input window, operand 1']
    #allocation4 [shape = 's32[2]{0}', space=sflag, size = 0x8, scoped, tag = 'scoped memory for subword_elmo_forward.5']
    #allocation5 [shape = 'u8[4096]{0}', space=vmem, size = 0x1000, scoped, tag = 'input window, operand 2']
    #allocation6 [shape = 's32[2]{0}', space=sflag, size = 0x8, scoped, tag = 'scoped memory for subword_elmo_forward.5']
    #allocation7 [shape = 'u8[262144]{0}', space=vmem, size = 0x40000, scoped, tag = 'output window, operand 0']
    %8 = vsyncpa [#allocation4], 0
    %s9 = scalar_lea.sflag [#allocation4], 1
    %10 = vsyncpa %s9, 0
    %11 = vsyncpa [#allocation6], 0
    %s12 = scalar_lea.sflag [#allocation6], 1
    %13 = vsyncpa %s12, 0
    loop: start=0, step=1, limit=4
    $region2: #{subword_elmo_forward.5} parent=1 // loop_pre_header
      _
    $region3: #{subword_elmo_forward.5} parent=1 // loop_header
      %s15 = sphi 0, %s19
      %p16 = scmp.ge.s32.totalorder %s15, 4
      %s22 = sphi 0, %s41
      %s23 = sphi 0, %s37
      %s24 = sphi 0, %s33
      %s25 = sphi 0, %s22
      %s26 = sphi 0, %s23
      %s27 = sphi 0, %s24
      %s28 = sphi 0, %s25
      %s29 = sphi 0, %s26
      %s30 = sphi 0, %s27
      %s46 = sphi 0, %s48
      %s49 = sphi 0, %s46
      %s50 = sphi 0, %s49
      %s66 = sphi 0, %s50
      %s74 = sphi 0, %s76
      %s77 = sphi 0, %s74
      %s78 = sphi 0, %s77
      %s94 = sphi 0, %s78
      %s100 = sphi 0, %s102
      %s103 = sphi 0, %s100
      %s104 = sphi 0, %s103
      %s120 = sphi 0, %s104
      %s128 = sphi 0, %s130
      %s131 = sphi 0, %s128
      %s132 = sphi 0, %s131
      %s148 = sphi 0, %s132
    $region4: #{subword_elmo_forward.5} parent=1 // loop_header_branch
      %18 = sbr.rel (%p16) target = $region8
    $region5: #{subword_elmo_forward.5} parent=1 // loop_body
      %s20 = ssub.s32 %s15, 1
      %s21 = ssub.s32 %s15, 2
      %s31 = sadd.s32 1, %s24
      %p32 = scmp.ge.s32.totalorder %s31, 1
      %s33 = scalar_select %p32, 0, %s31
      %s34 = sadd.s32 1, %s23
      %s35 = scalar_select %p32, %s34, %s23
      %p36 = scmp.ge.s32.totalorder %s35, 2
      %s37 = scalar_select %p36, 0, %s35
      %s38 = sadd.s32 1, %s22
      %s39 = scalar_select %p36, %s38, %s22
      %p40 = scmp.ge.s32.totalorder %s39, 1
      %s41 = scalar_select %p40, 0, %s39
      %s42 = ssub.s32 %s22, %s41
      %s43 = ssub.s32 %s24, %s33
      %s44 = sor.u32 %s42, %s43
      %p45 = scmp.eq.s32.totalorder %s44, 0
      %s47 = sadd.s32 %s46, 1
      %s48 = scalar_select %p45, %s46, %s47
      %p51 = pneg %p45
      %p52 = scmp.eq.s32.totalorder %s15, 1
      %p53 = por %p51, %p52
      %p54 = scmp.ne.s32.totalorder %s46, %s49
      %p55 = scmp.eq.s32.totalorder %s15, 0
      %p56 = por %p54, %p55
      %p57 = scmp.ne.s32.totalorder %s46, %s49
      %p58 = scmp.eq.s32.totalorder %s20, 1
      %p59 = por %p57, %p58
      %p60 = scmp.ne.s32.totalorder %s49, %s50
      %p61 = scmp.eq.s32.totalorder %s20, 0
      %p62 = por %p60, %p61
      %p63 = scmp.ne.s32.totalorder %s49, %s50
      %p64 = scmp.eq.s32.totalorder %s21, 1
      %p65 = por %p63, %p64
      %p67 = scmp.ne.s32.totalorder %s50, %s66
      %p68 = scmp.eq.s32.totalorder %s21, 0
      %p69 = por %p67, %p68
      %s70 = ssub.s32 %s24, %s33
      %s71 = ssub.s32 %s23, %s37
      %s72 = sor.u32 %s70, %s71
      %p73 = scmp.eq.s32.totalorder %s72, 0
      %s75 = sadd.s32 %s74, 1
      %s76 = scalar_select %p73, %s74, %s75
      %p79 = pneg %p73
      %p80 = scmp.eq.s32.totalorder %s15, 1
      %p81 = por %p79, %p80
      %p82 = scmp.ne.s32.totalorder %s74, %s77
      %p83 = scmp.eq.s32.totalorder %s15, 0
      %p84 = por %p82, %p83
      %p85 = scmp.ne.s32.totalorder %s74, %s77
      %p86 = scmp.eq.s32.totalorder %s20, 1
      %p87 = por %p85, %p86
      %p88 = scmp.ne.s32.totalorder %s77, %s78
      %p89 = scmp.eq.s32.totalorder %s20, 0
      %p90 = por %p88, %p89
      %p91 = scmp.ne.s32.totalorder %s77, %s78
      %p92 = scmp.eq.s32.totalorder %s21, 1
      %p93 = por %p91, %p92
      %p95 = scmp.ne.s32.totalorder %s78, %s94
      %p96 = scmp.eq.s32.totalorder %s21, 0
      %p97 = por %p95, %p96
      %s98 = ssub.s32 %s23, %s37
      %p99 = scmp.eq.s32.totalorder %s98, 0
      %s101 = sadd.s32 %s100, 1
      %s102 = scalar_select %p99, %s100, %s101
      %p105 = pneg %p99
      %p106 = scmp.eq.s32.totalorder %s15, 1
      %p107 = por %p105, %p106
      %p108 = scmp.ne.s32.totalorder %s100, %s103
      %p109 = scmp.eq.s32.totalorder %s15, 0
      %p110 = por %p108, %p109
      %p111 = scmp.ne.s32.totalorder %s100, %s103
      %p112 = scmp.eq.s32.totalorder %s20, 1
      %p113 = por %p111, %p112
      %p114 = scmp.ne.s32.totalorder %s103, %s104
      %p115 = scmp.eq.s32.totalorder %s20, 0
      %p116 = por %p114, %p115
      %p117 = scmp.ne.s32.totalorder %s103, %s104
      %p118 = scmp.eq.s32.totalorder %s21, 1
      %p119 = por %p117, %p118
      %p121 = scmp.ne.s32.totalorder %s104, %s120
      %p122 = scmp.eq.s32.totalorder %s21, 0
      %p123 = por %p121, %p122
      %s124 = ssub.s32 %s22, %s41
      %s125 = ssub.s32 %s23, %s37
      %s126 = sor.u32 %s124, %s125
      %p127 = scmp.eq.s32.totalorder %s126, 0
      %s129 = sadd.s32 %s128, 1
      %s130 = scalar_select %p127, %s128, %s129
      %p133 = pneg %p127
      %p134 = scmp.eq.s32.totalorder %s15, 1
      %p135 = por %p133, %p134
      %p136 = scmp.ne.s32.totalorder %s128, %s131
      %p137 = scmp.eq.s32.totalorder %s15, 0
      %p138 = por %p136, %p137
      %p139 = scmp.ne.s32.totalorder %s128, %s131
      %p140 = scmp.eq.s32.totalorder %s20, 1
      %p141 = por %p139, %p140
      %p142 = scmp.ne.s32.totalorder %s131, %s132
      %p143 = scmp.eq.s32.totalorder %s20, 0
      %p144 = por %p142, %p143
      %p145 = scmp.ne.s32.totalorder %s131, %s132
      %p146 = scmp.eq.s32.totalorder %s21, 1
      %p147 = por %p145, %p146
      %p149 = scmp.ne.s32.totalorder %s132, %s148
      %p150 = scmp.eq.s32.totalorder %s21, 0
      %p151 = por %p149, %p150
      %p152 = scmp.le.s32.totalorder 1, %s15
      %p153 = scmp.lt.s32.totalorder %s15, 3
      %p154 = pnand %p152, %p153
      %p155 = pneg %p154
      // Predicated region
      $region9: #{subword_elmo_forward.5} parent=5 // pred_check
        _
      $region10: #{subword_elmo_forward.5} parent=5 // pred_check_branch
        %157 = sbr.rel (%p154) target = $region12
      $region11: #{subword_elmo_forward.5} parent=5 // pred_region
        %s158 = ssub.s32 %s15, 1
        // Predicated region
        $region13: #{subword_elmo_forward.5} parent=11 // pred_check
          %p159 = pneg %p62
        $region14: #{subword_elmo_forward.5} parent=11 // pred_check_branch
          %161 = sbr.rel (%p159) target = $region16
        $region15: #{subword_elmo_forward.5} parent=11 // pred_region
          %s162 = smul.u32 8, %s25
          %p163 = scmp.lt.s32.totalorder %s162, 7
          %s164 = scalar_select %p163, %s162, 7
          %p165 = scmp.lt.s32.totalorder %s27, 0
          %s166 = scalar_select %p165, %s27, 0
          %s167 = sadd.s32 %s166, %s164
          %s168 = smul.addr %s167, 8
          %s169 = scalar_lea.vmem %s0, %s168
          %s170 = smul.u32 8, %s25
        $region16: #{subword_elmo_forward.5} parent=11 // pred_fallthru
          _
      $region12: #{subword_elmo_forward.5} parent=5 // pred_fallthru
        _
      %p171 = scmp.lt.s32.totalorder %s15, 2
      // Predicated region
      $region17: #{subword_elmo_forward.5} parent=5 // pred_check
        %p172 = pneg %p171
      $region18: #{subword_elmo_forward.5} parent=5 // pred_check_branch
        %174 = sbr.rel (%p172) target = $region20
      $region19: #{subword_elmo_forward.5} parent=5 // pred_region
        // Predicated region
        $region21: #{subword_elmo_forward.5} parent=19 // pred_check
          %p175 = pneg %p84
        $region22: #{subword_elmo_forward.5} parent=19 // pred_check_branch
          %177 = sbr.rel (%p175) target = $region24
        $region23: #{subword_elmo_forward.5} parent=19 // pred_region
          %s178 = sand.u32 %s74, 1
          %s179 = scalar_lea.sflag [#allocation4], %s178
          %s180 = sand.u32 %s74, 1
          %s181 = smul.addr %s180, 512
          %s182 = scalar_lea.vmem [#allocation3], %s181
          %s183 = smul.u32 16, %s24
          %s184 = smul.u32 4, %s23
          %s186 = ssub.s32 8192, 8192
          %187 = vsyncadd %s179, %s186
          %s188 = smul.addr %s183, 8
          %s189 = sadd.s32 %s184, %s188
          %s190 = smul.addr %s189, 128
          %s191 = scalar_lea.hbm %s1, %s190
          %s192 = sshll.u32 %s182, 4
          %s193 = int_to_ptr.vmem [resolvable:$true] %s192
          %198 = dma.hbm_to_vmem [thread:$0]  %s191, 8192, %s193, %s179, 1024, 512, 32
        $region24: #{subword_elmo_forward.5} parent=19 // pred_fallthru
          _
        // Predicated region
        $region25: #{subword_elmo_forward.5} parent=19 // pred_check
          %p199 = pneg %p110
        $region26: #{subword_elmo_forward.5} parent=19 // pred_check_branch
          %201 = sbr.rel (%p199) target = $region28
        $region27: #{subword_elmo_forward.5} parent=19 // pred_region
          %s202 = sand.u32 %s100, 1
          %s203 = scalar_lea.sflag [#allocation6], %s202
          %s204 = sand.u32 %s100, 1
          %s205 = smul.addr %s204, 4
          %s206 = scalar_lea.vmem [#allocation5], %s205
          %s207 = smul.u32 4, %s23
          %s209 = ssub.s32 64, 64
          %210 = vsyncadd %s203, %s209
          %s211 = smul.addr %s207, 16
          %s212 = scalar_lea.hbm %s2, %s211
          %s214 = sshll.u32 %s206, 4
          %s215 = int_to_ptr.vmem [resolvable:$true] %s214
          %217 = dma.hbm_to_vmem [thread:$0]  %s212, 64, %s215, %s203
        $region28: #{subword_elmo_forward.5} parent=19 // pred_fallthru
          _
      $region20: #{subword_elmo_forward.5} parent=5 // pred_fallthru
        _
      %p218 = scmp.le.s32.totalorder 1, %s15
      %p219 = scmp.lt.s32.totalorder %s15, 3
      %p220 = pnand %p218, %p219
      %p221 = pneg %p220
      // Predicated region
      $region29: #{subword_elmo_forward.5} parent=5 // pred_check
        _
      $region30: #{subword_elmo_forward.5} parent=5 // pred_check_branch
        %223 = sbr.rel (%p220) target = $region32
      $region31: #{subword_elmo_forward.5} parent=5 // pred_region
        %s224 = ssub.s32 %s15, 1
        %s225 = sand.u32 %s77, 1
        %s226 = scalar_lea.sflag [#allocation4], %s225
        %s227 = sand.u32 %s77, 1
        %s228 = smul.addr %s227, 512
        %s229 = scalar_lea.vmem [#allocation3], %s228
        // Predicated region
        $region33: #{subword_elmo_forward.5} parent=31 // pred_check
          %p230 = pneg %p90
        $region34: #{subword_elmo_forward.5} parent=31 // pred_check_branch
          %232 = sbr.rel (%p230) target = $region36
        $region35: #{subword_elmo_forward.5} parent=31 // pred_region
          %233 = dma.done %s226, 8192
        $region36: #{subword_elmo_forward.5} parent=31 // pred_fallthru
          _
        %s234 = sand.u32 %s103, 1
        %s235 = scalar_lea.sflag [#allocation6], %s234
        %s236 = sand.u32 %s103, 1
        %s237 = smul.addr %s236, 4
        %s238 = scalar_lea.vmem [#allocation5], %s237
        // Predicated region
        $region37: #{subword_elmo_forward.5} parent=31 // pred_check
          %p239 = pneg %p116
        $region38: #{subword_elmo_forward.5} parent=31 // pred_check_branch
          %241 = sbr.rel (%p239) target = $region40
        $region39: #{subword_elmo_forward.5} parent=31 // pred_region
          %242 = dma.done %s235, 64
        $region40: #{subword_elmo_forward.5} parent=31 // pred_fallthru
          _
        %s243 = smul.u32 8, %s25
        %p244 = scmp.lt.s32.totalorder %s243, 7
        %s245 = scalar_select %p244, %s243, 7
        %p246 = scmp.lt.s32.totalorder %s27, 0
        %s247 = scalar_select %p246, %s27, 0
        %s248 = sadd.s32 %s247, %s245
        %s249 = smul.addr %s248, 8
        %s250 = scalar_lea.vmem %s0, %s249
        %p251 = pneg %p62
        %p252 = pneg %p59
        %s253 = sand.u32 %s77, 1
        %s254 = scalar_lea.sflag [#allocation4], %s253
        %s255 = sand.u32 %s77, 1
        %s256 = smul.addr %s255, 512
        %s257 = scalar_lea.vmem [#allocation3], %s256
        %p258 = pneg %p90
        %p259 = pneg %p87
        %s260 = sand.u32 %s103, 1
        %s261 = scalar_lea.sflag [#allocation6], %s260
        %s262 = sand.u32 %s103, 1
        %s263 = smul.addr %s262, 4
        %s264 = scalar_lea.vmem [#allocation5], %s263
        %p265 = pneg %p116
        %p266 = pneg %p113
        %p267 = pneg %p144
        %p268 = pneg %p141
        %s269 = sand.u32 %s131, 1
        %s270 = sand.u32 %s131, 1
        %s271 = smul.addr %s270, 256
        %s272 = scalar_lea.vmem [#allocation7], %s271
        %s273 = smul.u32 8, %s25
        %p274 = scmp.lt.s32.totalorder %s273, 7
        %s275 = scalar_select %p274, %s273, 7
        %p276 = scmp.lt.s32.totalorder %s27, 0
        %s277 = scalar_select %p276, %s27, 0
        %s278 = sadd.s32 %s277, %s275
        %s279 = smul.addr %s278, 8
        %s280 = scalar_lea.vmem %s0, %s279
        %s281 = smul.u32 8, %s25
        %s282 = smul.u32 16, %s27
        %s283 = smul.u32 4, %s26
        %s284 = smul.u32 4, %s26
        %s285 = smul.u32 8, %s25
        %s286 = smul.u32 4, %s26
        %p287 = scmp.eq.s32.totalorder %s27, 0
        // Predicated region
        $region41: #{subword_elmo_forward.5} parent=31 // pred_check
          %p288 = pneg %p287
        $region42: #{subword_elmo_forward.5} parent=31 // pred_check_branch
          %290 = sbr.rel (%p288) target = $region44
        $region43: #{subword_elmo_forward.5} parent=31 // pred_region
          %291 = vst [vmem:[#allocation2] sm:$0xff] 0.0
          %292 = vst [vmem:[#allocation2 + $0x8] sm:$0xff] 0.0
          %293 = vst [vmem:[#allocation2 + $0x10] sm:$0xff] 0.0
          %294 = vst [vmem:[#allocation2 + $0x18] sm:$0xff] 0.0
          %295 = vst [vmem:[#allocation2 + $0x20] sm:$0xff] 0.0
          %296 = vst [vmem:[#allocation2 + $0x28] sm:$0xff] 0.0
          %297 = vst [vmem:[#allocation2 + $0x30] sm:$0xff] 0.0
          %298 = vst [vmem:[#allocation2 + $0x38] sm:$0xff] 0.0
          %299 = vst [vmem:[#allocation2 + $0x40] sm:$0xff] 0.0
          %300 = vst [vmem:[#allocation2 + $0x48] sm:$0xff] 0.0
          %301 = vst [vmem:[#allocation2 + $0x50] sm:$0xff] 0.0
          %302 = vst [vmem:[#allocation2 + $0x58] sm:$0xff] 0.0
          %303 = vst [vmem:[#allocation2 + $0x60] sm:$0xff] 0.0
          %304 = vst [vmem:[#allocation2 + $0x68] sm:$0xff] 0.0
          %305 = vst [vmem:[#allocation2 + $0x70] sm:$0xff] 0.0
          %306 = vst [vmem:[#allocation2 + $0x78] sm:$0xff] 0.0
          %307 = vst [vmem:[#allocation2 + $0x80] sm:$0xff] 0.0
          %308 = vst [vmem:[#allocation2 + $0x88] sm:$0xff] 0.0
          %309 = vst [vmem:[#allocation2 + $0x90] sm:$0xff] 0.0
          %310 = vst [vmem:[#allocation2 + $0x98] sm:$0xff] 0.0
          %311 = vst [vmem:[#allocation2 + $0xa0] sm:$0xff] 0.0
          %312 = vst [vmem:[#allocation2 + $0xa8] sm:$0xff] 0.0
          %313 = vst [vmem:[#allocation2 + $0xb0] sm:$0xff] 0.0
          %314 = vst [vmem:[#allocation2 + $0xb8] sm:$0xff] 0.0
          %315 = vst [vmem:[#allocation2 + $0xc0] sm:$0xff] 0.0
          %316 = vst [vmem:[#allocation2 + $0xc8] sm:$0xff] 0.0
          %317 = vst [vmem:[#allocation2 + $0xd0] sm:$0xff] 0.0
          %318 = vst [vmem:[#allocation2 + $0xd8] sm:$0xff] 0.0
          %319 = vst [vmem:[#allocation2 + $0xe0] sm:$0xff] 0.0
          %320 = vst [vmem:[#allocation2 + $0xe8] sm:$0xff] 0.0
          %321 = vst [vmem:[#allocation2 + $0xf0] sm:$0xff] 0.0
          %322 = vst [vmem:[#allocation2 + $0xf8] sm:$0xff] 0.0
        $region44: #{subword_elmo_forward.5} parent=31 // pred_fallthru
          _
        %v323 = vld [vmem:[#allocation2] sm:$0xff]
        %v324 = vld [vmem:[#allocation2 + $0x8] sm:$0xff]
        %v325 = vld [vmem:[#allocation2 + $0x10] sm:$0xff]
        %v326 = vld [vmem:[#allocation2 + $0x18] sm:$0xff]
        %v327 = vld [vmem:[#allocation2 + $0x20] sm:$0xff]
        %v328 = vld [vmem:[#allocation2 + $0x28] sm:$0xff]
        %v329 = vld [vmem:[#allocation2 + $0x30] sm:$0xff]
        %v330 = vld [vmem:[#allocation2 + $0x38] sm:$0xff]
        %v331 = vld [vmem:[#allocation2 + $0x40] sm:$0xff]
        %v332 = vld [vmem:[#allocation2 + $0x48] sm:$0xff]
        %v333 = vld [vmem:[#allocation2 + $0x50] sm:$0xff]
        %v334 = vld [vmem:[#allocation2 + $0x58] sm:$0xff]
        %v335 = vld [vmem:[#allocation2 + $0x60] sm:$0xff]
        %v336 = vld [vmem:[#allocation2 + $0x68] sm:$0xff]
        %v337 = vld [vmem:[#allocation2 + $0x70] sm:$0xff]
        %v338 = vld [vmem:[#allocation2 + $0x78] sm:$0xff]
        %v339 = vld [vmem:[#allocation2 + $0x80] sm:$0xff]
        %v340 = vld [vmem:[#allocation2 + $0x88] sm:$0xff]
        %v341 = vld [vmem:[#allocation2 + $0x90] sm:$0xff]
        %v342 = vld [vmem:[#allocation2 + $0x98] sm:$0xff]
        %v343 = vld [vmem:[#allocation2 + $0xa0] sm:$0xff]
        %v344 = vld [vmem:[#allocation2 + $0xa8] sm:$0xff]
        %v345 = vld [vmem:[#allocation2 + $0xb0] sm:$0xff]
        %v346 = vld [vmem:[#allocation2 + $0xb8] sm:$0xff]
        %v347 = vld [vmem:[#allocation2 + $0xc0] sm:$0xff]
        %v348 = vld [vmem:[#allocation2 + $0xc8] sm:$0xff]
        %v349 = vld [vmem:[#allocation2 + $0xd0] sm:$0xff]
        %v350 = vld [vmem:[#allocation2 + $0xd8] sm:$0xff]
        %v351 = vld [vmem:[#allocation2 + $0xe0] sm:$0xff]
        %v352 = vld [vmem:[#allocation2 + $0xe8] sm:$0xff]
        %v353 = vld [vmem:[#allocation2 + $0xf0] sm:$0xff]
        %v354 = vld [vmem:[#allocation2 + $0xf8] sm:$0xff]
        %v355 = vld [vmem:[%s280] sm:$0xff]
        %v356 = vld [vmem:[%s280 + $0x8] sm:$0xff]
        %v357 = vld [vmem:[%s280 + $0x10] sm:$0xff]
        %v358 = vld [vmem:[%s280 + $0x18] sm:$0xff]
        %v359 = vld [vmem:[%s280 + $0x20] sm:$0xff]
        %v360 = vld [vmem:[%s280 + $0x28] sm:$0xff]
        %v361 = vld [vmem:[%s280 + $0x30] sm:$0xff]
        %v362 = vld [vmem:[%s280 + $0x38] sm:$0xff]
        %v363 = vld [vmem:[%s229] sm:$0xff]
        %v364 = vld [vmem:[%s229 + $0x8] sm:$0xff]
        %v365 = vld [vmem:[%s229 + $0x10] sm:$0xff]
        %v366 = vld [vmem:[%s229 + $0x18] sm:$0xff]
        %v367 = vld [vmem:[%s229 + $0x20] sm:$0xff]
        %v368 = vld [vmem:[%s229 + $0x28] sm:$0xff]
        %v369 = vld [vmem:[%s229 + $0x30] sm:$0xff]
        %v370 = vld [vmem:[%s229 + $0x38] sm:$0xff]
        %v371 = vld [vmem:[%s229 + $0x40] sm:$0xff]
        %v372 = vld [vmem:[%s229 + $0x48] sm:$0xff]
        %v373 = vld [vmem:[%s229 + $0x50] sm:$0xff]
        %v374 = vld [vmem:[%s229 + $0x58] sm:$0xff]
        %v375 = vld [vmem:[%s229 + $0x60] sm:$0xff]
        %v376 = vld [vmem:[%s229 + $0x68] sm:$0xff]
        %v377 = vld [vmem:[%s229 + $0x70] sm:$0xff]
        %v378 = vld [vmem:[%s229 + $0x78] sm:$0xff]
        %v379 = vld [vmem:[%s229 + $0x80] sm:$0xff]
        %v380 = vld [vmem:[%s229 + $0x88] sm:$0xff]
        %v381 = vld [vmem:[%s229 + $0x90] sm:$0xff]
        %v382 = vld [vmem:[%s229 + $0x98] sm:$0xff]
        %v383 = vld [vmem:[%s229 + $0xa0] sm:$0xff]
        %v384 = vld [vmem:[%s229 + $0xa8] sm:$0xff]
        %v385 = vld [vmem:[%s229 + $0xb0] sm:$0xff]
        %v386 = vld [vmem:[%s229 + $0xb8] sm:$0xff]
        %v387 = vld [vmem:[%s229 + $0xc0] sm:$0xff]
        %v388 = vld [vmem:[%s229 + $0xc8] sm:$0xff]
        %v389 = vld [vmem:[%s229 + $0xd0] sm:$0xff]
        %v390 = vld [vmem:[%s229 + $0xd8] sm:$0xff]
        %v391 = vld [vmem:[%s229 + $0xe0] sm:$0xff]
        %v392 = vld [vmem:[%s229 + $0xe8] sm:$0xff]
        %v393 = vld [vmem:[%s229 + $0xf0] sm:$0xff]
        %v394 = vld [vmem:[%s229 + $0xf8] sm:$0xff]
        %v395 = vld [vmem:[%s229 + $0x100] sm:$0xff]
        %v396 = vld [vmem:[%s229 + $0x108] sm:$0xff]
        %v397 = vld [vmem:[%s229 + $0x110] sm:$0xff]
        %v398 = vld [vmem:[%s229 + $0x118] sm:$0xff]
        %v399 = vld [vmem:[%s229 + $0x120] sm:$0xff]
        %v400 = vld [vmem:[%s229 + $0x128] sm:$0xff]
        %v401 = vld [vmem:[%s229 + $0x130] sm:$0xff]
        %v402 = vld [vmem:[%s229 + $0x138] sm:$0xff]
        %v403 = vld [vmem:[%s229 + $0x140] sm:$0xff]
        %v404 = vld [vmem:[%s229 + $0x148] sm:$0xff]
        %v405 = vld [vmem:[%s229 + $0x150] sm:$0xff]
        %v406 = vld [vmem:[%s229 + $0x158] sm:$0xff]
        %v407 = vld [vmem:[%s229 + $0x160] sm:$0xff]
        %v408 = vld [vmem:[%s229 + $0x168] sm:$0xff]
        %v409 = vld [vmem:[%s229 + $0x170] sm:$0xff]
        %v410 = vld [vmem:[%s229 + $0x178] sm:$0xff]
        %v411 = vld [vmem:[%s229 + $0x180] sm:$0xff]
        %v412 = vld [vmem:[%s229 + $0x188] sm:$0xff]
        %v413 = vld [vmem:[%s229 + $0x190] sm:$0xff]
        %v414 = vld [vmem:[%s229 + $0x198] sm:$0xff]
        %v415 = vld [vmem:[%s229 + $0x1a0] sm:$0xff]
        %v416 = vld [vmem:[%s229 + $0x1a8] sm:$0xff]
        %v417 = vld [vmem:[%s229 + $0x1b0] sm:$0xff]
        %v418 = vld [vmem:[%s229 + $0x1b8] sm:$0xff]
        %v419 = vld [vmem:[%s229 + $0x1c0] sm:$0xff]
        %v420 = vld [vmem:[%s229 + $0x1c8] sm:$0xff]
        %v421 = vld [vmem:[%s229 + $0x1d0] sm:$0xff]
        %v422 = vld [vmem:[%s229 + $0x1d8] sm:$0xff]
        %v423 = vld [vmem:[%s229 + $0x1e0] sm:$0xff]
        %v424 = vld [vmem:[%s229 + $0x1e8] sm:$0xff]
        %v425 = vld [vmem:[%s229 + $0x1f0] sm:$0xff]
        %v426 = vld [vmem:[%s229 + $0x1f8] sm:$0xff]
        %427 = vmatprep.subr.mxu0 %v364
        %428 = vmatpush1.msra.mxu0 %v363
        %429 = vmatprep.subr.mxu0 %v368
        %430 = vmatpush1.msra.mxu0 %v367
        %431 = vmatprep.subr.mxu0 %v372
        %432 = vmatpush1.msra.mxu0 %v371
        %433 = vmatprep.subr.mxu0 %v376
        %434 = vmatpush1.msra.mxu0 %v375
        %435 = vmatprep.subr.mxu0 %v380
        %436 = vmatpush1.msra.mxu0 %v379
        %437 = vmatprep.subr.mxu0 %v384
        %438 = vmatpush1.msra.mxu0 %v383
        %439 = vmatprep.subr.mxu0 %v388
        %440 = vmatpush1.msra.mxu0 %v387
        %441 = vmatprep.subr.mxu0 %v392
        %442 = vmatpush1.msra.mxu0 %v391
        %443 = vmatprep.subr.mxu0 %v396
        %444 = vmatpush1.msra.mxu0 %v395
        %445 = vmatprep.subr.mxu0 %v400
        %446 = vmatpush1.msra.mxu0 %v399
        %447 = vmatprep.subr.mxu0 %v404
        %448 = vmatpush1.msra.mxu0 %v403
        %449 = vmatprep.subr.mxu0 %v408
        %450 = vmatpush1.msra.mxu0 %v407
        %451 = vmatprep.subr.mxu0 %v412
        %452 = vmatpush1.msra.mxu0 %v411
        %453 = vmatprep.subr.mxu0 %v416
        %454 = vmatpush1.msra.mxu0 %v415
        %455 = vmatprep.subr.mxu0 %v420
        %456 = vmatpush1.msra.mxu0 %v419
        %457 = vmatprep.subr.mxu0 %v424
        %458 = vmatpush1.msra.mxu0 %v423
        %459 = vmatprep.subr.mxu0 0.0
        %460 = vmatpush1.msra.mxu0 0.0
        %461 = vmatprep.subr.mxu0 0.0
        %462 = vmatpush1.msra.mxu0 0.0
        %463 = vmatprep.subr.mxu0 0.0
        %464 = vmatpush1.msra.mxu0 0.0
        %465 = vmatprep.subr.mxu0 0.0
        %466 = vmatpush1.msra.mxu0 0.0
        %467 = vmatprep.subr.mxu0 0.0
        %468 = vmatpush1.msra.mxu0 0.0
        %469 = vmatprep.subr.mxu0 0.0
        %470 = vmatpush1.msra.mxu0 0.0
        %471 = vmatprep.subr.mxu0 0.0
        %472 = vmatpush1.msra.mxu0 0.0
        %473 = vmatprep.subr.mxu0 0.0
        %474 = vmatpush1.msra.mxu0 0.0
        %475 = vmatprep.subr.mxu0 0.0
        %476 = vmatpush1.msra.mxu0 0.0
        %477 = vmatprep.subr.mxu0 0.0
        %478 = vmatpush1.msra.mxu0 0.0
        %479 = vmatprep.subr.mxu0 0.0
        %480 = vmatpush1.msra.mxu0 0.0
        %481 = vmatprep.subr.mxu0 0.0
        %482 = vmatpush1.msra.mxu0 0.0
        %483 = vmatprep.subr.mxu0 0.0
        %484 = vmatpush1.msra.mxu0 0.0
        %485 = vmatprep.subr.mxu0 0.0
        %486 = vmatpush1.msra.mxu0 0.0
        %487 = vmatprep.subr.mxu0 0.0
        %488 = vmatpush1.msra.mxu0 0.0
        %489 = vmatprep.subr.mxu0 0.0
        %490 = vmatpush1.msra.mxu0 0.0
        %491 = vmatprep.mubr.f32.mxu0 0.0
        %492 = vmatmul.mubr.f32.gmra.mrb[0].mxu0 %v355
        %v493 = vpop.f32.mrb[0].mxu0
        %v494 = vadd.f32 0.0, %v493
        %v495 = vpop.f32.mrb[0].mxu0
        %v496 = vadd.f32 0.0, %v495
        %497 = vmatprep.mubr.f32.mxu0 0.0
        %498 = vmatmul.mubr.f32.gmra.mrb[0].mxu0 %v356
        %v499 = vpop.f32.mrb[0].mxu0
        %v500 = vadd.f32 0.0, %v499
        %v501 = vpop.f32.mrb[0].mxu0
        %v502 = vadd.f32 0.0, %v501
        %503 = vmatprep.mubr.f32.mxu0 0.0
        %504 = vmatmul.mubr.f32.gmra.mrb[0].mxu0 %v357
        %v505 = vpop.f32.mrb[0].mxu0
        %v506 = vadd.f32 0.0, %v505
        %v507 = vpop.f32.mrb[0].mxu0
        %v508 = vadd.f32 0.0, %v507
        %509 = vmatprep.mubr.f32.mxu0 0.0
        %510 = vmatmul.mubr.f32.gmra.mrb[0].mxu0 %v358
        %v511 = vpop.f32.mrb[0].mxu0
        %v512 = vadd.f32 0.0, %v511
        %v513 = vpop.f32.mrb[0].mxu0
        %v514 = vadd.f32 0.0, %v513
        %515 = vmatprep.mubr.f32.mxu0 0.0
        %516 = vmatmul.mubr.f32.gmra.mrb[0].mxu0 %v359
        %v517 = vpop.f32.mrb[0].mxu0
        %v518 = vadd.f32 0.0, %v517
        %v519 = vpop.f32.mrb[0].mxu0
        %v520 = vadd.f32 0.0, %v519
        %521 = vmatprep.mubr.f32.mxu0 0.0
        %522 = vmatmul.mubr.f32.gmra.mrb[0].mxu0 %v360
        %v523 = vpop.f32.mrb[0].mxu0
        %v524 = vadd.f32 0.0, %v523
        %v525 = vpop.f32.mrb[0].mxu0
        %v526 = vadd.f32 0.0, %v525
        %527 = vmatprep.mubr.f32.mxu0 0.0
        %528 = vmatmul.mubr.f32.gmra.mrb[0].mxu0 %v361
        %v529 = vpop.f32.mrb[0].mxu0
        %v530 = vadd.f32 0.0, %v529
        %v531 = vpop.f32.mrb[0].mxu0
        %v532 = vadd.f32 0.0, %v531
        %533 = vmatprep.mubr.f32.mxu0 0.0
        %534 = vmatmul.mubr.f32.gmra.mrb[0].mxu0 %v362
        %v535 = vpop.f32.mrb[0].mxu0
        %v536 = vadd.f32 0.0, %v535
        %v537 = vpop.f32.mrb[0].mxu0
        %v538 = vadd.f32 0.0, %v537
        %539 = vdwg.mxu0
        %540 = vmatprep.subr.mxu0 %v366
        %541 = vmatpush1.msra.mxu0 %v365
        %542 = vmatprep.subr.mxu0 %v370
        %543 = vmatpush1.msra.mxu0 %v369
        %544 = vmatprep.subr.mxu0 %v374
        %545 = vmatpush1.msra.mxu0 %v373
        %546 = vmatprep.subr.mxu0 %v378
        %547 = vmatpush1.msra.mxu0 %v377
        %548 = vmatprep.subr.mxu0 %v382
        %549 = vmatpush1.msra.mxu0 %v381
        %550 = vmatprep.subr.mxu0 %v386
        %551 = vmatpush1.msra.mxu0 %v385
        %552 = vmatprep.subr.mxu0 %v390
        %553 = vmatpush1.msra.mxu0 %v389
        %554 = vmatprep.subr.mxu0 %v394
        %555 = vmatpush1.msra.mxu0 %v393
        %556 = vmatprep.subr.mxu0 %v398
        %557 = vmatpush1.msra.mxu0 %v397
        %558 = vmatprep.subr.mxu0 %v402
        %559 = vmatpush1.msra.mxu0 %v401
        %560 = vmatprep.subr.mxu0 %v406
        %561 = vmatpush1.msra.mxu0 %v405
        %562 = vmatprep.subr.mxu0 %v410
        %563 = vmatpush1.msra.mxu0 %v409
        %564 = vmatprep.subr.mxu0 %v414
        %565 = vmatpush1.msra.mxu0 %v413
        %566 = vmatprep.subr.mxu0 %v418
        %567 = vmatpush1.msra.mxu0 %v417
        %568 = vmatprep.subr.mxu0 %v422
        %569 = vmatpush1.msra.mxu0 %v421
        %570 = vmatprep.subr.mxu0 %v426
        %571 = vmatpush1.msra.mxu0 %v425
        %572 = vmatprep.subr.mxu0 0.0
        %573 = vmatpush1.msra.mxu0 0.0
        %574 = vmatprep.subr.mxu0 0.0
        %575 = vmatpush1.msra.mxu0 0.0
        %576 = vmatprep.subr.mxu0 0.0
        %577 = vmatpush1.msra.mxu0 0.0
        %578 = vmatprep.subr.mxu0 0.0
        %579 = vmatpush1.msra.mxu0 0.0
        %580 = vmatprep.subr.mxu0 0.0
        %581 = vmatpush1.msra.mxu0 0.0
        %582 = vmatprep.subr.mxu0 0.0
        %583 = vmatpush1.msra.mxu0 0.0
        %584 = vmatprep.subr.mxu0 0.0
        %585 = vmatpush1.msra.mxu0 0.0
        %586 = vmatprep.subr.mxu0 0.0
        %587 = vmatpush1.msra.mxu0 0.0
        %588 = vmatprep.subr.mxu0 0.0
        %589 = vmatpush1.msra.mxu0 0.0
        %590 = vmatprep.subr.mxu0 0.0
        %591 = vmatpush1.msra.mxu0 0.0
        %592 = vmatprep.subr.mxu0 0.0
        %593 = vmatpush1.msra.mxu0 0.0
        %594 = vmatprep.subr.mxu0 0.0
        %595 = vmatpush1.msra.mxu0 0.0
        %596 = vmatprep.subr.mxu0 0.0
        %597 = vmatpush1.msra.mxu0 0.0
        %598 = vmatprep.subr.mxu0 0.0
        %599 = vmatpush1.msra.mxu0 0.0
        %600 = vmatprep.subr.mxu0 0.0
        %601 = vmatpush1.msra.mxu0 0.0
        %602 = vmatprep.subr.mxu0 0.0
        %603 = vmatpush1.msra.mxu0 0.0
        %604 = vmatprep.mubr.f32.mxu0 0.0
        %605 = vmatmul.mubr.f32.gmra.mrb[0].mxu0 %v355
        %v606 = vpop.f32.mrb[0].mxu0
        %v607 = vadd.f32 0.0, %v606
        %v608 = vpop.f32.mrb[0].mxu0
        %v609 = vadd.f32 0.0, %v608
        %610 = vmatprep.mubr.f32.mxu0 0.0
        %611 = vmatmul.mubr.f32.gmra.mrb[0].mxu0 %v356
        %v612 = vpop.f32.mrb[0].mxu0
        %v613 = vadd.f32 0.0, %v612
        %v614 = vpop.f32.mrb[0].mxu0
        %v615 = vadd.f32 0.0, %v614
        %616 = vmatprep.mubr.f32.mxu0 0.0
        %617 = vmatmul.mubr.f32.gmra.mrb[0].mxu0 %v357
        %v618 = vpop.f32.mrb[0].mxu0
        %v619 = vadd.f32 0.0, %v618
        %v620 = vpop.f32.mrb[0].mxu0
        %v621 = vadd.f32 0.0, %v620
        %622 = vmatprep.mubr.f32.mxu0 0.0
        %623 = vmatmul.mubr.f32.gmra.mrb[0].mxu0 %v358
        %v624 = vpop.f32.mrb[0].mxu0
        %v625 = vadd.f32 0.0, %v624
        %v626 = vpop.f32.mrb[0].mxu0
        %v627 = vadd.f32 0.0, %v626
        %628 = vmatprep.mubr.f32.mxu0 0.0
        %629 = vmatmul.mubr.f32.gmra.mrb[0].mxu0 %v359
        %v630 = vpop.f32.mrb[0].mxu0
        %v631 = vadd.f32 0.0, %v630
        %v632 = vpop.f32.mrb[0].mxu0
        %v633 = vadd.f32 0.0, %v632
        %634 = vmatprep.mubr.f32.mxu0 0.0
        %635 = vmatmul.mubr.f32.gmra.mrb[0].mxu0 %v360
        %v636 = vpop.f32.mrb[0].mxu0
        %v637 = vadd.f32 0.0, %v636
        %v638 = vpop.f32.mrb[0].mxu0
        %v639 = vadd.f32 0.0, %v638
        %640 = vmatprep.mubr.f32.mxu0 0.0
        %641 = vmatmul.mubr.f32.gmra.mrb[0].mxu0 %v361
        %v642 = vpop.f32.mrb[0].mxu0
        %v643 = vadd.f32 0.0, %v642
        %v644 = vpop.f32.mrb[0].mxu0
        %v645 = vadd.f32 0.0, %v644
        %646 = vmatprep.mubr.f32.mxu0 0.0
        %647 = vmatmul.mubr.f32.gmra.mrb[0].mxu0 %v362
        %v648 = vpop.f32.mrb[0].mxu0
        %v649 = vadd.f32 0.0, %v648
        %v650 = vpop.f32.mrb[0].mxu0
        %v651 = vadd.f32 0.0, %v650
        %652 = vdwg.mxu0
        %v653 = vadd.f32 %v323, %v494
        %v654 = vadd.f32 %v324, %v496
        %v655 = vadd.f32 %v325, %v607
        %v656 = vadd.f32 %v326, %v609
        %v657 = vadd.f32 %v327, %v500
        %v658 = vadd.f32 %v328, %v502
        %v659 = vadd.f32 %v329, %v613
        %v660 = vadd.f32 %v330, %v615
        %v661 = vadd.f32 %v331, %v506
        %v662 = vadd.f32 %v332, %v508
        %v663 = vadd.f32 %v333, %v619
        %v664 = vadd.f32 %v334, %v621
        %v665 = vadd.f32 %v335, %v512
        %v666 = vadd.f32 %v336, %v514
        %v667 = vadd.f32 %v337, %v625
        %v668 = vadd.f32 %v338, %v627
        %v669 = vadd.f32 %v339, %v518
        %v670 = vadd.f32 %v340, %v520
        %v671 = vadd.f32 %v341, %v631
        %v672 = vadd.f32 %v342, %v633
        %v673 = vadd.f32 %v343, %v524
        %v674 = vadd.f32 %v344, %v526
        %v675 = vadd.f32 %v345, %v637
        %v676 = vadd.f32 %v346, %v639
        %v677 = vadd.f32 %v347, %v530
        %v678 = vadd.f32 %v348, %v532
        %v679 = vadd.f32 %v349, %v643
        %v680 = vadd.f32 %v350, %v645
        %v681 = vadd.f32 %v351, %v536
        %v682 = vadd.f32 %v352, %v538
        %v683 = vadd.f32 %v353, %v649
        %v684 = vadd.f32 %v354, %v651
        %685 = vst [vmem:[#allocation2] sm:$0xff] %v653
        %686 = vst [vmem:[#allocation2 + $0x8] sm:$0xff] %v654
        %687 = vst [vmem:[#allocation2 + $0x10] sm:$0xff] %v655
        %688 = vst [vmem:[#allocation2 + $0x18] sm:$0xff] %v656
        %689 = vst [vmem:[#allocation2 + $0x20] sm:$0xff] %v657
        %690 = vst [vmem:[#allocation2 + $0x28] sm:$0xff] %v658
        %691 = vst [vmem:[#allocation2 + $0x30] sm:$0xff] %v659
        %692 = vst [vmem:[#allocation2 + $0x38] sm:$0xff] %v660
        %693 = vst [vmem:[#allocation2 + $0x40] sm:$0xff] %v661
        %694 = vst [vmem:[#allocation2 + $0x48] sm:$0xff] %v662
        %695 = vst [vmem:[#allocation2 + $0x50] sm:$0xff] %v663
        %696 = vst [vmem:[#allocation2 + $0x58] sm:$0xff] %v664
        %697 = vst [vmem:[#allocation2 + $0x60] sm:$0xff] %v665
        %698 = vst [vmem:[#allocation2 + $0x68] sm:$0xff] %v666
        %699 = vst [vmem:[#allocation2 + $0x70] sm:$0xff] %v667
        %700 = vst [vmem:[#allocation2 + $0x78] sm:$0xff] %v668
        %701 = vst [vmem:[#allocation2 + $0x80] sm:$0xff] %v669
        %702 = vst [vmem:[#allocation2 + $0x88] sm:$0xff] %v670
        %703 = vst [vmem:[#allocation2 + $0x90] sm:$0xff] %v671
        %704 = vst [vmem:[#allocation2 + $0x98] sm:$0xff] %v672
        %705 = vst [vmem:[#allocation2 + $0xa0] sm:$0xff] %v673
        %706 = vst [vmem:[#allocation2 + $0xa8] sm:$0xff] %v674
        %707 = vst [vmem:[#allocation2 + $0xb0] sm:$0xff] %v675
        %708 = vst [vmem:[#allocation2 + $0xb8] sm:$0xff] %v676
        %709 = vst [vmem:[#allocation2 + $0xc0] sm:$0xff] %v677
        %710 = vst [vmem:[#allocation2 + $0xc8] sm:$0xff] %v678
        %711 = vst [vmem:[#allocation2 + $0xd0] sm:$0xff] %v679
        %712 = vst [vmem:[#allocation2 + $0xd8] sm:$0xff] %v680
        %713 = vst [vmem:[#allocation2 + $0xe0] sm:$0xff] %v681
        %714 = vst [vmem:[#allocation2 + $0xe8] sm:$0xff] %v682
        %715 = vst [vmem:[#allocation2 + $0xf0] sm:$0xff] %v683
        %716 = vst [vmem:[#allocation2 + $0xf8] sm:$0xff] %v684
        // Predicated region
        $region45: #{subword_elmo_forward.5} parent=31 // pred_check
          %p717 = pneg %p287
        $region46: #{subword_elmo_forward.5} parent=31 // pred_check_branch
          %719 = sbr.rel (%p717) target = $region48
        $region47: #{subword_elmo_forward.5} parent=31 // pred_region
          %v720 = vld [vmem:[#allocation2] sm:$0xff]
          %v721 = vld [vmem:[#allocation2 + $0x8] sm:$0xff]
          %v722 = vld [vmem:[#allocation2 + $0x10] sm:$0xff]
          %v723 = vld [vmem:[#allocation2 + $0x18] sm:$0xff]
          %v724 = vld [vmem:[#allocation2 + $0x20] sm:$0xff]
          %v725 = vld [vmem:[#allocation2 + $0x28] sm:$0xff]
          %v726 = vld [vmem:[#allocation2 + $0x30] sm:$0xff]
          %v727 = vld [vmem:[#allocation2 + $0x38] sm:$0xff]
          %v728 = vld [vmem:[#allocation2 + $0x40] sm:$0xff]
          %v729 = vld [vmem:[#allocation2 + $0x48] sm:$0xff]
          %v730 = vld [vmem:[#allocation2 + $0x50] sm:$0xff]
          %v731 = vld [vmem:[#allocation2 + $0x58] sm:$0xff]
          %v732 = vld [vmem:[#allocation2 + $0x60] sm:$0xff]
          %v733 = vld [vmem:[#allocation2 + $0x68] sm:$0xff]
          %v734 = vld [vmem:[#allocation2 + $0x70] sm:$0xff]
          %v735 = vld [vmem:[#allocation2 + $0x78] sm:$0xff]
          %v736 = vld [vmem:[#allocation2 + $0x80] sm:$0xff]
          %v737 = vld [vmem:[#allocation2 + $0x88] sm:$0xff]
          %v738 = vld [vmem:[#allocation2 + $0x90] sm:$0xff]
          %v739 = vld [vmem:[#allocation2 + $0x98] sm:$0xff]
          %v740 = vld [vmem:[#allocation2 + $0xa0] sm:$0xff]
          %v741 = vld [vmem:[#allocation2 + $0xa8] sm:$0xff]
          %v742 = vld [vmem:[#allocation2 + $0xb0] sm:$0xff]
          %v743 = vld [vmem:[#allocation2 + $0xb8] sm:$0xff]
          %v744 = vld [vmem:[#allocation2 + $0xc0] sm:$0xff]
          %v745 = vld [vmem:[#allocation2 + $0xc8] sm:$0xff]
          %v746 = vld [vmem:[#allocation2 + $0xd0] sm:$0xff]
          %v747 = vld [vmem:[#allocation2 + $0xd8] sm:$0xff]
          %v748 = vld [vmem:[#allocation2 + $0xe0] sm:$0xff]
          %v749 = vld [vmem:[#allocation2 + $0xe8] sm:$0xff]
          %v750 = vld [vmem:[#allocation2 + $0xf0] sm:$0xff]
          %v751 = vld [vmem:[#allocation2 + $0xf8] sm:$0xff]
          %v752 = vld [vmem:[%s238] sm:$0xf]
          %v754 = vlaneseq
          %v755 = vshrl.u32 %v754, 7
          %v756 = vsub.s32 0, %v755
          %v757 = vrot.slane %v752, %v756
          %v758 = vlaneseq
          %v759 = vshrl.u32 %v758, 7
          %v760 = vsub.s32 1, %v759
          %v761 = vrot.slane %v752, %v760
          %v762 = vlaneseq
          %v763 = vshrl.u32 %v762, 7
          %v764 = vsub.s32 2, %v763
          %v765 = vrot.slane %v752, %v764
          %v766 = vlaneseq
          %v767 = vshrl.u32 %v766, 7
          %v768 = vsub.s32 3, %v767
          %v769 = vrot.slane %v752, %v768
          %v774 = vadd.f32 %v720, %v757
          %v775 = vadd.f32 %v721, %v761
          %v776 = vadd.f32 %v722, %v765
          %v777 = vadd.f32 %v723, %v769
          %v778 = vadd.f32 %v724, %v757
          %v779 = vadd.f32 %v725, %v761
          %v780 = vadd.f32 %v726, %v765
          %v781 = vadd.f32 %v727, %v769
          %v782 = vadd.f32 %v728, %v757
          %v783 = vadd.f32 %v729, %v761
          %v784 = vadd.f32 %v730, %v765
          %v785 = vadd.f32 %v731, %v769
          %v786 = vadd.f32 %v732, %v757
          %v787 = vadd.f32 %v733, %v761
          %v788 = vadd.f32 %v734, %v765
          %v789 = vadd.f32 %v735, %v769
          %v790 = vadd.f32 %v736, %v757
          %v791 = vadd.f32 %v737, %v761
          %v792 = vadd.f32 %v738, %v765
          %v793 = vadd.f32 %v739, %v769
          %v794 = vadd.f32 %v740, %v757
          %v795 = vadd.f32 %v741, %v761
          %v796 = vadd.f32 %v742, %v765
          %v797 = vadd.f32 %v743, %v769
          %v798 = vadd.f32 %v744, %v757
          %v799 = vadd.f32 %v745, %v761
          %v800 = vadd.f32 %v746, %v765
          %v801 = vadd.f32 %v747, %v769
          %v802 = vadd.f32 %v748, %v757
          %v803 = vadd.f32 %v749, %v761
          %v804 = vadd.f32 %v750, %v765
          %v805 = vadd.f32 %v751, %v769
          %806 = vst [vmem:[%s272] sm:$0xff] %v774
          %807 = vst [vmem:[%s272 + $0x8] sm:$0xff] %v775
          %808 = vst [vmem:[%s272 + $0x10] sm:$0xff] %v776
          %809 = vst [vmem:[%s272 + $0x18] sm:$0xff] %v777
          %810 = vst [vmem:[%s272 + $0x20] sm:$0xff] %v778
          %811 = vst [vmem:[%s272 + $0x28] sm:$0xff] %v779
          %812 = vst [vmem:[%s272 + $0x30] sm:$0xff] %v780
          %813 = vst [vmem:[%s272 + $0x38] sm:$0xff] %v781
          %814 = vst [vmem:[%s272 + $0x40] sm:$0xff] %v782
          %815 = vst [vmem:[%s272 + $0x48] sm:$0xff] %v783
          %816 = vst [vmem:[%s272 + $0x50] sm:$0xff] %v784
          %817 = vst [vmem:[%s272 + $0x58] sm:$0xff] %v785
          %818 = vst [vmem:[%s272 + $0x60] sm:$0xff] %v786
          %819 = vst [vmem:[%s272 + $0x68] sm:$0xff] %v787
          %820 = vst [vmem:[%s272 + $0x70] sm:$0xff] %v788
          %821 = vst [vmem:[%s272 + $0x78] sm:$0xff] %v789
          %822 = vst [vmem:[%s272 + $0x80] sm:$0xff] %v790
          %823 = vst [vmem:[%s272 + $0x88] sm:$0xff] %v791
          %824 = vst [vmem:[%s272 + $0x90] sm:$0xff] %v792
          %825 = vst [vmem:[%s272 + $0x98] sm:$0xff] %v793
          %826 = vst [vmem:[%s272 + $0xa0] sm:$0xff] %v794
          %827 = vst [vmem:[%s272 + $0xa8] sm:$0xff] %v795
          %828 = vst [vmem:[%s272 + $0xb0] sm:$0xff] %v796
          %829 = vst [vmem:[%s272 + $0xb8] sm:$0xff] %v797
          %830 = vst [vmem:[%s272 + $0xc0] sm:$0xff] %v798
          %831 = vst [vmem:[%s272 + $0xc8] sm:$0xff] %v799
          %832 = vst [vmem:[%s272 + $0xd0] sm:$0xff] %v800
          %833 = vst [vmem:[%s272 + $0xd8] sm:$0xff] %v801
          %834 = vst [vmem:[%s272 + $0xe0] sm:$0xff] %v802
          %835 = vst [vmem:[%s272 + $0xe8] sm:$0xff] %v803
          %836 = vst [vmem:[%s272 + $0xf0] sm:$0xff] %v804
          %837 = vst [vmem:[%s272 + $0xf8] sm:$0xff] %v805
        $region48: #{subword_elmo_forward.5} parent=31 // pred_fallthru
          _
        %s838 = sand.u32 %s131, 1
        %s839 = sand.u32 %s131, 1
        %s840 = smul.addr %s839, 256
        %s841 = scalar_lea.vmem [#allocation7], %s840
        // Predicated region
        $region49: #{subword_elmo_forward.5} parent=31 // pred_check
          %p842 = pneg %p141
        $region50: #{subword_elmo_forward.5} parent=31 // pred_check_branch
          %844 = sbr.rel (%p842) target = $region52
        $region51: #{subword_elmo_forward.5} parent=31 // pred_region
          %s845 = smul.u32 8, %s25
          %s846 = smul.u32 4, %s26
          %s847 = smul.addr %s845, 8
          %s848 = sadd.s32 %s846, %s847
          %s849 = smul.addr %s848, 8
          %s850 = scalar_lea.vmem %s3, %s849
          // Predicated region
          $region53: #{subword_elmo_forward.5} parent=51 // pred_check
            _
          $region54: #{subword_elmo_forward.5} parent=51 // pred_check_branch
            %852 = sbr.rel (0) target = $region56
          $region55: #{subword_elmo_forward.5} parent=51 // pred_region
            // Predicated region
            $region57: #{subword_elmo_forward.5} parent=55 // pred_check
              _
            $region58: #{subword_elmo_forward.5} parent=55 // pred_check_branch
              %854 = sbr.rel (0) target = $region60
            $region59: #{subword_elmo_forward.5} parent=55 // pred_region
              loop: start=0, step=1, limit=1
              $region61: #{subword_elmo_forward.5} parent=59 // loop_pre_header
                _
              $region62: #{subword_elmo_forward.5} parent=59 // loop_header
                %s856 = sphi 0, %s860
                %p857 = scmp.ge.s32.totalorder %s856, 1
                %s861 = sphi %s841, %s841
                %s862 = sphi %s850, %s850
              $region63: #{subword_elmo_forward.5} parent=59 // loop_header_branch
                %859 = sbr.rel (%p857) target = $region67
              $region64: #{subword_elmo_forward.5} parent=59 // loop_body
                %v863 = vld [vmem:[%s861] sm:$0xff]
                %864 = vst [vmem:[%s862] sm:$0xff] %v863
                %v865 = vld [vmem:[%s861 + $0x8] sm:$0xff]
                %866 = vst [vmem:[%s862 + $0x8] sm:$0xff] %v865
                %v867 = vld [vmem:[%s861 + $0x10] sm:$0xff]
                %868 = vst [vmem:[%s862 + $0x10] sm:$0xff] %v867
                %v869 = vld [vmem:[%s861 + $0x18] sm:$0xff]
                %870 = vst [vmem:[%s862 + $0x18] sm:$0xff] %v869
                %v871 = vld [vmem:[%s861 + $0x20] sm:$0xff]
                %872 = vst [vmem:[%s862 + $0x40] sm:$0xff] %v871
                %v873 = vld [vmem:[%s861 + $0x28] sm:$0xff]
                %874 = vst [vmem:[%s862 + $0x48] sm:$0xff] %v873
                %v875 = vld [vmem:[%s861 + $0x30] sm:$0xff]
                %876 = vst [vmem:[%s862 + $0x50] sm:$0xff] %v875
                %v877 = vld [vmem:[%s861 + $0x38] sm:$0xff]
                %878 = vst [vmem:[%s862 + $0x58] sm:$0xff] %v877
                %v879 = vld [vmem:[%s861 + $0x40] sm:$0xff]
                %880 = vst [vmem:[%s862 + $0x80] sm:$0xff] %v879
                %v881 = vld [vmem:[%s861 + $0x48] sm:$0xff]
                %882 = vst [vmem:[%s862 + $0x88] sm:$0xff] %v881
                %v883 = vld [vmem:[%s861 + $0x50] sm:$0xff]
                %884 = vst [vmem:[%s862 + $0x90] sm:$0xff] %v883
                %v885 = vld [vmem:[%s861 + $0x58] sm:$0xff]
                %886 = vst [vmem:[%s862 + $0x98] sm:$0xff] %v885
                %v887 = vld [vmem:[%s861 + $0x60] sm:$0xff]
                %888 = vst [vmem:[%s862 + $0xc0] sm:$0xff] %v887
                %v889 = vld [vmem:[%s861 + $0x68] sm:$0xff]
                %890 = vst [vmem:[%s862 + $0xc8] sm:$0xff] %v889
                %v891 = vld [vmem:[%s861 + $0x70] sm:$0xff]
                %892 = vst [vmem:[%s862 + $0xd0] sm:$0xff] %v891
                %v893 = vld [vmem:[%s861 + $0x78] sm:$0xff]
                %894 = vst [vmem:[%s862 + $0xd8] sm:$0xff] %v893
                %v895 = vld [vmem:[%s861 + $0x80] sm:$0xff]
                %896 = vst [vmem:[%s862 + $0x100] sm:$0xff] %v895
                %v897 = vld [vmem:[%s861 + $0x88] sm:$0xff]
                %898 = vst [vmem:[%s862 + $0x108] sm:$0xff] %v897
                %v899 = vld [vmem:[%s861 + $0x90] sm:$0xff]
                %900 = vst [vmem:[%s862 + $0x110] sm:$0xff] %v899
                %v901 = vld [vmem:[%s861 + $0x98] sm:$0xff]
                %902 = vst [vmem:[%s862 + $0x118] sm:$0xff] %v901
                %v903 = vld [vmem:[%s861 + $0xa0] sm:$0xff]
                %904 = vst [vmem:[%s862 + $0x140] sm:$0xff] %v903
                %v905 = vld [vmem:[%s861 + $0xa8] sm:$0xff]
                %906 = vst [vmem:[%s862 + $0x148] sm:$0xff] %v905
                %v907 = vld [vmem:[%s861 + $0xb0] sm:$0xff]
                %908 = vst [vmem:[%s862 + $0x150] sm:$0xff] %v907
                %v909 = vld [vmem:[%s861 + $0xb8] sm:$0xff]
                %910 = vst [vmem:[%s862 + $0x158] sm:$0xff] %v909
                %v911 = vld [vmem:[%s861 + $0xc0] sm:$0xff]
                %912 = vst [vmem:[%s862 + $0x180] sm:$0xff] %v911
                %v913 = vld [vmem:[%s861 + $0xc8] sm:$0xff]
                %914 = vst [vmem:[%s862 + $0x188] sm:$0xff] %v913
                %v915 = vld [vmem:[%s861 + $0xd0] sm:$0xff]
                %916 = vst [vmem:[%s862 + $0x190] sm:$0xff] %v915
                %v917 = vld [vmem:[%s861 + $0xd8] sm:$0xff]
                %918 = vst [vmem:[%s862 + $0x198] sm:$0xff] %v917
                %v919 = vld [vmem:[%s861 + $0xe0] sm:$0xff]
                %920 = vst [vmem:[%s862 + $0x1c0] sm:$0xff] %v919
                %v921 = vld [vmem:[%s861 + $0xe8] sm:$0xff]
                %922 = vst [vmem:[%s862 + $0x1c8] sm:$0xff] %v921
                %v923 = vld [vmem:[%s861 + $0xf0] sm:$0xff]
                %924 = vst [vmem:[%s862 + $0x1d0] sm:$0xff] %v923
                %v925 = vld [vmem:[%s861 + $0xf8] sm:$0xff]
                %926 = vst [vmem:[%s862 + $0x1d8] sm:$0xff] %v925
              $region65: #{subword_elmo_forward.5} parent=59 // loop_footer
                %s860 = sadd.s32 1, %s856
              $region66: #{subword_elmo_forward.5} parent=59 // loop_footer_branch
                %855 = sbr.rel target = $region62
              $region67: #{subword_elmo_forward.5} parent=59 // loop_exit
                _
            $region60: #{subword_elmo_forward.5} parent=55 // pred_fallthru
              _
            // Predicated region
            $region68: #{subword_elmo_forward.5} parent=55 // pred_check
              _
            $region69: #{subword_elmo_forward.5} parent=55 // pred_check_branch
              %928 = sbr.rel target = $region71
            $region70: #{subword_elmo_forward.5} parent=55 // pred_region
              _
            $region71: #{subword_elmo_forward.5} parent=55 // pred_fallthru
              _
          $region56: #{subword_elmo_forward.5} parent=51 // pred_fallthru
            _
          %929 = vnop
        $region52: #{subword_elmo_forward.5} parent=31 // pred_fallthru
          _
      $region32: #{subword_elmo_forward.5} parent=5 // pred_fallthru
        _
      %p930 = scmp.le.s32.totalorder 2, %s15
      // Predicated region
      $region72: #{subword_elmo_forward.5} parent=5 // pred_check
        %p931 = pneg %p930
      $region73: #{subword_elmo_forward.5} parent=5 // pred_check_branch
        %933 = sbr.rel (%p931) target = $region75
      $region74: #{subword_elmo_forward.5} parent=5 // pred_region
        %s934 = ssub.s32 %s15, 2
        // Predicated region
        $region76: #{subword_elmo_forward.5} parent=74 // pred_check
          %p935 = pneg %p147
        $region77: #{subword_elmo_forward.5} parent=74 // pred_check_branch
          %937 = sbr.rel (%p935) target = $region79
        $region78: #{subword_elmo_forward.5} parent=74 // pred_region
          %s938 = sand.u32 %s132, 1
          %s939 = sand.u32 %s132, 1
          %s940 = smul.addr %s939, 256
          %s941 = scalar_lea.vmem [#allocation7], %s940
        $region79: #{subword_elmo_forward.5} parent=74 // pred_fallthru
          _
      $region75: #{subword_elmo_forward.5} parent=5 // pred_fallthru
        _
    $region6: #{subword_elmo_forward.5} parent=1 // loop_footer
      %s19 = sadd.s32 1, %s15
    $region7: #{subword_elmo_forward.5} parent=1 // loop_footer_branch
      %14 = sbr.rel target = $region3
    $region8: #{subword_elmo_forward.5} parent=1 // loop_exit
      _
    %942 = vsyncpa [#allocation4], 1
    %s943 = scalar_lea.sflag [#allocation4], 1
    %944 = vsyncpa %s943, 1
    %945 = vsyncpa [#allocation6], 1
    %s946 = scalar_lea.sflag [#allocation6], 1
    %947 = vsyncpa %s946, 1

// kernel: subword_elmo_forward.7
$region0: #{subword_elmo_forward.7}
  #allocation0 [shape = 'u32[]', space=smem, size = 0x4, offset = 0x4, fixed_abs, tag = 'smem constant byte address 0x4 - core index']
  #allocation1 [shape = 'u32[144,128]{1,0:T(1,128)}', space=vmem, size = 0x12000, scoped, tag = 'internal scratch']
  #allocation2 [shape = 'f32[64,512]{1,0:T(8,128)}', space=vmem, size = 0x20000, scoped, tag = 'scratch operand']
  %s0 = inlined_call_operand.vmem [shape: f32[64,256], index: 0, kind: input, shape index: {}]
  %s1 = inlined_call_operand.vmem [shape: f32[256,1024], index: 1, kind: input, shape index: {}]
  %s2 = inlined_call_operand.vmem [shape: f32[1,1024], index: 2, kind: input, shape index: {}]
  %s3 = inlined_call_operand.vmem [shape: f32[64,1024], index: 3, kind: output, shape index: {}]
  %s4 = sld [smem:[#allocation0]]
  $region95: #{subword_elmo_forward.7} parent=0
    _
  %s6 = ssub.s32 1, %s4
  %s7 = scalar_select 0, %s6, %s4
  $region1: #{subword_elmo_forward.7} parent=0
    #allocation3 [shape = 'u8[1048576]{0}', space=vmem, size = 0x100000, scoped, tag = 'input window, operand 1']
    #allocation4 [shape = 'u8[262144]{0}', space=vmem, size = 0x40000, scoped, tag = 'output window, operand 0']
    loop: start=0, step=1, limit=4
    $region2: #{subword_elmo_forward.7} parent=1 // loop_pre_header
      _
    $region3: #{subword_elmo_forward.7} parent=1 // loop_header
      %s9 = sphi 0, %s13
      %p10 = scmp.ge.s32.totalorder %s9, 4
      %s16 = sphi 0, %s35
      %s17 = sphi 0, %s31
      %s18 = sphi 0, %s27
      %s19 = sphi 0, %s16
      %s20 = sphi 0, %s17
      %s21 = sphi 0, %s18
      %s22 = sphi 0, %s19
      %s23 = sphi 0, %s20
      %s24 = sphi 0, %s21
      %s40 = sphi 0, %s42
      %s43 = sphi 0, %s40
      %s44 = sphi 0, %s43
      %s60 = sphi 0, %s44
      %s68 = sphi 0, %s70
      %s71 = sphi 0, %s68
      %s72 = sphi 0, %s71
      %s88 = sphi 0, %s72
      %s94 = sphi 0, %s96
      %s97 = sphi 0, %s94
      %s98 = sphi 0, %s97
      %s114 = sphi 0, %s98
      %s122 = sphi 0, %s124
      %s125 = sphi 0, %s122
      %s126 = sphi 0, %s125
      %s142 = sphi 0, %s126
    $region4: #{subword_elmo_forward.7} parent=1 // loop_header_branch
      %12 = sbr.rel (%p10) target = $region8
    $region5: #{subword_elmo_forward.7} parent=1 // loop_body
      %s14 = ssub.s32 %s9, 1
      %s15 = ssub.s32 %s9, 2
      %s25 = sadd.s32 1, %s18
      %p26 = scmp.ge.s32.totalorder %s25, 1
      %s27 = scalar_select %p26, 0, %s25
      %s28 = sadd.s32 1, %s17
      %s29 = scalar_select %p26, %s28, %s17
      %p30 = scmp.ge.s32.totalorder %s29, 2
      %s31 = scalar_select %p30, 0, %s29
      %s32 = sadd.s32 1, %s16
      %s33 = scalar_select %p30, %s32, %s16
      %p34 = scmp.ge.s32.totalorder %s33, 1
      %s35 = scalar_select %p34, 0, %s33
      %s36 = ssub.s32 %s16, %s35
      %s37 = ssub.s32 %s18, %s27
      %s38 = sor.u32 %s36, %s37
      %p39 = scmp.eq.s32.totalorder %s38, 0
      %s41 = sadd.s32 %s40, 1
      %s42 = scalar_select %p39, %s40, %s41
      %p45 = pneg %p39
      %p46 = scmp.eq.s32.totalorder %s9, 1
      %p47 = por %p45, %p46
      %p48 = scmp.ne.s32.totalorder %s40, %s43
      %p49 = scmp.eq.s32.totalorder %s9, 0
      %p50 = por %p48, %p49
      %p51 = scmp.ne.s32.totalorder %s40, %s43
      %p52 = scmp.eq.s32.totalorder %s14, 1
      %p53 = por %p51, %p52
      %p54 = scmp.ne.s32.totalorder %s43, %s44
      %p55 = scmp.eq.s32.totalorder %s14, 0
      %p56 = por %p54, %p55
      %p57 = scmp.ne.s32.totalorder %s43, %s44
      %p58 = scmp.eq.s32.totalorder %s15, 1
      %p59 = por %p57, %p58
      %p61 = scmp.ne.s32.totalorder %s44, %s60
      %p62 = scmp.eq.s32.totalorder %s15, 0
      %p63 = por %p61, %p62
      %s64 = ssub.s32 %s18, %s27
      %s65 = ssub.s32 %s17, %s31
      %s66 = sor.u32 %s64, %s65
      %p67 = scmp.eq.s32.totalorder %s66, 0
      %s69 = sadd.s32 %s68, 1
      %s70 = scalar_select %p67, %s68, %s69
      %p73 = pneg %p67
      %p74 = scmp.eq.s32.totalorder %s9, 1
      %p75 = por %p73, %p74
      %p76 = scmp.ne.s32.totalorder %s68, %s71
      %p77 = scmp.eq.s32.totalorder %s9, 0
      %p78 = por %p76, %p77
      %p79 = scmp.ne.s32.totalorder %s68, %s71
      %p80 = scmp.eq.s32.totalorder %s14, 1
      %p81 = por %p79, %p80
      %p82 = scmp.ne.s32.totalorder %s71, %s72
      %p83 = scmp.eq.s32.totalorder %s14, 0
      %p84 = por %p82, %p83
      %p85 = scmp.ne.s32.totalorder %s71, %s72
      %p86 = scmp.eq.s32.totalorder %s15, 1
      %p87 = por %p85, %p86
      %p89 = scmp.ne.s32.totalorder %s72, %s88
      %p90 = scmp.eq.s32.totalorder %s15, 0
      %p91 = por %p89, %p90
      %s92 = ssub.s32 %s17, %s31
      %p93 = scmp.eq.s32.totalorder %s92, 0
      %s95 = sadd.s32 %s94, 1
      %s96 = scalar_select %p93, %s94, %s95
      %p99 = pneg %p93
      %p100 = scmp.eq.s32.totalorder %s9, 1
      %p101 = por %p99, %p100
      %p102 = scmp.ne.s32.totalorder %s94, %s97
      %p103 = scmp.eq.s32.totalorder %s9, 0
      %p104 = por %p102, %p103
      %p105 = scmp.ne.s32.totalorder %s94, %s97
      %p106 = scmp.eq.s32.totalorder %s14, 1
      %p107 = por %p105, %p106
      %p108 = scmp.ne.s32.totalorder %s97, %s98
      %p109 = scmp.eq.s32.totalorder %s14, 0
      %p110 = por %p108, %p109
      %p111 = scmp.ne.s32.totalorder %s97, %s98
      %p112 = scmp.eq.s32.totalorder %s15, 1
      %p113 = por %p111, %p112
      %p115 = scmp.ne.s32.totalorder %s98, %s114
      %p116 = scmp.eq.s32.totalorder %s15, 0
      %p117 = por %p115, %p116
      %s118 = ssub.s32 %s16, %s35
      %s119 = ssub.s32 %s17, %s31
      %s120 = sor.u32 %s118, %s119
      %p121 = scmp.eq.s32.totalorder %s120, 0
      %s123 = sadd.s32 %s122, 1
      %s124 = scalar_select %p121, %s122, %s123
      %p127 = pneg %p121
      %p128 = scmp.eq.s32.totalorder %s9, 1
      %p129 = por %p127, %p128
      %p130 = scmp.ne.s32.totalorder %s122, %s125
      %p131 = scmp.eq.s32.totalorder %s9, 0
      %p132 = por %p130, %p131
      %p133 = scmp.ne.s32.totalorder %s122, %s125
      %p134 = scmp.eq.s32.totalorder %s14, 1
      %p135 = por %p133, %p134
      %p136 = scmp.ne.s32.totalorder %s125, %s126
      %p137 = scmp.eq.s32.totalorder %s14, 0
      %p138 = por %p136, %p137
      %p139 = scmp.ne.s32.totalorder %s125, %s126
      %p140 = scmp.eq.s32.totalorder %s15, 1
      %p141 = por %p139, %p140
      %p143 = scmp.ne.s32.totalorder %s126, %s142
      %p144 = scmp.eq.s32.totalorder %s15, 0
      %p145 = por %p143, %p144
      %p146 = scmp.le.s32.totalorder 1, %s9
      %p147 = scmp.lt.s32.totalorder %s9, 3
      %p148 = pnand %p146, %p147
      %p149 = pneg %p148
      // Predicated region
      $region9: #{subword_elmo_forward.7} parent=5 // pred_check
        _
      $region10: #{subword_elmo_forward.7} parent=5 // pred_check_branch
        %151 = sbr.rel (%p148) target = $region12
      $region11: #{subword_elmo_forward.7} parent=5 // pred_region
        %s152 = ssub.s32 %s9, 1
        // Predicated region
        $region13: #{subword_elmo_forward.7} parent=11 // pred_check
          %p153 = pneg %p56
        $region14: #{subword_elmo_forward.7} parent=11 // pred_check_branch
          %155 = sbr.rel (%p153) target = $region16
        $region15: #{subword_elmo_forward.7} parent=11 // pred_region
          %s156 = smul.u32 8, %s19
          %s157 = smul.u32 2, %s21
          %p158 = scmp.lt.s32.totalorder %s156, 7
          %s159 = scalar_select %p158, %s156, 7
          %p160 = scmp.lt.s32.totalorder %s157, 1
          %s161 = scalar_select %p160, %s157, 1
          %s162 = smul.addr %s159, 2
          %s163 = sadd.s32 %s161, %s162
          %s164 = smul.addr %s163, 8
          %s165 = scalar_lea.vmem %s0, %s164
          %s166 = smul.u32 8, %s19
          %s167 = smul.u32 2, %s21
        $region16: #{subword_elmo_forward.7} parent=11 // pred_fallthru
          _
      $region12: #{subword_elmo_forward.7} parent=5 // pred_fallthru
        _
      %p168 = scmp.lt.s32.totalorder %s9, 2
      // Predicated region
      $region17: #{subword_elmo_forward.7} parent=5 // pred_check
        %p169 = pneg %p168
      $region18: #{subword_elmo_forward.7} parent=5 // pred_check_branch
        %171 = sbr.rel (%p169) target = $region20
      $region19: #{subword_elmo_forward.7} parent=5 // pred_region
        // Predicated region
        $region21: #{subword_elmo_forward.7} parent=19 // pred_check
          %p172 = pneg %p78
        $region22: #{subword_elmo_forward.7} parent=19 // pred_check_branch
          %174 = sbr.rel (%p172) target = $region24
        $region23: #{subword_elmo_forward.7} parent=19 // pred_region
          %s175 = sand.u32 %s68, 1
          %s176 = sand.u32 %s68, 1
          %s177 = smul.addr %s176, 1024
          %s178 = scalar_lea.vmem [#allocation3], %s177
          %s179 = smul.u32 32, %s18
          %s180 = smul.u32 4, %s17
          %s181 = smul.addr %s179, 8
          %s182 = sadd.s32 %s180, %s181
          %s183 = smul.addr %s182, 8
          %s184 = scalar_lea.vmem %s1, %s183
          // Predicated region
          $region25: #{subword_elmo_forward.7} parent=23 // pred_check
            _
          $region26: #{subword_elmo_forward.7} parent=23 // pred_check_branch
            %186 = sbr.rel (0) target = $region28
          $region27: #{subword_elmo_forward.7} parent=23 // pred_region
            // Predicated region
            $region29: #{subword_elmo_forward.7} parent=27 // pred_check
              _
            $region30: #{subword_elmo_forward.7} parent=27 // pred_check_branch
              %188 = sbr.rel (0) target = $region32
            $region31: #{subword_elmo_forward.7} parent=27 // pred_region
              loop: start=0, step=1, limit=1
              $region33: #{subword_elmo_forward.7} parent=31 // loop_pre_header
                _
              $region34: #{subword_elmo_forward.7} parent=31 // loop_header
                %s190 = sphi 0, %s194
                %p191 = scmp.ge.s32.totalorder %s190, 1
                %s195 = sphi %s184, %s184
                %s196 = sphi %s178, %s178
              $region35: #{subword_elmo_forward.7} parent=31 // loop_header_branch
                %193 = sbr.rel (%p191) target = $region39
              $region36: #{subword_elmo_forward.7} parent=31 // loop_body
                %v197 = vld [vmem:[%s195] sm:$0xff]
                %198 = vst [vmem:[%s196] sm:$0xff] %v197
                %v199 = vld [vmem:[%s195 + $0x8] sm:$0xff]
                %200 = vst [vmem:[%s196 + $0x8] sm:$0xff] %v199
                %v201 = vld [vmem:[%s195 + $0x10] sm:$0xff]
                %202 = vst [vmem:[%s196 + $0x10] sm:$0xff] %v201
                %v203 = vld [vmem:[%s195 + $0x18] sm:$0xff]
                %204 = vst [vmem:[%s196 + $0x18] sm:$0xff] %v203
                %v205 = vld [vmem:[%s195 + $0x40] sm:$0xff]
                %206 = vst [vmem:[%s196 + $0x20] sm:$0xff] %v205
                %v207 = vld [vmem:[%s195 + $0x48] sm:$0xff]
                %208 = vst [vmem:[%s196 + $0x28] sm:$0xff] %v207
                %v209 = vld [vmem:[%s195 + $0x50] sm:$0xff]
                %210 = vst [vmem:[%s196 + $0x30] sm:$0xff] %v209
                %v211 = vld [vmem:[%s195 + $0x58] sm:$0xff]
                %212 = vst [vmem:[%s196 + $0x38] sm:$0xff] %v211
                %v213 = vld [vmem:[%s195 + $0x80] sm:$0xff]
                %214 = vst [vmem:[%s196 + $0x40] sm:$0xff] %v213
                %v215 = vld [vmem:[%s195 + $0x88] sm:$0xff]
                %216 = vst [vmem:[%s196 + $0x48] sm:$0xff] %v215
                %v217 = vld [vmem:[%s195 + $0x90] sm:$0xff]
                %218 = vst [vmem:[%s196 + $0x50] sm:$0xff] %v217
                %v219 = vld [vmem:[%s195 + $0x98] sm:$0xff]
                %220 = vst [vmem:[%s196 + $0x58] sm:$0xff] %v219
                %v221 = vld [vmem:[%s195 + $0xc0] sm:$0xff]
                %222 = vst [vmem:[%s196 + $0x60] sm:$0xff] %v221
                %v223 = vld [vmem:[%s195 + $0xc8] sm:$0xff]
                %224 = vst [vmem:[%s196 + $0x68] sm:$0xff] %v223
                %v225 = vld [vmem:[%s195 + $0xd0] sm:$0xff]
                %226 = vst [vmem:[%s196 + $0x70] sm:$0xff] %v225
                %v227 = vld [vmem:[%s195 + $0xd8] sm:$0xff]
                %228 = vst [vmem:[%s196 + $0x78] sm:$0xff] %v227
                %v229 = vld [vmem:[%s195 + $0x100] sm:$0xff]
                %230 = vst [vmem:[%s196 + $0x80] sm:$0xff] %v229
                %v231 = vld [vmem:[%s195 + $0x108] sm:$0xff]
                %232 = vst [vmem:[%s196 + $0x88] sm:$0xff] %v231
                %v233 = vld [vmem:[%s195 + $0x110] sm:$0xff]
                %234 = vst [vmem:[%s196 + $0x90] sm:$0xff] %v233
                %v235 = vld [vmem:[%s195 + $0x118] sm:$0xff]
                %236 = vst [vmem:[%s196 + $0x98] sm:$0xff] %v235
                %v237 = vld [vmem:[%s195 + $0x140] sm:$0xff]
                %238 = vst [vmem:[%s196 + $0xa0] sm:$0xff] %v237
                %v239 = vld [vmem:[%s195 + $0x148] sm:$0xff]
                %240 = vst [vmem:[%s196 + $0xa8] sm:$0xff] %v239
                %v241 = vld [vmem:[%s195 + $0x150] sm:$0xff]
                %242 = vst [vmem:[%s196 + $0xb0] sm:$0xff] %v241
                %v243 = vld [vmem:[%s195 + $0x158] sm:$0xff]
                %244 = vst [vmem:[%s196 + $0xb8] sm:$0xff] %v243
                %v245 = vld [vmem:[%s195 + $0x180] sm:$0xff]
                %246 = vst [vmem:[%s196 + $0xc0] sm:$0xff] %v245
                %v247 = vld [vmem:[%s195 + $0x188] sm:$0xff]
                %248 = vst [vmem:[%s196 + $0xc8] sm:$0xff] %v247
                %v249 = vld [vmem:[%s195 + $0x190] sm:$0xff]
                %250 = vst [vmem:[%s196 + $0xd0] sm:$0xff] %v249
                %v251 = vld [vmem:[%s195 + $0x198] sm:$0xff]
                %252 = vst [vmem:[%s196 + $0xd8] sm:$0xff] %v251
                %v253 = vld [vmem:[%s195 + $0x1c0] sm:$0xff]
                %254 = vst [vmem:[%s196 + $0xe0] sm:$0xff] %v253
                %v255 = vld [vmem:[%s195 + $0x1c8] sm:$0xff]
                %256 = vst [vmem:[%s196 + $0xe8] sm:$0xff] %v255
                %v257 = vld [vmem:[%s195 + $0x1d0] sm:$0xff]
                %258 = vst [vmem:[%s196 + $0xf0] sm:$0xff] %v257
                %v259 = vld [vmem:[%s195 + $0x1d8] sm:$0xff]
                %260 = vst [vmem:[%s196 + $0xf8] sm:$0xff] %v259
                %v261 = vld [vmem:[%s195 + $0x200] sm:$0xff]
                %262 = vst [vmem:[%s196 + $0x100] sm:$0xff] %v261
                %v263 = vld [vmem:[%s195 + $0x208] sm:$0xff]
                %264 = vst [vmem:[%s196 + $0x108] sm:$0xff] %v263
                %v265 = vld [vmem:[%s195 + $0x210] sm:$0xff]
                %266 = vst [vmem:[%s196 + $0x110] sm:$0xff] %v265
                %v267 = vld [vmem:[%s195 + $0x218] sm:$0xff]
                %268 = vst [vmem:[%s196 + $0x118] sm:$0xff] %v267
                %v269 = vld [vmem:[%s195 + $0x240] sm:$0xff]
                %270 = vst [vmem:[%s196 + $0x120] sm:$0xff] %v269
                %v271 = vld [vmem:[%s195 + $0x248] sm:$0xff]
                %272 = vst [vmem:[%s196 + $0x128] sm:$0xff] %v271
                %v273 = vld [vmem:[%s195 + $0x250] sm:$0xff]
                %274 = vst [vmem:[%s196 + $0x130] sm:$0xff] %v273
                %v275 = vld [vmem:[%s195 + $0x258] sm:$0xff]
                %276 = vst [vmem:[%s196 + $0x138] sm:$0xff] %v275
                %v277 = vld [vmem:[%s195 + $0x280] sm:$0xff]
                %278 = vst [vmem:[%s196 + $0x140] sm:$0xff] %v277
                %v279 = vld [vmem:[%s195 + $0x288] sm:$0xff]
                %280 = vst [vmem:[%s196 + $0x148] sm:$0xff] %v279
                %v281 = vld [vmem:[%s195 + $0x290] sm:$0xff]
                %282 = vst [vmem:[%s196 + $0x150] sm:$0xff] %v281
                %v283 = vld [vmem:[%s195 + $0x298] sm:$0xff]
                %284 = vst [vmem:[%s196 + $0x158] sm:$0xff] %v283
                %v285 = vld [vmem:[%s195 + $0x2c0] sm:$0xff]
                %286 = vst [vmem:[%s196 + $0x160] sm:$0xff] %v285
                %v287 = vld [vmem:[%s195 + $0x2c8] sm:$0xff]
                %288 = vst [vmem:[%s196 + $0x168] sm:$0xff] %v287
                %v289 = vld [vmem:[%s195 + $0x2d0] sm:$0xff]
                %290 = vst [vmem:[%s196 + $0x170] sm:$0xff] %v289
                %v291 = vld [vmem:[%s195 + $0x2d8] sm:$0xff]
                %292 = vst [vmem:[%s196 + $0x178] sm:$0xff] %v291
                %v293 = vld [vmem:[%s195 + $0x300] sm:$0xff]
                %294 = vst [vmem:[%s196 + $0x180] sm:$0xff] %v293
                %v295 = vld [vmem:[%s195 + $0x308] sm:$0xff]
                %296 = vst [vmem:[%s196 + $0x188] sm:$0xff] %v295
                %v297 = vld [vmem:[%s195 + $0x310] sm:$0xff]
                %298 = vst [vmem:[%s196 + $0x190] sm:$0xff] %v297
                %v299 = vld [vmem:[%s195 + $0x318] sm:$0xff]
                %300 = vst [vmem:[%s196 + $0x198] sm:$0xff] %v299
                %v301 = vld [vmem:[%s195 + $0x340] sm:$0xff]
                %302 = vst [vmem:[%s196 + $0x1a0] sm:$0xff] %v301
                %v303 = vld [vmem:[%s195 + $0x348] sm:$0xff]
                %304 = vst [vmem:[%s196 + $0x1a8] sm:$0xff] %v303
                %v305 = vld [vmem:[%s195 + $0x350] sm:$0xff]
                %306 = vst [vmem:[%s196 + $0x1b0] sm:$0xff] %v305
                %v307 = vld [vmem:[%s195 + $0x358] sm:$0xff]
                %308 = vst [vmem:[%s196 + $0x1b8] sm:$0xff] %v307
                %v309 = vld [vmem:[%s195 + $0x380] sm:$0xff]
                %310 = vst [vmem:[%s196 + $0x1c0] sm:$0xff] %v309
                %v311 = vld [vmem:[%s195 + $0x388] sm:$0xff]
                %312 = vst [vmem:[%s196 + $0x1c8] sm:$0xff] %v311
                %v313 = vld [vmem:[%s195 + $0x390] sm:$0xff]
                %314 = vst [vmem:[%s196 + $0x1d0] sm:$0xff] %v313
                %v315 = vld [vmem:[%s195 + $0x398] sm:$0xff]
                %316 = vst [vmem:[%s196 + $0x1d8] sm:$0xff] %v315
                %v317 = vld [vmem:[%s195 + $0x3c0] sm:$0xff]
                %318 = vst [vmem:[%s196 + $0x1e0] sm:$0xff] %v317
                %v319 = vld [vmem:[%s195 + $0x3c8] sm:$0xff]
                %320 = vst [vmem:[%s196 + $0x1e8] sm:$0xff] %v319
                %v321 = vld [vmem:[%s195 + $0x3d0] sm:$0xff]
                %322 = vst [vmem:[%s196 + $0x1f0] sm:$0xff] %v321
                %v323 = vld [vmem:[%s195 + $0x3d8] sm:$0xff]
                %324 = vst [vmem:[%s196 + $0x1f8] sm:$0xff] %v323
                %v325 = vld [vmem:[%s195 + $0x400] sm:$0xff]
                %326 = vst [vmem:[%s196 + $0x200] sm:$0xff] %v325
                %v327 = vld [vmem:[%s195 + $0x408] sm:$0xff]
                %328 = vst [vmem:[%s196 + $0x208] sm:$0xff] %v327
                %v329 = vld [vmem:[%s195 + $0x410] sm:$0xff]
                %330 = vst [vmem:[%s196 + $0x210] sm:$0xff] %v329
                %v331 = vld [vmem:[%s195 + $0x418] sm:$0xff]
                %332 = vst [vmem:[%s196 + $0x218] sm:$0xff] %v331
                %v333 = vld [vmem:[%s195 + $0x440] sm:$0xff]
                %334 = vst [vmem:[%s196 + $0x220] sm:$0xff] %v333
                %v335 = vld [vmem:[%s195 + $0x448] sm:$0xff]
                %336 = vst [vmem:[%s196 + $0x228] sm:$0xff] %v335
                %v337 = vld [vmem:[%s195 + $0x450] sm:$0xff]
                %338 = vst [vmem:[%s196 + $0x230] sm:$0xff] %v337
                %v339 = vld [vmem:[%s195 + $0x458] sm:$0xff]
                %340 = vst [vmem:[%s196 + $0x238] sm:$0xff] %v339
                %v341 = vld [vmem:[%s195 + $0x480] sm:$0xff]
                %342 = vst [vmem:[%s196 + $0x240] sm:$0xff] %v341
                %v343 = vld [vmem:[%s195 + $0x488] sm:$0xff]
                %344 = vst [vmem:[%s196 + $0x248] sm:$0xff] %v343
                %v345 = vld [vmem:[%s195 + $0x490] sm:$0xff]
                %346 = vst [vmem:[%s196 + $0x250] sm:$0xff] %v345
                %v347 = vld [vmem:[%s195 + $0x498] sm:$0xff]
                %348 = vst [vmem:[%s196 + $0x258] sm:$0xff] %v347
                %v349 = vld [vmem:[%s195 + $0x4c0] sm:$0xff]
                %350 = vst [vmem:[%s196 + $0x260] sm:$0xff] %v349
                %v351 = vld [vmem:[%s195 + $0x4c8] sm:$0xff]
                %352 = vst [vmem:[%s196 + $0x268] sm:$0xff] %v351
                %v353 = vld [vmem:[%s195 + $0x4d0] sm:$0xff]
                %354 = vst [vmem:[%s196 + $0x270] sm:$0xff] %v353
                %v355 = vld [vmem:[%s195 + $0x4d8] sm:$0xff]
                %356 = vst [vmem:[%s196 + $0x278] sm:$0xff] %v355
                %v357 = vld [vmem:[%s195 + $0x500] sm:$0xff]
                %358 = vst [vmem:[%s196 + $0x280] sm:$0xff] %v357
                %v359 = vld [vmem:[%s195 + $0x508] sm:$0xff]
                %360 = vst [vmem:[%s196 + $0x288] sm:$0xff] %v359
                %v361 = vld [vmem:[%s195 + $0x510] sm:$0xff]
                %362 = vst [vmem:[%s196 + $0x290] sm:$0xff] %v361
                %v363 = vld [vmem:[%s195 + $0x518] sm:$0xff]
                %364 = vst [vmem:[%s196 + $0x298] sm:$0xff] %v363
                %v365 = vld [vmem:[%s195 + $0x540] sm:$0xff]
                %366 = vst [vmem:[%s196 + $0x2a0] sm:$0xff] %v365
                %v367 = vld [vmem:[%s195 + $0x548] sm:$0xff]
                %368 = vst [vmem:[%s196 + $0x2a8] sm:$0xff] %v367
                %v369 = vld [vmem:[%s195 + $0x550] sm:$0xff]
                %370 = vst [vmem:[%s196 + $0x2b0] sm:$0xff] %v369
                %v371 = vld [vmem:[%s195 + $0x558] sm:$0xff]
                %372 = vst [vmem:[%s196 + $0x2b8] sm:$0xff] %v371
                %v373 = vld [vmem:[%s195 + $0x580] sm:$0xff]
                %374 = vst [vmem:[%s196 + $0x2c0] sm:$0xff] %v373
                %v375 = vld [vmem:[%s195 + $0x588] sm:$0xff]
                %376 = vst [vmem:[%s196 + $0x2c8] sm:$0xff] %v375
                %v377 = vld [vmem:[%s195 + $0x590] sm:$0xff]
                %378 = vst [vmem:[%s196 + $0x2d0] sm:$0xff] %v377
                %v379 = vld [vmem:[%s195 + $0x598] sm:$0xff]
                %380 = vst [vmem:[%s196 + $0x2d8] sm:$0xff] %v379
                %v381 = vld [vmem:[%s195 + $0x5c0] sm:$0xff]
                %382 = vst [vmem:[%s196 + $0x2e0] sm:$0xff] %v381
                %v383 = vld [vmem:[%s195 + $0x5c8] sm:$0xff]
                %384 = vst [vmem:[%s196 + $0x2e8] sm:$0xff] %v383
                %v385 = vld [vmem:[%s195 + $0x5d0] sm:$0xff]
                %386 = vst [vmem:[%s196 + $0x2f0] sm:$0xff] %v385
                %v387 = vld [vmem:[%s195 + $0x5d8] sm:$0xff]
                %388 = vst [vmem:[%s196 + $0x2f8] sm:$0xff] %v387
                %v389 = vld [vmem:[%s195 + $0x600] sm:$0xff]
                %390 = vst [vmem:[%s196 + $0x300] sm:$0xff] %v389
                %v391 = vld [vmem:[%s195 + $0x608] sm:$0xff]
                %392 = vst [vmem:[%s196 + $0x308] sm:$0xff] %v391
                %v393 = vld [vmem:[%s195 + $0x610] sm:$0xff]
                %394 = vst [vmem:[%s196 + $0x310] sm:$0xff] %v393
                %v395 = vld [vmem:[%s195 + $0x618] sm:$0xff]
                %396 = vst [vmem:[%s196 + $0x318] sm:$0xff] %v395
                %v397 = vld [vmem:[%s195 + $0x640] sm:$0xff]
                %398 = vst [vmem:[%s196 + $0x320] sm:$0xff] %v397
                %v399 = vld [vmem:[%s195 + $0x648] sm:$0xff]
                %400 = vst [vmem:[%s196 + $0x328] sm:$0xff] %v399
                %v401 = vld [vmem:[%s195 + $0x650] sm:$0xff]
                %402 = vst [vmem:[%s196 + $0x330] sm:$0xff] %v401
                %v403 = vld [vmem:[%s195 + $0x658] sm:$0xff]
                %404 = vst [vmem:[%s196 + $0x338] sm:$0xff] %v403
                %v405 = vld [vmem:[%s195 + $0x680] sm:$0xff]
                %406 = vst [vmem:[%s196 + $0x340] sm:$0xff] %v405
                %v407 = vld [vmem:[%s195 + $0x688] sm:$0xff]
                %408 = vst [vmem:[%s196 + $0x348] sm:$0xff] %v407
                %v409 = vld [vmem:[%s195 + $0x690] sm:$0xff]
                %410 = vst [vmem:[%s196 + $0x350] sm:$0xff] %v409
                %v411 = vld [vmem:[%s195 + $0x698] sm:$0xff]
                %412 = vst [vmem:[%s196 + $0x358] sm:$0xff] %v411
                %v413 = vld [vmem:[%s195 + $0x6c0] sm:$0xff]
                %414 = vst [vmem:[%s196 + $0x360] sm:$0xff] %v413
                %v415 = vld [vmem:[%s195 + $0x6c8] sm:$0xff]
                %416 = vst [vmem:[%s196 + $0x368] sm:$0xff] %v415
                %v417 = vld [vmem:[%s195 + $0x6d0] sm:$0xff]
                %418 = vst [vmem:[%s196 + $0x370] sm:$0xff] %v417
                %v419 = vld [vmem:[%s195 + $0x6d8] sm:$0xff]
                %420 = vst [vmem:[%s196 + $0x378] sm:$0xff] %v419
                %v421 = vld [vmem:[%s195 + $0x700] sm:$0xff]
                %422 = vst [vmem:[%s196 + $0x380] sm:$0xff] %v421
                %v423 = vld [vmem:[%s195 + $0x708] sm:$0xff]
                %424 = vst [vmem:[%s196 + $0x388] sm:$0xff] %v423
                %v425 = vld [vmem:[%s195 + $0x710] sm:$0xff]
                %426 = vst [vmem:[%s196 + $0x390] sm:$0xff] %v425
                %v427 = vld [vmem:[%s195 + $0x718] sm:$0xff]
                %428 = vst [vmem:[%s196 + $0x398] sm:$0xff] %v427
                %v429 = vld [vmem:[%s195 + $0x740] sm:$0xff]
                %430 = vst [vmem:[%s196 + $0x3a0] sm:$0xff] %v429
                %v431 = vld [vmem:[%s195 + $0x748] sm:$0xff]
                %432 = vst [vmem:[%s196 + $0x3a8] sm:$0xff] %v431
                %v433 = vld [vmem:[%s195 + $0x750] sm:$0xff]
                %434 = vst [vmem:[%s196 + $0x3b0] sm:$0xff] %v433
                %v435 = vld [vmem:[%s195 + $0x758] sm:$0xff]
                %436 = vst [vmem:[%s196 + $0x3b8] sm:$0xff] %v435
                %v437 = vld [vmem:[%s195 + $0x780] sm:$0xff]
                %438 = vst [vmem:[%s196 + $0x3c0] sm:$0xff] %v437
                %v439 = vld [vmem:[%s195 + $0x788] sm:$0xff]
                %440 = vst [vmem:[%s196 + $0x3c8] sm:$0xff] %v439
                %v441 = vld [vmem:[%s195 + $0x790] sm:$0xff]
                %442 = vst [vmem:[%s196 + $0x3d0] sm:$0xff] %v441
                %v443 = vld [vmem:[%s195 + $0x798] sm:$0xff]
                %444 = vst [vmem:[%s196 + $0x3d8] sm:$0xff] %v443
                %v445 = vld [vmem:[%s195 + $0x7c0] sm:$0xff]
                %446 = vst [vmem:[%s196 + $0x3e0] sm:$0xff] %v445
                %v447 = vld [vmem:[%s195 + $0x7c8] sm:$0xff]
                %448 = vst [vmem:[%s196 + $0x3e8] sm:$0xff] %v447
                %v449 = vld [vmem:[%s195 + $0x7d0] sm:$0xff]
                %450 = vst [vmem:[%s196 + $0x3f0] sm:$0xff] %v449
                %v451 = vld [vmem:[%s195 + $0x7d8] sm:$0xff]
                %452 = vst [vmem:[%s196 + $0x3f8] sm:$0xff] %v451
              $region37: #{subword_elmo_forward.7} parent=31 // loop_footer
                %s194 = sadd.s32 1, %s190
              $region38: #{subword_elmo_forward.7} parent=31 // loop_footer_branch
                %189 = sbr.rel target = $region34
              $region39: #{subword_elmo_forward.7} parent=31 // loop_exit
                _
            $region32: #{subword_elmo_forward.7} parent=27 // pred_fallthru
              _
            // Predicated region
            $region40: #{subword_elmo_forward.7} parent=27 // pred_check
              _
            $region41: #{subword_elmo_forward.7} parent=27 // pred_check_branch
              %454 = sbr.rel target = $region43
            $region42: #{subword_elmo_forward.7} parent=27 // pred_region
              _
            $region43: #{subword_elmo_forward.7} parent=27 // pred_fallthru
              _
          $region28: #{subword_elmo_forward.7} parent=23 // pred_fallthru
            _
          %455 = vnop
        $region24: #{subword_elmo_forward.7} parent=19 // pred_fallthru
          _
        // Predicated region
        $region44: #{subword_elmo_forward.7} parent=19 // pred_check
          %p456 = pneg %p104
        $region45: #{subword_elmo_forward.7} parent=19 // pred_check_branch
          %458 = sbr.rel (%p456) target = $region47
        $region46: #{subword_elmo_forward.7} parent=19 // pred_region
          %s459 = smul.u32 4, %s17
          %p460 = scmp.lt.s32.totalorder %s459, 7
          %s461 = scalar_select %p460, %s459, 7
          %s462 = scalar_lea.vmem %s2, %s461
          %s463 = smul.u32 4, %s17
        $region47: #{subword_elmo_forward.7} parent=19 // pred_fallthru
          _
      $region20: #{subword_elmo_forward.7} parent=5 // pred_fallthru
        _
      %p464 = scmp.le.s32.totalorder 1, %s9
      %p465 = scmp.lt.s32.totalorder %s9, 3
      %p466 = pnand %p464, %p465
      %p467 = pneg %p466
      // Predicated region
      $region48: #{subword_elmo_forward.7} parent=5 // pred_check
        _
      $region49: #{subword_elmo_forward.7} parent=5 // pred_check_branch
        %469 = sbr.rel (%p466) target = $region51
      $region50: #{subword_elmo_forward.7} parent=5 // pred_region
        %s470 = ssub.s32 %s9, 1
        %s471 = sand.u32 %s71, 1
        %s472 = sand.u32 %s71, 1
        %s473 = smul.addr %s472, 1024
        %s474 = scalar_lea.vmem [#allocation3], %s473
        // Predicated region
        $region52: #{subword_elmo_forward.7} parent=50 // pred_check
          %p475 = pneg %p84
        $region53: #{subword_elmo_forward.7} parent=50 // pred_check_branch
          %477 = sbr.rel (%p475) target = $region55
        $region54: #{subword_elmo_forward.7} parent=50 // pred_region
          _
        $region55: #{subword_elmo_forward.7} parent=50 // pred_fallthru
          _
        %s478 = smul.u32 8, %s19
        %s479 = smul.u32 2, %s21
        %p480 = scmp.lt.s32.totalorder %s478, 7
        %s481 = scalar_select %p480, %s478, 7
        %p482 = scmp.lt.s32.totalorder %s479, 1
        %s483 = scalar_select %p482, %s479, 1
        %s484 = smul.addr %s481, 2
        %s485 = sadd.s32 %s483, %s484
        %s486 = smul.addr %s485, 8
        %s487 = scalar_lea.vmem %s0, %s486
        %p488 = pneg %p56
        %p489 = pneg %p53
        %s490 = sand.u32 %s71, 1
        %s491 = sand.u32 %s71, 1
        %s492 = smul.addr %s491, 1024
        %s493 = scalar_lea.vmem [#allocation3], %s492
        %p494 = pneg %p84
        %p495 = pneg %p81
        %s496 = smul.u32 4, %s20
        %p497 = scmp.lt.s32.totalorder %s496, 7
        %s498 = scalar_select %p497, %s496, 7
        %s499 = scalar_lea.vmem %s2, %s498
        %p500 = pneg %p110
        %p501 = pneg %p107
        %p502 = pneg %p138
        %p503 = pneg %p135
        %s504 = sand.u32 %s125, 1
        %s505 = sand.u32 %s125, 1
        %s506 = smul.addr %s505, 256
        %s507 = scalar_lea.vmem [#allocation4], %s506
        %s508 = smul.u32 8, %s19
        %s509 = smul.u32 2, %s21
        %p510 = scmp.lt.s32.totalorder %s508, 7
        %s511 = scalar_select %p510, %s508, 7
        %p512 = scmp.lt.s32.totalorder %s509, 1
        %s513 = scalar_select %p512, %s509, 1
        %s514 = smul.addr %s511, 2
        %s515 = sadd.s32 %s513, %s514
        %s516 = smul.addr %s515, 8
        %s517 = scalar_lea.vmem %s0, %s516
        %s518 = smul.u32 8, %s19
        %s519 = smul.u32 2, %s21
        %s520 = smul.u32 32, %s21
        %s521 = smul.u32 4, %s20
        %s522 = smul.u32 4, %s20
        %p523 = scmp.lt.s32.totalorder %s522, 7
        %s524 = scalar_select %p523, %s522, 7
        %s525 = scalar_lea.vmem %s2, %s524
        %s526 = smul.u32 4, %s20
        %s527 = smul.u32 8, %s19
        %s528 = smul.u32 4, %s20
        %p529 = scmp.eq.s32.totalorder %s21, 0
        // Predicated region
        $region56: #{subword_elmo_forward.7} parent=50 // pred_check
          %p530 = pneg %p529
        $region57: #{subword_elmo_forward.7} parent=50 // pred_check_branch
          %532 = sbr.rel (%p530) target = $region59
        $region58: #{subword_elmo_forward.7} parent=50 // pred_region
          %533 = vst [vmem:[#allocation2] sm:$0xff] 0.0
          %534 = vst [vmem:[#allocation2 + $0x8] sm:$0xff] 0.0
          %535 = vst [vmem:[#allocation2 + $0x10] sm:$0xff] 0.0
          %536 = vst [vmem:[#allocation2 + $0x18] sm:$0xff] 0.0
          %537 = vst [vmem:[#allocation2 + $0x20] sm:$0xff] 0.0
          %538 = vst [vmem:[#allocation2 + $0x28] sm:$0xff] 0.0
          %539 = vst [vmem:[#allocation2 + $0x30] sm:$0xff] 0.0
          %540 = vst [vmem:[#allocation2 + $0x38] sm:$0xff] 0.0
          %541 = vst [vmem:[#allocation2 + $0x40] sm:$0xff] 0.0
          %542 = vst [vmem:[#allocation2 + $0x48] sm:$0xff] 0.0
          %543 = vst [vmem:[#allocation2 + $0x50] sm:$0xff] 0.0
          %544 = vst [vmem:[#allocation2 + $0x58] sm:$0xff] 0.0
          %545 = vst [vmem:[#allocation2 + $0x60] sm:$0xff] 0.0
          %546 = vst [vmem:[#allocation2 + $0x68] sm:$0xff] 0.0
          %547 = vst [vmem:[#allocation2 + $0x70] sm:$0xff] 0.0
          %548 = vst [vmem:[#allocation2 + $0x78] sm:$0xff] 0.0
          %549 = vst [vmem:[#allocation2 + $0x80] sm:$0xff] 0.0
          %550 = vst [vmem:[#allocation2 + $0x88] sm:$0xff] 0.0
          %551 = vst [vmem:[#allocation2 + $0x90] sm:$0xff] 0.0
          %552 = vst [vmem:[#allocation2 + $0x98] sm:$0xff] 0.0
          %553 = vst [vmem:[#allocation2 + $0xa0] sm:$0xff] 0.0
          %554 = vst [vmem:[#allocation2 + $0xa8] sm:$0xff] 0.0
          %555 = vst [vmem:[#allocation2 + $0xb0] sm:$0xff] 0.0
          %556 = vst [vmem:[#allocation2 + $0xb8] sm:$0xff] 0.0
          %557 = vst [vmem:[#allocation2 + $0xc0] sm:$0xff] 0.0
          %558 = vst [vmem:[#allocation2 + $0xc8] sm:$0xff] 0.0
          %559 = vst [vmem:[#allocation2 + $0xd0] sm:$0xff] 0.0
          %560 = vst [vmem:[#allocation2 + $0xd8] sm:$0xff] 0.0
          %561 = vst [vmem:[#allocation2 + $0xe0] sm:$0xff] 0.0
          %562 = vst [vmem:[#allocation2 + $0xe8] sm:$0xff] 0.0
          %563 = vst [vmem:[#allocation2 + $0xf0] sm:$0xff] 0.0
          %564 = vst [vmem:[#allocation2 + $0xf8] sm:$0xff] 0.0
        $region59: #{subword_elmo_forward.7} parent=50 // pred_fallthru
          _
        %v565 = vld [vmem:[#allocation2] sm:$0xff]
        %v566 = vld [vmem:[#allocation2 + $0x8] sm:$0xff]
        %v567 = vld [vmem:[#allocation2 + $0x10] sm:$0xff]
        %v568 = vld [vmem:[#allocation2 + $0x18] sm:$0xff]
        %v569 = vld [vmem:[#allocation2 + $0x20] sm:$0xff]
        %v570 = vld [vmem:[#allocation2 + $0x28] sm:$0xff]
        %v571 = vld [vmem:[#allocation2 + $0x30] sm:$0xff]
        %v572 = vld [vmem:[#allocation2 + $0x38] sm:$0xff]
        %v573 = vld [vmem:[#allocation2 + $0x40] sm:$0xff]
        %v574 = vld [vmem:[#allocation2 + $0x48] sm:$0xff]
        %v575 = vld [vmem:[#allocation2 + $0x50] sm:$0xff]
        %v576 = vld [vmem:[#allocation2 + $0x58] sm:$0xff]
        %v577 = vld [vmem:[#allocation2 + $0x60] sm:$0xff]
        %v578 = vld [vmem:[#allocation2 + $0x68] sm:$0xff]
        %v579 = vld [vmem:[#allocation2 + $0x70] sm:$0xff]
        %v580 = vld [vmem:[#allocation2 + $0x78] sm:$0xff]
        %v581 = vld [vmem:[#allocation2 + $0x80] sm:$0xff]
        %v582 = vld [vmem:[#allocation2 + $0x88] sm:$0xff]
        %v583 = vld [vmem:[#allocation2 + $0x90] sm:$0xff]
        %v584 = vld [vmem:[#allocation2 + $0x98] sm:$0xff]
        %v585 = vld [vmem:[#allocation2 + $0xa0] sm:$0xff]
        %v586 = vld [vmem:[#allocation2 + $0xa8] sm:$0xff]
        %v587 = vld [vmem:[#allocation2 + $0xb0] sm:$0xff]
        %v588 = vld [vmem:[#allocation2 + $0xb8] sm:$0xff]
        %v589 = vld [vmem:[#allocation2 + $0xc0] sm:$0xff]
        %v590 = vld [vmem:[#allocation2 + $0xc8] sm:$0xff]
        %v591 = vld [vmem:[#allocation2 + $0xd0] sm:$0xff]
        %v592 = vld [vmem:[#allocation2 + $0xd8] sm:$0xff]
        %v593 = vld [vmem:[#allocation2 + $0xe0] sm:$0xff]
        %v594 = vld [vmem:[#allocation2 + $0xe8] sm:$0xff]
        %v595 = vld [vmem:[#allocation2 + $0xf0] sm:$0xff]
        %v596 = vld [vmem:[#allocation2 + $0xf8] sm:$0xff]
        %v597 = vld [vmem:[%s517] sm:$0xff]
        %v598 = vld [vmem:[%s517 + $0x8] sm:$0xff]
        %v599 = vld [vmem:[%s517 + $0x10] sm:$0xff]
        %v600 = vld [vmem:[%s517 + $0x18] sm:$0xff]
        %v601 = vld [vmem:[%s517 + $0x20] sm:$0xff]
        %v602 = vld [vmem:[%s517 + $0x28] sm:$0xff]
        %v603 = vld [vmem:[%s517 + $0x30] sm:$0xff]
        %v604 = vld [vmem:[%s517 + $0x38] sm:$0xff]
        %v605 = vld [vmem:[%s517 + $0x40] sm:$0xff]
        %v606 = vld [vmem:[%s517 + $0x48] sm:$0xff]
        %v607 = vld [vmem:[%s517 + $0x50] sm:$0xff]
        %v608 = vld [vmem:[%s517 + $0x58] sm:$0xff]
        %v609 = vld [vmem:[%s517 + $0x60] sm:$0xff]
        %v610 = vld [vmem:[%s517 + $0x68] sm:$0xff]
        %v611 = vld [vmem:[%s517 + $0x70] sm:$0xff]
        %v612 = vld [vmem:[%s517 + $0x78] sm:$0xff]
        %v613 = vld [vmem:[%s474] sm:$0xff]
        %v614 = vld [vmem:[%s474 + $0x8] sm:$0xff]
        %v615 = vld [vmem:[%s474 + $0x10] sm:$0xff]
        %v616 = vld [vmem:[%s474 + $0x18] sm:$0xff]
        %v617 = vld [vmem:[%s474 + $0x20] sm:$0xff]
        %v618 = vld [vmem:[%s474 + $0x28] sm:$0xff]
        %v619 = vld [vmem:[%s474 + $0x30] sm:$0xff]
        %v620 = vld [vmem:[%s474 + $0x38] sm:$0xff]
        %v621 = vld [vmem:[%s474 + $0x40] sm:$0xff]
        %v622 = vld [vmem:[%s474 + $0x48] sm:$0xff]
        %v623 = vld [vmem:[%s474 + $0x50] sm:$0xff]
        %v624 = vld [vmem:[%s474 + $0x58] sm:$0xff]
        %v625 = vld [vmem:[%s474 + $0x60] sm:$0xff]
        %v626 = vld [vmem:[%s474 + $0x68] sm:$0xff]
        %v627 = vld [vmem:[%s474 + $0x70] sm:$0xff]
        %v628 = vld [vmem:[%s474 + $0x78] sm:$0xff]
        %v629 = vld [vmem:[%s474 + $0x80] sm:$0xff]
        %v630 = vld [vmem:[%s474 + $0x88] sm:$0xff]
        %v631 = vld [vmem:[%s474 + $0x90] sm:$0xff]
        %v632 = vld [vmem:[%s474 + $0x98] sm:$0xff]
        %v633 = vld [vmem:[%s474 + $0xa0] sm:$0xff]
        %v634 = vld [vmem:[%s474 + $0xa8] sm:$0xff]
        %v635 = vld [vmem:[%s474 + $0xb0] sm:$0xff]
        %v636 = vld [vmem:[%s474 + $0xb8] sm:$0xff]
        %v637 = vld [vmem:[%s474 + $0xc0] sm:$0xff]
        %v638 = vld [vmem:[%s474 + $0xc8] sm:$0xff]
        %v639 = vld [vmem:[%s474 + $0xd0] sm:$0xff]
        %v640 = vld [vmem:[%s474 + $0xd8] sm:$0xff]
        %v641 = vld [vmem:[%s474 + $0xe0] sm:$0xff]
        %v642 = vld [vmem:[%s474 + $0xe8] sm:$0xff]
        %v643 = vld [vmem:[%s474 + $0xf0] sm:$0xff]
        %v644 = vld [vmem:[%s474 + $0xf8] sm:$0xff]
        %v645 = vld [vmem:[%s474 + $0x100] sm:$0xff]
        %v646 = vld [vmem:[%s474 + $0x108] sm:$0xff]
        %v647 = vld [vmem:[%s474 + $0x110] sm:$0xff]
        %v648 = vld [vmem:[%s474 + $0x118] sm:$0xff]
        %v649 = vld [vmem:[%s474 + $0x120] sm:$0xff]
        %v650 = vld [vmem:[%s474 + $0x128] sm:$0xff]
        %v651 = vld [vmem:[%s474 + $0x130] sm:$0xff]
        %v652 = vld [vmem:[%s474 + $0x138] sm:$0xff]
        %v653 = vld [vmem:[%s474 + $0x140] sm:$0xff]
        %v654 = vld [vmem:[%s474 + $0x148] sm:$0xff]
        %v655 = vld [vmem:[%s474 + $0x150] sm:$0xff]
        %v656 = vld [vmem:[%s474 + $0x158] sm:$0xff]
        %v657 = vld [vmem:[%s474 + $0x160] sm:$0xff]
        %v658 = vld [vmem:[%s474 + $0x168] sm:$0xff]
        %v659 = vld [vmem:[%s474 + $0x170] sm:$0xff]
        %v660 = vld [vmem:[%s474 + $0x178] sm:$0xff]
        %v661 = vld [vmem:[%s474 + $0x180] sm:$0xff]
        %v662 = vld [vmem:[%s474 + $0x188] sm:$0xff]
        %v663 = vld [vmem:[%s474 + $0x190] sm:$0xff]
        %v664 = vld [vmem:[%s474 + $0x198] sm:$0xff]
        %v665 = vld [vmem:[%s474 + $0x1a0] sm:$0xff]
        %v666 = vld [vmem:[%s474 + $0x1a8] sm:$0xff]
        %v667 = vld [vmem:[%s474 + $0x1b0] sm:$0xff]
        %v668 = vld [vmem:[%s474 + $0x1b8] sm:$0xff]
        %v669 = vld [vmem:[%s474 + $0x1c0] sm:$0xff]
        %v670 = vld [vmem:[%s474 + $0x1c8] sm:$0xff]
        %v671 = vld [vmem:[%s474 + $0x1d0] sm:$0xff]
        %v672 = vld [vmem:[%s474 + $0x1d8] sm:$0xff]
        %v673 = vld [vmem:[%s474 + $0x1e0] sm:$0xff]
        %v674 = vld [vmem:[%s474 + $0x1e8] sm:$0xff]
        %v675 = vld [vmem:[%s474 + $0x1f0] sm:$0xff]
        %v676 = vld [vmem:[%s474 + $0x1f8] sm:$0xff]
        %v677 = vld [vmem:[%s474 + $0x200] sm:$0xff]
        %v678 = vld [vmem:[%s474 + $0x208] sm:$0xff]
        %v679 = vld [vmem:[%s474 + $0x210] sm:$0xff]
        %v680 = vld [vmem:[%s474 + $0x218] sm:$0xff]
        %v681 = vld [vmem:[%s474 + $0x220] sm:$0xff]
        %v682 = vld [vmem:[%s474 + $0x228] sm:$0xff]
        %v683 = vld [vmem:[%s474 + $0x230] sm:$0xff]
        %v684 = vld [vmem:[%s474 + $0x238] sm:$0xff]
        %v685 = vld [vmem:[%s474 + $0x240] sm:$0xff]
        %v686 = vld [vmem:[%s474 + $0x248] sm:$0xff]
        %v687 = vld [vmem:[%s474 + $0x250] sm:$0xff]
        %v688 = vld [vmem:[%s474 + $0x258] sm:$0xff]
        %v689 = vld [vmem:[%s474 + $0x260] sm:$0xff]
        %v690 = vld [vmem:[%s474 + $0x268] sm:$0xff]
        %v691 = vld [vmem:[%s474 + $0x270] sm:$0xff]
        %v692 = vld [vmem:[%s474 + $0x278] sm:$0xff]
        %v693 = vld [vmem:[%s474 + $0x280] sm:$0xff]
        %v694 = vld [vmem:[%s474 + $0x288] sm:$0xff]
        %v695 = vld [vmem:[%s474 + $0x290] sm:$0xff]
        %v696 = vld [vmem:[%s474 + $0x298] sm:$0xff]
        %v697 = vld [vmem:[%s474 + $0x2a0] sm:$0xff]
        %v698 = vld [vmem:[%s474 + $0x2a8] sm:$0xff]
        %v699 = vld [vmem:[%s474 + $0x2b0] sm:$0xff]
        %v700 = vld [vmem:[%s474 + $0x2b8] sm:$0xff]
        %v701 = vld [vmem:[%s474 + $0x2c0] sm:$0xff]
        %v702 = vld [vmem:[%s474 + $0x2c8] sm:$0xff]
        %v703 = vld [vmem:[%s474 + $0x2d0] sm:$0xff]
        %v704 = vld [vmem:[%s474 + $0x2d8] sm:$0xff]
        %v705 = vld [vmem:[%s474 + $0x2e0] sm:$0xff]
        %v706 = vld [vmem:[%s474 + $0x2e8] sm:$0xff]
        %v707 = vld [vmem:[%s474 + $0x2f0] sm:$0xff]
        %v708 = vld [vmem:[%s474 + $0x2f8] sm:$0xff]
        %v709 = vld [vmem:[%s474 + $0x300] sm:$0xff]
        %v710 = vld [vmem:[%s474 + $0x308] sm:$0xff]
        %v711 = vld [vmem:[%s474 + $0x310] sm:$0xff]
        %v712 = vld [vmem:[%s474 + $0x318] sm:$0xff]
        %v713 = vld [vmem:[%s474 + $0x320] sm:$0xff]
        %v714 = vld [vmem:[%s474 + $0x328] sm:$0xff]
        %v715 = vld [vmem:[%s474 + $0x330] sm:$0xff]
        %v716 = vld [vmem:[%s474 + $0x338] sm:$0xff]
        %v717 = vld [vmem:[%s474 + $0x340] sm:$0xff]
        %v718 = vld [vmem:[%s474 + $0x348] sm:$0xff]
        %v719 = vld [vmem:[%s474 + $0x350] sm:$0xff]
        %v720 = vld [vmem:[%s474 + $0x358] sm:$0xff]
        %v721 = vld [vmem:[%s474 + $0x360] sm:$0xff]
        %v722 = vld [vmem:[%s474 + $0x368] sm:$0xff]
        %v723 = vld [vmem:[%s474 + $0x370] sm:$0xff]
        %v724 = vld [vmem:[%s474 + $0x378] sm:$0xff]
        %v725 = vld [vmem:[%s474 + $0x380] sm:$0xff]
        %v726 = vld [vmem:[%s474 + $0x388] sm:$0xff]
        %v727 = vld [vmem:[%s474 + $0x390] sm:$0xff]
        %v728 = vld [vmem:[%s474 + $0x398] sm:$0xff]
        %v729 = vld [vmem:[%s474 + $0x3a0] sm:$0xff]
        %v730 = vld [vmem:[%s474 + $0x3a8] sm:$0xff]
        %v731 = vld [vmem:[%s474 + $0x3b0] sm:$0xff]
        %v732 = vld [vmem:[%s474 + $0x3b8] sm:$0xff]
        %v733 = vld [vmem:[%s474 + $0x3c0] sm:$0xff]
        %v734 = vld [vmem:[%s474 + $0x3c8] sm:$0xff]
        %v735 = vld [vmem:[%s474 + $0x3d0] sm:$0xff]
        %v736 = vld [vmem:[%s474 + $0x3d8] sm:$0xff]
        %v737 = vld [vmem:[%s474 + $0x3e0] sm:$0xff]
        %v738 = vld [vmem:[%s474 + $0x3e8] sm:$0xff]
        %v739 = vld [vmem:[%s474 + $0x3f0] sm:$0xff]
        %v740 = vld [vmem:[%s474 + $0x3f8] sm:$0xff]
        %741 = vmatprep.subr.mxu0 %v614
        %742 = vmatpush1.msra.mxu0 %v613
        %743 = vmatprep.subr.mxu0 %v618
        %744 = vmatpush1.msra.mxu0 %v617
        %745 = vmatprep.subr.mxu0 %v622
        %746 = vmatpush1.msra.mxu0 %v621
        %747 = vmatprep.subr.mxu0 %v626
        %748 = vmatpush1.msra.mxu0 %v625
        %749 = vmatprep.subr.mxu0 %v630
        %750 = vmatpush1.msra.mxu0 %v629
        %751 = vmatprep.subr.mxu0 %v634
        %752 = vmatpush1.msra.mxu0 %v633
        %753 = vmatprep.subr.mxu0 %v638
        %754 = vmatpush1.msra.mxu0 %v637
        %755 = vmatprep.subr.mxu0 %v642
        %756 = vmatpush1.msra.mxu0 %v641
        %757 = vmatprep.subr.mxu0 %v646
        %758 = vmatpush1.msra.mxu0 %v645
        %759 = vmatprep.subr.mxu0 %v650
        %760 = vmatpush1.msra.mxu0 %v649
        %761 = vmatprep.subr.mxu0 %v654
        %762 = vmatpush1.msra.mxu0 %v653
        %763 = vmatprep.subr.mxu0 %v658
        %764 = vmatpush1.msra.mxu0 %v657
        %765 = vmatprep.subr.mxu0 %v662
        %766 = vmatpush1.msra.mxu0 %v661
        %767 = vmatprep.subr.mxu0 %v666
        %768 = vmatpush1.msra.mxu0 %v665
        %769 = vmatprep.subr.mxu0 %v670
        %770 = vmatpush1.msra.mxu0 %v669
        %771 = vmatprep.subr.mxu0 %v674
        %772 = vmatpush1.msra.mxu0 %v673
        %773 = vmatprep.subr.mxu0 %v678
        %774 = vmatpush1.msra.mxu0 %v677
        %775 = vmatprep.subr.mxu0 %v682
        %776 = vmatpush1.msra.mxu0 %v681
        %777 = vmatprep.subr.mxu0 %v686
        %778 = vmatpush1.msra.mxu0 %v685
        %779 = vmatprep.subr.mxu0 %v690
        %780 = vmatpush1.msra.mxu0 %v689
        %781 = vmatprep.subr.mxu0 %v694
        %782 = vmatpush1.msra.mxu0 %v693
        %783 = vmatprep.subr.mxu0 %v698
        %784 = vmatpush1.msra.mxu0 %v697
        %785 = vmatprep.subr.mxu0 %v702
        %786 = vmatpush1.msra.mxu0 %v701
        %787 = vmatprep.subr.mxu0 %v706
        %788 = vmatpush1.msra.mxu0 %v705
        %789 = vmatprep.subr.mxu0 %v710
        %790 = vmatpush1.msra.mxu0 %v709
        %791 = vmatprep.subr.mxu0 %v714
        %792 = vmatpush1.msra.mxu0 %v713
        %793 = vmatprep.subr.mxu0 %v718
        %794 = vmatpush1.msra.mxu0 %v717
        %795 = vmatprep.subr.mxu0 %v722
        %796 = vmatpush1.msra.mxu0 %v721
        %797 = vmatprep.subr.mxu0 %v726
        %798 = vmatpush1.msra.mxu0 %v725
        %799 = vmatprep.subr.mxu0 %v730
        %800 = vmatpush1.msra.mxu0 %v729
        %801 = vmatprep.subr.mxu0 %v734
        %802 = vmatpush1.msra.mxu0 %v733
        %803 = vmatprep.subr.mxu0 %v738
        %804 = vmatpush1.msra.mxu0 %v737
        %805 = vmatprep.mubr.f32.mxu0 %v598
        %806 = vmatmul.mubr.f32.gmra.mrb[0].mxu0 %v597
        %v807 = vpop.f32.mrb[0].mxu0
        %v808 = vadd.f32 0.0, %v807
        %v809 = vpop.f32.mrb[0].mxu0
        %v810 = vadd.f32 0.0, %v809
        %811 = vmatprep.mubr.f32.mxu0 %v600
        %812 = vmatmul.mubr.f32.gmra.mrb[0].mxu0 %v599
        %v813 = vpop.f32.mrb[0].mxu0
        %v814 = vadd.f32 0.0, %v813
        %v815 = vpop.f32.mrb[0].mxu0
        %v816 = vadd.f32 0.0, %v815
        %817 = vmatprep.mubr.f32.mxu0 %v602
        %818 = vmatmul.mubr.f32.gmra.mrb[0].mxu0 %v601
        %v819 = vpop.f32.mrb[0].mxu0
        %v820 = vadd.f32 0.0, %v819
        %v821 = vpop.f32.mrb[0].mxu0
        %v822 = vadd.f32 0.0, %v821
        %823 = vmatprep.mubr.f32.mxu0 %v604
        %824 = vmatmul.mubr.f32.gmra.mrb[0].mxu0 %v603
        %v825 = vpop.f32.mrb[0].mxu0
        %v826 = vadd.f32 0.0, %v825
        %v827 = vpop.f32.mrb[0].mxu0
        %v828 = vadd.f32 0.0, %v827
        %829 = vmatprep.mubr.f32.mxu0 %v606
        %830 = vmatmul.mubr.f32.gmra.mrb[0].mxu0 %v605
        %v831 = vpop.f32.mrb[0].mxu0
        %v832 = vadd.f32 0.0, %v831
        %v833 = vpop.f32.mrb[0].mxu0
        %v834 = vadd.f32 0.0, %v833
        %835 = vmatprep.mubr.f32.mxu0 %v608
        %836 = vmatmul.mubr.f32.gmra.mrb[0].mxu0 %v607
        %v837 = vpop.f32.mrb[0].mxu0
        %v838 = vadd.f32 0.0, %v837
        %v839 = vpop.f32.mrb[0].mxu0
        %v840 = vadd.f32 0.0, %v839
        %841 = vmatprep.mubr.f32.mxu0 %v610
        %842 = vmatmul.mubr.f32.gmra.mrb[0].mxu0 %v609
        %v843 = vpop.f32.mrb[0].mxu0
        %v844 = vadd.f32 0.0, %v843
        %v845 = vpop.f32.mrb[0].mxu0
        %v846 = vadd.f32 0.0, %v845
        %847 = vmatprep.mubr.f32.mxu0 %v612
        %848 = vmatmul.mubr.f32.gmra.mrb[0].mxu0 %v611
        %v849 = vpop.f32.mrb[0].mxu0
        %v850 = vadd.f32 0.0, %v849
        %v851 = vpop.f32.mrb[0].mxu0
        %v852 = vadd.f32 0.0, %v851
        %853 = vdwg.mxu0
        %854 = vmatprep.subr.mxu0 %v616
        %855 = vmatpush1.msra.mxu0 %v615
        %856 = vmatprep.subr.mxu0 %v620
        %857 = vmatpush1.msra.mxu0 %v619
        %858 = vmatprep.subr.mxu0 %v624
        %859 = vmatpush1.msra.mxu0 %v623
        %860 = vmatprep.subr.mxu0 %v628
        %861 = vmatpush1.msra.mxu0 %v627
        %862 = vmatprep.subr.mxu0 %v632
        %863 = vmatpush1.msra.mxu0 %v631
        %864 = vmatprep.subr.mxu0 %v636
        %865 = vmatpush1.msra.mxu0 %v635
        %866 = vmatprep.subr.mxu0 %v640
        %867 = vmatpush1.msra.mxu0 %v639
        %868 = vmatprep.subr.mxu0 %v644
        %869 = vmatpush1.msra.mxu0 %v643
        %870 = vmatprep.subr.mxu0 %v648
        %871 = vmatpush1.msra.mxu0 %v647
        %872 = vmatprep.subr.mxu0 %v652
        %873 = vmatpush1.msra.mxu0 %v651
        %874 = vmatprep.subr.mxu0 %v656
        %875 = vmatpush1.msra.mxu0 %v655
        %876 = vmatprep.subr.mxu0 %v660
        %877 = vmatpush1.msra.mxu0 %v659
        %878 = vmatprep.subr.mxu0 %v664
        %879 = vmatpush1.msra.mxu0 %v663
        %880 = vmatprep.subr.mxu0 %v668
        %881 = vmatpush1.msra.mxu0 %v667
        %882 = vmatprep.subr.mxu0 %v672
        %883 = vmatpush1.msra.mxu0 %v671
        %884 = vmatprep.subr.mxu0 %v676
        %885 = vmatpush1.msra.mxu0 %v675
        %886 = vmatprep.subr.mxu0 %v680
        %887 = vmatpush1.msra.mxu0 %v679
        %888 = vmatprep.subr.mxu0 %v684
        %889 = vmatpush1.msra.mxu0 %v683
        %890 = vmatprep.subr.mxu0 %v688
        %891 = vmatpush1.msra.mxu0 %v687
        %892 = vmatprep.subr.mxu0 %v692
        %893 = vmatpush1.msra.mxu0 %v691
        %894 = vmatprep.subr.mxu0 %v696
        %895 = vmatpush1.msra.mxu0 %v695
        %896 = vmatprep.subr.mxu0 %v700
        %897 = vmatpush1.msra.mxu0 %v699
        %898 = vmatprep.subr.mxu0 %v704
        %899 = vmatpush1.msra.mxu0 %v703
        %900 = vmatprep.subr.mxu0 %v708
        %901 = vmatpush1.msra.mxu0 %v707
        %902 = vmatprep.subr.mxu0 %v712
        %903 = vmatpush1.msra.mxu0 %v711
        %904 = vmatprep.subr.mxu0 %v716
        %905 = vmatpush1.msra.mxu0 %v715
        %906 = vmatprep.subr.mxu0 %v720
        %907 = vmatpush1.msra.mxu0 %v719
        %908 = vmatprep.subr.mxu0 %v724
        %909 = vmatpush1.msra.mxu0 %v723
        %910 = vmatprep.subr.mxu0 %v728
        %911 = vmatpush1.msra.mxu0 %v727
        %912 = vmatprep.subr.mxu0 %v732
        %913 = vmatpush1.msra.mxu0 %v731
        %914 = vmatprep.subr.mxu0 %v736
        %915 = vmatpush1.msra.mxu0 %v735
        %916 = vmatprep.subr.mxu0 %v740
        %917 = vmatpush1.msra.mxu0 %v739
        %918 = vmatprep.mubr.f32.mxu0 %v598
        %919 = vmatmul.mubr.f32.gmra.mrb[0].mxu0 %v597
        %v920 = vpop.f32.mrb[0].mxu0
        %v921 = vadd.f32 0.0, %v920
        %v922 = vpop.f32.mrb[0].mxu0
        %v923 = vadd.f32 0.0, %v922
        %924 = vmatprep.mubr.f32.mxu0 %v600
        %925 = vmatmul.mubr.f32.gmra.mrb[0].mxu0 %v599
        %v926 = vpop.f32.mrb[0].mxu0
        %v927 = vadd.f32 0.0, %v926
        %v928 = vpop.f32.mrb[0].mxu0
        %v929 = vadd.f32 0.0, %v928
        %930 = vmatprep.mubr.f32.mxu0 %v602
        %931 = vmatmul.mubr.f32.gmra.mrb[0].mxu0 %v601
        %v932 = vpop.f32.mrb[0].mxu0
        %v933 = vadd.f32 0.0, %v932
        %v934 = vpop.f32.mrb[0].mxu0
        %v935 = vadd.f32 0.0, %v934
        %936 = vmatprep.mubr.f32.mxu0 %v604
        %937 = vmatmul.mubr.f32.gmra.mrb[0].mxu0 %v603
        %v938 = vpop.f32.mrb[0].mxu0
        %v939 = vadd.f32 0.0, %v938
        %v940 = vpop.f32.mrb[0].mxu0
        %v941 = vadd.f32 0.0, %v940
        %942 = vmatprep.mubr.f32.mxu0 %v606
        %943 = vmatmul.mubr.f32.gmra.mrb[0].mxu0 %v605
        %v944 = vpop.f32.mrb[0].mxu0
        %v945 = vadd.f32 0.0, %v944
        %v946 = vpop.f32.mrb[0].mxu0
        %v947 = vadd.f32 0.0, %v946
        %948 = vmatprep.mubr.f32.mxu0 %v608
        %949 = vmatmul.mubr.f32.gmra.mrb[0].mxu0 %v607
        %v950 = vpop.f32.mrb[0].mxu0
        %v951 = vadd.f32 0.0, %v950
        %v952 = vpop.f32.mrb[0].mxu0
        %v953 = vadd.f32 0.0, %v952
        %954 = vmatprep.mubr.f32.mxu0 %v610
        %955 = vmatmul.mubr.f32.gmra.mrb[0].mxu0 %v609
        %v956 = vpop.f32.mrb[0].mxu0
        %v957 = vadd.f32 0.0, %v956
        %v958 = vpop.f32.mrb[0].mxu0
        %v959 = vadd.f32 0.0, %v958
        %960 = vmatprep.mubr.f32.mxu0 %v612
        %961 = vmatmul.mubr.f32.gmra.mrb[0].mxu0 %v611
        %v962 = vpop.f32.mrb[0].mxu0
        %v963 = vadd.f32 0.0, %v962
        %v964 = vpop.f32.mrb[0].mxu0
        %v965 = vadd.f32 0.0, %v964
        %966 = vdwg.mxu0
        %v967 = vadd.f32 %v565, %v808
        %v968 = vadd.f32 %v566, %v810
        %v969 = vadd.f32 %v567, %v921
        %v970 = vadd.f32 %v568, %v923
        %v971 = vadd.f32 %v569, %v814
        %v972 = vadd.f32 %v570, %v816
        %v973 = vadd.f32 %v571, %v927
        %v974 = vadd.f32 %v572, %v929
        %v975 = vadd.f32 %v573, %v820
        %v976 = vadd.f32 %v574, %v822
        %v977 = vadd.f32 %v575, %v933
        %v978 = vadd.f32 %v576, %v935
        %v979 = vadd.f32 %v577, %v826
        %v980 = vadd.f32 %v578, %v828
        %v981 = vadd.f32 %v579, %v939
        %v982 = vadd.f32 %v580, %v941
        %v983 = vadd.f32 %v581, %v832
        %v984 = vadd.f32 %v582, %v834
        %v985 = vadd.f32 %v583, %v945
        %v986 = vadd.f32 %v584, %v947
        %v987 = vadd.f32 %v585, %v838
        %v988 = vadd.f32 %v586, %v840
        %v989 = vadd.f32 %v587, %v951
        %v990 = vadd.f32 %v588, %v953
        %v991 = vadd.f32 %v589, %v844
        %v992 = vadd.f32 %v590, %v846
        %v993 = vadd.f32 %v591, %v957
        %v994 = vadd.f32 %v592, %v959
        %v995 = vadd.f32 %v593, %v850
        %v996 = vadd.f32 %v594, %v852
        %v997 = vadd.f32 %v595, %v963
        %v998 = vadd.f32 %v596, %v965
        %999 = vst [vmem:[#allocation2] sm:$0xff] %v967
        %1000 = vst [vmem:[#allocation2 + $0x8] sm:$0xff] %v968
        %1001 = vst [vmem:[#allocation2 + $0x10] sm:$0xff] %v969
        %1002 = vst [vmem:[#allocation2 + $0x18] sm:$0xff] %v970
        %1003 = vst [vmem:[#allocation2 + $0x20] sm:$0xff] %v971
        %1004 = vst [vmem:[#allocation2 + $0x28] sm:$0xff] %v972
        %1005 = vst [vmem:[#allocation2 + $0x30] sm:$0xff] %v973
        %1006 = vst [vmem:[#allocation2 + $0x38] sm:$0xff] %v974
        %1007 = vst [vmem:[#allocation2 + $0x40] sm:$0xff] %v975
        %1008 = vst [vmem:[#allocation2 + $0x48] sm:$0xff] %v976
        %1009 = vst [vmem:[#allocation2 + $0x50] sm:$0xff] %v977
        %1010 = vst [vmem:[#allocation2 + $0x58] sm:$0xff] %v978
        %1011 = vst [vmem:[#allocation2 + $0x60] sm:$0xff] %v979
        %1012 = vst [vmem:[#allocation2 + $0x68] sm:$0xff] %v980
        %1013 = vst [vmem:[#allocation2 + $0x70] sm:$0xff] %v981
        %1014 = vst [vmem:[#allocation2 + $0x78] sm:$0xff] %v982
        %1015 = vst [vmem:[#allocation2 + $0x80] sm:$0xff] %v983
        %1016 = vst [vmem:[#allocation2 + $0x88] sm:$0xff] %v984
        %1017 = vst [vmem:[#allocation2 + $0x90] sm:$0xff] %v985
        %1018 = vst [vmem:[#allocation2 + $0x98] sm:$0xff] %v986
        %1019 = vst [vmem:[#allocation2 + $0xa0] sm:$0xff] %v987
        %1020 = vst [vmem:[#allocation2 + $0xa8] sm:$0xff] %v988
        %1021 = vst [vmem:[#allocation2 + $0xb0] sm:$0xff] %v989
        %1022 = vst [vmem:[#allocation2 + $0xb8] sm:$0xff] %v990
        %1023 = vst [vmem:[#allocation2 + $0xc0] sm:$0xff] %v991
        %1024 = vst [vmem:[#allocation2 + $0xc8] sm:$0xff] %v992
        %1025 = vst [vmem:[#allocation2 + $0xd0] sm:$0xff] %v993
        %1026 = vst [vmem:[#allocation2 + $0xd8] sm:$0xff] %v994
        %1027 = vst [vmem:[#allocation2 + $0xe0] sm:$0xff] %v995
        %1028 = vst [vmem:[#allocation2 + $0xe8] sm:$0xff] %v996
        %1029 = vst [vmem:[#allocation2 + $0xf0] sm:$0xff] %v997
        %1030 = vst [vmem:[#allocation2 + $0xf8] sm:$0xff] %v998
        // Predicated region
        $region60: #{subword_elmo_forward.7} parent=50 // pred_check
          %p1031 = pneg %p529
        $region61: #{subword_elmo_forward.7} parent=50 // pred_check_branch
          %1033 = sbr.rel (%p1031) target = $region63
        $region62: #{subword_elmo_forward.7} parent=50 // pred_region
          %v1034 = vld [vmem:[#allocation2] sm:$0xff]
          %v1035 = vld [vmem:[#allocation2 + $0x8] sm:$0xff]
          %v1036 = vld [vmem:[#allocation2 + $0x10] sm:$0xff]
          %v1037 = vld [vmem:[#allocation2 + $0x18] sm:$0xff]
          %v1038 = vld [vmem:[#allocation2 + $0x20] sm:$0xff]
          %v1039 = vld [vmem:[#allocation2 + $0x28] sm:$0xff]
          %v1040 = vld [vmem:[#allocation2 + $0x30] sm:$0xff]
          %v1041 = vld [vmem:[#allocation2 + $0x38] sm:$0xff]
          %v1042 = vld [vmem:[#allocation2 + $0x40] sm:$0xff]
          %v1043 = vld [vmem:[#allocation2 + $0x48] sm:$0xff]
          %v1044 = vld [vmem:[#allocation2 + $0x50] sm:$0xff]
          %v1045 = vld [vmem:[#allocation2 + $0x58] sm:$0xff]
          %v1046 = vld [vmem:[#allocation2 + $0x60] sm:$0xff]
          %v1047 = vld [vmem:[#allocation2 + $0x68] sm:$0xff]
          %v1048 = vld [vmem:[#allocation2 + $0x70] sm:$0xff]
          %v1049 = vld [vmem:[#allocation2 + $0x78] sm:$0xff]
          %v1050 = vld [vmem:[#allocation2 + $0x80] sm:$0xff]
          %v1051 = vld [vmem:[#allocation2 + $0x88] sm:$0xff]
          %v1052 = vld [vmem:[#allocation2 + $0x90] sm:$0xff]
          %v1053 = vld [vmem:[#allocation2 + $0x98] sm:$0xff]
          %v1054 = vld [vmem:[#allocation2 + $0xa0] sm:$0xff]
          %v1055 = vld [vmem:[#allocation2 + $0xa8] sm:$0xff]
          %v1056 = vld [vmem:[#allocation2 + $0xb0] sm:$0xff]
          %v1057 = vld [vmem:[#allocation2 + $0xb8] sm:$0xff]
          %v1058 = vld [vmem:[#allocation2 + $0xc0] sm:$0xff]
          %v1059 = vld [vmem:[#allocation2 + $0xc8] sm:$0xff]
          %v1060 = vld [vmem:[#allocation2 + $0xd0] sm:$0xff]
          %v1061 = vld [vmem:[#allocation2 + $0xd8] sm:$0xff]
          %v1062 = vld [vmem:[#allocation2 + $0xe0] sm:$0xff]
          %v1063 = vld [vmem:[#allocation2 + $0xe8] sm:$0xff]
          %v1064 = vld [vmem:[#allocation2 + $0xf0] sm:$0xff]
          %v1065 = vld [vmem:[#allocation2 + $0xf8] sm:$0xff]
          %v1066 = vld [vmem:[%s525] sm:$0xf]
          %v1068 = vlaneseq
          %v1069 = vshrl.u32 %v1068, 7
          %v1070 = vsub.s32 0, %v1069
          %v1071 = vrot.slane %v1066, %v1070
          %v1072 = vlaneseq
          %v1073 = vshrl.u32 %v1072, 7
          %v1074 = vsub.s32 1, %v1073
          %v1075 = vrot.slane %v1066, %v1074
          %v1076 = vlaneseq
          %v1077 = vshrl.u32 %v1076, 7
          %v1078 = vsub.s32 2, %v1077
          %v1079 = vrot.slane %v1066, %v1078
          %v1080 = vlaneseq
          %v1081 = vshrl.u32 %v1080, 7
          %v1082 = vsub.s32 3, %v1081
          %v1083 = vrot.slane %v1066, %v1082
          %v1088 = vadd.f32 %v1034, %v1071
          %v1089 = vadd.f32 %v1035, %v1075
          %v1090 = vadd.f32 %v1036, %v1079
          %v1091 = vadd.f32 %v1037, %v1083
          %v1092 = vadd.f32 %v1038, %v1071
          %v1093 = vadd.f32 %v1039, %v1075
          %v1094 = vadd.f32 %v1040, %v1079
          %v1095 = vadd.f32 %v1041, %v1083
          %v1096 = vadd.f32 %v1042, %v1071
          %v1097 = vadd.f32 %v1043, %v1075
          %v1098 = vadd.f32 %v1044, %v1079
          %v1099 = vadd.f32 %v1045, %v1083
          %v1100 = vadd.f32 %v1046, %v1071
          %v1101 = vadd.f32 %v1047, %v1075
          %v1102 = vadd.f32 %v1048, %v1079
          %v1103 = vadd.f32 %v1049, %v1083
          %v1104 = vadd.f32 %v1050, %v1071
          %v1105 = vadd.f32 %v1051, %v1075
          %v1106 = vadd.f32 %v1052, %v1079
          %v1107 = vadd.f32 %v1053, %v1083
          %v1108 = vadd.f32 %v1054, %v1071
          %v1109 = vadd.f32 %v1055, %v1075
          %v1110 = vadd.f32 %v1056, %v1079
          %v1111 = vadd.f32 %v1057, %v1083
          %v1112 = vadd.f32 %v1058, %v1071
          %v1113 = vadd.f32 %v1059, %v1075
          %v1114 = vadd.f32 %v1060, %v1079
          %v1115 = vadd.f32 %v1061, %v1083
          %v1116 = vadd.f32 %v1062, %v1071
          %v1117 = vadd.f32 %v1063, %v1075
          %v1118 = vadd.f32 %v1064, %v1079
          %v1119 = vadd.f32 %v1065, %v1083
          %1120 = vst [vmem:[%s507] sm:$0xff] %v1088
          %1121 = vst [vmem:[%s507 + $0x8] sm:$0xff] %v1089
          %1122 = vst [vmem:[%s507 + $0x10] sm:$0xff] %v1090
          %1123 = vst [vmem:[%s507 + $0x18] sm:$0xff] %v1091
          %1124 = vst [vmem:[%s507 + $0x20] sm:$0xff] %v1092
          %1125 = vst [vmem:[%s507 + $0x28] sm:$0xff] %v1093
          %1126 = vst [vmem:[%s507 + $0x30] sm:$0xff] %v1094
          %1127 = vst [vmem:[%s507 + $0x38] sm:$0xff] %v1095
          %1128 = vst [vmem:[%s507 + $0x40] sm:$0xff] %v1096
          %1129 = vst [vmem:[%s507 + $0x48] sm:$0xff] %v1097
          %1130 = vst [vmem:[%s507 + $0x50] sm:$0xff] %v1098
          %1131 = vst [vmem:[%s507 + $0x58] sm:$0xff] %v1099
          %1132 = vst [vmem:[%s507 + $0x60] sm:$0xff] %v1100
          %1133 = vst [vmem:[%s507 + $0x68] sm:$0xff] %v1101
          %1134 = vst [vmem:[%s507 + $0x70] sm:$0xff] %v1102
          %1135 = vst [vmem:[%s507 + $0x78] sm:$0xff] %v1103
          %1136 = vst [vmem:[%s507 + $0x80] sm:$0xff] %v1104
          %1137 = vst [vmem:[%s507 + $0x88] sm:$0xff] %v1105
          %1138 = vst [vmem:[%s507 + $0x90] sm:$0xff] %v1106
          %1139 = vst [vmem:[%s507 + $0x98] sm:$0xff] %v1107
          %1140 = vst [vmem:[%s507 + $0xa0] sm:$0xff] %v1108
          %1141 = vst [vmem:[%s507 + $0xa8] sm:$0xff] %v1109
          %1142 = vst [vmem:[%s507 + $0xb0] sm:$0xff] %v1110
          %1143 = vst [vmem:[%s507 + $0xb8] sm:$0xff] %v1111
          %1144 = vst [vmem:[%s507 + $0xc0] sm:$0xff] %v1112
          %1145 = vst [vmem:[%s507 + $0xc8] sm:$0xff] %v1113
          %1146 = vst [vmem:[%s507 + $0xd0] sm:$0xff] %v1114
          %1147 = vst [vmem:[%s507 + $0xd8] sm:$0xff] %v1115
          %1148 = vst [vmem:[%s507 + $0xe0] sm:$0xff] %v1116
          %1149 = vst [vmem:[%s507 + $0xe8] sm:$0xff] %v1117
          %1150 = vst [vmem:[%s507 + $0xf0] sm:$0xff] %v1118
          %1151 = vst [vmem:[%s507 + $0xf8] sm:$0xff] %v1119
        $region63: #{subword_elmo_forward.7} parent=50 // pred_fallthru
          _
        %s1152 = sand.u32 %s125, 1
        %s1153 = sand.u32 %s125, 1
        %s1154 = smul.addr %s1153, 256
        %s1155 = scalar_lea.vmem [#allocation4], %s1154
        // Predicated region
        $region64: #{subword_elmo_forward.7} parent=50 // pred_check
          %p1156 = pneg %p135
        $region65: #{subword_elmo_forward.7} parent=50 // pred_check_branch
          %1158 = sbr.rel (%p1156) target = $region67
        $region66: #{subword_elmo_forward.7} parent=50 // pred_region
          %s1159 = smul.u32 8, %s19
          %s1160 = smul.u32 4, %s20
          %s1161 = smul.addr %s1159, 8
          %s1162 = sadd.s32 %s1160, %s1161
          %s1163 = smul.addr %s1162, 8
          %s1164 = scalar_lea.vmem %s3, %s1163
          // Predicated region
          $region68: #{subword_elmo_forward.7} parent=66 // pred_check
            _
          $region69: #{subword_elmo_forward.7} parent=66 // pred_check_branch
            %1166 = sbr.rel (0) target = $region71
          $region70: #{subword_elmo_forward.7} parent=66 // pred_region
            // Predicated region
            $region72: #{subword_elmo_forward.7} parent=70 // pred_check
              _
            $region73: #{subword_elmo_forward.7} parent=70 // pred_check_branch
              %1168 = sbr.rel (0) target = $region75
            $region74: #{subword_elmo_forward.7} parent=70 // pred_region
              loop: start=0, step=1, limit=1
              $region76: #{subword_elmo_forward.7} parent=74 // loop_pre_header
                _
              $region77: #{subword_elmo_forward.7} parent=74 // loop_header
                %s1170 = sphi 0, %s1174
                %p1171 = scmp.ge.s32.totalorder %s1170, 1
                %s1175 = sphi %s1155, %s1155
                %s1176 = sphi %s1164, %s1164
              $region78: #{subword_elmo_forward.7} parent=74 // loop_header_branch
                %1173 = sbr.rel (%p1171) target = $region82
              $region79: #{subword_elmo_forward.7} parent=74 // loop_body
                %v1177 = vld [vmem:[%s1175] sm:$0xff]
                %1178 = vst [vmem:[%s1176] sm:$0xff] %v1177
                %v1179 = vld [vmem:[%s1175 + $0x8] sm:$0xff]
                %1180 = vst [vmem:[%s1176 + $0x8] sm:$0xff] %v1179
                %v1181 = vld [vmem:[%s1175 + $0x10] sm:$0xff]
                %1182 = vst [vmem:[%s1176 + $0x10] sm:$0xff] %v1181
                %v1183 = vld [vmem:[%s1175 + $0x18] sm:$0xff]
                %1184 = vst [vmem:[%s1176 + $0x18] sm:$0xff] %v1183
                %v1185 = vld [vmem:[%s1175 + $0x20] sm:$0xff]
                %1186 = vst [vmem:[%s1176 + $0x40] sm:$0xff] %v1185
                %v1187 = vld [vmem:[%s1175 + $0x28] sm:$0xff]
                %1188 = vst [vmem:[%s1176 + $0x48] sm:$0xff] %v1187
                %v1189 = vld [vmem:[%s1175 + $0x30] sm:$0xff]
                %1190 = vst [vmem:[%s1176 + $0x50] sm:$0xff] %v1189
                %v1191 = vld [vmem:[%s1175 + $0x38] sm:$0xff]
                %1192 = vst [vmem:[%s1176 + $0x58] sm:$0xff] %v1191
                %v1193 = vld [vmem:[%s1175 + $0x40] sm:$0xff]
                %1194 = vst [vmem:[%s1176 + $0x80] sm:$0xff] %v1193
                %v1195 = vld [vmem:[%s1175 + $0x48] sm:$0xff]
                %1196 = vst [vmem:[%s1176 + $0x88] sm:$0xff] %v1195
                %v1197 = vld [vmem:[%s1175 + $0x50] sm:$0xff]
                %1198 = vst [vmem:[%s1176 + $0x90] sm:$0xff] %v1197
                %v1199 = vld [vmem:[%s1175 + $0x58] sm:$0xff]
                %1200 = vst [vmem:[%s1176 + $0x98] sm:$0xff] %v1199
                %v1201 = vld [vmem:[%s1175 + $0x60] sm:$0xff]
                %1202 = vst [vmem:[%s1176 + $0xc0] sm:$0xff] %v1201
                %v1203 = vld [vmem:[%s1175 + $0x68] sm:$0xff]
                %1204 = vst [vmem:[%s1176 + $0xc8] sm:$0xff] %v1203
                %v1205 = vld [vmem:[%s1175 + $0x70] sm:$0xff]
                %1206 = vst [vmem:[%s1176 + $0xd0] sm:$0xff] %v1205
                %v1207 = vld [vmem:[%s1175 + $0x78] sm:$0xff]
                %1208 = vst [vmem:[%s1176 + $0xd8] sm:$0xff] %v1207
                %v1209 = vld [vmem:[%s1175 + $0x80] sm:$0xff]
                %1210 = vst [vmem:[%s1176 + $0x100] sm:$0xff] %v1209
                %v1211 = vld [vmem:[%s1175 + $0x88] sm:$0xff]
                %1212 = vst [vmem:[%s1176 + $0x108] sm:$0xff] %v1211
                %v1213 = vld [vmem:[%s1175 + $0x90] sm:$0xff]
                %1214 = vst [vmem:[%s1176 + $0x110] sm:$0xff] %v1213
                %v1215 = vld [vmem:[%s1175 + $0x98] sm:$0xff]
                %1216 = vst [vmem:[%s1176 + $0x118] sm:$0xff] %v1215
                %v1217 = vld [vmem:[%s1175 + $0xa0] sm:$0xff]
                %1218 = vst [vmem:[%s1176 + $0x140] sm:$0xff] %v1217
                %v1219 = vld [vmem:[%s1175 + $0xa8] sm:$0xff]
                %1220 = vst [vmem:[%s1176 + $0x148] sm:$0xff] %v1219
                %v1221 = vld [vmem:[%s1175 + $0xb0] sm:$0xff]
                %1222 = vst [vmem:[%s1176 + $0x150] sm:$0xff] %v1221
                %v1223 = vld [vmem:[%s1175 + $0xb8] sm:$0xff]
                %1224 = vst [vmem:[%s1176 + $0x158] sm:$0xff] %v1223
                %v1225 = vld [vmem:[%s1175 + $0xc0] sm:$0xff]
                %1226 = vst [vmem:[%s1176 + $0x180] sm:$0xff] %v1225
                %v1227 = vld [vmem:[%s1175 + $0xc8] sm:$0xff]
                %1228 = vst [vmem:[%s1176 + $0x188] sm:$0xff] %v1227
                %v1229 = vld [vmem:[%s1175 + $0xd0] sm:$0xff]
                %1230 = vst [vmem:[%s1176 + $0x190] sm:$0xff] %v1229
                %v1231 = vld [vmem:[%s1175 + $0xd8] sm:$0xff]
                %1232 = vst [vmem:[%s1176 + $0x198] sm:$0xff] %v1231
                %v1233 = vld [vmem:[%s1175 + $0xe0] sm:$0xff]
                %1234 = vst [vmem:[%s1176 + $0x1c0] sm:$0xff] %v1233
                %v1235 = vld [vmem:[%s1175 + $0xe8] sm:$0xff]
                %1236 = vst [vmem:[%s1176 + $0x1c8] sm:$0xff] %v1235
                %v1237 = vld [vmem:[%s1175 + $0xf0] sm:$0xff]
                %1238 = vst [vmem:[%s1176 + $0x1d0] sm:$0xff] %v1237
                %v1239 = vld [vmem:[%s1175 + $0xf8] sm:$0xff]
                %1240 = vst [vmem:[%s1176 + $0x1d8] sm:$0xff] %v1239
              $region80: #{subword_elmo_forward.7} parent=74 // loop_footer
                %s1174 = sadd.s32 1, %s1170
              $region81: #{subword_elmo_forward.7} parent=74 // loop_footer_branch
                %1169 = sbr.rel target = $region77
              $region82: #{subword_elmo_forward.7} parent=74 // loop_exit
                _
            $region75: #{subword_elmo_forward.7} parent=70 // pred_fallthru
              _
            // Predicated region
            $region83: #{subword_elmo_forward.7} parent=70 // pred_check
              _
            $region84: #{subword_elmo_forward.7} parent=70 // pred_check_branch
              %1242 = sbr.rel target = $region86
            $region85: #{subword_elmo_forward.7} parent=70 // pred_region
              _
            $region86: #{subword_elmo_forward.7} parent=70 // pred_fallthru
              _
          $region71: #{subword_elmo_forward.7} parent=66 // pred_fallthru
            _
          %1243 = vnop
        $region67: #{subword_elmo_forward.7} parent=50 // pred_fallthru
          _
      $region51: #{subword_elmo_forward.7} parent=5 // pred_fallthru
        _
      %p1244 = scmp.le.s32.totalorder 2, %s9
      // Predicated region
      $region87: #{subword_elmo_forward.7} parent=5 // pred_check
        %p1245 = pneg %p1244
      $region88: #{subword_elmo_forward.7} parent=5 // pred_check_branch
        %1247 = sbr.rel (%p1245) target = $region90
      $region89: #{subword_elmo_forward.7} parent=5 // pred_region
        %s1248 = ssub.s32 %s9, 2
        // Predicated region
        $region91: #{subword_elmo_forward.7} parent=89 // pred_check
          %p1249 = pneg %p141
        $region92: #{subword_elmo_forward.7} parent=89 // pred_check_branch
          %1251 = sbr.rel (%p1249) target = $region94
        $region93: #{subword_elmo_forward.7} parent=89 // pred_region
          %s1252 = sand.u32 %s126, 1
          %s1253 = sand.u32 %s126, 1
          %s1254 = smul.addr %s1253, 256
          %s1255 = scalar_lea.vmem [#allocation4], %s1254
        $region94: #{subword_elmo_forward.7} parent=89 // pred_fallthru
          _
      $region90: #{subword_elmo_forward.7} parent=5 // pred_fallthru
        _
    $region6: #{subword_elmo_forward.7} parent=1 // loop_footer
      %s13 = sadd.s32 1, %s9
    $region7: #{subword_elmo_forward.7} parent=1 // loop_footer_branch
      %8 = sbr.rel target = $region3
    $region8: #{subword_elmo_forward.7} parent=1 // loop_exit
      _

// kernel: subword_elmo_forward.9
$region0: #{subword_elmo_forward.9}
  #allocation0 [shape = 'u32[]', space=smem, size = 0x4, offset = 0x4, fixed_abs, tag = 'smem constant byte address 0x4 - core index']
  #allocation1 [shape = 'u32[144,128]{1,0:T(1,128)}', space=vmem, size = 0x12000, scoped, tag = 'internal scratch']
  #allocation2 [shape = 'f32[64,1]{1,0:T(8,128)}', space=vmem, size = 0x8000, scoped, tag = 'scratch operand']
  #allocation3 [shape = 'f32[64,1]{1,0:T(8,128)}', space=vmem, size = 0x8000, scoped, tag = 'scratch operand']
  #allocation4 [shape = 'f32[64,1]{1,0:T(8,128)}', space=vmem, size = 0x8000, scoped, tag = 'scratch operand']
  #allocation5 [shape = 's32[64,1]{1,0:T(8,128)}', space=vmem, size = 0x8000, scoped, tag = 'scratch operand']
  #allocation6 [shape = 'f32[64,1]{1,0:T(8,128)}', space=vmem, size = 0x8000, scoped, tag = 'scratch operand']
  #allocation7 [shape = 'f32[1,1]{1,0:T(1,128)}', space=vmem, size = 0x200, scoped, tag = 'scratch operand']
  #allocation8 [shape = 'f32[1,1]{1,0:T(1,128)}', space=vmem, size = 0x200, scoped, tag = 'scratch operand']
  %s0 = inlined_call_operand.vmem [shape: f32[64,256], index: 0, kind: input, shape index: {}]
  %s1 = inlined_call_operand.vmem [shape: f32[256,128], index: 1, kind: input, shape index: {}]
  %s2 = inlined_call_operand.vmem [shape: f32[1,128], index: 2, kind: input, shape index: {}]
  %s3 = inlined_call_operand.vmem [shape: s32[64,1], index: 3, kind: input, shape index: {}]
  %s4 = inlined_call_operand.hbm [shape: f32[1,1], index: 4, kind: output, shape index: {0}]
  %s5 = inlined_call_operand.vmem [shape: s32[64,1], index: 5, kind: output, shape index: {1}]
  %6 = xla_tuple %s4, %s5
  %s7 = sld [smem:[#allocation0]]
  $region50: #{subword_elmo_forward.9} parent=0
    _
  %s9 = ssub.s32 1, %s7
  %s10 = scalar_select 0, %s9, %s7
  $region1: #{subword_elmo_forward.9} parent=0
    #allocation9 [shape = 'u8[512]{0}', space=vmem, size = 0x400, scoped, tag = 'output window, operand 0, single buffered']
    #allocation10 [shape = 's32[1]{0}', space=sflag, size = 0x4, scoped, tag = 'scoped memory for subword_elmo_forward.9']
    %11 = vsyncpa [#allocation10], 0
    // Predicated region
    $region2: #{subword_elmo_forward.9} parent=1 // pred_check
      _
    $region3: #{subword_elmo_forward.9} parent=1 // pred_check_branch
      %13 = sbr.rel (0) target = $region5
    $region4: #{subword_elmo_forward.9} parent=1 // pred_region
      _
    $region5: #{subword_elmo_forward.9} parent=1 // pred_fallthru
      _
    // Predicated region
    $region6: #{subword_elmo_forward.9} parent=1 // pred_check
      _
    $region7: #{subword_elmo_forward.9} parent=1 // pred_check_branch
      %15 = sbr.rel (0) target = $region9
    $region8: #{subword_elmo_forward.9} parent=1 // pred_region
      _
    $region9: #{subword_elmo_forward.9} parent=1 // pred_fallthru
      _
    // Predicated region
    $region10: #{subword_elmo_forward.9} parent=1 // pred_check
      _
    $region11: #{subword_elmo_forward.9} parent=1 // pred_check_branch
      %17 = sbr.rel (0) target = $region13
    $region12: #{subword_elmo_forward.9} parent=1 // pred_region
      _
    $region13: #{subword_elmo_forward.9} parent=1 // pred_fallthru
      _
    // Predicated region
    $region14: #{subword_elmo_forward.9} parent=1 // pred_check
      _
    $region15: #{subword_elmo_forward.9} parent=1 // pred_check_branch
      %19 = sbr.rel (0) target = $region17
    $region16: #{subword_elmo_forward.9} parent=1 // pred_region
      _
    $region17: #{subword_elmo_forward.9} parent=1 // pred_fallthru
      _
    %p20 = scmp.eq.s32.totalorder 0, 0
    %p21 = scmp.eq.s32.totalorder 0, 0
    %p22 = pnand %p20, %p21
    %p23 = pneg %p22
    // Predicated region
    $region18: #{subword_elmo_forward.9} parent=1 // pred_check
      _
    $region19: #{subword_elmo_forward.9} parent=1 // pred_check_branch
      %25 = sbr.rel (%p22) target = $region21
    $region20: #{subword_elmo_forward.9} parent=1 // pred_region
      %vm26 = vcmask 0
      %27 = vst.msk [vmem:[#allocation7] sm:$0x1] %vm26, 0.0
      %28 = vst.msk [vmem:[#allocation8] sm:$0x1] %vm26, 0.0
    $region21: #{subword_elmo_forward.9} parent=1 // pred_fallthru
      _
    // Predicated region
    $region22: #{subword_elmo_forward.9} parent=1 // pred_check
      %p29 = pneg %p21
    $region23: #{subword_elmo_forward.9} parent=1 // pred_check_branch
      %31 = sbr.rel (%p29) target = $region25
    $region24: #{subword_elmo_forward.9} parent=1 // pred_region
      %vm32 = vcmask 7168
      %33 = vst.msk [vmem:[#allocation2] sm:$0xff] %vm32, -inf
      %34 = vst.msk [vmem:[#allocation2 + $0x8] sm:$0xff] %vm32, -inf
      %35 = vst.msk [vmem:[#allocation2 + $0x10] sm:$0xff] %vm32, -inf
      %36 = vst.msk [vmem:[#allocation2 + $0x18] sm:$0xff] %vm32, -inf
      %37 = vst.msk [vmem:[#allocation2 + $0x20] sm:$0xff] %vm32, -inf
      %38 = vst.msk [vmem:[#allocation2 + $0x28] sm:$0xff] %vm32, -inf
      %39 = vst.msk [vmem:[#allocation2 + $0x30] sm:$0xff] %vm32, -inf
      %40 = vst.msk [vmem:[#allocation2 + $0x38] sm:$0xff] %vm32, -inf
      %41 = vst.msk [vmem:[#allocation3] sm:$0xff] %vm32, 0.0
      %42 = vst.msk [vmem:[#allocation3 + $0x8] sm:$0xff] %vm32, 0.0
      %43 = vst.msk [vmem:[#allocation3 + $0x10] sm:$0xff] %vm32, 0.0
      %44 = vst.msk [vmem:[#allocation3 + $0x18] sm:$0xff] %vm32, 0.0
      %45 = vst.msk [vmem:[#allocation3 + $0x20] sm:$0xff] %vm32, 0.0
      %46 = vst.msk [vmem:[#allocation3 + $0x28] sm:$0xff] %vm32, 0.0
      %47 = vst.msk [vmem:[#allocation3 + $0x30] sm:$0xff] %vm32, 0.0
      %48 = vst.msk [vmem:[#allocation3 + $0x38] sm:$0xff] %vm32, 0.0
      %49 = vst.msk [vmem:[#allocation4] sm:$0xff] %vm32, -inf
      %50 = vst.msk [vmem:[#allocation4 + $0x8] sm:$0xff] %vm32, -inf
      %51 = vst.msk [vmem:[#allocation4 + $0x10] sm:$0xff] %vm32, -inf
      %52 = vst.msk [vmem:[#allocation4 + $0x18] sm:$0xff] %vm32, -inf
      %53 = vst.msk [vmem:[#allocation4 + $0x20] sm:$0xff] %vm32, -inf
      %54 = vst.msk [vmem:[#allocation4 + $0x28] sm:$0xff] %vm32, -inf
      %55 = vst.msk [vmem:[#allocation4 + $0x30] sm:$0xff] %vm32, -inf
      %56 = vst.msk [vmem:[#allocation4 + $0x38] sm:$0xff] %vm32, -inf
      %57 = vst.msk [vmem:[#allocation5] sm:$0xff] %vm32, 0
      %58 = vst.msk [vmem:[#allocation5 + $0x8] sm:$0xff] %vm32, 0
      %59 = vst.msk [vmem:[#allocation5 + $0x10] sm:$0xff] %vm32, 0
      %60 = vst.msk [vmem:[#allocation5 + $0x18] sm:$0xff] %vm32, 0
      %61 = vst.msk [vmem:[#allocation5 + $0x20] sm:$0xff] %vm32, 0
      %62 = vst.msk [vmem:[#allocation5 + $0x28] sm:$0xff] %vm32, 0
      %63 = vst.msk [vmem:[#allocation5 + $0x30] sm:$0xff] %vm32, 0
      %64 = vst.msk [vmem:[#allocation5 + $0x38] sm:$0xff] %vm32, 0
      %65 = vst.msk [vmem:[#allocation6] sm:$0xff] %vm32, 0.0
      %66 = vst.msk [vmem:[#allocation6 + $0x8] sm:$0xff] %vm32, 0.0
      %67 = vst.msk [vmem:[#allocation6 + $0x10] sm:$0xff] %vm32, 0.0
      %68 = vst.msk [vmem:[#allocation6 + $0x18] sm:$0xff] %vm32, 0.0
      %69 = vst.msk [vmem:[#allocation6 + $0x20] sm:$0xff] %vm32, 0.0
      %70 = vst.msk [vmem:[#allocation6 + $0x28] sm:$0xff] %vm32, 0.0
      %71 = vst.msk [vmem:[#allocation6 + $0x30] sm:$0xff] %vm32, 0.0
      %72 = vst.msk [vmem:[#allocation6 + $0x38] sm:$0xff] %vm32, 0.0
    $region25: #{subword_elmo_forward.9} parent=1 // pred_fallthru
      _
    %v73 = vld [vmem:[%s0] sm:$0xff]
    %v74 = vld [vmem:[%s0 + $0x8] sm:$0xff]
    %v75 = vld [vmem:[%s0 + $0x10] sm:$0xff]
    %v76 = vld [vmem:[%s0 + $0x18] sm:$0xff]
    %v77 = vld [vmem:[%s0 + $0x20] sm:$0xff]
    %v78 = vld [vmem:[%s0 + $0x28] sm:$0xff]
    %v79 = vld [vmem:[%s0 + $0x30] sm:$0xff]
    %v80 = vld [vmem:[%s0 + $0x38] sm:$0xff]
    %v81 = vld [vmem:[%s0 + $0x40] sm:$0xff]
    %v82 = vld [vmem:[%s0 + $0x48] sm:$0xff]
    %v83 = vld [vmem:[%s0 + $0x50] sm:$0xff]
    %v84 = vld [vmem:[%s0 + $0x58] sm:$0xff]
    %v85 = vld [vmem:[%s0 + $0x60] sm:$0xff]
    %v86 = vld [vmem:[%s0 + $0x68] sm:$0xff]
    %v87 = vld [vmem:[%s0 + $0x70] sm:$0xff]
    %v88 = vld [vmem:[%s0 + $0x78] sm:$0xff]
    %v89 = vld [vmem:[%s1] sm:$0xff]
    %v90 = vld [vmem:[%s1 + $0x8] sm:$0xff]
    %v91 = vld [vmem:[%s1 + $0x10] sm:$0xff]
    %v92 = vld [vmem:[%s1 + $0x18] sm:$0xff]
    %v93 = vld [vmem:[%s1 + $0x20] sm:$0xff]
    %v94 = vld [vmem:[%s1 + $0x28] sm:$0xff]
    %v95 = vld [vmem:[%s1 + $0x30] sm:$0xff]
    %v96 = vld [vmem:[%s1 + $0x38] sm:$0xff]
    %v97 = vld [vmem:[%s1 + $0x40] sm:$0xff]
    %v98 = vld [vmem:[%s1 + $0x48] sm:$0xff]
    %v99 = vld [vmem:[%s1 + $0x50] sm:$0xff]
    %v100 = vld [vmem:[%s1 + $0x58] sm:$0xff]
    %v101 = vld [vmem:[%s1 + $0x60] sm:$0xff]
    %v102 = vld [vmem:[%s1 + $0x68] sm:$0xff]
    %v103 = vld [vmem:[%s1 + $0x70] sm:$0xff]
    %v104 = vld [vmem:[%s1 + $0x78] sm:$0xff]
    %v105 = vld [vmem:[%s1 + $0x80] sm:$0xff]
    %v106 = vld [vmem:[%s1 + $0x88] sm:$0xff]
    %v107 = vld [vmem:[%s1 + $0x90] sm:$0xff]
    %v108 = vld [vmem:[%s1 + $0x98] sm:$0xff]
    %v109 = vld [vmem:[%s1 + $0xa0] sm:$0xff]
    %v110 = vld [vmem:[%s1 + $0xa8] sm:$0xff]
    %v111 = vld [vmem:[%s1 + $0xb0] sm:$0xff]
    %v112 = vld [vmem:[%s1 + $0xb8] sm:$0xff]
    %v113 = vld [vmem:[%s1 + $0xc0] sm:$0xff]
    %v114 = vld [vmem:[%s1 + $0xc8] sm:$0xff]
    %v115 = vld [vmem:[%s1 + $0xd0] sm:$0xff]
    %v116 = vld [vmem:[%s1 + $0xd8] sm:$0xff]
    %v117 = vld [vmem:[%s1 + $0xe0] sm:$0xff]
    %v118 = vld [vmem:[%s1 + $0xe8] sm:$0xff]
    %v119 = vld [vmem:[%s1 + $0xf0] sm:$0xff]
    %v120 = vld [vmem:[%s1 + $0xf8] sm:$0xff]
    %v121 = vld [vmem:[%s2] sm:$0x1]
    %v123 = vlaneseq
    %v124 = vshrl.u32 %v123, 7
    %v125 = vsub.s32 0, %v124
    %v126 = vrot.slane %v121, %v125
    %128 = vmatprep.subr.mxu0 0.0
    %129 = vmatpush1.msra.mxu0 %v89
    %130 = vmatprep.subr.mxu0 0.0
    %131 = vmatpush1.msra.mxu0 %v90
    %132 = vmatprep.subr.mxu0 0.0
    %133 = vmatpush1.msra.mxu0 %v91
    %134 = vmatprep.subr.mxu0 0.0
    %135 = vmatpush1.msra.mxu0 %v92
    %136 = vmatprep.subr.mxu0 0.0
    %137 = vmatpush1.msra.mxu0 %v93
    %138 = vmatprep.subr.mxu0 0.0
    %139 = vmatpush1.msra.mxu0 %v94
    %140 = vmatprep.subr.mxu0 0.0
    %141 = vmatpush1.msra.mxu0 %v95
    %142 = vmatprep.subr.mxu0 0.0
    %143 = vmatpush1.msra.mxu0 %v96
    %144 = vmatprep.subr.mxu0 0.0
    %145 = vmatpush1.msra.mxu0 %v97
    %146 = vmatprep.subr.mxu0 0.0
    %147 = vmatpush1.msra.mxu0 %v98
    %148 = vmatprep.subr.mxu0 0.0
    %149 = vmatpush1.msra.mxu0 %v99
    %150 = vmatprep.subr.mxu0 0.0
    %151 = vmatpush1.msra.mxu0 %v100
    %152 = vmatprep.subr.mxu0 0.0
    %153 = vmatpush1.msra.mxu0 %v101
    %154 = vmatprep.subr.mxu0 0.0
    %155 = vmatpush1.msra.mxu0 %v102
    %156 = vmatprep.subr.mxu0 0.0
    %157 = vmatpush1.msra.mxu0 %v103
    %158 = vmatprep.subr.mxu0 0.0
    %159 = vmatpush1.msra.mxu0 %v104
    %160 = vmatprep.subr.mxu0 0.0
    %161 = vmatpush1.msra.mxu0 %v105
    %162 = vmatprep.subr.mxu0 0.0
    %163 = vmatpush1.msra.mxu0 %v106
    %164 = vmatprep.subr.mxu0 0.0
    %165 = vmatpush1.msra.mxu0 %v107
    %166 = vmatprep.subr.mxu0 0.0
    %167 = vmatpush1.msra.mxu0 %v108
    %168 = vmatprep.subr.mxu0 0.0
    %169 = vmatpush1.msra.mxu0 %v109
    %170 = vmatprep.subr.mxu0 0.0
    %171 = vmatpush1.msra.mxu0 %v110
    %172 = vmatprep.subr.mxu0 0.0
    %173 = vmatpush1.msra.mxu0 %v111
    %174 = vmatprep.subr.mxu0 0.0
    %175 = vmatpush1.msra.mxu0 %v112
    %176 = vmatprep.subr.mxu0 0.0
    %177 = vmatpush1.msra.mxu0 %v113
    %178 = vmatprep.subr.mxu0 0.0
    %179 = vmatpush1.msra.mxu0 %v114
    %180 = vmatprep.subr.mxu0 0.0
    %181 = vmatpush1.msra.mxu0 %v115
    %182 = vmatprep.subr.mxu0 0.0
    %183 = vmatpush1.msra.mxu0 %v116
    %184 = vmatprep.subr.mxu0 0.0
    %185 = vmatpush1.msra.mxu0 %v117
    %186 = vmatprep.subr.mxu0 0.0
    %187 = vmatpush1.msra.mxu0 %v118
    %188 = vmatprep.subr.mxu0 0.0
    %189 = vmatpush1.msra.mxu0 %v119
    %190 = vmatprep.subr.mxu0 0.0
    %191 = vmatpush1.msra.mxu0 %v120
    %192 = vmatprep.mubr.f32.mxu0 %v74
    %193 = vmatmul.mubr.f32.gmra.mrb[0].mxu0 %v73
    %v194 = vpop.f32.mrb[0].mxu0
    %v195 = vadd.f32 %v126, %v194
    %v196 = vpop.f32.mrb[0].mxu0
    %197 = vmatprep.mubr.f32.mxu0 %v76
    %198 = vmatmul.mubr.f32.gmra.mrb[0].mxu0 %v75
    %v199 = vpop.f32.mrb[0].mxu0
    %v200 = vadd.f32 %v126, %v199
    %v201 = vpop.f32.mrb[0].mxu0
    %202 = vmatprep.mubr.f32.mxu0 %v78
    %203 = vmatmul.mubr.f32.gmra.mrb[0].mxu0 %v77
    %v204 = vpop.f32.mrb[0].mxu0
    %v205 = vadd.f32 %v126, %v204
    %v206 = vpop.f32.mrb[0].mxu0
    %207 = vmatprep.mubr.f32.mxu0 %v80
    %208 = vmatmul.mubr.f32.gmra.mrb[0].mxu0 %v79
    %v209 = vpop.f32.mrb[0].mxu0
    %v210 = vadd.f32 %v126, %v209
    %v211 = vpop.f32.mrb[0].mxu0
    %212 = vmatprep.mubr.f32.mxu0 %v82
    %213 = vmatmul.mubr.f32.gmra.mrb[0].mxu0 %v81
    %v214 = vpop.f32.mrb[0].mxu0
    %v215 = vadd.f32 %v126, %v214
    %v216 = vpop.f32.mrb[0].mxu0
    %217 = vmatprep.mubr.f32.mxu0 %v84
    %218 = vmatmul.mubr.f32.gmra.mrb[0].mxu0 %v83
    %v219 = vpop.f32.mrb[0].mxu0
    %v220 = vadd.f32 %v126, %v219
    %v221 = vpop.f32.mrb[0].mxu0
    %222 = vmatprep.mubr.f32.mxu0 %v86
    %223 = vmatmul.mubr.f32.gmra.mrb[0].mxu0 %v85
    %v224 = vpop.f32.mrb[0].mxu0
    %v225 = vadd.f32 %v126, %v224
    %v226 = vpop.f32.mrb[0].mxu0
    %227 = vmatprep.mubr.f32.mxu0 %v88
    %228 = vmatmul.mubr.f32.gmra.mrb[0].mxu0 %v87
    %v229 = vpop.f32.mrb[0].mxu0
    %v230 = vadd.f32 %v126, %v229
    %v231 = vpop.f32.mrb[0].mxu0
    %232 = vdwg.mxu0
    %v233 = vlaneseq
    %v234 = vand.u32 %v233, 127
    %s235 = smul.u32 0, 128
    %v236 = vstv %s235
    %v237 = vadd.s32 %v234, %v236
    %238 = vmax.xlane.f32.xlu0 %v195
    %v239 = vpop.xlane.xlu0 %238
    %240 = vmax.xlane.f32.xlu0 %v200
    %v241 = vpop.xlane.xlu0 %240
    %242 = vmax.xlane.f32.xlu0 %v205
    %v243 = vpop.xlane.xlu0 %242
    %244 = vmax.xlane.f32.xlu0 %v210
    %v245 = vpop.xlane.xlu0 %244
    %246 = vmax.xlane.f32.xlu0 %v215
    %v247 = vpop.xlane.xlu0 %246
    %248 = vmax.xlane.f32.xlu0 %v220
    %v249 = vpop.xlane.xlu0 %248
    %250 = vmax.xlane.f32.xlu0 %v225
    %v251 = vpop.xlane.xlu0 %250
    %252 = vmax.xlane.f32.xlu0 %v230
    %v253 = vpop.xlane.xlu0 %252
    %vm254 = vcmp.eq.f32.partialorder %v195, %v239
    %vm255 = vcmp.eq.f32.partialorder %v200, %v241
    %vm256 = vcmp.eq.f32.partialorder %v205, %v243
    %vm257 = vcmp.eq.f32.partialorder %v210, %v245
    %vm258 = vcmp.eq.f32.partialorder %v215, %v247
    %vm259 = vcmp.eq.f32.partialorder %v220, %v249
    %vm260 = vcmp.eq.f32.partialorder %v225, %v251
    %vm261 = vcmp.eq.f32.partialorder %v230, %v253
    %v262 = vsel %vm254, %v237, 2147483647
    %v263 = vsel %vm255, %v237, 2147483647
    %v264 = vsel %vm256, %v237, 2147483647
    %v265 = vsel %vm257, %v237, 2147483647
    %v266 = vsel %vm258, %v237, 2147483647
    %v267 = vsel %vm259, %v237, 2147483647
    %v268 = vsel %vm260, %v237, 2147483647
    %v269 = vsel %vm261, %v237, 2147483647
    %v270 = vand.u32 %v262, 65535
    %v271 = vshra.s32 %v262, 16
    %v272 = vcvt.s32.f32 %v270
    %v273 = vcvt.s32.f32 %v271
    %274 = vmin.xlane.f32.xlu0 %v273
    %v275 = vpop.xlane.xlu0 %274
    %vm276 = vcmp.eq.f32.partialorder %v273, %v275
    %v277 = vsel %vm276, %v272, inf
    %278 = vmin.xlane.f32.xlu0 %v277
    %v279 = vpop.xlane.xlu0 %278
    %v280 = vcvt.f32.s32 %v279
    %v281 = vcvt.f32.s32 %v275
    %v282 = vshll.u32 %v281, 16
    %v283 = vadd.s32 %v282, %v280
    %v284 = vand.u32 %v263, 65535
    %v285 = vshra.s32 %v263, 16
    %v286 = vcvt.s32.f32 %v284
    %v287 = vcvt.s32.f32 %v285
    %288 = vmin.xlane.f32.xlu0 %v287
    %v289 = vpop.xlane.xlu0 %288
    %vm290 = vcmp.eq.f32.partialorder %v287, %v289
    %v291 = vsel %vm290, %v286, inf
    %292 = vmin.xlane.f32.xlu0 %v291
    %v293 = vpop.xlane.xlu0 %292
    %v294 = vcvt.f32.s32 %v293
    %v295 = vcvt.f32.s32 %v289
    %v296 = vshll.u32 %v295, 16
    %v297 = vadd.s32 %v296, %v294
    %v298 = vand.u32 %v264, 65535
    %v299 = vshra.s32 %v264, 16
    %v300 = vcvt.s32.f32 %v298
    %v301 = vcvt.s32.f32 %v299
    %302 = vmin.xlane.f32.xlu0 %v301
    %v303 = vpop.xlane.xlu0 %302
    %vm304 = vcmp.eq.f32.partialorder %v301, %v303
    %v305 = vsel %vm304, %v300, inf
    %306 = vmin.xlane.f32.xlu0 %v305
    %v307 = vpop.xlane.xlu0 %306
    %v308 = vcvt.f32.s32 %v307
    %v309 = vcvt.f32.s32 %v303
    %v310 = vshll.u32 %v309, 16
    %v311 = vadd.s32 %v310, %v308
    %v312 = vand.u32 %v265, 65535
    %v313 = vshra.s32 %v265, 16
    %v314 = vcvt.s32.f32 %v312
    %v315 = vcvt.s32.f32 %v313
    %316 = vmin.xlane.f32.xlu0 %v315
    %v317 = vpop.xlane.xlu0 %316
    %vm318 = vcmp.eq.f32.partialorder %v315, %v317
    %v319 = vsel %vm318, %v314, inf
    %320 = vmin.xlane.f32.xlu0 %v319
    %v321 = vpop.xlane.xlu0 %320
    %v322 = vcvt.f32.s32 %v321
    %v323 = vcvt.f32.s32 %v317
    %v324 = vshll.u32 %v323, 16
    %v325 = vadd.s32 %v324, %v322
    %v326 = vand.u32 %v266, 65535
    %v327 = vshra.s32 %v266, 16
    %v328 = vcvt.s32.f32 %v326
    %v329 = vcvt.s32.f32 %v327
    %330 = vmin.xlane.f32.xlu0 %v329
    %v331 = vpop.xlane.xlu0 %330
    %vm332 = vcmp.eq.f32.partialorder %v329, %v331
    %v333 = vsel %vm332, %v328, inf
    %334 = vmin.xlane.f32.xlu0 %v333
    %v335 = vpop.xlane.xlu0 %334
    %v336 = vcvt.f32.s32 %v335
    %v337 = vcvt.f32.s32 %v331
    %v338 = vshll.u32 %v337, 16
    %v339 = vadd.s32 %v338, %v336
    %v340 = vand.u32 %v267, 65535
    %v341 = vshra.s32 %v267, 16
    %v342 = vcvt.s32.f32 %v340
    %v343 = vcvt.s32.f32 %v341
    %344 = vmin.xlane.f32.xlu0 %v343
    %v345 = vpop.xlane.xlu0 %344
    %vm346 = vcmp.eq.f32.partialorder %v343, %v345
    %v347 = vsel %vm346, %v342, inf
    %348 = vmin.xlane.f32.xlu0 %v347
    %v349 = vpop.xlane.xlu0 %348
    %v350 = vcvt.f32.s32 %v349
    %v351 = vcvt.f32.s32 %v345
    %v352 = vshll.u32 %v351, 16
    %v353 = vadd.s32 %v352, %v350
    %v354 = vand.u32 %v268, 65535
    %v355 = vshra.s32 %v268, 16
    %v356 = vcvt.s32.f32 %v354
    %v357 = vcvt.s32.f32 %v355
    %358 = vmin.xlane.f32.xlu0 %v357
    %v359 = vpop.xlane.xlu0 %358
    %vm360 = vcmp.eq.f32.partialorder %v357, %v359
    %v361 = vsel %vm360, %v356, inf
    %362 = vmin.xlane.f32.xlu0 %v361
    %v363 = vpop.xlane.xlu0 %362
    %v364 = vcvt.f32.s32 %v363
    %v365 = vcvt.f32.s32 %v359
    %v366 = vshll.u32 %v365, 16
    %v367 = vadd.s32 %v366, %v364
    %v368 = vand.u32 %v269, 65535
    %v369 = vshra.s32 %v269, 16
    %v370 = vcvt.s32.f32 %v368
    %v371 = vcvt.s32.f32 %v369
    %372 = vmin.xlane.f32.xlu0 %v371
    %v373 = vpop.xlane.xlu0 %372
    %vm374 = vcmp.eq.f32.partialorder %v371, %v373
    %v375 = vsel %vm374, %v370, inf
    %376 = vmin.xlane.f32.xlu0 %v375
    %v377 = vpop.xlane.xlu0 %376
    %v378 = vcvt.f32.s32 %v377
    %v379 = vcvt.f32.s32 %v373
    %v380 = vshll.u32 %v379, 16
    %v381 = vadd.s32 %v380, %v378
    %v382 = vld [vmem:[#allocation4] sm:$0xff]
    %v383 = vld [vmem:[#allocation4 + $0x8] sm:$0xff]
    %v384 = vld [vmem:[#allocation4 + $0x10] sm:$0xff]
    %v385 = vld [vmem:[#allocation4 + $0x18] sm:$0xff]
    %v386 = vld [vmem:[#allocation4 + $0x20] sm:$0xff]
    %v387 = vld [vmem:[#allocation4 + $0x28] sm:$0xff]
    %v388 = vld [vmem:[#allocation4 + $0x30] sm:$0xff]
    %v389 = vld [vmem:[#allocation4 + $0x38] sm:$0xff]
    %vm390 = vcmp.gt.f32.partialorder %v239, %v382
    %vm391 = vcmp.gt.f32.partialorder %v241, %v383
    %vm392 = vcmp.gt.f32.partialorder %v243, %v384
    %vm393 = vcmp.gt.f32.partialorder %v245, %v385
    %vm394 = vcmp.gt.f32.partialorder %v247, %v386
    %vm395 = vcmp.gt.f32.partialorder %v249, %v387
    %vm396 = vcmp.gt.f32.partialorder %v251, %v388
    %vm397 = vcmp.gt.f32.partialorder %v253, %v389
    %v398 = vld [vmem:[#allocation5] sm:$0xff]
    %v399 = vld [vmem:[#allocation5 + $0x8] sm:$0xff]
    %v400 = vld [vmem:[#allocation5 + $0x10] sm:$0xff]
    %v401 = vld [vmem:[#allocation5 + $0x18] sm:$0xff]
    %v402 = vld [vmem:[#allocation5 + $0x20] sm:$0xff]
    %v403 = vld [vmem:[#allocation5 + $0x28] sm:$0xff]
    %v404 = vld [vmem:[#allocation5 + $0x30] sm:$0xff]
    %v405 = vld [vmem:[#allocation5 + $0x38] sm:$0xff]
    %v406 = vsel %vm390, %v283, %v398
    %v407 = vsel %vm391, %v297, %v399
    %v408 = vsel %vm392, %v311, %v400
    %v409 = vsel %vm393, %v325, %v401
    %v410 = vsel %vm394, %v339, %v402
    %v411 = vsel %vm395, %v353, %v403
    %v412 = vsel %vm396, %v367, %v404
    %v413 = vsel %vm397, %v381, %v405
    %vm414 = vcmask 7168
    %415 = vst.msk [vmem:[#allocation5] sm:$0xff] %vm414, %v406
    %416 = vst.msk [vmem:[#allocation5 + $0x8] sm:$0xff] %vm414, %v407
    %417 = vst.msk [vmem:[#allocation5 + $0x10] sm:$0xff] %vm414, %v408
    %418 = vst.msk [vmem:[#allocation5 + $0x18] sm:$0xff] %vm414, %v409
    %419 = vst.msk [vmem:[#allocation5 + $0x20] sm:$0xff] %vm414, %v410
    %420 = vst.msk [vmem:[#allocation5 + $0x28] sm:$0xff] %vm414, %v411
    %421 = vst.msk [vmem:[#allocation5 + $0x30] sm:$0xff] %vm414, %v412
    %422 = vst.msk [vmem:[#allocation5 + $0x38] sm:$0xff] %vm414, %v413
    %v423 = vld [vmem:[#allocation4] sm:$0xff]
    %v424 = vld [vmem:[#allocation4 + $0x8] sm:$0xff]
    %v425 = vld [vmem:[#allocation4 + $0x10] sm:$0xff]
    %v426 = vld [vmem:[#allocation4 + $0x18] sm:$0xff]
    %v427 = vld [vmem:[#allocation4 + $0x20] sm:$0xff]
    %v428 = vld [vmem:[#allocation4 + $0x28] sm:$0xff]
    %v429 = vld [vmem:[#allocation4 + $0x30] sm:$0xff]
    %v430 = vld [vmem:[#allocation4 + $0x38] sm:$0xff]
    %v431 = vsel %vm390, %v239, %v423
    %v432 = vsel %vm391, %v241, %v424
    %v433 = vsel %vm392, %v243, %v425
    %v434 = vsel %vm393, %v245, %v426
    %v435 = vsel %vm394, %v247, %v427
    %v436 = vsel %vm395, %v249, %v428
    %v437 = vsel %vm396, %v251, %v429
    %v438 = vsel %vm397, %v253, %v430
    %439 = vst.msk [vmem:[#allocation4] sm:$0xff] %vm414, %v431
    %440 = vst.msk [vmem:[#allocation4 + $0x8] sm:$0xff] %vm414, %v432
    %441 = vst.msk [vmem:[#allocation4 + $0x10] sm:$0xff] %vm414, %v433
    %442 = vst.msk [vmem:[#allocation4 + $0x18] sm:$0xff] %vm414, %v434
    %443 = vst.msk [vmem:[#allocation4 + $0x20] sm:$0xff] %vm414, %v435
    %444 = vst.msk [vmem:[#allocation4 + $0x28] sm:$0xff] %vm414, %v436
    %445 = vst.msk [vmem:[#allocation4 + $0x30] sm:$0xff] %vm414, %v437
    %446 = vst.msk [vmem:[#allocation4 + $0x38] sm:$0xff] %vm414, %v438
    %v447 = vld [vmem:[#allocation2] sm:$0xff]
    %v448 = vld [vmem:[#allocation2 + $0x8] sm:$0xff]
    %v449 = vld [vmem:[#allocation2 + $0x10] sm:$0xff]
    %v450 = vld [vmem:[#allocation2 + $0x18] sm:$0xff]
    %v451 = vld [vmem:[#allocation2 + $0x20] sm:$0xff]
    %v452 = vld [vmem:[#allocation2 + $0x28] sm:$0xff]
    %v453 = vld [vmem:[#allocation2 + $0x30] sm:$0xff]
    %v454 = vld [vmem:[#allocation2 + $0x38] sm:$0xff]
    %v455 = vmax.f32 %v447, %v239
    %v456 = vmax.f32 %v448, %v241
    %v457 = vmax.f32 %v449, %v243
    %v458 = vmax.f32 %v450, %v245
    %v459 = vmax.f32 %v451, %v247
    %v460 = vmax.f32 %v452, %v249
    %v461 = vmax.f32 %v453, %v251
    %v462 = vmax.f32 %v454, %v253
    %v463 = vld [vmem:[#allocation3] sm:$0xff]
    %v464 = vld [vmem:[#allocation3 + $0x8] sm:$0xff]
    %v465 = vld [vmem:[#allocation3 + $0x10] sm:$0xff]
    %v466 = vld [vmem:[#allocation3 + $0x18] sm:$0xff]
    %v467 = vld [vmem:[#allocation3 + $0x20] sm:$0xff]
    %v468 = vld [vmem:[#allocation3 + $0x28] sm:$0xff]
    %v469 = vld [vmem:[#allocation3 + $0x30] sm:$0xff]
    %v470 = vld [vmem:[#allocation3 + $0x38] sm:$0xff]
    %v471 = vsub.f32 %v447, %v455
    %v472 = vsub.f32 %v448, %v456
    %v473 = vsub.f32 %v449, %v457
    %v474 = vsub.f32 %v450, %v458
    %v475 = vsub.f32 %v451, %v459
    %v476 = vsub.f32 %v452, %v460
    %v477 = vsub.f32 %v453, %v461
    %v478 = vsub.f32 %v454, %v462
    %v479 = vmul.f32 %v471, 1.442695
    %v480 = vpow.pop %v479
    %v481 = vmul.f32 %v472, 1.442695
    %v482 = vpow.pop %v481
    %v483 = vmul.f32 %v473, 1.442695
    %v484 = vpow.pop %v483
    %v485 = vmul.f32 %v474, 1.442695
    %v486 = vpow.pop %v485
    %v487 = vmul.f32 %v475, 1.442695
    %v488 = vpow.pop %v487
    %v489 = vmul.f32 %v476, 1.442695
    %v490 = vpow.pop %v489
    %v491 = vmul.f32 %v477, 1.442695
    %v492 = vpow.pop %v491
    %v493 = vmul.f32 %v478, 1.442695
    %v494 = vpow.pop %v493
    %v495 = vmul.f32 %v463, %v480
    %v496 = vmul.f32 %v464, %v482
    %v497 = vmul.f32 %v465, %v484
    %v498 = vmul.f32 %v466, %v486
    %v499 = vmul.f32 %v467, %v488
    %v500 = vmul.f32 %v468, %v490
    %v501 = vmul.f32 %v469, %v492
    %v502 = vmul.f32 %v470, %v494
    %504 = vset.pattern.permute.xlu0 0
    %505 = vperm.xlu0 %504, %v455
    %v506 = vpop.permute.xlu0 %505
    %509 = vset.pattern.permute.xlu0 0
    %510 = vperm.xlu0 %509, %v456
    %v511 = vpop.permute.xlu0 %510
    %514 = vset.pattern.permute.xlu0 0
    %515 = vperm.xlu0 %514, %v457
    %v516 = vpop.permute.xlu0 %515
    %519 = vset.pattern.permute.xlu0 0
    %520 = vperm.xlu0 %519, %v458
    %v521 = vpop.permute.xlu0 %520
    %524 = vset.pattern.permute.xlu0 0
    %525 = vperm.xlu0 %524, %v459
    %v526 = vpop.permute.xlu0 %525
    %529 = vset.pattern.permute.xlu0 0
    %530 = vperm.xlu0 %529, %v460
    %v531 = vpop.permute.xlu0 %530
    %534 = vset.pattern.permute.xlu0 0
    %535 = vperm.xlu0 %534, %v461
    %v536 = vpop.permute.xlu0 %535
    %539 = vset.pattern.permute.xlu0 0
    %540 = vperm.xlu0 %539, %v462
    %v541 = vpop.permute.xlu0 %540
    %v543 = vsub.f32 %v195, %v506
    %v544 = vsub.f32 %v200, %v511
    %v545 = vsub.f32 %v205, %v516
    %v546 = vsub.f32 %v210, %v521
    %v547 = vsub.f32 %v215, %v526
    %v548 = vsub.f32 %v220, %v531
    %v549 = vsub.f32 %v225, %v536
    %v550 = vsub.f32 %v230, %v541
    %v551 = vmul.f32 %v543, 1.442695
    %v552 = vpow.pop %v551
    %v553 = vmul.f32 %v544, 1.442695
    %v554 = vpow.pop %v553
    %v555 = vmul.f32 %v545, 1.442695
    %v556 = vpow.pop %v555
    %v557 = vmul.f32 %v546, 1.442695
    %v558 = vpow.pop %v557
    %v559 = vmul.f32 %v547, 1.442695
    %v560 = vpow.pop %v559
    %v561 = vmul.f32 %v548, 1.442695
    %v562 = vpow.pop %v561
    %v563 = vmul.f32 %v549, 1.442695
    %v564 = vpow.pop %v563
    %v565 = vmul.f32 %v550, 1.442695
    %v566 = vpow.pop %v565
    %567 = vadd.xlane.f32.xlu0 %v552
    %v568 = vpop.xlane.xlu0 %567
    %569 = vadd.xlane.f32.xlu0 %v554
    %v570 = vpop.xlane.xlu0 %569
    %571 = vadd.xlane.f32.xlu0 %v556
    %v572 = vpop.xlane.xlu0 %571
    %573 = vadd.xlane.f32.xlu0 %v558
    %v574 = vpop.xlane.xlu0 %573
    %575 = vadd.xlane.f32.xlu0 %v560
    %v576 = vpop.xlane.xlu0 %575
    %577 = vadd.xlane.f32.xlu0 %v562
    %v578 = vpop.xlane.xlu0 %577
    %579 = vadd.xlane.f32.xlu0 %v564
    %v580 = vpop.xlane.xlu0 %579
    %581 = vadd.xlane.f32.xlu0 %v566
    %v582 = vpop.xlane.xlu0 %581
    %v583 = vadd.f32 %v495, %v568
    %v584 = vadd.f32 %v496, %v570
    %v585 = vadd.f32 %v497, %v572
    %v586 = vadd.f32 %v498, %v574
    %v587 = vadd.f32 %v499, %v576
    %v588 = vadd.f32 %v500, %v578
    %v589 = vadd.f32 %v501, %v580
    %v590 = vadd.f32 %v502, %v582
    %591 = vst.msk [vmem:[#allocation3] sm:$0xff] %vm414, %v583
    %592 = vst.msk [vmem:[#allocation3 + $0x8] sm:$0xff] %vm414, %v584
    %593 = vst.msk [vmem:[#allocation3 + $0x10] sm:$0xff] %vm414, %v585
    %594 = vst.msk [vmem:[#allocation3 + $0x18] sm:$0xff] %vm414, %v586
    %595 = vst.msk [vmem:[#allocation3 + $0x20] sm:$0xff] %vm414, %v587
    %596 = vst.msk [vmem:[#allocation3 + $0x28] sm:$0xff] %vm414, %v588
    %597 = vst.msk [vmem:[#allocation3 + $0x30] sm:$0xff] %vm414, %v589
    %598 = vst.msk [vmem:[#allocation3 + $0x38] sm:$0xff] %vm414, %v590
    %599 = vst.msk [vmem:[#allocation2] sm:$0xff] %vm414, %v455
    %600 = vst.msk [vmem:[#allocation2 + $0x8] sm:$0xff] %vm414, %v456
    %601 = vst.msk [vmem:[#allocation2 + $0x10] sm:$0xff] %vm414, %v457
    %602 = vst.msk [vmem:[#allocation2 + $0x18] sm:$0xff] %vm414, %v458
    %603 = vst.msk [vmem:[#allocation2 + $0x20] sm:$0xff] %vm414, %v459
    %604 = vst.msk [vmem:[#allocation2 + $0x28] sm:$0xff] %vm414, %v460
    %605 = vst.msk [vmem:[#allocation2 + $0x30] sm:$0xff] %vm414, %v461
    %606 = vst.msk [vmem:[#allocation2 + $0x38] sm:$0xff] %vm414, %v462
    %v607 = vld [vmem:[%s3] sm:$0xff]
    %v608 = vld [vmem:[%s3 + $0x8] sm:$0xff]
    %v609 = vld [vmem:[%s3 + $0x10] sm:$0xff]
    %v610 = vld [vmem:[%s3 + $0x18] sm:$0xff]
    %v611 = vld [vmem:[%s3 + $0x20] sm:$0xff]
    %v612 = vld [vmem:[%s3 + $0x28] sm:$0xff]
    %v613 = vld [vmem:[%s3 + $0x30] sm:$0xff]
    %v614 = vld [vmem:[%s3 + $0x38] sm:$0xff]
    %v615 = vld [vmem:[#allocation6] sm:$0xff]
    %v616 = vld [vmem:[#allocation6 + $0x8] sm:$0xff]
    %v617 = vld [vmem:[#allocation6 + $0x10] sm:$0xff]
    %v618 = vld [vmem:[#allocation6 + $0x18] sm:$0xff]
    %v619 = vld [vmem:[#allocation6 + $0x20] sm:$0xff]
    %v620 = vld [vmem:[#allocation6 + $0x28] sm:$0xff]
    %v621 = vld [vmem:[#allocation6 + $0x30] sm:$0xff]
    %v622 = vld [vmem:[#allocation6 + $0x38] sm:$0xff]
    %623 = vset.pattern.permute.xlu0 0
    %624 = vperm.xlu0 %623, %v607
    %v625 = vpop.permute.xlu0 %624
    %626 = vset.pattern.permute.xlu0 0
    %627 = vperm.xlu0 %626, %v608
    %v628 = vpop.permute.xlu0 %627
    %629 = vset.pattern.permute.xlu0 0
    %630 = vperm.xlu0 %629, %v609
    %v631 = vpop.permute.xlu0 %630
    %632 = vset.pattern.permute.xlu0 0
    %633 = vperm.xlu0 %632, %v610
    %v634 = vpop.permute.xlu0 %633
    %635 = vset.pattern.permute.xlu0 0
    %636 = vperm.xlu0 %635, %v611
    %v637 = vpop.permute.xlu0 %636
    %638 = vset.pattern.permute.xlu0 0
    %639 = vperm.xlu0 %638, %v612
    %v640 = vpop.permute.xlu0 %639
    %641 = vset.pattern.permute.xlu0 0
    %642 = vperm.xlu0 %641, %v613
    %v643 = vpop.permute.xlu0 %642
    %644 = vset.pattern.permute.xlu0 0
    %645 = vperm.xlu0 %644, %v614
    %v646 = vpop.permute.xlu0 %645
    %vm647 = vcmp.eq.s32.totalorder %v237, %v625
    %vm648 = vcmp.eq.s32.totalorder %v237, %v628
    %vm649 = vcmp.eq.s32.totalorder %v237, %v631
    %vm650 = vcmp.eq.s32.totalorder %v237, %v634
    %vm651 = vcmp.eq.s32.totalorder %v237, %v637
    %vm652 = vcmp.eq.s32.totalorder %v237, %v640
    %vm653 = vcmp.eq.s32.totalorder %v237, %v643
    %vm654 = vcmp.eq.s32.totalorder %v237, %v646
    %v655 = vsel %vm647, %v195, 0.0
    %v656 = vsel %vm648, %v200, 0.0
    %v657 = vsel %vm649, %v205, 0.0
    %v658 = vsel %vm650, %v210, 0.0
    %v659 = vsel %vm651, %v215, 0.0
    %v660 = vsel %vm652, %v220, 0.0
    %v661 = vsel %vm653, %v225, 0.0
    %v662 = vsel %vm654, %v230, 0.0
    %663 = vadd.xlane.f32.xlu0 %v655
    %v664 = vpop.xlane.xlu0 %663
    %665 = vadd.xlane.f32.xlu0 %v656
    %v666 = vpop.xlane.xlu0 %665
    %667 = vadd.xlane.f32.xlu0 %v657
    %v668 = vpop.xlane.xlu0 %667
    %669 = vadd.xlane.f32.xlu0 %v658
    %v670 = vpop.xlane.xlu0 %669
    %671 = vadd.xlane.f32.xlu0 %v659
    %v672 = vpop.xlane.xlu0 %671
    %673 = vadd.xlane.f32.xlu0 %v660
    %v674 = vpop.xlane.xlu0 %673
    %675 = vadd.xlane.f32.xlu0 %v661
    %v676 = vpop.xlane.xlu0 %675
    %677 = vadd.xlane.f32.xlu0 %v662
    %v678 = vpop.xlane.xlu0 %677
    %v679 = vadd.f32 %v615, %v664
    %v680 = vadd.f32 %v616, %v666
    %v681 = vadd.f32 %v617, %v668
    %v682 = vadd.f32 %v618, %v670
    %v683 = vadd.f32 %v619, %v672
    %v684 = vadd.f32 %v620, %v674
    %v685 = vadd.f32 %v621, %v676
    %v686 = vadd.f32 %v622, %v678
    %687 = vst.msk [vmem:[#allocation6] sm:$0xff] %vm414, %v679
    %688 = vst.msk [vmem:[#allocation6 + $0x8] sm:$0xff] %vm414, %v680
    %689 = vst.msk [vmem:[#allocation6 + $0x10] sm:$0xff] %vm414, %v681
    %690 = vst.msk [vmem:[#allocation6 + $0x18] sm:$0xff] %vm414, %v682
    %691 = vst.msk [vmem:[#allocation6 + $0x20] sm:$0xff] %vm414, %v683
    %692 = vst.msk [vmem:[#allocation6 + $0x28] sm:$0xff] %vm414, %v684
    %693 = vst.msk [vmem:[#allocation6 + $0x30] sm:$0xff] %vm414, %v685
    %694 = vst.msk [vmem:[#allocation6 + $0x38] sm:$0xff] %vm414, %v686
    // Predicated region
    $region26: #{subword_elmo_forward.9} parent=1 // pred_check
      %p695 = pneg %p21
    $region27: #{subword_elmo_forward.9} parent=1 // pred_check_branch
      %697 = sbr.rel (%p695) target = $region29
    $region28: #{subword_elmo_forward.9} parent=1 // pred_region
      %v698 = vld [vmem:[#allocation5] sm:$0xff]
      %v699 = vld [vmem:[#allocation5 + $0x8] sm:$0xff]
      %v700 = vld [vmem:[#allocation5 + $0x10] sm:$0xff]
      %v701 = vld [vmem:[#allocation5 + $0x18] sm:$0xff]
      %v702 = vld [vmem:[#allocation5 + $0x20] sm:$0xff]
      %v703 = vld [vmem:[#allocation5 + $0x28] sm:$0xff]
      %v704 = vld [vmem:[#allocation5 + $0x30] sm:$0xff]
      %v705 = vld [vmem:[#allocation5 + $0x38] sm:$0xff]
      %706 = vst.msk [vmem:[%s5] sm:$0xff] %vm414, %v698
      %707 = vst.msk [vmem:[%s5 + $0x8] sm:$0xff] %vm414, %v699
      %708 = vst.msk [vmem:[%s5 + $0x10] sm:$0xff] %vm414, %v700
      %709 = vst.msk [vmem:[%s5 + $0x18] sm:$0xff] %vm414, %v701
      %710 = vst.msk [vmem:[%s5 + $0x20] sm:$0xff] %vm414, %v702
      %711 = vst.msk [vmem:[%s5 + $0x28] sm:$0xff] %vm414, %v703
      %712 = vst.msk [vmem:[%s5 + $0x30] sm:$0xff] %vm414, %v704
      %713 = vst.msk [vmem:[%s5 + $0x38] sm:$0xff] %vm414, %v705
      %v714 = vld [vmem:[#allocation2] sm:$0xff]
      %v715 = vld [vmem:[#allocation2 + $0x8] sm:$0xff]
      %v716 = vld [vmem:[#allocation2 + $0x10] sm:$0xff]
      %v717 = vld [vmem:[#allocation2 + $0x18] sm:$0xff]
      %v718 = vld [vmem:[#allocation2 + $0x20] sm:$0xff]
      %v719 = vld [vmem:[#allocation2 + $0x28] sm:$0xff]
      %v720 = vld [vmem:[#allocation2 + $0x30] sm:$0xff]
      %v721 = vld [vmem:[#allocation2 + $0x38] sm:$0xff]
      %v722 = vld [vmem:[#allocation3] sm:$0xff]
      %v723 = vld [vmem:[#allocation3 + $0x8] sm:$0xff]
      %v724 = vld [vmem:[#allocation3 + $0x10] sm:$0xff]
      %v725 = vld [vmem:[#allocation3 + $0x18] sm:$0xff]
      %v726 = vld [vmem:[#allocation3 + $0x20] sm:$0xff]
      %v727 = vld [vmem:[#allocation3 + $0x28] sm:$0xff]
      %v728 = vld [vmem:[#allocation3 + $0x30] sm:$0xff]
      %v729 = vld [vmem:[#allocation3 + $0x38] sm:$0xff]
      %v730 = vlog2.pop %v722
      %v731 = vmul.f32 %v730, 0.6931472
      %v732 = vlog2.pop %v723
      %v733 = vmul.f32 %v732, 0.6931472
      %v734 = vlog2.pop %v724
      %v735 = vmul.f32 %v734, 0.6931472
      %v736 = vlog2.pop %v725
      %v737 = vmul.f32 %v736, 0.6931472
      %v738 = vlog2.pop %v726
      %v739 = vmul.f32 %v738, 0.6931472
      %v740 = vlog2.pop %v727
      %v741 = vmul.f32 %v740, 0.6931472
      %v742 = vlog2.pop %v728
      %v743 = vmul.f32 %v742, 0.6931472
      %v744 = vlog2.pop %v729
      %v745 = vmul.f32 %v744, 0.6931472
      %v746 = vadd.f32 %v714, %v731
      %v747 = vadd.f32 %v715, %v733
      %v748 = vadd.f32 %v716, %v735
      %v749 = vadd.f32 %v717, %v737
      %v750 = vadd.f32 %v718, %v739
      %v751 = vadd.f32 %v719, %v741
      %v752 = vadd.f32 %v720, %v743
      %v753 = vadd.f32 %v721, %v745
      %v754 = vld [vmem:[#allocation6] sm:$0xff]
      %v755 = vld [vmem:[#allocation6 + $0x8] sm:$0xff]
      %v756 = vld [vmem:[#allocation6 + $0x10] sm:$0xff]
      %v757 = vld [vmem:[#allocation6 + $0x18] sm:$0xff]
      %v758 = vld [vmem:[#allocation6 + $0x20] sm:$0xff]
      %v759 = vld [vmem:[#allocation6 + $0x28] sm:$0xff]
      %v760 = vld [vmem:[#allocation6 + $0x30] sm:$0xff]
      %v761 = vld [vmem:[#allocation6 + $0x38] sm:$0xff]
      %v762 = vsub.f32 %v746, %v754
      %v763 = vsub.f32 %v747, %v755
      %v764 = vsub.f32 %v748, %v756
      %v765 = vsub.f32 %v749, %v757
      %v766 = vsub.f32 %v750, %v758
      %v767 = vsub.f32 %v751, %v759
      %v768 = vsub.f32 %v752, %v760
      %v769 = vsub.f32 %v753, %v761
      %vm770 = vcmp.ne.s32.totalorder %v607, 0
      %vm771 = vcmp.ne.s32.totalorder %v608, 0
      %vm772 = vcmp.ne.s32.totalorder %v609, 0
      %vm773 = vcmp.ne.s32.totalorder %v610, 0
      %vm774 = vcmp.ne.s32.totalorder %v611, 0
      %vm775 = vcmp.ne.s32.totalorder %v612, 0
      %vm776 = vcmp.ne.s32.totalorder %v613, 0
      %vm777 = vcmp.ne.s32.totalorder %v614, 0
      %v778 = vsel %vm770, 1, 0
      %v779 = vsel %vm771, 1, 0
      %v780 = vsel %vm772, 1, 0
      %v781 = vsel %vm773, 1, 0
      %v782 = vsel %vm774, 1, 0
      %v783 = vsel %vm775, 1, 0
      %v784 = vsel %vm776, 1, 0
      %v785 = vsel %vm777, 1, 0
      %v786 = vcvt.s32.f32 %v778
      %v787 = vcvt.s32.f32 %v779
      %v788 = vcvt.s32.f32 %v780
      %v789 = vcvt.s32.f32 %v781
      %v790 = vcvt.s32.f32 %v782
      %v791 = vcvt.s32.f32 %v783
      %v792 = vcvt.s32.f32 %v784
      %v793 = vcvt.s32.f32 %v785
      %v794 = vld [vmem:[#allocation7] sm:$0x1]
      %v795 = vmul.f32 %v762, %v786
      %v796 = vmul.f32 %v763, %v787
      %v797 = vmul.f32 %v764, %v788
      %v798 = vmul.f32 %v765, %v789
      %v799 = vmul.f32 %v766, %v790
      %v800 = vmul.f32 %v767, %v791
      %v801 = vmul.f32 %v768, %v792
      %v802 = vmul.f32 %v769, %v793
      %v803 = vsel %vm414, %v795, 0.0
      %v804 = vsel %vm414, %v796, 0.0
      %v805 = vadd.f32 %v803, %v804
      %v806 = vsel %vm414, %v797, 0.0
      %v807 = vadd.f32 %v805, %v806
      %v808 = vsel %vm414, %v798, 0.0
      %v809 = vadd.f32 %v807, %v808
      %v810 = vsel %vm414, %v799, 0.0
      %v811 = vadd.f32 %v809, %v810
      %v812 = vsel %vm414, %v800, 0.0
      %v813 = vadd.f32 %v811, %v812
      %v814 = vsel %vm414, %v801, 0.0
      %v815 = vadd.f32 %v813, %v814
      %v816 = vsel %vm414, %v802, 0.0
      %v817 = vadd.f32 %v815, %v816
      %818 = vadd.xlane.f32.xlu0 %v817
      %v819 = vpop.xlane.xlu0 %818
      %v820 = vrot.slane %v819, 4
      %v821 = vadd.f32 %v819, %v820
      %v822 = vrot.slane %v821, 2
      %v823 = vadd.f32 %v821, %v822
      %v824 = vrot.slane %v823, 1
      %v825 = vadd.f32 %v823, %v824
      %s826 = vtos %v825
      %v827 = vstv %s826
      %v828 = vadd.f32 %v794, %v827
      %vm829 = vcmask 0
      %830 = vst.msk [vmem:[#allocation7] sm:$0x1] %vm829, %v828
      %v831 = vld [vmem:[#allocation8] sm:$0x1]
      %v832 = vsel %vm414, %v786, 0.0
      %v833 = vsel %vm414, %v787, 0.0
      %v834 = vadd.f32 %v832, %v833
      %v835 = vsel %vm414, %v788, 0.0
      %v836 = vadd.f32 %v834, %v835
      %v837 = vsel %vm414, %v789, 0.0
      %v838 = vadd.f32 %v836, %v837
      %v839 = vsel %vm414, %v790, 0.0
      %v840 = vadd.f32 %v838, %v839
      %v841 = vsel %vm414, %v791, 0.0
      %v842 = vadd.f32 %v840, %v841
      %v843 = vsel %vm414, %v792, 0.0
      %v844 = vadd.f32 %v842, %v843
      %v845 = vsel %vm414, %v793, 0.0
      %v846 = vadd.f32 %v844, %v845
      %847 = vadd.xlane.f32.xlu0 %v846
      %v848 = vpop.xlane.xlu0 %847
      %v849 = vrot.slane %v848, 4
      %v850 = vadd.f32 %v848, %v849
      %v851 = vrot.slane %v850, 2
      %v852 = vadd.f32 %v850, %v851
      %v853 = vrot.slane %v852, 1
      %v854 = vadd.f32 %v852, %v853
      %s855 = vtos %v854
      %v856 = vstv %s855
      %v857 = vadd.f32 %v831, %v856
      %858 = vst.msk [vmem:[#allocation8] sm:$0x1] %vm829, %v857
    $region29: #{subword_elmo_forward.9} parent=1 // pred_fallthru
      _
    // Predicated region
    $region30: #{subword_elmo_forward.9} parent=1 // pred_check
      _
    $region31: #{subword_elmo_forward.9} parent=1 // pred_check_branch
      %860 = sbr.rel (%p22) target = $region33
    $region32: #{subword_elmo_forward.9} parent=1 // pred_region
      %v861 = vld [vmem:[#allocation7] sm:$0x1]
      %v862 = vld [vmem:[#allocation8] sm:$0x1]
      %v863 = vrcp.pop %v862
      %v864 = vmul.f32 %v861, %v863
      %vm865 = vcmask 0
      %866 = vst.msk [vmem:[#allocation9] sm:$0x1] %vm865, %v864
    $region33: #{subword_elmo_forward.9} parent=1 // pred_fallthru
      _
    // Predicated region
    $region34: #{subword_elmo_forward.9} parent=1 // pred_check
      _
    $region35: #{subword_elmo_forward.9} parent=1 // pred_check_branch
      %868 = sbr.rel (0) target = $region37
    $region36: #{subword_elmo_forward.9} parent=1 // pred_region
      %s870 = ssub.s32 16, 16
      %871 = vsyncadd [#allocation10], %s870
      %s873 = sshll.u32 [#allocation9], 4
      %s874 = int_to_ptr.vmem [resolvable:$true] %s873
      %876 = dma.vmem_to_hbm [thread:$0]  %s874, 16, %s4, [#allocation10]
    $region37: #{subword_elmo_forward.9} parent=1 // pred_fallthru
      _
    // Predicated region
    $region38: #{subword_elmo_forward.9} parent=1 // pred_check
      _
    $region39: #{subword_elmo_forward.9} parent=1 // pred_check_branch
      %878 = sbr.rel (0) target = $region41
    $region40: #{subword_elmo_forward.9} parent=1 // pred_region
      _
    $region41: #{subword_elmo_forward.9} parent=1 // pred_fallthru
      _
    // Predicated region
    $region42: #{subword_elmo_forward.9} parent=1 // pred_check
      _
    $region43: #{subword_elmo_forward.9} parent=1 // pred_check_branch
      %880 = sbr.rel (0) target = $region45
    $region44: #{subword_elmo_forward.9} parent=1 // pred_region
      %881 = dma.done [#allocation10], 16
    $region45: #{subword_elmo_forward.9} parent=1 // pred_fallthru
      _
    // Predicated region
    $region46: #{subword_elmo_forward.9} parent=1 // pred_check
      _
    $region47: #{subword_elmo_forward.9} parent=1 // pred_check_branch
      %883 = sbr.rel (0) target = $region49
    $region48: #{subword_elmo_forward.9} parent=1 // pred_region
      _
    $region49: #{subword_elmo_forward.9} parent=1 // pred_fallthru
      _
    %884 = vsyncpa [#allocation10], 1

// kernel: subword_elmo_forward.6
$region0: #{subword_elmo_forward.6}
  #allocation0 [shape = 'u32[]', space=smem, size = 0x4, offset = 0x4, fixed_abs, tag = 'smem constant byte address 0x4 - core index']
  #allocation1 [shape = 'u32[144,128]{1,0:T(1,128)}', space=vmem, size = 0x12000, scoped, tag = 'internal scratch']
  %s0 = inlined_call_operand.vmem [shape: f32[8,8,1024], index: 0, kind: input, shape index: {}]
  %s1 = inlined_call_operand.vmem [shape: f32[256,1024], index: 1, kind: input, shape index: {}]
  %s2 = inlined_call_operand.vmem [shape: s32[8,1], index: 2, kind: input, shape index: {}]
  %s3 = inlined_call_operand.vmem [shape: f32[8,8,256], index: 3, kind: output, shape index: {}]
  %s4 = sld [smem:[#allocation0]]
  $region22: #{subword_elmo_forward.6} parent=0
    _
  %s6 = ssub.s32 1, %s4
  %s7 = scalar_select 0, %s6, %s4
  // Predicated region
  $region2: #{subword_elmo_forward.6} parent=0 // pred_check
    _
  $region3: #{subword_elmo_forward.6} parent=0 // pred_check_branch
    %9 = sbr.rel (0) target = $region5
  $region4: #{subword_elmo_forward.6} parent=0 // pred_region
    _
  $region5: #{subword_elmo_forward.6} parent=0 // pred_fallthru
    _
  // Predicated region
  $region6: #{subword_elmo_forward.6} parent=0 // pred_check
    _
  $region7: #{subword_elmo_forward.6} parent=0 // pred_check_branch
    %11 = sbr.rel (0) target = $region9
  $region8: #{subword_elmo_forward.6} parent=0 // pred_region
    _
  $region9: #{subword_elmo_forward.6} parent=0 // pred_fallthru
    _
  // Predicated region
  $region10: #{subword_elmo_forward.6} parent=0 // pred_check
    _
  $region11: #{subword_elmo_forward.6} parent=0 // pred_check_branch
    %13 = sbr.rel (0) target = $region13
  $region12: #{subword_elmo_forward.6} parent=0 // pred_region
    _
  $region13: #{subword_elmo_forward.6} parent=0 // pred_fallthru
    _
  %v14 = vld [vmem:[%s2] sm:$0xff]
  %v15 = vld [vmem:[%s1] sm:$0xff]
  %v16 = vld [vmem:[%s1 + $0x8] sm:$0xff]
  %v17 = vld [vmem:[%s1 + $0x10] sm:$0xff]
  %v18 = vld [vmem:[%s1 + $0x18] sm:$0xff]
  %v19 = vld [vmem:[%s1 + $0x20] sm:$0xff]
  %v20 = vld [vmem:[%s1 + $0x28] sm:$0xff]
  %v21 = vld [vmem:[%s1 + $0x30] sm:$0xff]
  %v22 = vld [vmem:[%s1 + $0x38] sm:$0xff]
  %v23 = vld [vmem:[%s1 + $0x40] sm:$0xff]
  %v24 = vld [vmem:[%s1 + $0x48] sm:$0xff]
  %v25 = vld [vmem:[%s1 + $0x50] sm:$0xff]
  %v26 = vld [vmem:[%s1 + $0x58] sm:$0xff]
  %v27 = vld [vmem:[%s1 + $0x60] sm:$0xff]
  %v28 = vld [vmem:[%s1 + $0x68] sm:$0xff]
  %v29 = vld [vmem:[%s1 + $0x70] sm:$0xff]
  %v30 = vld [vmem:[%s1 + $0x78] sm:$0xff]
  %v31 = vld [vmem:[%s1 + $0x80] sm:$0xff]
  %v32 = vld [vmem:[%s1 + $0x88] sm:$0xff]
  %v33 = vld [vmem:[%s1 + $0x90] sm:$0xff]
  %v34 = vld [vmem:[%s1 + $0x98] sm:$0xff]
  %v35 = vld [vmem:[%s1 + $0xa0] sm:$0xff]
  %v36 = vld [vmem:[%s1 + $0xa8] sm:$0xff]
  %v37 = vld [vmem:[%s1 + $0xb0] sm:$0xff]
  %v38 = vld [vmem:[%s1 + $0xb8] sm:$0xff]
  %v39 = vld [vmem:[%s1 + $0xc0] sm:$0xff]
  %v40 = vld [vmem:[%s1 + $0xc8] sm:$0xff]
  %v41 = vld [vmem:[%s1 + $0xd0] sm:$0xff]
  %v42 = vld [vmem:[%s1 + $0xd8] sm:$0xff]
  %v43 = vld [vmem:[%s1 + $0xe0] sm:$0xff]
  %v44 = vld [vmem:[%s1 + $0xe8] sm:$0xff]
  %v45 = vld [vmem:[%s1 + $0xf0] sm:$0xff]
  %v46 = vld [vmem:[%s1 + $0xf8] sm:$0xff]
  %v47 = vld [vmem:[%s1 + $0x100] sm:$0xff]
  %v48 = vld [vmem:[%s1 + $0x108] sm:$0xff]
  %v49 = vld [vmem:[%s1 + $0x110] sm:$0xff]
  %v50 = vld [vmem:[%s1 + $0x118] sm:$0xff]
  %v51 = vld [vmem:[%s1 + $0x120] sm:$0xff]
  %v52 = vld [vmem:[%s1 + $0x128] sm:$0xff]
  %v53 = vld [vmem:[%s1 + $0x130] sm:$0xff]
  %v54 = vld [vmem:[%s1 + $0x138] sm:$0xff]
  %v55 = vld [vmem:[%s1 + $0x140] sm:$0xff]
  %v56 = vld [vmem:[%s1 + $0x148] sm:$0xff]
  %v57 = vld [vmem:[%s1 + $0x150] sm:$0xff]
  %v58 = vld [vmem:[%s1 + $0x158] sm:$0xff]
  %v59 = vld [vmem:[%s1 + $0x160] sm:$0xff]
  %v60 = vld [vmem:[%s1 + $0x168] sm:$0xff]
  %v61 = vld [vmem:[%s1 + $0x170] sm:$0xff]
  %v62 = vld [vmem:[%s1 + $0x178] sm:$0xff]
  %v63 = vld [vmem:[%s1 + $0x180] sm:$0xff]
  %v64 = vld [vmem:[%s1 + $0x188] sm:$0xff]
  %v65 = vld [vmem:[%s1 + $0x190] sm:$0xff]
  %v66 = vld [vmem:[%s1 + $0x198] sm:$0xff]
  %v67 = vld [vmem:[%s1 + $0x1a0] sm:$0xff]
  %v68 = vld [vmem:[%s1 + $0x1a8] sm:$0xff]
  %v69 = vld [vmem:[%s1 + $0x1b0] sm:$0xff]
  %v70 = vld [vmem:[%s1 + $0x1b8] sm:$0xff]
  %v71 = vld [vmem:[%s1 + $0x1c0] sm:$0xff]
  %v72 = vld [vmem:[%s1 + $0x1c8] sm:$0xff]
  %v73 = vld [vmem:[%s1 + $0x1d0] sm:$0xff]
  %v74 = vld [vmem:[%s1 + $0x1d8] sm:$0xff]
  %v75 = vld [vmem:[%s1 + $0x1e0] sm:$0xff]
  %v76 = vld [vmem:[%s1 + $0x1e8] sm:$0xff]
  %v77 = vld [vmem:[%s1 + $0x1f0] sm:$0xff]
  %v78 = vld [vmem:[%s1 + $0x1f8] sm:$0xff]
  %v79 = vld [vmem:[%s1 + $0x200] sm:$0xff]
  %v80 = vld [vmem:[%s1 + $0x208] sm:$0xff]
  %v81 = vld [vmem:[%s1 + $0x210] sm:$0xff]
  %v82 = vld [vmem:[%s1 + $0x218] sm:$0xff]
  %v83 = vld [vmem:[%s1 + $0x220] sm:$0xff]
  %v84 = vld [vmem:[%s1 + $0x228] sm:$0xff]
  %v85 = vld [vmem:[%s1 + $0x230] sm:$0xff]
  %v86 = vld [vmem:[%s1 + $0x238] sm:$0xff]
  %v87 = vld [vmem:[%s1 + $0x240] sm:$0xff]
  %v88 = vld [vmem:[%s1 + $0x248] sm:$0xff]
  %v89 = vld [vmem:[%s1 + $0x250] sm:$0xff]
  %v90 = vld [vmem:[%s1 + $0x258] sm:$0xff]
  %v91 = vld [vmem:[%s1 + $0x260] sm:$0xff]
  %v92 = vld [vmem:[%s1 + $0x268] sm:$0xff]
  %v93 = vld [vmem:[%s1 + $0x270] sm:$0xff]
  %v94 = vld [vmem:[%s1 + $0x278] sm:$0xff]
  %v95 = vld [vmem:[%s1 + $0x280] sm:$0xff]
  %v96 = vld [vmem:[%s1 + $0x288] sm:$0xff]
  %v97 = vld [vmem:[%s1 + $0x290] sm:$0xff]
  %v98 = vld [vmem:[%s1 + $0x298] sm:$0xff]
  %v99 = vld [vmem:[%s1 + $0x2a0] sm:$0xff]
  %v100 = vld [vmem:[%s1 + $0x2a8] sm:$0xff]
  %v101 = vld [vmem:[%s1 + $0x2b0] sm:$0xff]
  %v102 = vld [vmem:[%s1 + $0x2b8] sm:$0xff]
  %v103 = vld [vmem:[%s1 + $0x2c0] sm:$0xff]
  %v104 = vld [vmem:[%s1 + $0x2c8] sm:$0xff]
  %v105 = vld [vmem:[%s1 + $0x2d0] sm:$0xff]
  %v106 = vld [vmem:[%s1 + $0x2d8] sm:$0xff]
  %v107 = vld [vmem:[%s1 + $0x2e0] sm:$0xff]
  %v108 = vld [vmem:[%s1 + $0x2e8] sm:$0xff]
  %v109 = vld [vmem:[%s1 + $0x2f0] sm:$0xff]
  %v110 = vld [vmem:[%s1 + $0x2f8] sm:$0xff]
  %v111 = vld [vmem:[%s1 + $0x300] sm:$0xff]
  %v112 = vld [vmem:[%s1 + $0x308] sm:$0xff]
  %v113 = vld [vmem:[%s1 + $0x310] sm:$0xff]
  %v114 = vld [vmem:[%s1 + $0x318] sm:$0xff]
  %v115 = vld [vmem:[%s1 + $0x320] sm:$0xff]
  %v116 = vld [vmem:[%s1 + $0x328] sm:$0xff]
  %v117 = vld [vmem:[%s1 + $0x330] sm:$0xff]
  %v118 = vld [vmem:[%s1 + $0x338] sm:$0xff]
  %v119 = vld [vmem:[%s1 + $0x340] sm:$0xff]
  %v120 = vld [vmem:[%s1 + $0x348] sm:$0xff]
  %v121 = vld [vmem:[%s1 + $0x350] sm:$0xff]
  %v122 = vld [vmem:[%s1 + $0x358] sm:$0xff]
  %v123 = vld [vmem:[%s1 + $0x360] sm:$0xff]
  %v124 = vld [vmem:[%s1 + $0x368] sm:$0xff]
  %v125 = vld [vmem:[%s1 + $0x370] sm:$0xff]
  %v126 = vld [vmem:[%s1 + $0x378] sm:$0xff]
  %v127 = vld [vmem:[%s1 + $0x380] sm:$0xff]
  %v128 = vld [vmem:[%s1 + $0x388] sm:$0xff]
  %v129 = vld [vmem:[%s1 + $0x390] sm:$0xff]
  %v130 = vld [vmem:[%s1 + $0x398] sm:$0xff]
  %v131 = vld [vmem:[%s1 + $0x3a0] sm:$0xff]
  %v132 = vld [vmem:[%s1 + $0x3a8] sm:$0xff]
  %v133 = vld [vmem:[%s1 + $0x3b0] sm:$0xff]
  %v134 = vld [vmem:[%s1 + $0x3b8] sm:$0xff]
  %v135 = vld [vmem:[%s1 + $0x3c0] sm:$0xff]
  %v136 = vld [vmem:[%s1 + $0x3c8] sm:$0xff]
  %v137 = vld [vmem:[%s1 + $0x3d0] sm:$0xff]
  %v138 = vld [vmem:[%s1 + $0x3d8] sm:$0xff]
  %v139 = vld [vmem:[%s1 + $0x3e0] sm:$0xff]
  %v140 = vld [vmem:[%s1 + $0x3e8] sm:$0xff]
  %v141 = vld [vmem:[%s1 + $0x3f0] sm:$0xff]
  %v142 = vld [vmem:[%s1 + $0x3f8] sm:$0xff]
  %v143 = vld [vmem:[%s1 + $0x400] sm:$0xff]
  %v144 = vld [vmem:[%s1 + $0x408] sm:$0xff]
  %v145 = vld [vmem:[%s1 + $0x410] sm:$0xff]
  %v146 = vld [vmem:[%s1 + $0x418] sm:$0xff]
  %v147 = vld [vmem:[%s1 + $0x420] sm:$0xff]
  %v148 = vld [vmem:[%s1 + $0x428] sm:$0xff]
  %v149 = vld [vmem:[%s1 + $0x430] sm:$0xff]
  %v150 = vld [vmem:[%s1 + $0x438] sm:$0xff]
  %v151 = vld [vmem:[%s1 + $0x440] sm:$0xff]
  %v152 = vld [vmem:[%s1 + $0x448] sm:$0xff]
  %v153 = vld [vmem:[%s1 + $0x450] sm:$0xff]
  %v154 = vld [vmem:[%s1 + $0x458] sm:$0xff]
  %v155 = vld [vmem:[%s1 + $0x460] sm:$0xff]
  %v156 = vld [vmem:[%s1 + $0x468] sm:$0xff]
  %v157 = vld [vmem:[%s1 + $0x470] sm:$0xff]
  %v158 = vld [vmem:[%s1 + $0x478] sm:$0xff]
  %v159 = vld [vmem:[%s1 + $0x480] sm:$0xff]
  %v160 = vld [vmem:[%s1 + $0x488] sm:$0xff]
  %v161 = vld [vmem:[%s1 + $0x490] sm:$0xff]
  %v162 = vld [vmem:[%s1 + $0x498] sm:$0xff]
  %v163 = vld [vmem:[%s1 + $0x4a0] sm:$0xff]
  %v164 = vld [vmem:[%s1 + $0x4a8] sm:$0xff]
  %v165 = vld [vmem:[%s1 + $0x4b0] sm:$0xff]
  %v166 = vld [vmem:[%s1 + $0x4b8] sm:$0xff]
  %v167 = vld [vmem:[%s1 + $0x4c0] sm:$0xff]
  %v168 = vld [vmem:[%s1 + $0x4c8] sm:$0xff]
  %v169 = vld [vmem:[%s1 + $0x4d0] sm:$0xff]
  %v170 = vld [vmem:[%s1 + $0x4d8] sm:$0xff]
  %v171 = vld [vmem:[%s1 + $0x4e0] sm:$0xff]
  %v172 = vld [vmem:[%s1 + $0x4e8] sm:$0xff]
  %v173 = vld [vmem:[%s1 + $0x4f0] sm:$0xff]
  %v174 = vld [vmem:[%s1 + $0x4f8] sm:$0xff]
  %v175 = vld [vmem:[%s1 + $0x500] sm:$0xff]
  %v176 = vld [vmem:[%s1 + $0x508] sm:$0xff]
  %v177 = vld [vmem:[%s1 + $0x510] sm:$0xff]
  %v178 = vld [vmem:[%s1 + $0x518] sm:$0xff]
  %v179 = vld [vmem:[%s1 + $0x520] sm:$0xff]
  %v180 = vld [vmem:[%s1 + $0x528] sm:$0xff]
  %v181 = vld [vmem:[%s1 + $0x530] sm:$0xff]
  %v182 = vld [vmem:[%s1 + $0x538] sm:$0xff]
  %v183 = vld [vmem:[%s1 + $0x540] sm:$0xff]
  %v184 = vld [vmem:[%s1 + $0x548] sm:$0xff]
  %v185 = vld [vmem:[%s1 + $0x550] sm:$0xff]
  %v186 = vld [vmem:[%s1 + $0x558] sm:$0xff]
  %v187 = vld [vmem:[%s1 + $0x560] sm:$0xff]
  %v188 = vld [vmem:[%s1 + $0x568] sm:$0xff]
  %v189 = vld [vmem:[%s1 + $0x570] sm:$0xff]
  %v190 = vld [vmem:[%s1 + $0x578] sm:$0xff]
  %v191 = vld [vmem:[%s1 + $0x580] sm:$0xff]
  %v192 = vld [vmem:[%s1 + $0x588] sm:$0xff]
  %v193 = vld [vmem:[%s1 + $0x590] sm:$0xff]
  %v194 = vld [vmem:[%s1 + $0x598] sm:$0xff]
  %v195 = vld [vmem:[%s1 + $0x5a0] sm:$0xff]
  %v196 = vld [vmem:[%s1 + $0x5a8] sm:$0xff]
  %v197 = vld [vmem:[%s1 + $0x5b0] sm:$0xff]
  %v198 = vld [vmem:[%s1 + $0x5b8] sm:$0xff]
  %v199 = vld [vmem:[%s1 + $0x5c0] sm:$0xff]
  %v200 = vld [vmem:[%s1 + $0x5c8] sm:$0xff]
  %v201 = vld [vmem:[%s1 + $0x5d0] sm:$0xff]
  %v202 = vld [vmem:[%s1 + $0x5d8] sm:$0xff]
  %v203 = vld [vmem:[%s1 + $0x5e0] sm:$0xff]
  %v204 = vld [vmem:[%s1 + $0x5e8] sm:$0xff]
  %v205 = vld [vmem:[%s1 + $0x5f0] sm:$0xff]
  %v206 = vld [vmem:[%s1 + $0x5f8] sm:$0xff]
  %v207 = vld [vmem:[%s1 + $0x600] sm:$0xff]
  %v208 = vld [vmem:[%s1 + $0x608] sm:$0xff]
  %v209 = vld [vmem:[%s1 + $0x610] sm:$0xff]
  %v210 = vld [vmem:[%s1 + $0x618] sm:$0xff]
  %v211 = vld [vmem:[%s1 + $0x620] sm:$0xff]
  %v212 = vld [vmem:[%s1 + $0x628] sm:$0xff]
  %v213 = vld [vmem:[%s1 + $0x630] sm:$0xff]
  %v214 = vld [vmem:[%s1 + $0x638] sm:$0xff]
  %v215 = vld [vmem:[%s1 + $0x640] sm:$0xff]
  %v216 = vld [vmem:[%s1 + $0x648] sm:$0xff]
  %v217 = vld [vmem:[%s1 + $0x650] sm:$0xff]
  %v218 = vld [vmem:[%s1 + $0x658] sm:$0xff]
  %v219 = vld [vmem:[%s1 + $0x660] sm:$0xff]
  %v220 = vld [vmem:[%s1 + $0x668] sm:$0xff]
  %v221 = vld [vmem:[%s1 + $0x670] sm:$0xff]
  %v222 = vld [vmem:[%s1 + $0x678] sm:$0xff]
  %v223 = vld [vmem:[%s1 + $0x680] sm:$0xff]
  %v224 = vld [vmem:[%s1 + $0x688] sm:$0xff]
  %v225 = vld [vmem:[%s1 + $0x690] sm:$0xff]
  %v226 = vld [vmem:[%s1 + $0x698] sm:$0xff]
  %v227 = vld [vmem:[%s1 + $0x6a0] sm:$0xff]
  %v228 = vld [vmem:[%s1 + $0x6a8] sm:$0xff]
  %v229 = vld [vmem:[%s1 + $0x6b0] sm:$0xff]
  %v230 = vld [vmem:[%s1 + $0x6b8] sm:$0xff]
  %v231 = vld [vmem:[%s1 + $0x6c0] sm:$0xff]
  %v232 = vld [vmem:[%s1 + $0x6c8] sm:$0xff]
  %v233 = vld [vmem:[%s1 + $0x6d0] sm:$0xff]
  %v234 = vld [vmem:[%s1 + $0x6d8] sm:$0xff]
  %v235 = vld [vmem:[%s1 + $0x6e0] sm:$0xff]
  %v236 = vld [vmem:[%s1 + $0x6e8] sm:$0xff]
  %v237 = vld [vmem:[%s1 + $0x6f0] sm:$0xff]
  %v238 = vld [vmem:[%s1 + $0x6f8] sm:$0xff]
  %v239 = vld [vmem:[%s1 + $0x700] sm:$0xff]
  %v240 = vld [vmem:[%s1 + $0x708] sm:$0xff]
  %v241 = vld [vmem:[%s1 + $0x710] sm:$0xff]
  %v242 = vld [vmem:[%s1 + $0x718] sm:$0xff]
  %v243 = vld [vmem:[%s1 + $0x720] sm:$0xff]
  %v244 = vld [vmem:[%s1 + $0x728] sm:$0xff]
  %v245 = vld [vmem:[%s1 + $0x730] sm:$0xff]
  %v246 = vld [vmem:[%s1 + $0x738] sm:$0xff]
  %v247 = vld [vmem:[%s1 + $0x740] sm:$0xff]
  %v248 = vld [vmem:[%s1 + $0x748] sm:$0xff]
  %v249 = vld [vmem:[%s1 + $0x750] sm:$0xff]
  %v250 = vld [vmem:[%s1 + $0x758] sm:$0xff]
  %v251 = vld [vmem:[%s1 + $0x760] sm:$0xff]
  %v252 = vld [vmem:[%s1 + $0x768] sm:$0xff]
  %v253 = vld [vmem:[%s1 + $0x770] sm:$0xff]
  %v254 = vld [vmem:[%s1 + $0x778] sm:$0xff]
  %v255 = vld [vmem:[%s1 + $0x780] sm:$0xff]
  %v256 = vld [vmem:[%s1 + $0x788] sm:$0xff]
  %v257 = vld [vmem:[%s1 + $0x790] sm:$0xff]
  %v258 = vld [vmem:[%s1 + $0x798] sm:$0xff]
  %v259 = vld [vmem:[%s1 + $0x7a0] sm:$0xff]
  %v260 = vld [vmem:[%s1 + $0x7a8] sm:$0xff]
  %v261 = vld [vmem:[%s1 + $0x7b0] sm:$0xff]
  %v262 = vld [vmem:[%s1 + $0x7b8] sm:$0xff]
  %v263 = vld [vmem:[%s1 + $0x7c0] sm:$0xff]
  %v264 = vld [vmem:[%s1 + $0x7c8] sm:$0xff]
  %v265 = vld [vmem:[%s1 + $0x7d0] sm:$0xff]
  %v266 = vld [vmem:[%s1 + $0x7d8] sm:$0xff]
  %v267 = vld [vmem:[%s1 + $0x7e0] sm:$0xff]
  %v268 = vld [vmem:[%s1 + $0x7e8] sm:$0xff]
  %v269 = vld [vmem:[%s1 + $0x7f0] sm:$0xff]
  %v270 = vld [vmem:[%s1 + $0x7f8] sm:$0xff]
  %v271 = vld [vmem:[%s0] sm:$0xff]
  %v272 = vld [vmem:[%s0 + $0x8] sm:$0xff]
  %v273 = vld [vmem:[%s0 + $0x10] sm:$0xff]
  %v274 = vld [vmem:[%s0 + $0x18] sm:$0xff]
  %s275 = scalar_lea.vmem %s0, 448
  %v276 = vld [vmem:[%s275 + $0x20] sm:$0xff]
  %v277 = vld [vmem:[%s275 + $0x28] sm:$0xff]
  %v278 = vld [vmem:[%s275 + $0x30] sm:$0xff]
  %v279 = vld [vmem:[%s275 + $0x38] sm:$0xff]
  %280 = vmatprep.subr.mxu0 %v16
  %281 = vmatpush1.msra.mxu0 %v15
  %282 = vmatprep.subr.mxu0 %v24
  %283 = vmatpush1.msra.mxu0 %v23
  %284 = vmatprep.subr.mxu0 %v32
  %285 = vmatpush1.msra.mxu0 %v31
  %286 = vmatprep.subr.mxu0 %v40
  %287 = vmatpush1.msra.mxu0 %v39
  %288 = vmatprep.subr.mxu0 %v48
  %289 = vmatpush1.msra.mxu0 %v47
  %290 = vmatprep.subr.mxu0 %v56
  %291 = vmatpush1.msra.mxu0 %v55
  %292 = vmatprep.subr.mxu0 %v64
  %293 = vmatpush1.msra.mxu0 %v63
  %294 = vmatprep.subr.mxu0 %v72
  %295 = vmatpush1.msra.mxu0 %v71
  %296 = vmatprep.subr.mxu0 %v80
  %297 = vmatpush1.msra.mxu0 %v79
  %298 = vmatprep.subr.mxu0 %v88
  %299 = vmatpush1.msra.mxu0 %v87
  %300 = vmatprep.subr.mxu0 %v96
  %301 = vmatpush1.msra.mxu0 %v95
  %302 = vmatprep.subr.mxu0 %v104
  %303 = vmatpush1.msra.mxu0 %v103
  %304 = vmatprep.subr.mxu0 %v112
  %305 = vmatpush1.msra.mxu0 %v111
  %306 = vmatprep.subr.mxu0 %v120
  %307 = vmatpush1.msra.mxu0 %v119
  %308 = vmatprep.subr.mxu0 %v128
  %309 = vmatpush1.msra.mxu0 %v127
  %310 = vmatprep.subr.mxu0 %v136
  %311 = vmatpush1.msra.mxu0 %v135
  %312 = vmatprep.subr.mxu0 %v144
  %313 = vmatpush1.msra.mxu0 %v143
  %314 = vmatprep.subr.mxu0 %v152
  %315 = vmatpush1.msra.mxu0 %v151
  %316 = vmatprep.subr.mxu0 %v160
  %317 = vmatpush1.msra.mxu0 %v159
  %318 = vmatprep.subr.mxu0 %v168
  %319 = vmatpush1.msra.mxu0 %v167
  %320 = vmatprep.subr.mxu0 %v176
  %321 = vmatpush1.msra.mxu0 %v175
  %322 = vmatprep.subr.mxu0 %v184
  %323 = vmatpush1.msra.mxu0 %v183
  %324 = vmatprep.subr.mxu0 %v192
  %325 = vmatpush1.msra.mxu0 %v191
  %326 = vmatprep.subr.mxu0 %v200
  %327 = vmatpush1.msra.mxu0 %v199
  %328 = vmatprep.subr.mxu0 %v208
  %329 = vmatpush1.msra.mxu0 %v207
  %330 = vmatprep.subr.mxu0 %v216
  %331 = vmatpush1.msra.mxu0 %v215
  %332 = vmatprep.subr.mxu0 %v224
  %333 = vmatpush1.msra.mxu0 %v223
  %334 = vmatprep.subr.mxu0 %v232
  %335 = vmatpush1.msra.mxu0 %v231
  %336 = vmatprep.subr.mxu0 %v240
  %337 = vmatpush1.msra.mxu0 %v239
  %338 = vmatprep.subr.mxu0 %v248
  %339 = vmatpush1.msra.mxu0 %v247
  %340 = vmatprep.subr.mxu0 %v256
  %341 = vmatpush1.msra.mxu0 %v255
  %342 = vmatprep.subr.mxu0 %v264
  %343 = vmatpush1.msra.mxu0 %v263
  %344 = vmatprep.mubr.f32.mxu0 0.0
  %345 = vmatmul.mubr.f32.gmra.mrb[0].mxu0 0.0
  %v346 = vpop.f32.mrb[0].mxu0
  %v347 = vadd.f32 0.0, %v346
  %v348 = vpop.f32.mrb[0].mxu0
  %v349 = vadd.f32 0.0, %v348
  %350 = vdwg.mxu0
  %351 = vmatprep.subr.mxu0 %v18
  %352 = vmatpush1.msra.mxu0 %v17
  %353 = vmatprep.subr.mxu0 %v26
  %354 = vmatpush1.msra.mxu0 %v25
  %355 = vmatprep.subr.mxu0 %v34
  %356 = vmatpush1.msra.mxu0 %v33
  %357 = vmatprep.subr.mxu0 %v42
  %358 = vmatpush1.msra.mxu0 %v41
  %359 = vmatprep.subr.mxu0 %v50
  %360 = vmatpush1.msra.mxu0 %v49
  %361 = vmatprep.subr.mxu0 %v58
  %362 = vmatpush1.msra.mxu0 %v57
  %363 = vmatprep.subr.mxu0 %v66
  %364 = vmatpush1.msra.mxu0 %v65
  %365 = vmatprep.subr.mxu0 %v74
  %366 = vmatpush1.msra.mxu0 %v73
  %367 = vmatprep.subr.mxu0 %v82
  %368 = vmatpush1.msra.mxu0 %v81
  %369 = vmatprep.subr.mxu0 %v90
  %370 = vmatpush1.msra.mxu0 %v89
  %371 = vmatprep.subr.mxu0 %v98
  %372 = vmatpush1.msra.mxu0 %v97
  %373 = vmatprep.subr.mxu0 %v106
  %374 = vmatpush1.msra.mxu0 %v105
  %375 = vmatprep.subr.mxu0 %v114
  %376 = vmatpush1.msra.mxu0 %v113
  %377 = vmatprep.subr.mxu0 %v122
  %378 = vmatpush1.msra.mxu0 %v121
  %379 = vmatprep.subr.mxu0 %v130
  %380 = vmatpush1.msra.mxu0 %v129
  %381 = vmatprep.subr.mxu0 %v138
  %382 = vmatpush1.msra.mxu0 %v137
  %383 = vmatprep.subr.mxu0 %v146
  %384 = vmatpush1.msra.mxu0 %v145
  %385 = vmatprep.subr.mxu0 %v154
  %386 = vmatpush1.msra.mxu0 %v153
  %387 = vmatprep.subr.mxu0 %v162
  %388 = vmatpush1.msra.mxu0 %v161
  %389 = vmatprep.subr.mxu0 %v170
  %390 = vmatpush1.msra.mxu0 %v169
  %391 = vmatprep.subr.mxu0 %v178
  %392 = vmatpush1.msra.mxu0 %v177
  %393 = vmatprep.subr.mxu0 %v186
  %394 = vmatpush1.msra.mxu0 %v185
  %395 = vmatprep.subr.mxu0 %v194
  %396 = vmatpush1.msra.mxu0 %v193
  %397 = vmatprep.subr.mxu0 %v202
  %398 = vmatpush1.msra.mxu0 %v201
  %399 = vmatprep.subr.mxu0 %v210
  %400 = vmatpush1.msra.mxu0 %v209
  %401 = vmatprep.subr.mxu0 %v218
  %402 = vmatpush1.msra.mxu0 %v217
  %403 = vmatprep.subr.mxu0 %v226
  %404 = vmatpush1.msra.mxu0 %v225
  %405 = vmatprep.subr.mxu0 %v234
  %406 = vmatpush1.msra.mxu0 %v233
  %407 = vmatprep.subr.mxu0 %v242
  %408 = vmatpush1.msra.mxu0 %v241
  %409 = vmatprep.subr.mxu0 %v250
  %410 = vmatpush1.msra.mxu0 %v249
  %411 = vmatprep.subr.mxu0 %v258
  %412 = vmatpush1.msra.mxu0 %v257
  %413 = vmatprep.subr.mxu0 %v266
  %414 = vmatpush1.msra.mxu0 %v265
  %415 = vmatprep.mubr.f32.mxu0 0.0
  %416 = vmatmul.mubr.f32.gmra.mrb[0].mxu0 0.0
  %v417 = vpop.f32.mrb[0].mxu0
  %v418 = vadd.f32 0.0, %v417
  %v419 = vpop.f32.mrb[0].mxu0
  %v420 = vadd.f32 0.0, %v419
  %421 = vdwg.mxu0
  %422 = vmatprep.subr.mxu0 %v20
  %423 = vmatpush1.msra.mxu0 %v19
  %424 = vmatprep.subr.mxu0 %v28
  %425 = vmatpush1.msra.mxu0 %v27
  %426 = vmatprep.subr.mxu0 %v36
  %427 = vmatpush1.msra.mxu0 %v35
  %428 = vmatprep.subr.mxu0 %v44
  %429 = vmatpush1.msra.mxu0 %v43
  %430 = vmatprep.subr.mxu0 %v52
  %431 = vmatpush1.msra.mxu0 %v51
  %432 = vmatprep.subr.mxu0 %v60
  %433 = vmatpush1.msra.mxu0 %v59
  %434 = vmatprep.subr.mxu0 %v68
  %435 = vmatpush1.msra.mxu0 %v67
  %436 = vmatprep.subr.mxu0 %v76
  %437 = vmatpush1.msra.mxu0 %v75
  %438 = vmatprep.subr.mxu0 %v84
  %439 = vmatpush1.msra.mxu0 %v83
  %440 = vmatprep.subr.mxu0 %v92
  %441 = vmatpush1.msra.mxu0 %v91
  %442 = vmatprep.subr.mxu0 %v100
  %443 = vmatpush1.msra.mxu0 %v99
  %444 = vmatprep.subr.mxu0 %v108
  %445 = vmatpush1.msra.mxu0 %v107
  %446 = vmatprep.subr.mxu0 %v116
  %447 = vmatpush1.msra.mxu0 %v115
  %448 = vmatprep.subr.mxu0 %v124
  %449 = vmatpush1.msra.mxu0 %v123
  %450 = vmatprep.subr.mxu0 %v132
  %451 = vmatpush1.msra.mxu0 %v131
  %452 = vmatprep.subr.mxu0 %v140
  %453 = vmatpush1.msra.mxu0 %v139
  %454 = vmatprep.subr.mxu0 %v148
  %455 = vmatpush1.msra.mxu0 %v147
  %456 = vmatprep.subr.mxu0 %v156
  %457 = vmatpush1.msra.mxu0 %v155
  %458 = vmatprep.subr.mxu0 %v164
  %459 = vmatpush1.msra.mxu0 %v163
  %460 = vmatprep.subr.mxu0 %v172
  %461 = vmatpush1.msra.mxu0 %v171
  %462 = vmatprep.subr.mxu0 %v180
  %463 = vmatpush1.msra.mxu0 %v179
  %464 = vmatprep.subr.mxu0 %v188
  %465 = vmatpush1.msra.mxu0 %v187
  %466 = vmatprep.subr.mxu0 %v196
  %467 = vmatpush1.msra.mxu0 %v195
  %468 = vmatprep.subr.mxu0 %v204
  %469 = vmatpush1.msra.mxu0 %v203
  %470 = vmatprep.subr.mxu0 %v212
  %471 = vmatpush1.msra.mxu0 %v211
  %472 = vmatprep.subr.mxu0 %v220
  %473 = vmatpush1.msra.mxu0 %v219
  %474 = vmatprep.subr.mxu0 %v228
  %475 = vmatpush1.msra.mxu0 %v227
  %476 = vmatprep.subr.mxu0 %v236
  %477 = vmatpush1.msra.mxu0 %v235
  %478 = vmatprep.subr.mxu0 %v244
  %479 = vmatpush1.msra.mxu0 %v243
  %480 = vmatprep.subr.mxu0 %v252
  %481 = vmatpush1.msra.mxu0 %v251
  %482 = vmatprep.subr.mxu0 %v260
  %483 = vmatpush1.msra.mxu0 %v259
  %484 = vmatprep.subr.mxu0 %v268
  %485 = vmatpush1.msra.mxu0 %v267
  %486 = vmatprep.mubr.f32.mxu0 0.0
  %487 = vmatmul.mubr.f32.gmra.mrb[0].mxu0 0.0
  %v488 = vpop.f32.mrb[0].mxu0
  %v489 = vadd.f32 0.0, %v488
  %v490 = vpop.f32.mrb[0].mxu0
  %v491 = vadd.f32 0.0, %v490
  %492 = vdwg.mxu0
  %493 = vmatprep.subr.mxu0 %v22
  %494 = vmatpush1.msra.mxu0 %v21
  %495 = vmatprep.subr.mxu0 %v30
  %496 = vmatpush1.msra.mxu0 %v29
  %497 = vmatprep.subr.mxu0 %v38
  %498 = vmatpush1.msra.mxu0 %v37
  %499 = vmatprep.subr.mxu0 %v46
  %500 = vmatpush1.msra.mxu0 %v45
  %501 = vmatprep.subr.mxu0 %v54
  %502 = vmatpush1.msra.mxu0 %v53
  %503 = vmatprep.subr.mxu0 %v62
  %504 = vmatpush1.msra.mxu0 %v61
  %505 = vmatprep.subr.mxu0 %v70
  %506 = vmatpush1.msra.mxu0 %v69
  %507 = vmatprep.subr.mxu0 %v78
  %508 = vmatpush1.msra.mxu0 %v77
  %509 = vmatprep.subr.mxu0 %v86
  %510 = vmatpush1.msra.mxu0 %v85
  %511 = vmatprep.subr.mxu0 %v94
  %512 = vmatpush1.msra.mxu0 %v93
  %513 = vmatprep.subr.mxu0 %v102
  %514 = vmatpush1.msra.mxu0 %v101
  %515 = vmatprep.subr.mxu0 %v110
  %516 = vmatpush1.msra.mxu0 %v109
  %517 = vmatprep.subr.mxu0 %v118
  %518 = vmatpush1.msra.mxu0 %v117
  %519 = vmatprep.subr.mxu0 %v126
  %520 = vmatpush1.msra.mxu0 %v125
  %521 = vmatprep.subr.mxu0 %v134
  %522 = vmatpush1.msra.mxu0 %v133
  %523 = vmatprep.subr.mxu0 %v142
  %524 = vmatpush1.msra.mxu0 %v141
  %525 = vmatprep.subr.mxu0 %v150
  %526 = vmatpush1.msra.mxu0 %v149
  %527 = vmatprep.subr.mxu0 %v158
  %528 = vmatpush1.msra.mxu0 %v157
  %529 = vmatprep.subr.mxu0 %v166
  %530 = vmatpush1.msra.mxu0 %v165
  %531 = vmatprep.subr.mxu0 %v174
  %532 = vmatpush1.msra.mxu0 %v173
  %533 = vmatprep.subr.mxu0 %v182
  %534 = vmatpush1.msra.mxu0 %v181
  %535 = vmatprep.subr.mxu0 %v190
  %536 = vmatpush1.msra.mxu0 %v189
  %537 = vmatprep.subr.mxu0 %v198
  %538 = vmatpush1.msra.mxu0 %v197
  %539 = vmatprep.subr.mxu0 %v206
  %540 = vmatpush1.msra.mxu0 %v205
  %541 = vmatprep.subr.mxu0 %v214
  %542 = vmatpush1.msra.mxu0 %v213
  %543 = vmatprep.subr.mxu0 %v222
  %544 = vmatpush1.msra.mxu0 %v221
  %545 = vmatprep.subr.mxu0 %v230
  %546 = vmatpush1.msra.mxu0 %v229
  %547 = vmatprep.subr.mxu0 %v238
  %548 = vmatpush1.msra.mxu0 %v237
  %549 = vmatprep.subr.mxu0 %v246
  %550 = vmatpush1.msra.mxu0 %v245
  %551 = vmatprep.subr.mxu0 %v254
  %552 = vmatpush1.msra.mxu0 %v253
  %553 = vmatprep.subr.mxu0 %v262
  %554 = vmatpush1.msra.mxu0 %v261
  %555 = vmatprep.subr.mxu0 %v270
  %556 = vmatpush1.msra.mxu0 %v269
  %557 = vmatprep.mubr.f32.mxu0 0.0
  %558 = vmatmul.mubr.f32.gmra.mrb[0].mxu0 0.0
  %v559 = vpop.f32.mrb[0].mxu0
  %v560 = vadd.f32 0.0, %v559
  %v561 = vpop.f32.mrb[0].mxu0
  %v562 = vadd.f32 0.0, %v561
  %563 = vdwg.mxu0
  %v564 = vadd.f32 %v271, %v347
  %v565 = vadd.f32 %v272, %v349
  %v566 = vadd.f32 %v273, %v418
  %v567 = vadd.f32 %v274, %v420
  %v568 = vxor.u32 %v564, 2147483648
  %v569 = vmul.f32 %v568, 1.442695
  %v570 = vpow.pop %v569
  %v571 = vadd.f32 %v570, 1.0
  %v572 = vrcp.pop %v571
  %v573 = vmul.f32 1.0, %v572
  %v574 = vxor.u32 %v565, 2147483648
  %v575 = vmul.f32 %v574, 1.442695
  %v576 = vpow.pop %v575
  %v577 = vadd.f32 %v576, 1.0
  %v578 = vrcp.pop %v577
  %v579 = vmul.f32 1.0, %v578
  %v580 = vtanh.pop %v566
  %v581 = vxor.u32 %v567, 2147483648
  %v582 = vmul.f32 %v581, 1.442695
  %v583 = vpow.pop %v582
  %v584 = vadd.f32 %v583, 1.0
  %v585 = vrcp.pop %v584
  %v586 = vmul.f32 1.0, %v585
  %v587 = vmul.f32 %v579, 0.0
  %v588 = vmul.f32 %v573, %v580
  %v589 = vadd.f32 %v587, %v588
  %v590 = vtanh.pop %v589
  %v591 = vmul.f32 %v586, %v590
  %v592 = vadd.f32 %v276, %v489
  %v593 = vadd.f32 %v277, %v491
  %v594 = vadd.f32 %v278, %v560
  %v595 = vadd.f32 %v279, %v562
  %v596 = vxor.u32 %v592, 2147483648
  %v597 = vmul.f32 %v596, 1.442695
  %v598 = vpow.pop %v597
  %v599 = vadd.f32 %v598, 1.0
  %v600 = vrcp.pop %v599
  %v601 = vmul.f32 1.0, %v600
  %v602 = vxor.u32 %v593, 2147483648
  %v603 = vmul.f32 %v602, 1.442695
  %v604 = vpow.pop %v603
  %v605 = vadd.f32 %v604, 1.0
  %v606 = vrcp.pop %v605
  %v607 = vmul.f32 1.0, %v606
  %v608 = vtanh.pop %v594
  %v609 = vxor.u32 %v595, 2147483648
  %v610 = vmul.f32 %v609, 1.442695
  %v611 = vpow.pop %v610
  %v612 = vadd.f32 %v611, 1.0
  %v613 = vrcp.pop %v612
  %v614 = vmul.f32 1.0, %v613
  %v615 = vmul.f32 %v607, 0.0
  %v616 = vmul.f32 %v601, %v608
  %v617 = vadd.f32 %v615, %v616
  %v618 = vtanh.pop %v617
  %v619 = vmul.f32 %v614, %v618
  %vm620 = vcmp.gt.s32.totalorder %v14, 0
  %vm621 = vcmp.gt.s32.totalorder %v14, 7
  %v622 = vsel %vm620, 1, 0
  %623 = vset.pattern.permute.xlu0 0
  %624 = vperm.xlu0 %623, %v622
  %v625 = vpop.permute.xlu0 %624
  %vm626 = vcmp.eq.s32.totalorder %v625, 1
  %v627 = vsel %vm626, %v591, 0.0
  %v628 = vsel %vm626, %v589, 0.0
  %v629 = vsel %vm621, 1, 0
  %630 = vset.pattern.permute.xlu0 0
  %631 = vperm.xlu0 %630, %v629
  %v632 = vpop.permute.xlu0 %631
  %vm633 = vcmp.eq.s32.totalorder %v632, 1
  %v634 = vsel %vm633, %v619, 0.0
  %v635 = vsel %vm633, %v617, 0.0
  %636 = vst [vmem:[%s3] sm:$0xff] %v627
  %s637 = scalar_lea.vmem %s3, 112
  %638 = vst [vmem:[%s637 + $0x8] sm:$0xff] %v634
  %s639 = scalar_lea.vmem %s0, 64
  %v640 = vld [vmem:[%s639] sm:$0xff]
  %v641 = vld [vmem:[%s639 + $0x8] sm:$0xff]
  %v642 = vld [vmem:[%s639 + $0x10] sm:$0xff]
  %v643 = vld [vmem:[%s639 + $0x18] sm:$0xff]
  %s644 = scalar_lea.vmem %s0, 384
  %v645 = vld [vmem:[%s644 + $0x20] sm:$0xff]
  %v646 = vld [vmem:[%s644 + $0x28] sm:$0xff]
  %v647 = vld [vmem:[%s644 + $0x30] sm:$0xff]
  %v648 = vld [vmem:[%s644 + $0x38] sm:$0xff]
  %649 = vmatprep.subr.mxu0 %v16
  %650 = vmatpush1.msra.mxu0 %v15
  %651 = vmatprep.subr.mxu0 %v24
  %652 = vmatpush1.msra.mxu0 %v23
  %653 = vmatprep.subr.mxu0 %v32
  %654 = vmatpush1.msra.mxu0 %v31
  %655 = vmatprep.subr.mxu0 %v40
  %656 = vmatpush1.msra.mxu0 %v39
  %657 = vmatprep.subr.mxu0 %v48
  %658 = vmatpush1.msra.mxu0 %v47
  %659 = vmatprep.subr.mxu0 %v56
  %660 = vmatpush1.msra.mxu0 %v55
  %661 = vmatprep.subr.mxu0 %v64
  %662 = vmatpush1.msra.mxu0 %v63
  %663 = vmatprep.subr.mxu0 %v72
  %664 = vmatpush1.msra.mxu0 %v71
  %665 = vmatprep.subr.mxu0 %v80
  %666 = vmatpush1.msra.mxu0 %v79
  %667 = vmatprep.subr.mxu0 %v88
  %668 = vmatpush1.msra.mxu0 %v87
  %669 = vmatprep.subr.mxu0 %v96
  %670 = vmatpush1.msra.mxu0 %v95
  %671 = vmatprep.subr.mxu0 %v104
  %672 = vmatpush1.msra.mxu0 %v103
  %673 = vmatprep.subr.mxu0 %v112
  %674 = vmatpush1.msra.mxu0 %v111
  %675 = vmatprep.subr.mxu0 %v120
  %676 = vmatpush1.msra.mxu0 %v119
  %677 = vmatprep.subr.mxu0 %v128
  %678 = vmatpush1.msra.mxu0 %v127
  %679 = vmatprep.subr.mxu0 %v136
  %680 = vmatpush1.msra.mxu0 %v135
  %681 = vmatprep.subr.mxu0 %v144
  %682 = vmatpush1.msra.mxu0 %v143
  %683 = vmatprep.subr.mxu0 %v152
  %684 = vmatpush1.msra.mxu0 %v151
  %685 = vmatprep.subr.mxu0 %v160
  %686 = vmatpush1.msra.mxu0 %v159
  %687 = vmatprep.subr.mxu0 %v168
  %688 = vmatpush1.msra.mxu0 %v167
  %689 = vmatprep.subr.mxu0 %v176
  %690 = vmatpush1.msra.mxu0 %v175
  %691 = vmatprep.subr.mxu0 %v184
  %692 = vmatpush1.msra.mxu0 %v183
  %693 = vmatprep.subr.mxu0 %v192
  %694 = vmatpush1.msra.mxu0 %v191
  %695 = vmatprep.subr.mxu0 %v200
  %696 = vmatpush1.msra.mxu0 %v199
  %697 = vmatprep.subr.mxu0 %v208
  %698 = vmatpush1.msra.mxu0 %v207
  %699 = vmatprep.subr.mxu0 %v216
  %700 = vmatpush1.msra.mxu0 %v215
  %701 = vmatprep.subr.mxu0 %v224
  %702 = vmatpush1.msra.mxu0 %v223
  %703 = vmatprep.subr.mxu0 %v232
  %704 = vmatpush1.msra.mxu0 %v231
  %705 = vmatprep.subr.mxu0 %v240
  %706 = vmatpush1.msra.mxu0 %v239
  %707 = vmatprep.subr.mxu0 %v248
  %708 = vmatpush1.msra.mxu0 %v247
  %709 = vmatprep.subr.mxu0 %v256
  %710 = vmatpush1.msra.mxu0 %v255
  %711 = vmatprep.subr.mxu0 %v264
  %712 = vmatpush1.msra.mxu0 %v263
  %713 = vmatprep.mubr.f32.mxu0 %v634
  %714 = vmatmul.mubr.f32.gmra.mrb[0].mxu0 %v627
  %v715 = vpop.f32.mrb[0].mxu0
  %v716 = vadd.f32 0.0, %v715
  %v717 = vpop.f32.mrb[0].mxu0
  %v718 = vadd.f32 0.0, %v717
  %719 = vdwg.mxu0
  %720 = vmatprep.subr.mxu0 %v18
  %721 = vmatpush1.msra.mxu0 %v17
  %722 = vmatprep.subr.mxu0 %v26
  %723 = vmatpush1.msra.mxu0 %v25
  %724 = vmatprep.subr.mxu0 %v34
  %725 = vmatpush1.msra.mxu0 %v33
  %726 = vmatprep.subr.mxu0 %v42
  %727 = vmatpush1.msra.mxu0 %v41
  %728 = vmatprep.subr.mxu0 %v50
  %729 = vmatpush1.msra.mxu0 %v49
  %730 = vmatprep.subr.mxu0 %v58
  %731 = vmatpush1.msra.mxu0 %v57
  %732 = vmatprep.subr.mxu0 %v66
  %733 = vmatpush1.msra.mxu0 %v65
  %734 = vmatprep.subr.mxu0 %v74
  %735 = vmatpush1.msra.mxu0 %v73
  %736 = vmatprep.subr.mxu0 %v82
  %737 = vmatpush1.msra.mxu0 %v81
  %738 = vmatprep.subr.mxu0 %v90
  %739 = vmatpush1.msra.mxu0 %v89
  %740 = vmatprep.subr.mxu0 %v98
  %741 = vmatpush1.msra.mxu0 %v97
  %742 = vmatprep.subr.mxu0 %v106
  %743 = vmatpush1.msra.mxu0 %v105
  %744 = vmatprep.subr.mxu0 %v114
  %745 = vmatpush1.msra.mxu0 %v113
  %746 = vmatprep.subr.mxu0 %v122
  %747 = vmatpush1.msra.mxu0 %v121
  %748 = vmatprep.subr.mxu0 %v130
  %749 = vmatpush1.msra.mxu0 %v129
  %750 = vmatprep.subr.mxu0 %v138
  %751 = vmatpush1.msra.mxu0 %v137
  %752 = vmatprep.subr.mxu0 %v146
  %753 = vmatpush1.msra.mxu0 %v145
  %754 = vmatprep.subr.mxu0 %v154
  %755 = vmatpush1.msra.mxu0 %v153
  %756 = vmatprep.subr.mxu0 %v162
  %757 = vmatpush1.msra.mxu0 %v161
  %758 = vmatprep.subr.mxu0 %v170
  %759 = vmatpush1.msra.mxu0 %v169
  %760 = vmatprep.subr.mxu0 %v178
  %761 = vmatpush1.msra.mxu0 %v177
  %762 = vmatprep.subr.mxu0 %v186
  %763 = vmatpush1.msra.mxu0 %v185
  %764 = vmatprep.subr.mxu0 %v194
  %765 = vmatpush1.msra.mxu0 %v193
  %766 = vmatprep.subr.mxu0 %v202
  %767 = vmatpush1.msra.mxu0 %v201
  %768 = vmatprep.subr.mxu0 %v210
  %769 = vmatpush1.msra.mxu0 %v209
  %770 = vmatprep.subr.mxu0 %v218
  %771 = vmatpush1.msra.mxu0 %v217
  %772 = vmatprep.subr.mxu0 %v226
  %773 = vmatpush1.msra.mxu0 %v225
  %774 = vmatprep.subr.mxu0 %v234
  %775 = vmatpush1.msra.mxu0 %v233
  %776 = vmatprep.subr.mxu0 %v242
  %777 = vmatpush1.msra.mxu0 %v241
  %778 = vmatprep.subr.mxu0 %v250
  %779 = vmatpush1.msra.mxu0 %v249
  %780 = vmatprep.subr.mxu0 %v258
  %781 = vmatpush1.msra.mxu0 %v257
  %782 = vmatprep.subr.mxu0 %v266
  %783 = vmatpush1.msra.mxu0 %v265
  %784 = vmatprep.mubr.f32.mxu0 %v634
  %785 = vmatmul.mubr.f32.gmra.mrb[0].mxu0 %v627
  %v786 = vpop.f32.mrb[0].mxu0
  %v787 = vadd.f32 0.0, %v786
  %v788 = vpop.f32.mrb[0].mxu0
  %v789 = vadd.f32 0.0, %v788
  %790 = vdwg.mxu0
  %791 = vmatprep.subr.mxu0 %v20
  %792 = vmatpush1.msra.mxu0 %v19
  %793 = vmatprep.subr.mxu0 %v28
  %794 = vmatpush1.msra.mxu0 %v27
  %795 = vmatprep.subr.mxu0 %v36
  %796 = vmatpush1.msra.mxu0 %v35
  %797 = vmatprep.subr.mxu0 %v44
  %798 = vmatpush1.msra.mxu0 %v43
  %799 = vmatprep.subr.mxu0 %v52
  %800 = vmatpush1.msra.mxu0 %v51
  %801 = vmatprep.subr.mxu0 %v60
  %802 = vmatpush1.msra.mxu0 %v59
  %803 = vmatprep.subr.mxu0 %v68
  %804 = vmatpush1.msra.mxu0 %v67
  %805 = vmatprep.subr.mxu0 %v76
  %806 = vmatpush1.msra.mxu0 %v75
  %807 = vmatprep.subr.mxu0 %v84
  %808 = vmatpush1.msra.mxu0 %v83
  %809 = vmatprep.subr.mxu0 %v92
  %810 = vmatpush1.msra.mxu0 %v91
  %811 = vmatprep.subr.mxu0 %v100
  %812 = vmatpush1.msra.mxu0 %v99
  %813 = vmatprep.subr.mxu0 %v108
  %814 = vmatpush1.msra.mxu0 %v107
  %815 = vmatprep.subr.mxu0 %v116
  %816 = vmatpush1.msra.mxu0 %v115
  %817 = vmatprep.subr.mxu0 %v124
  %818 = vmatpush1.msra.mxu0 %v123
  %819 = vmatprep.subr.mxu0 %v132
  %820 = vmatpush1.msra.mxu0 %v131
  %821 = vmatprep.subr.mxu0 %v140
  %822 = vmatpush1.msra.mxu0 %v139
  %823 = vmatprep.subr.mxu0 %v148
  %824 = vmatpush1.msra.mxu0 %v147
  %825 = vmatprep.subr.mxu0 %v156
  %826 = vmatpush1.msra.mxu0 %v155
  %827 = vmatprep.subr.mxu0 %v164
  %828 = vmatpush1.msra.mxu0 %v163
  %829 = vmatprep.subr.mxu0 %v172
  %830 = vmatpush1.msra.mxu0 %v171
  %831 = vmatprep.subr.mxu0 %v180
  %832 = vmatpush1.msra.mxu0 %v179
  %833 = vmatprep.subr.mxu0 %v188
  %834 = vmatpush1.msra.mxu0 %v187
  %835 = vmatprep.subr.mxu0 %v196
  %836 = vmatpush1.msra.mxu0 %v195
  %837 = vmatprep.subr.mxu0 %v204
  %838 = vmatpush1.msra.mxu0 %v203
  %839 = vmatprep.subr.mxu0 %v212
  %840 = vmatpush1.msra.mxu0 %v211
  %841 = vmatprep.subr.mxu0 %v220
  %842 = vmatpush1.msra.mxu0 %v219
  %843 = vmatprep.subr.mxu0 %v228
  %844 = vmatpush1.msra.mxu0 %v227
  %845 = vmatprep.subr.mxu0 %v236
  %846 = vmatpush1.msra.mxu0 %v235
  %847 = vmatprep.subr.mxu0 %v244
  %848 = vmatpush1.msra.mxu0 %v243
  %849 = vmatprep.subr.mxu0 %v252
  %850 = vmatpush1.msra.mxu0 %v251
  %851 = vmatprep.subr.mxu0 %v260
  %852 = vmatpush1.msra.mxu0 %v259
  %853 = vmatprep.subr.mxu0 %v268
  %854 = vmatpush1.msra.mxu0 %v267
  %855 = vmatprep.mubr.f32.mxu0 %v634
  %856 = vmatmul.mubr.f32.gmra.mrb[0].mxu0 %v627
  %v857 = vpop.f32.mrb[0].mxu0
  %v858 = vadd.f32 0.0, %v857
  %v859 = vpop.f32.mrb[0].mxu0
  %v860 = vadd.f32 0.0, %v859
  %861 = vdwg.mxu0
  %862 = vmatprep.subr.mxu0 %v22
  %863 = vmatpush1.msra.mxu0 %v21
  %864 = vmatprep.subr.mxu0 %v30
  %865 = vmatpush1.msra.mxu0 %v29
  %866 = vmatprep.subr.mxu0 %v38
  %867 = vmatpush1.msra.mxu0 %v37
  %868 = vmatprep.subr.mxu0 %v46
  %869 = vmatpush1.msra.mxu0 %v45
  %870 = vmatprep.subr.mxu0 %v54
  %871 = vmatpush1.msra.mxu0 %v53
  %872 = vmatprep.subr.mxu0 %v62
  %873 = vmatpush1.msra.mxu0 %v61
  %874 = vmatprep.subr.mxu0 %v70
  %875 = vmatpush1.msra.mxu0 %v69
  %876 = vmatprep.subr.mxu0 %v78
  %877 = vmatpush1.msra.mxu0 %v77
  %878 = vmatprep.subr.mxu0 %v86
  %879 = vmatpush1.msra.mxu0 %v85
  %880 = vmatprep.subr.mxu0 %v94
  %881 = vmatpush1.msra.mxu0 %v93
  %882 = vmatprep.subr.mxu0 %v102
  %883 = vmatpush1.msra.mxu0 %v101
  %884 = vmatprep.subr.mxu0 %v110
  %885 = vmatpush1.msra.mxu0 %v109
  %886 = vmatprep.subr.mxu0 %v118
  %887 = vmatpush1.msra.mxu0 %v117
  %888 = vmatprep.subr.mxu0 %v126
  %889 = vmatpush1.msra.mxu0 %v125
  %890 = vmatprep.subr.mxu0 %v134
  %891 = vmatpush1.msra.mxu0 %v133
  %892 = vmatprep.subr.mxu0 %v142
  %893 = vmatpush1.msra.mxu0 %v141
  %894 = vmatprep.subr.mxu0 %v150
  %895 = vmatpush1.msra.mxu0 %v149
  %896 = vmatprep.subr.mxu0 %v158
  %897 = vmatpush1.msra.mxu0 %v157
  %898 = vmatprep.subr.mxu0 %v166
  %899 = vmatpush1.msra.mxu0 %v165
  %900 = vmatprep.subr.mxu0 %v174
  %901 = vmatpush1.msra.mxu0 %v173
  %902 = vmatprep.subr.mxu0 %v182
  %903 = vmatpush1.msra.mxu0 %v181
  %904 = vmatprep.subr.mxu0 %v190
  %905 = vmatpush1.msra.mxu0 %v189
  %906 = vmatprep.subr.mxu0 %v198
  %907 = vmatpush1.msra.mxu0 %v197
  %908 = vmatprep.subr.mxu0 %v206
  %909 = vmatpush1.msra.mxu0 %v205
  %910 = vmatprep.subr.mxu0 %v214
  %911 = vmatpush1.msra.mxu0 %v213
  %912 = vmatprep.subr.mxu0 %v222
  %913 = vmatpush1.msra.mxu0 %v221
  %914 = vmatprep.subr.mxu0 %v230
  %915 = vmatpush1.msra.mxu0 %v229
  %916 = vmatprep.subr.mxu0 %v238
  %917 = vmatpush1.msra.mxu0 %v237
  %918 = vmatprep.subr.mxu0 %v246
  %919 = vmatpush1.msra.mxu0 %v245
  %920 = vmatprep.subr.mxu0 %v254
  %921 = vmatpush1.msra.mxu0 %v253
  %922 = vmatprep.subr.mxu0 %v262
  %923 = vmatpush1.msra.mxu0 %v261
  %924 = vmatprep.subr.mxu0 %v270
  %925 = vmatpush1.msra.mxu0 %v269
  %926 = vmatprep.mubr.f32.mxu0 %v634
  %927 = vmatmul.mubr.f32.gmra.mrb[0].mxu0 %v627
  %v928 = vpop.f32.mrb[0].mxu0
  %v929 = vadd.f32 0.0, %v928
  %v930 = vpop.f32.mrb[0].mxu0
  %v931 = vadd.f32 0.0, %v930
  %932 = vdwg.mxu0
  %v933 = vadd.f32 %v640, %v716
  %v934 = vadd.f32 %v641, %v718
  %v935 = vadd.f32 %v642, %v787
  %v936 = vadd.f32 %v643, %v789
  %v937 = vxor.u32 %v933, 2147483648
  %v938 = vmul.f32 %v937, 1.442695
  %v939 = vpow.pop %v938
  %v940 = vadd.f32 %v939, 1.0
  %v941 = vrcp.pop %v940
  %v942 = vmul.f32 1.0, %v941
  %v943 = vxor.u32 %v934, 2147483648
  %v944 = vmul.f32 %v943, 1.442695
  %v945 = vpow.pop %v944
  %v946 = vadd.f32 %v945, 1.0
  %v947 = vrcp.pop %v946
  %v948 = vmul.f32 1.0, %v947
  %v949 = vtanh.pop %v935
  %v950 = vxor.u32 %v936, 2147483648
  %v951 = vmul.f32 %v950, 1.442695
  %v952 = vpow.pop %v951
  %v953 = vadd.f32 %v952, 1.0
  %v954 = vrcp.pop %v953
  %v955 = vmul.f32 1.0, %v954
  %v956 = vmul.f32 %v948, %v628
  %v957 = vmul.f32 %v942, %v949
  %v958 = vadd.f32 %v956, %v957
  %v959 = vtanh.pop %v958
  %v960 = vmul.f32 %v955, %v959
  %v961 = vadd.f32 %v645, %v858
  %v962 = vadd.f32 %v646, %v860
  %v963 = vadd.f32 %v647, %v929
  %v964 = vadd.f32 %v648, %v931
  %v965 = vxor.u32 %v961, 2147483648
  %v966 = vmul.f32 %v965, 1.442695
  %v967 = vpow.pop %v966
  %v968 = vadd.f32 %v967, 1.0
  %v969 = vrcp.pop %v968
  %v970 = vmul.f32 1.0, %v969
  %v971 = vxor.u32 %v962, 2147483648
  %v972 = vmul.f32 %v971, 1.442695
  %v973 = vpow.pop %v972
  %v974 = vadd.f32 %v973, 1.0
  %v975 = vrcp.pop %v974
  %v976 = vmul.f32 1.0, %v975
  %v977 = vtanh.pop %v963
  %v978 = vxor.u32 %v964, 2147483648
  %v979 = vmul.f32 %v978, 1.442695
  %v980 = vpow.pop %v979
  %v981 = vadd.f32 %v980, 1.0
  %v982 = vrcp.pop %v981
  %v983 = vmul.f32 1.0, %v982
  %v984 = vmul.f32 %v976, %v635
  %v985 = vmul.f32 %v970, %v977
  %v986 = vadd.f32 %v984, %v985
  %v987 = vtanh.pop %v986
  %v988 = vmul.f32 %v983, %v987
  %vm989 = vcmp.gt.s32.totalorder %v14, 1
  %vm990 = vcmp.gt.s32.totalorder %v14, 6
  %v991 = vsel %vm989, 1, 0
  %992 = vset.pattern.permute.xlu0 0
  %993 = vperm.xlu0 %992, %v991
  %v994 = vpop.permute.xlu0 %993
  %vm995 = vcmp.eq.s32.totalorder %v994, 1
  %v996 = vsel %vm995, %v960, %v627
  %v997 = vsel %vm995, %v958, %v628
  %v998 = vsel %vm990, 1, 0
  %999 = vset.pattern.permute.xlu0 0
  %1000 = vperm.xlu0 %999, %v998
  %v1001 = vpop.permute.xlu0 %1000
  %vm1002 = vcmp.eq.s32.totalorder %v1001, 1
  %v1003 = vsel %vm1002, %v988, %v634
  %v1004 = vsel %vm1002, %v986, %v635
  %v1005 = vsel %vm995, %v960, 0.0
  %s1006 = scalar_lea.vmem %s3, 16
  %1007 = vst [vmem:[%s1006] sm:$0xff] %v1005
  %v1008 = vsel %vm1002, %v988, 0.0
  %s1009 = scalar_lea.vmem %s3, 96
  %1010 = vst [vmem:[%s1009 + $0x8] sm:$0xff] %v1008
  %s1011 = scalar_lea.vmem %s0, 128
  %v1012 = vld [vmem:[%s1011] sm:$0xff]
  %v1013 = vld [vmem:[%s1011 + $0x8] sm:$0xff]
  %v1014 = vld [vmem:[%s1011 + $0x10] sm:$0xff]
  %v1015 = vld [vmem:[%s1011 + $0x18] sm:$0xff]
  %s1016 = scalar_lea.vmem %s0, 320
  %v1017 = vld [vmem:[%s1016 + $0x20] sm:$0xff]
  %v1018 = vld [vmem:[%s1016 + $0x28] sm:$0xff]
  %v1019 = vld [vmem:[%s1016 + $0x30] sm:$0xff]
  %v1020 = vld [vmem:[%s1016 + $0x38] sm:$0xff]
  %1021 = vmatprep.subr.mxu0 %v16
  %1022 = vmatpush1.msra.mxu0 %v15
  %1023 = vmatprep.subr.mxu0 %v24
  %1024 = vmatpush1.msra.mxu0 %v23
  %1025 = vmatprep.subr.mxu0 %v32
  %1026 = vmatpush1.msra.mxu0 %v31
  %1027 = vmatprep.subr.mxu0 %v40
  %1028 = vmatpush1.msra.mxu0 %v39
  %1029 = vmatprep.subr.mxu0 %v48
  %1030 = vmatpush1.msra.mxu0 %v47
  %1031 = vmatprep.subr.mxu0 %v56
  %1032 = vmatpush1.msra.mxu0 %v55
  %1033 = vmatprep.subr.mxu0 %v64
  %1034 = vmatpush1.msra.mxu0 %v63
  %1035 = vmatprep.subr.mxu0 %v72
  %1036 = vmatpush1.msra.mxu0 %v71
  %1037 = vmatprep.subr.mxu0 %v80
  %1038 = vmatpush1.msra.mxu0 %v79
  %1039 = vmatprep.subr.mxu0 %v88
  %1040 = vmatpush1.msra.mxu0 %v87
  %1041 = vmatprep.subr.mxu0 %v96
  %1042 = vmatpush1.msra.mxu0 %v95
  %1043 = vmatprep.subr.mxu0 %v104
  %1044 = vmatpush1.msra.mxu0 %v103
  %1045 = vmatprep.subr.mxu0 %v112
  %1046 = vmatpush1.msra.mxu0 %v111
  %1047 = vmatprep.subr.mxu0 %v120
  %1048 = vmatpush1.msra.mxu0 %v119
  %1049 = vmatprep.subr.mxu0 %v128
  %1050 = vmatpush1.msra.mxu0 %v127
  %1051 = vmatprep.subr.mxu0 %v136
  %1052 = vmatpush1.msra.mxu0 %v135
  %1053 = vmatprep.subr.mxu0 %v144
  %1054 = vmatpush1.msra.mxu0 %v143
  %1055 = vmatprep.subr.mxu0 %v152
  %1056 = vmatpush1.msra.mxu0 %v151
  %1057 = vmatprep.subr.mxu0 %v160
  %1058 = vmatpush1.msra.mxu0 %v159
  %1059 = vmatprep.subr.mxu0 %v168
  %1060 = vmatpush1.msra.mxu0 %v167
  %1061 = vmatprep.subr.mxu0 %v176
  %1062 = vmatpush1.msra.mxu0 %v175
  %1063 = vmatprep.subr.mxu0 %v184
  %1064 = vmatpush1.msra.mxu0 %v183
  %1065 = vmatprep.subr.mxu0 %v192
  %1066 = vmatpush1.msra.mxu0 %v191
  %1067 = vmatprep.subr.mxu0 %v200
  %1068 = vmatpush1.msra.mxu0 %v199
  %1069 = vmatprep.subr.mxu0 %v208
  %1070 = vmatpush1.msra.mxu0 %v207
  %1071 = vmatprep.subr.mxu0 %v216
  %1072 = vmatpush1.msra.mxu0 %v215
  %1073 = vmatprep.subr.mxu0 %v224
  %1074 = vmatpush1.msra.mxu0 %v223
  %1075 = vmatprep.subr.mxu0 %v232
  %1076 = vmatpush1.msra.mxu0 %v231
  %1077 = vmatprep.subr.mxu0 %v240
  %1078 = vmatpush1.msra.mxu0 %v239
  %1079 = vmatprep.subr.mxu0 %v248
  %1080 = vmatpush1.msra.mxu0 %v247
  %1081 = vmatprep.subr.mxu0 %v256
  %1082 = vmatpush1.msra.mxu0 %v255
  %1083 = vmatprep.subr.mxu0 %v264
  %1084 = vmatpush1.msra.mxu0 %v263
  %1085 = vmatprep.mubr.f32.mxu0 %v1003
  %1086 = vmatmul.mubr.f32.gmra.mrb[0].mxu0 %v996
  %v1087 = vpop.f32.mrb[0].mxu0
  %v1088 = vadd.f32 0.0, %v1087
  %v1089 = vpop.f32.mrb[0].mxu0
  %v1090 = vadd.f32 0.0, %v1089
  %1091 = vdwg.mxu0
  %1092 = vmatprep.subr.mxu0 %v18
  %1093 = vmatpush1.msra.mxu0 %v17
  %1094 = vmatprep.subr.mxu0 %v26
  %1095 = vmatpush1.msra.mxu0 %v25
  %1096 = vmatprep.subr.mxu0 %v34
  %1097 = vmatpush1.msra.mxu0 %v33
  %1098 = vmatprep.subr.mxu0 %v42
  %1099 = vmatpush1.msra.mxu0 %v41
  %1100 = vmatprep.subr.mxu0 %v50
  %1101 = vmatpush1.msra.mxu0 %v49
  %1102 = vmatprep.subr.mxu0 %v58
  %1103 = vmatpush1.msra.mxu0 %v57
  %1104 = vmatprep.subr.mxu0 %v66
  %1105 = vmatpush1.msra.mxu0 %v65
  %1106 = vmatprep.subr.mxu0 %v74
  %1107 = vmatpush1.msra.mxu0 %v73
  %1108 = vmatprep.subr.mxu0 %v82
  %1109 = vmatpush1.msra.mxu0 %v81
  %1110 = vmatprep.subr.mxu0 %v90
  %1111 = vmatpush1.msra.mxu0 %v89
  %1112 = vmatprep.subr.mxu0 %v98
  %1113 = vmatpush1.msra.mxu0 %v97
  %1114 = vmatprep.subr.mxu0 %v106
  %1115 = vmatpush1.msra.mxu0 %v105
  %1116 = vmatprep.subr.mxu0 %v114
  %1117 = vmatpush1.msra.mxu0 %v113
  %1118 = vmatprep.subr.mxu0 %v122
  %1119 = vmatpush1.msra.mxu0 %v121
  %1120 = vmatprep.subr.mxu0 %v130
  %1121 = vmatpush1.msra.mxu0 %v129
  %1122 = vmatprep.subr.mxu0 %v138
  %1123 = vmatpush1.msra.mxu0 %v137
  %1124 = vmatprep.subr.mxu0 %v146
  %1125 = vmatpush1.msra.mxu0 %v145
  %1126 = vmatprep.subr.mxu0 %v154
  %1127 = vmatpush1.msra.mxu0 %v153
  %1128 = vmatprep.subr.mxu0 %v162
  %1129 = vmatpush1.msra.mxu0 %v161
  %1130 = vmatprep.subr.mxu0 %v170
  %1131 = vmatpush1.msra.mxu0 %v169
  %1132 = vmatprep.subr.mxu0 %v178
  %1133 = vmatpush1.msra.mxu0 %v177
  %1134 = vmatprep.subr.mxu0 %v186
  %1135 = vmatpush1.msra.mxu0 %v185
  %1136 = vmatprep.subr.mxu0 %v194
  %1137 = vmatpush1.msra.mxu0 %v193
  %1138 = vmatprep.subr.mxu0 %v202
  %1139 = vmatpush1.msra.mxu0 %v201
  %1140 = vmatprep.subr.mxu0 %v210
  %1141 = vmatpush1.msra.mxu0 %v209
  %1142 = vmatprep.subr.mxu0 %v218
  %1143 = vmatpush1.msra.mxu0 %v217
  %1144 = vmatprep.subr.mxu0 %v226
  %1145 = vmatpush1.msra.mxu0 %v225
  %1146 = vmatprep.subr.mxu0 %v234
  %1147 = vmatpush1.msra.mxu0 %v233
  %1148 = vmatprep.subr.mxu0 %v242
  %1149 = vmatpush1.msra.mxu0 %v241
  %1150 = vmatprep.subr.mxu0 %v250
  %1151 = vmatpush1.msra.mxu0 %v249
  %1152 = vmatprep.subr.mxu0 %v258
  %1153 = vmatpush1.msra.mxu0 %v257
  %1154 = vmatprep.subr.mxu0 %v266
  %1155 = vmatpush1.msra.mxu0 %v265
  %1156 = vmatprep.mubr.f32.mxu0 %v1003
  %1157 = vmatmul.mubr.f32.gmra.mrb[0].mxu0 %v996
  %v1158 = vpop.f32.mrb[0].mxu0
  %v1159 = vadd.f32 0.0, %v1158
  %v1160 = vpop.f32.mrb[0].mxu0
  %v1161 = vadd.f32 0.0, %v1160
  %1162 = vdwg.mxu0
  %1163 = vmatprep.subr.mxu0 %v20
  %1164 = vmatpush1.msra.mxu0 %v19
  %1165 = vmatprep.subr.mxu0 %v28
  %1166 = vmatpush1.msra.mxu0 %v27
  %1167 = vmatprep.subr.mxu0 %v36
  %1168 = vmatpush1.msra.mxu0 %v35
  %1169 = vmatprep.subr.mxu0 %v44
  %1170 = vmatpush1.msra.mxu0 %v43
  %1171 = vmatprep.subr.mxu0 %v52
  %1172 = vmatpush1.msra.mxu0 %v51
  %1173 = vmatprep.subr.mxu0 %v60
  %1174 = vmatpush1.msra.mxu0 %v59
  %1175 = vmatprep.subr.mxu0 %v68
  %1176 = vmatpush1.msra.mxu0 %v67
  %1177 = vmatprep.subr.mxu0 %v76
  %1178 = vmatpush1.msra.mxu0 %v75
  %1179 = vmatprep.subr.mxu0 %v84
  %1180 = vmatpush1.msra.mxu0 %v83
  %1181 = vmatprep.subr.mxu0 %v92
  %1182 = vmatpush1.msra.mxu0 %v91
  %1183 = vmatprep.subr.mxu0 %v100
  %1184 = vmatpush1.msra.mxu0 %v99
  %1185 = vmatprep.subr.mxu0 %v108
  %1186 = vmatpush1.msra.mxu0 %v107
  %1187 = vmatprep.subr.mxu0 %v116
  %1188 = vmatpush1.msra.mxu0 %v115
  %1189 = vmatprep.subr.mxu0 %v124
  %1190 = vmatpush1.msra.mxu0 %v123
  %1191 = vmatprep.subr.mxu0 %v132
  %1192 = vmatpush1.msra.mxu0 %v131
  %1193 = vmatprep.subr.mxu0 %v140
  %1194 = vmatpush1.msra.mxu0 %v139
  %1195 = vmatprep.subr.mxu0 %v148
  %1196 = vmatpush1.msra.mxu0 %v147
  %1197 = vmatprep.subr.mxu0 %v156
  %1198 = vmatpush1.msra.mxu0 %v155
  %1199 = vmatprep.subr.mxu0 %v164
  %1200 = vmatpush1.msra.mxu0 %v163
  %1201 = vmatprep.subr.mxu0 %v172
  %1202 = vmatpush1.msra.mxu0 %v171
  %1203 = vmatprep.subr.mxu0 %v180
  %1204 = vmatpush1.msra.mxu0 %v179
  %1205 = vmatprep.subr.mxu0 %v188
  %1206 = vmatpush1.msra.mxu0 %v187
  %1207 = vmatprep.subr.mxu0 %v196
  %1208 = vmatpush1.msra.mxu0 %v195
  %1209 = vmatprep.subr.mxu0 %v204
  %1210 = vmatpush1.msra.mxu0 %v203
  %1211 = vmatprep.subr.mxu0 %v212
  %1212 = vmatpush1.msra.mxu0 %v211
  %1213 = vmatprep.subr.mxu0 %v220
  %1214 = vmatpush1.msra.mxu0 %v219
  %1215 = vmatprep.subr.mxu0 %v228
  %1216 = vmatpush1.msra.mxu0 %v227
  %1217 = vmatprep.subr.mxu0 %v236
  %1218 = vmatpush1.msra.mxu0 %v235
  %1219 = vmatprep.subr.mxu0 %v244
  %1220 = vmatpush1.msra.mxu0 %v243
  %1221 = vmatprep.subr.mxu0 %v252
  %1222 = vmatpush1.msra.mxu0 %v251
  %1223 = vmatprep.subr.mxu0 %v260
  %1224 = vmatpush1.msra.mxu0 %v259
  %1225 = vmatprep.subr.mxu0 %v268
  %1226 = vmatpush1.msra.mxu0 %v267
  %1227 = vmatprep.mubr.f32.mxu0 %v1003
  %1228 = vmatmul.mubr.f32.gmra.mrb[0].mxu0 %v996
  %v1229 = vpop.f32.mrb[0].mxu0
  %v1230 = vadd.f32 0.0, %v1229
  %v1231 = vpop.f32.mrb[0].mxu0
  %v1232 = vadd.f32 0.0, %v1231
  %1233 = vdwg.mxu0
  %1234 = vmatprep.subr.mxu0 %v22
  %1235 = vmatpush1.msra.mxu0 %v21
  %1236 = vmatprep.subr.mxu0 %v30
  %1237 = vmatpush1.msra.mxu0 %v29
  %1238 = vmatprep.subr.mxu0 %v38
  %1239 = vmatpush1.msra.mxu0 %v37
  %1240 = vmatprep.subr.mxu0 %v46
  %1241 = vmatpush1.msra.mxu0 %v45
  %1242 = vmatprep.subr.mxu0 %v54
  %1243 = vmatpush1.msra.mxu0 %v53
  %1244 = vmatprep.subr.mxu0 %v62
  %1245 = vmatpush1.msra.mxu0 %v61
  %1246 = vmatprep.subr.mxu0 %v70
  %1247 = vmatpush1.msra.mxu0 %v69
  %1248 = vmatprep.subr.mxu0 %v78
  %1249 = vmatpush1.msra.mxu0 %v77
  %1250 = vmatprep.subr.mxu0 %v86
  %1251 = vmatpush1.msra.mxu0 %v85
  %1252 = vmatprep.subr.mxu0 %v94
  %1253 = vmatpush1.msra.mxu0 %v93
  %1254 = vmatprep.subr.mxu0 %v102
  %1255 = vmatpush1.msra.mxu0 %v101
  %1256 = vmatprep.subr.mxu0 %v110
  %1257 = vmatpush1.msra.mxu0 %v109
  %1258 = vmatprep.subr.mxu0 %v118
  %1259 = vmatpush1.msra.mxu0 %v117
  %1260 = vmatprep.subr.mxu0 %v126
  %1261 = vmatpush1.msra.mxu0 %v125
  %1262 = vmatprep.subr.mxu0 %v134
  %1263 = vmatpush1.msra.mxu0 %v133
  %1264 = vmatprep.subr.mxu0 %v142
  %1265 = vmatpush1.msra.mxu0 %v141
  %1266 = vmatprep.subr.mxu0 %v150
  %1267 = vmatpush1.msra.mxu0 %v149
  %1268 = vmatprep.subr.mxu0 %v158
  %1269 = vmatpush1.msra.mxu0 %v157
  %1270 = vmatprep.subr.mxu0 %v166
  %1271 = vmatpush1.msra.mxu0 %v165
  %1272 = vmatprep.subr.mxu0 %v174
  %1273 = vmatpush1.msra.mxu0 %v173
  %1274 = vmatprep.subr.mxu0 %v182
  %1275 = vmatpush1.msra.mxu0 %v181
  %1276 = vmatprep.subr.mxu0 %v190
  %1277 = vmatpush1.msra.mxu0 %v189
  %1278 = vmatprep.subr.mxu0 %v198
  %1279 = vmatpush1.msra.mxu0 %v197
  %1280 = vmatprep.subr.mxu0 %v206
  %1281 = vmatpush1.msra.mxu0 %v205
  %1282 = vmatprep.subr.mxu0 %v214
  %1283 = vmatpush1.msra.mxu0 %v213
  %1284 = vmatprep.subr.mxu0 %v222
  %1285 = vmatpush1.msra.mxu0 %v221
  %1286 = vmatprep.subr.mxu0 %v230
  %1287 = vmatpush1.msra.mxu0 %v229
  %1288 = vmatprep.subr.mxu0 %v238
  %1289 = vmatpush1.msra.mxu0 %v237
  %1290 = vmatprep.subr.mxu0 %v246
  %1291 = vmatpush1.msra.mxu0 %v245
  %1292 = vmatprep.subr.mxu0 %v254
  %1293 = vmatpush1.msra.mxu0 %v253
  %1294 = vmatprep.subr.mxu0 %v262
  %1295 = vmatpush1.msra.mxu0 %v261
  %1296 = vmatprep.subr.mxu0 %v270
  %1297 = vmatpush1.msra.mxu0 %v269
  %1298 = vmatprep.mubr.f32.mxu0 %v1003
  %1299 = vmatmul.mubr.f32.gmra.mrb[0].mxu0 %v996
  %v1300 = vpop.f32.mrb[0].mxu0
  %v1301 = vadd.f32 0.0, %v1300
  %v1302 = vpop.f32.mrb[0].mxu0
  %v1303 = vadd.f32 0.0, %v1302
  %1304 = vdwg.mxu0
  %v1305 = vadd.f32 %v1012, %v1088
  %v1306 = vadd.f32 %v1013, %v1090
  %v1307 = vadd.f32 %v1014, %v1159
  %v1308 = vadd.f32 %v1015, %v1161
  %v1309 = vxor.u32 %v1305, 2147483648
  %v1310 = vmul.f32 %v1309, 1.442695
  %v1311 = vpow.pop %v1310
  %v1312 = vadd.f32 %v1311, 1.0
  %v1313 = vrcp.pop %v1312
  %v1314 = vmul.f32 1.0, %v1313
  %v1315 = vxor.u32 %v1306, 2147483648
  %v1316 = vmul.f32 %v1315, 1.442695
  %v1317 = vpow.pop %v1316
  %v1318 = vadd.f32 %v1317, 1.0
  %v1319 = vrcp.pop %v1318
  %v1320 = vmul.f32 1.0, %v1319
  %v1321 = vtanh.pop %v1307
  %v1322 = vxor.u32 %v1308, 2147483648
  %v1323 = vmul.f32 %v1322, 1.442695
  %v1324 = vpow.pop %v1323
  %v1325 = vadd.f32 %v1324, 1.0
  %v1326 = vrcp.pop %v1325
  %v1327 = vmul.f32 1.0, %v1326
  %v1328 = vmul.f32 %v1320, %v997
  %v1329 = vmul.f32 %v1314, %v1321
  %v1330 = vadd.f32 %v1328, %v1329
  %v1331 = vtanh.pop %v1330
  %v1332 = vmul.f32 %v1327, %v1331
  %v1333 = vadd.f32 %v1017, %v1230
  %v1334 = vadd.f32 %v1018, %v1232
  %v1335 = vadd.f32 %v1019, %v1301
  %v1336 = vadd.f32 %v1020, %v1303
  %v1337 = vxor.u32 %v1333, 2147483648
  %v1338 = vmul.f32 %v1337, 1.442695
  %v1339 = vpow.pop %v1338
  %v1340 = vadd.f32 %v1339, 1.0
  %v1341 = vrcp.pop %v1340
  %v1342 = vmul.f32 1.0, %v1341
  %v1343 = vxor.u32 %v1334, 2147483648
  %v1344 = vmul.f32 %v1343, 1.442695
  %v1345 = vpow.pop %v1344
  %v1346 = vadd.f32 %v1345, 1.0
  %v1347 = vrcp.pop %v1346
  %v1348 = vmul.f32 1.0, %v1347
  %v1349 = vtanh.pop %v1335
  %v1350 = vxor.u32 %v1336, 2147483648
  %v1351 = vmul.f32 %v1350, 1.442695
  %v1352 = vpow.pop %v1351
  %v1353 = vadd.f32 %v1352, 1.0
  %v1354 = vrcp.pop %v1353
  %v1355 = vmul.f32 1.0, %v1354
  %v1356 = vmul.f32 %v1348, %v1004
  %v1357 = vmul.f32 %v1342, %v1349
  %v1358 = vadd.f32 %v1356, %v1357
  %v1359 = vtanh.pop %v1358
  %v1360 = vmul.f32 %v1355, %v1359
  %vm1361 = vcmp.gt.s32.totalorder %v14, 2
  %vm1362 = vcmp.gt.s32.totalorder %v14, 5
  %v1363 = vsel %vm1361, 1, 0
  %1364 = vset.pattern.permute.xlu0 0
  %1365 = vperm.xlu0 %1364, %v1363
  %v1366 = vpop.permute.xlu0 %1365
  %vm1367 = vcmp.eq.s32.totalorder %v1366, 1
  %v1368 = vsel %vm1367, %v1332, %v996
  %v1369 = vsel %vm1367, %v1330, %v997
  %v1370 = vsel %vm1362, 1, 0
  %1371 = vset.pattern.permute.xlu0 0
  %1372 = vperm.xlu0 %1371, %v1370
  %v1373 = vpop.permute.xlu0 %1372
  %vm1374 = vcmp.eq.s32.totalorder %v1373, 1
  %v1375 = vsel %vm1374, %v1360, %v1003
  %v1376 = vsel %vm1374, %v1358, %v1004
  %v1377 = vsel %vm1367, %v1332, 0.0
  %s1378 = scalar_lea.vmem %s3, 32
  %1379 = vst [vmem:[%s1378] sm:$0xff] %v1377
  %v1380 = vsel %vm1374, %v1360, 0.0
  %s1381 = scalar_lea.vmem %s3, 80
  %1382 = vst [vmem:[%s1381 + $0x8] sm:$0xff] %v1380
  %s1383 = scalar_lea.vmem %s0, 192
  %v1384 = vld [vmem:[%s1383] sm:$0xff]
  %v1385 = vld [vmem:[%s1383 + $0x8] sm:$0xff]
  %v1386 = vld [vmem:[%s1383 + $0x10] sm:$0xff]
  %v1387 = vld [vmem:[%s1383 + $0x18] sm:$0xff]
  %s1388 = scalar_lea.vmem %s0, 256
  %v1389 = vld [vmem:[%s1388 + $0x20] sm:$0xff]
  %v1390 = vld [vmem:[%s1388 + $0x28] sm:$0xff]
  %v1391 = vld [vmem:[%s1388 + $0x30] sm:$0xff]
  %v1392 = vld [vmem:[%s1388 + $0x38] sm:$0xff]
  %1393 = vmatprep.subr.mxu0 %v16
  %1394 = vmatpush1.msra.mxu0 %v15
  %1395 = vmatprep.subr.mxu0 %v24
  %1396 = vmatpush1.msra.mxu0 %v23
  %1397 = vmatprep.subr.mxu0 %v32
  %1398 = vmatpush1.msra.mxu0 %v31
  %1399 = vmatprep.subr.mxu0 %v40
  %1400 = vmatpush1.msra.mxu0 %v39
  %1401 = vmatprep.subr.mxu0 %v48
  %1402 = vmatpush1.msra.mxu0 %v47
  %1403 = vmatprep.subr.mxu0 %v56
  %1404 = vmatpush1.msra.mxu0 %v55
  %1405 = vmatprep.subr.mxu0 %v64
  %1406 = vmatpush1.msra.mxu0 %v63
  %1407 = vmatprep.subr.mxu0 %v72
  %1408 = vmatpush1.msra.mxu0 %v71
  %1409 = vmatprep.subr.mxu0 %v80
  %1410 = vmatpush1.msra.mxu0 %v79
  %1411 = vmatprep.subr.mxu0 %v88
  %1412 = vmatpush1.msra.mxu0 %v87
  %1413 = vmatprep.subr.mxu0 %v96
  %1414 = vmatpush1.msra.mxu0 %v95
  %1415 = vmatprep.subr.mxu0 %v104
  %1416 = vmatpush1.msra.mxu0 %v103
  %1417 = vmatprep.subr.mxu0 %v112
  %1418 = vmatpush1.msra.mxu0 %v111
  %1419 = vmatprep.subr.mxu0 %v120
  %1420 = vmatpush1.msra.mxu0 %v119
  %1421 = vmatprep.subr.mxu0 %v128
  %1422 = vmatpush1.msra.mxu0 %v127
  %1423 = vmatprep.subr.mxu0 %v136
  %1424 = vmatpush1.msra.mxu0 %v135
  %1425 = vmatprep.subr.mxu0 %v144
  %1426 = vmatpush1.msra.mxu0 %v143
  %1427 = vmatprep.subr.mxu0 %v152
  %1428 = vmatpush1.msra.mxu0 %v151
  %1429 = vmatprep.subr.mxu0 %v160
  %1430 = vmatpush1.msra.mxu0 %v159
  %1431 = vmatprep.subr.mxu0 %v168
  %1432 = vmatpush1.msra.mxu0 %v167
  %1433 = vmatprep.subr.mxu0 %v176
  %1434 = vmatpush1.msra.mxu0 %v175
  %1435 = vmatprep.subr.mxu0 %v184
  %1436 = vmatpush1.msra.mxu0 %v183
  %1437 = vmatprep.subr.mxu0 %v192
  %1438 = vmatpush1.msra.mxu0 %v191
  %1439 = vmatprep.subr.mxu0 %v200
  %1440 = vmatpush1.msra.mxu0 %v199
  %1441 = vmatprep.subr.mxu0 %v208
  %1442 = vmatpush1.msra.mxu0 %v207
  %1443 = vmatprep.subr.mxu0 %v216
  %1444 = vmatpush1.msra.mxu0 %v215
  %1445 = vmatprep.subr.mxu0 %v224
  %1446 = vmatpush1.msra.mxu0 %v223
  %1447 = vmatprep.subr.mxu0 %v232
  %1448 = vmatpush1.msra.mxu0 %v231
  %1449 = vmatprep.subr.mxu0 %v240
  %1450 = vmatpush1.msra.mxu0 %v239
  %1451 = vmatprep.subr.mxu0 %v248
  %1452 = vmatpush1.msra.mxu0 %v247
  %1453 = vmatprep.subr.mxu0 %v256
  %1454 = vmatpush1.msra.mxu0 %v255
  %1455 = vmatprep.subr.mxu0 %v264
  %1456 = vmatpush1.msra.mxu0 %v263
  %1457 = vmatprep.mubr.f32.mxu0 %v1375
  %1458 = vmatmul.mubr.f32.gmra.mrb[0].mxu0 %v1368
  %v1459 = vpop.f32.mrb[0].mxu0
  %v1460 = vadd.f32 0.0, %v1459
  %v1461 = vpop.f32.mrb[0].mxu0
  %v1462 = vadd.f32 0.0, %v1461
  %1463 = vdwg.mxu0
  %1464 = vmatprep.subr.mxu0 %v18
  %1465 = vmatpush1.msra.mxu0 %v17
  %1466 = vmatprep.subr.mxu0 %v26
  %1467 = vmatpush1.msra.mxu0 %v25
  %1468 = vmatprep.subr.mxu0 %v34
  %1469 = vmatpush1.msra.mxu0 %v33
  %1470 = vmatprep.subr.mxu0 %v42
  %1471 = vmatpush1.msra.mxu0 %v41
  %1472 = vmatprep.subr.mxu0 %v50
  %1473 = vmatpush1.msra.mxu0 %v49
  %1474 = vmatprep.subr.mxu0 %v58
  %1475 = vmatpush1.msra.mxu0 %v57
  %1476 = vmatprep.subr.mxu0 %v66
  %1477 = vmatpush1.msra.mxu0 %v65
  %1478 = vmatprep.subr.mxu0 %v74
  %1479 = vmatpush1.msra.mxu0 %v73
  %1480 = vmatprep.subr.mxu0 %v82
  %1481 = vmatpush1.msra.mxu0 %v81
  %1482 = vmatprep.subr.mxu0 %v90
  %1483 = vmatpush1.msra.mxu0 %v89
  %1484 = vmatprep.subr.mxu0 %v98
  %1485 = vmatpush1.msra.mxu0 %v97
  %1486 = vmatprep.subr.mxu0 %v106
  %1487 = vmatpush1.msra.mxu0 %v105
  %1488 = vmatprep.subr.mxu0 %v114
  %1489 = vmatpush1.msra.mxu0 %v113
  %1490 = vmatprep.subr.mxu0 %v122
  %1491 = vmatpush1.msra.mxu0 %v121
  %1492 = vmatprep.subr.mxu0 %v130
  %1493 = vmatpush1.msra.mxu0 %v129
  %1494 = vmatprep.subr.mxu0 %v138
  %1495 = vmatpush1.msra.mxu0 %v137
  %1496 = vmatprep.subr.mxu0 %v146
  %1497 = vmatpush1.msra.mxu0 %v145
  %1498 = vmatprep.subr.mxu0 %v154
  %1499 = vmatpush1.msra.mxu0 %v153
  %1500 = vmatprep.subr.mxu0 %v162
  %1501 = vmatpush1.msra.mxu0 %v161
  %1502 = vmatprep.subr.mxu0 %v170
  %1503 = vmatpush1.msra.mxu0 %v169
  %1504 = vmatprep.subr.mxu0 %v178
  %1505 = vmatpush1.msra.mxu0 %v177
  %1506 = vmatprep.subr.mxu0 %v186
  %1507 = vmatpush1.msra.mxu0 %v185
  %1508 = vmatprep.subr.mxu0 %v194
  %1509 = vmatpush1.msra.mxu0 %v193
  %1510 = vmatprep.subr.mxu0 %v202
  %1511 = vmatpush1.msra.mxu0 %v201
  %1512 = vmatprep.subr.mxu0 %v210
  %1513 = vmatpush1.msra.mxu0 %v209
  %1514 = vmatprep.subr.mxu0 %v218
  %1515 = vmatpush1.msra.mxu0 %v217
  %1516 = vmatprep.subr.mxu0 %v226
  %1517 = vmatpush1.msra.mxu0 %v225
  %1518 = vmatprep.subr.mxu0 %v234
  %1519 = vmatpush1.msra.mxu0 %v233
  %1520 = vmatprep.subr.mxu0 %v242
  %1521 = vmatpush1.msra.mxu0 %v241
  %1522 = vmatprep.subr.mxu0 %v250
  %1523 = vmatpush1.msra.mxu0 %v249
  %1524 = vmatprep.subr.mxu0 %v258
  %1525 = vmatpush1.msra.mxu0 %v257
  %1526 = vmatprep.subr.mxu0 %v266
  %1527 = vmatpush1.msra.mxu0 %v265
  %1528 = vmatprep.mubr.f32.mxu0 %v1375
  %1529 = vmatmul.mubr.f32.gmra.mrb[0].mxu0 %v1368
  %v1530 = vpop.f32.mrb[0].mxu0
  %v1531 = vadd.f32 0.0, %v1530
  %v1532 = vpop.f32.mrb[0].mxu0
  %v1533 = vadd.f32 0.0, %v1532
  %1534 = vdwg.mxu0
  %1535 = vmatprep.subr.mxu0 %v20
  %1536 = vmatpush1.msra.mxu0 %v19
  %1537 = vmatprep.subr.mxu0 %v28
  %1538 = vmatpush1.msra.mxu0 %v27
  %1539 = vmatprep.subr.mxu0 %v36
  %1540 = vmatpush1.msra.mxu0 %v35
  %1541 = vmatprep.subr.mxu0 %v44
  %1542 = vmatpush1.msra.mxu0 %v43
  %1543 = vmatprep.subr.mxu0 %v52
  %1544 = vmatpush1.msra.mxu0 %v51
  %1545 = vmatprep.subr.mxu0 %v60
  %1546 = vmatpush1.msra.mxu0 %v59
  %1547 = vmatprep.subr.mxu0 %v68
  %1548 = vmatpush1.msra.mxu0 %v67
  %1549 = vmatprep.subr.mxu0 %v76
  %1550 = vmatpush1.msra.mxu0 %v75
  %1551 = vmatprep.subr.mxu0 %v84
  %1552 = vmatpush1.msra.mxu0 %v83
  %1553 = vmatprep.subr.mxu0 %v92
  %1554 = vmatpush1.msra.mxu0 %v91
  %1555 = vmatprep.subr.mxu0 %v100
  %1556 = vmatpush1.msra.mxu0 %v99
  %1557 = vmatprep.subr.mxu0 %v108
  %1558 = vmatpush1.msra.mxu0 %v107
  %1559 = vmatprep.subr.mxu0 %v116
  %1560 = vmatpush1.msra.mxu0 %v115
  %1561 = vmatprep.subr.mxu0 %v124
  %1562 = vmatpush1.msra.mxu0 %v123
  %1563 = vmatprep.subr.mxu0 %v132
  %1564 = vmatpush1.msra.mxu0 %v131
  %1565 = vmatprep.subr.mxu0 %v140
  %1566 = vmatpush1.msra.mxu0 %v139
  %1567 = vmatprep.subr.mxu0 %v148
  %1568 = vmatpush1.msra.mxu0 %v147
  %1569 = vmatprep.subr.mxu0 %v156
  %1570 = vmatpush1.msra.mxu0 %v155
  %1571 = vmatprep.subr.mxu0 %v164
  %1572 = vmatpush1.msra.mxu0 %v163
  %1573 = vmatprep.subr.mxu0 %v172
  %1574 = vmatpush1.msra.mxu0 %v171
  %1575 = vmatprep.subr.mxu0 %v180
  %1576 = vmatpush1.msra.mxu0 %v179
  %1577 = vmatprep.subr.mxu0 %v188
  %1578 = vmatpush1.msra.mxu0 %v187
  %1579 = vmatprep.subr.mxu0 %v196
  %1580 = vmatpush1.msra.mxu0 %v195
  %1581 = vmatprep.subr.mxu0 %v204
  %1582 = vmatpush1.msra.mxu0 %v203
  %1583 = vmatprep.subr.mxu0 %v212
  %1584 = vmatpush1.msra.mxu0 %v211
  %1585 = vmatprep.subr.mxu0 %v220
  %1586 = vmatpush1.msra.mxu0 %v219
  %1587 = vmatprep.subr.mxu0 %v228
  %1588 = vmatpush1.msra.mxu0 %v227
  %1589 = vmatprep.subr.mxu0 %v236
  %1590 = vmatpush1.msra.mxu0 %v235
  %1591 = vmatprep.subr.mxu0 %v244
  %1592 = vmatpush1.msra.mxu0 %v243
  %1593 = vmatprep.subr.mxu0 %v252
  %1594 = vmatpush1.msra.mxu0 %v251
  %1595 = vmatprep.subr.mxu0 %v260
  %1596 = vmatpush1.msra.mxu0 %v259
  %1597 = vmatprep.subr.mxu0 %v268
  %1598 = vmatpush1.msra.mxu0 %v267
  %1599 = vmatprep.mubr.f32.mxu0 %v1375
  %1600 = vmatmul.mubr.f32.gmra.mrb[0].mxu0 %v1368
  %v1601 = vpop.f32.mrb[0].mxu0
  %v1602 = vadd.f32 0.0, %v1601
  %v1603 = vpop.f32.mrb[0].mxu0
  %v1604 = vadd.f32 0.0, %v1603
  %1605 = vdwg.mxu0
  %1606 = vmatprep.subr.mxu0 %v22
  %1607 = vmatpush1.msra.mxu0 %v21
  %1608 = vmatprep.subr.mxu0 %v30
  %1609 = vmatpush1.msra.mxu0 %v29
  %1610 = vmatprep.subr.mxu0 %v38
  %1611 = vmatpush1.msra.mxu0 %v37
  %1612 = vmatprep.subr.mxu0 %v46
  %1613 = vmatpush1.msra.mxu0 %v45
  %1614 = vmatprep.subr.mxu0 %v54
  %1615 = vmatpush1.msra.mxu0 %v53
  %1616 = vmatprep.subr.mxu0 %v62
  %1617 = vmatpush1.msra.mxu0 %v61
  %1618 = vmatprep.subr.mxu0 %v70
  %1619 = vmatpush1.msra.mxu0 %v69
  %1620 = vmatprep.subr.mxu0 %v78
  %1621 = vmatpush1.msra.mxu0 %v77
  %1622 = vmatprep.subr.mxu0 %v86
  %1623 = vmatpush1.msra.mxu0 %v85
  %1624 = vmatprep.subr.mxu0 %v94
  %1625 = vmatpush1.msra.mxu0 %v93
  %1626 = vmatprep.subr.mxu0 %v102
  %1627 = vmatpush1.msra.mxu0 %v101
  %1628 = vmatprep.subr.mxu0 %v110
  %1629 = vmatpush1.msra.mxu0 %v109
  %1630 = vmatprep.subr.mxu0 %v118
  %1631 = vmatpush1.msra.mxu0 %v117
  %1632 = vmatprep.subr.mxu0 %v126
  %1633 = vmatpush1.msra.mxu0 %v125
  %1634 = vmatprep.subr.mxu0 %v134
  %1635 = vmatpush1.msra.mxu0 %v133
  %1636 = vmatprep.subr.mxu0 %v142
  %1637 = vmatpush1.msra.mxu0 %v141
  %1638 = vmatprep.subr.mxu0 %v150
  %1639 = vmatpush1.msra.mxu0 %v149
  %1640 = vmatprep.subr.mxu0 %v158
  %1641 = vmatpush1.msra.mxu0 %v157
  %1642 = vmatprep.subr.mxu0 %v166
  %1643 = vmatpush1.msra.mxu0 %v165
  %1644 = vmatprep.subr.mxu0 %v174
  %1645 = vmatpush1.msra.mxu0 %v173
  %1646 = vmatprep.subr.mxu0 %v182
  %1647 = vmatpush1.msra.mxu0 %v181
  %1648 = vmatprep.subr.mxu0 %v190
  %1649 = vmatpush1.msra.mxu0 %v189
  %1650 = vmatprep.subr.mxu0 %v198
  %1651 = vmatpush1.msra.mxu0 %v197
  %1652 = vmatprep.subr.mxu0 %v206
  %1653 = vmatpush1.msra.mxu0 %v205
  %1654 = vmatprep.subr.mxu0 %v214
  %1655 = vmatpush1.msra.mxu0 %v213
  %1656 = vmatprep.subr.mxu0 %v222
  %1657 = vmatpush1.msra.mxu0 %v221
  %1658 = vmatprep.subr.mxu0 %v230
  %1659 = vmatpush1.msra.mxu0 %v229
  %1660 = vmatprep.subr.mxu0 %v238
  %1661 = vmatpush1.msra.mxu0 %v237
  %1662 = vmatprep.subr.mxu0 %v246
  %1663 = vmatpush1.msra.mxu0 %v245
  %1664 = vmatprep.subr.mxu0 %v254
  %1665 = vmatpush1.msra.mxu0 %v253
  %1666 = vmatprep.subr.mxu0 %v262
  %1667 = vmatpush1.msra.mxu0 %v261
  %1668 = vmatprep.subr.mxu0 %v270
  %1669 = vmatpush1.msra.mxu0 %v269
  %1670 = vmatprep.mubr.f32.mxu0 %v1375
  %1671 = vmatmul.mubr.f32.gmra.mrb[0].mxu0 %v1368
  %v1672 = vpop.f32.mrb[0].mxu0
  %v1673 = vadd.f32 0.0, %v1672
  %v1674 = vpop.f32.mrb[0].mxu0
  %v1675 = vadd.f32 0.0, %v1674
  %1676 = vdwg.mxu0
  %v1677 = vadd.f32 %v1384, %v1460
  %v1678 = vadd.f32 %v1385, %v1462
  %v1679 = vadd.f32 %v1386, %v1531
  %v1680 = vadd.f32 %v1387, %v1533
  %v1681 = vxor.u32 %v1677, 2147483648
  %v1682 = vmul.f32 %v1681, 1.442695
  %v1683 = vpow.pop %v1682
  %v1684 = vadd.f32 %v1683, 1.0
  %v1685 = vrcp.pop %v1684
  %v1686 = vmul.f32 1.0, %v1685
  %v1687 = vxor.u32 %v1678, 2147483648
  %v1688 = vmul.f32 %v1687, 1.442695
  %v1689 = vpow.pop %v1688
  %v1690 = vadd.f32 %v1689, 1.0
  %v1691 = vrcp.pop %v1690
  %v1692 = vmul.f32 1.0, %v1691
  %v1693 = vtanh.pop %v1679
  %v1694 = vxor.u32 %v1680, 2147483648
  %v1695 = vmul.f32 %v1694, 1.442695
  %v1696 = vpow.pop %v1695
  %v1697 = vadd.f32 %v1696, 1.0
  %v1698 = vrcp.pop %v1697
  %v1699 = vmul.f32 1.0, %v1698
  %v1700 = vmul.f32 %v1692, %v1369
  %v1701 = vmul.f32 %v1686, %v1693
  %v1702 = vadd.f32 %v1700, %v1701
  %v1703 = vtanh.pop %v1702
  %v1704 = vmul.f32 %v1699, %v1703
  %v1705 = vadd.f32 %v1389, %v1602
  %v1706 = vadd.f32 %v1390, %v1604
  %v1707 = vadd.f32 %v1391, %v1673
  %v1708 = vadd.f32 %v1392, %v1675
  %v1709 = vxor.u32 %v1705, 2147483648
  %v1710 = vmul.f32 %v1709, 1.442695
  %v1711 = vpow.pop %v1710
  %v1712 = vadd.f32 %v1711, 1.0
  %v1713 = vrcp.pop %v1712
  %v1714 = vmul.f32 1.0, %v1713
  %v1715 = vxor.u32 %v1706, 2147483648
  %v1716 = vmul.f32 %v1715, 1.442695
  %v1717 = vpow.pop %v1716
  %v1718 = vadd.f32 %v1717, 1.0
  %v1719 = vrcp.pop %v1718
  %v1720 = vmul.f32 1.0, %v1719
  %v1721 = vtanh.pop %v1707
  %v1722 = vxor.u32 %v1708, 2147483648
  %v1723 = vmul.f32 %v1722, 1.442695
  %v1724 = vpow.pop %v1723
  %v1725 = vadd.f32 %v1724, 1.0
  %v1726 = vrcp.pop %v1725
  %v1727 = vmul.f32 1.0, %v1726
  %v1728 = vmul.f32 %v1720, %v1376
  %v1729 = vmul.f32 %v1714, %v1721
  %v1730 = vadd.f32 %v1728, %v1729
  %v1731 = vtanh.pop %v1730
  %v1732 = vmul.f32 %v1727, %v1731
  %vm1733 = vcmp.gt.s32.totalorder %v14, 3
  %vm1734 = vcmp.gt.s32.totalorder %v14, 4
  %v1735 = vsel %vm1733, 1, 0
  %1736 = vset.pattern.permute.xlu0 0
  %1737 = vperm.xlu0 %1736, %v1735
  %v1738 = vpop.permute.xlu0 %1737
  %vm1739 = vcmp.eq.s32.totalorder %v1738, 1
  %v1740 = vsel %vm1739, %v1704, %v1368
  %v1741 = vsel %vm1739, %v1702, %v1369
  %v1742 = vsel %vm1734, 1, 0
  %1743 = vset.pattern.permute.xlu0 0
  %1744 = vperm.xlu0 %1743, %v1742
  %v1745 = vpop.permute.xlu0 %1744
  %vm1746 = vcmp.eq.s32.totalorder %v1745, 1
  %v1747 = vsel %vm1746, %v1732, %v1375
  %v1748 = vsel %vm1746, %v1730, %v1376
  %v1749 = vsel %vm1739, %v1704, 0.0
  %s1750 = scalar_lea.vmem %s3, 48
  %1751 = vst [vmem:[%s1750] sm:$0xff] %v1749
  %v1752 = vsel %vm1746, %v1732, 0.0
  %s1753 = scalar_lea.vmem %s3, 64
  %1754 = vst [vmem:[%s1753 + $0x8] sm:$0xff] %v1752
  %v1755 = vld [vmem:[%s1388] sm:$0xff]
  %v1756 = vld [vmem:[%s1388 + $0x8] sm:$0xff]
  %v1757 = vld [vmem:[%s1388 + $0x10] sm:$0xff]
  %v1758 = vld [vmem:[%s1388 + $0x18] sm:$0xff]
  %v1759 = vld [vmem:[%s1383 + $0x20] sm:$0xff]
  %v1760 = vld [vmem:[%s1383 + $0x28] sm:$0xff]
  %v1761 = vld [vmem:[%s1383 + $0x30] sm:$0xff]
  %v1762 = vld [vmem:[%s1383 + $0x38] sm:$0xff]
  %1763 = vmatprep.subr.mxu0 %v16
  %1764 = vmatpush1.msra.mxu0 %v15
  %1765 = vmatprep.subr.mxu0 %v24
  %1766 = vmatpush1.msra.mxu0 %v23
  %1767 = vmatprep.subr.mxu0 %v32
  %1768 = vmatpush1.msra.mxu0 %v31
  %1769 = vmatprep.subr.mxu0 %v40
  %1770 = vmatpush1.msra.mxu0 %v39
  %1771 = vmatprep.subr.mxu0 %v48
  %1772 = vmatpush1.msra.mxu0 %v47
  %1773 = vmatprep.subr.mxu0 %v56
  %1774 = vmatpush1.msra.mxu0 %v55
  %1775 = vmatprep.subr.mxu0 %v64
  %1776 = vmatpush1.msra.mxu0 %v63
  %1777 = vmatprep.subr.mxu0 %v72
  %1778 = vmatpush1.msra.mxu0 %v71
  %1779 = vmatprep.subr.mxu0 %v80
  %1780 = vmatpush1.msra.mxu0 %v79
  %1781 = vmatprep.subr.mxu0 %v88
  %1782 = vmatpush1.msra.mxu0 %v87
  %1783 = vmatprep.subr.mxu0 %v96
  %1784 = vmatpush1.msra.mxu0 %v95
  %1785 = vmatprep.subr.mxu0 %v104
  %1786 = vmatpush1.msra.mxu0 %v103
  %1787 = vmatprep.subr.mxu0 %v112
  %1788 = vmatpush1.msra.mxu0 %v111
  %1789 = vmatprep.subr.mxu0 %v120
  %1790 = vmatpush1.msra.mxu0 %v119
  %1791 = vmatprep.subr.mxu0 %v128
  %1792 = vmatpush1.msra.mxu0 %v127
  %1793 = vmatprep.subr.mxu0 %v136
  %1794 = vmatpush1.msra.mxu0 %v135
  %1795 = vmatprep.subr.mxu0 %v144
  %1796 = vmatpush1.msra.mxu0 %v143
  %1797 = vmatprep.subr.mxu0 %v152
  %1798 = vmatpush1.msra.mxu0 %v151
  %1799 = vmatprep.subr.mxu0 %v160
  %1800 = vmatpush1.msra.mxu0 %v159
  %1801 = vmatprep.subr.mxu0 %v168
  %1802 = vmatpush1.msra.mxu0 %v167
  %1803 = vmatprep.subr.mxu0 %v176
  %1804 = vmatpush1.msra.mxu0 %v175
  %1805 = vmatprep.subr.mxu0 %v184
  %1806 = vmatpush1.msra.mxu0 %v183
  %1807 = vmatprep.subr.mxu0 %v192
  %1808 = vmatpush1.msra.mxu0 %v191
  %1809 = vmatprep.subr.mxu0 %v200
  %1810 = vmatpush1.msra.mxu0 %v199
  %1811 = vmatprep.subr.mxu0 %v208
  %1812 = vmatpush1.msra.mxu0 %v207
  %1813 = vmatprep.subr.mxu0 %v216
  %1814 = vmatpush1.msra.mxu0 %v215
  %1815 = vmatprep.subr.mxu0 %v224
  %1816 = vmatpush1.msra.mxu0 %v223
  %1817 = vmatprep.subr.mxu0 %v232
  %1818 = vmatpush1.msra.mxu0 %v231
  %1819 = vmatprep.subr.mxu0 %v240
  %1820 = vmatpush1.msra.mxu0 %v239
  %1821 = vmatprep.subr.mxu0 %v248
  %1822 = vmatpush1.msra.mxu0 %v247
  %1823 = vmatprep.subr.mxu0 %v256
  %1824 = vmatpush1.msra.mxu0 %v255
  %1825 = vmatprep.subr.mxu0 %v264
  %1826 = vmatpush1.msra.mxu0 %v263
  %1827 = vmatprep.mubr.f32.mxu0 %v1747
  %1828 = vmatmul.mubr.f32.gmra.mrb[0].mxu0 %v1740
  %v1829 = vpop.f32.mrb[0].mxu0
  %v1830 = vadd.f32 0.0, %v1829
  %v1831 = vpop.f32.mrb[0].mxu0
  %v1832 = vadd.f32 0.0, %v1831
  %1833 = vdwg.mxu0
  %1834 = vmatprep.subr.mxu0 %v18
  %1835 = vmatpush1.msra.mxu0 %v17
  %1836 = vmatprep.subr.mxu0 %v26
  %1837 = vmatpush1.msra.mxu0 %v25
  %1838 = vmatprep.subr.mxu0 %v34
  %1839 = vmatpush1.msra.mxu0 %v33
  %1840 = vmatprep.subr.mxu0 %v42
  %1841 = vmatpush1.msra.mxu0 %v41
  %1842 = vmatprep.subr.mxu0 %v50
  %1843 = vmatpush1.msra.mxu0 %v49
  %1844 = vmatprep.subr.mxu0 %v58
  %1845 = vmatpush1.msra.mxu0 %v57
  %1846 = vmatprep.subr.mxu0 %v66
  %1847 = vmatpush1.msra.mxu0 %v65
  %1848 = vmatprep.subr.mxu0 %v74
  %1849 = vmatpush1.msra.mxu0 %v73
  %1850 = vmatprep.subr.mxu0 %v82
  %1851 = vmatpush1.msra.mxu0 %v81
  %1852 = vmatprep.subr.mxu0 %v90
  %1853 = vmatpush1.msra.mxu0 %v89
  %1854 = vmatprep.subr.mxu0 %v98
  %1855 = vmatpush1.msra.mxu0 %v97
  %1856 = vmatprep.subr.mxu0 %v106
  %1857 = vmatpush1.msra.mxu0 %v105
  %1858 = vmatprep.subr.mxu0 %v114
  %1859 = vmatpush1.msra.mxu0 %v113
  %1860 = vmatprep.subr.mxu0 %v122
  %1861 = vmatpush1.msra.mxu0 %v121
  %1862 = vmatprep.subr.mxu0 %v130
  %1863 = vmatpush1.msra.mxu0 %v129
  %1864 = vmatprep.subr.mxu0 %v138
  %1865 = vmatpush1.msra.mxu0 %v137
  %1866 = vmatprep.subr.mxu0 %v146
  %1867 = vmatpush1.msra.mxu0 %v145
  %1868 = vmatprep.subr.mxu0 %v154
  %1869 = vmatpush1.msra.mxu0 %v153
  %1870 = vmatprep.subr.mxu0 %v162
  %1871 = vmatpush1.msra.mxu0 %v161
  %1872 = vmatprep.subr.mxu0 %v170
  %1873 = vmatpush1.msra.mxu0 %v169
  %1874 = vmatprep.subr.mxu0 %v178
  %1875 = vmatpush1.msra.mxu0 %v177
  %1876 = vmatprep.subr.mxu0 %v186
  %1877 = vmatpush1.msra.mxu0 %v185
  %1878 = vmatprep.subr.mxu0 %v194
  %1879 = vmatpush1.msra.mxu0 %v193
  %1880 = vmatprep.subr.mxu0 %v202
  %1881 = vmatpush1.msra.mxu0 %v201
  %1882 = vmatprep.subr.mxu0 %v210
  %1883 = vmatpush1.msra.mxu0 %v209
  %1884 = vmatprep.subr.mxu0 %v218
  %1885 = vmatpush1.msra.mxu0 %v217
  %1886 = vmatprep.subr.mxu0 %v226
  %1887 = vmatpush1.msra.mxu0 %v225
  %1888 = vmatprep.subr.mxu0 %v234
  %1889 = vmatpush1.msra.mxu0 %v233
  %1890 = vmatprep.subr.mxu0 %v242
  %1891 = vmatpush1.msra.mxu0 %v241
  %1892 = vmatprep.subr.mxu0 %v250
  %1893 = vmatpush1.msra.mxu0 %v249
  %1894 = vmatprep.subr.mxu0 %v258
  %1895 = vmatpush1.msra.mxu0 %v257
  %1896 = vmatprep.subr.mxu0 %v266
  %1897 = vmatpush1.msra.mxu0 %v265
  %1898 = vmatprep.mubr.f32.mxu0 %v1747
  %1899 = vmatmul.mubr.f32.gmra.mrb[0].mxu0 %v1740
  %v1900 = vpop.f32.mrb[0].mxu0
  %v1901 = vadd.f32 0.0, %v1900
  %v1902 = vpop.f32.mrb[0].mxu0
  %v1903 = vadd.f32 0.0, %v1902
  %1904 = vdwg.mxu0
  %1905 = vmatprep.subr.mxu0 %v20
  %1906 = vmatpush1.msra.mxu0 %v19
  %1907 = vmatprep.subr.mxu0 %v28
  %1908 = vmatpush1.msra.mxu0 %v27
  %1909 = vmatprep.subr.mxu0 %v36
  %1910 = vmatpush1.msra.mxu0 %v35
  %1911 = vmatprep.subr.mxu0 %v44
  %1912 = vmatpush1.msra.mxu0 %v43
  %1913 = vmatprep.subr.mxu0 %v52
  %1914 = vmatpush1.msra.mxu0 %v51
  %1915 = vmatprep.subr.mxu0 %v60
  %1916 = vmatpush1.msra.mxu0 %v59
  %1917 = vmatprep.subr.mxu0 %v68
  %1918 = vmatpush1.msra.mxu0 %v67
  %1919 = vmatprep.subr.mxu0 %v76
  %1920 = vmatpush1.msra.mxu0 %v75
  %1921 = vmatprep.subr.mxu0 %v84
  %1922 = vmatpush1.msra.mxu0 %v83
  %1923 = vmatprep.subr.mxu0 %v92
  %1924 = vmatpush1.msra.mxu0 %v91
  %1925 = vmatprep.subr.mxu0 %v100
  %1926 = vmatpush1.msra.mxu0 %v99
  %1927 = vmatprep.subr.mxu0 %v108
  %1928 = vmatpush1.msra.mxu0 %v107
  %1929 = vmatprep.subr.mxu0 %v116
  %1930 = vmatpush1.msra.mxu0 %v115
  %1931 = vmatprep.subr.mxu0 %v124
  %1932 = vmatpush1.msra.mxu0 %v123
  %1933 = vmatprep.subr.mxu0 %v132
  %1934 = vmatpush1.msra.mxu0 %v131
  %1935 = vmatprep.subr.mxu0 %v140
  %1936 = vmatpush1.msra.mxu0 %v139
  %1937 = vmatprep.subr.mxu0 %v148
  %1938 = vmatpush1.msra.mxu0 %v147
  %1939 = vmatprep.subr.mxu0 %v156
  %1940 = vmatpush1.msra.mxu0 %v155
  %1941 = vmatprep.subr.mxu0 %v164
  %1942 = vmatpush1.msra.mxu0 %v163
  %1943 = vmatprep.subr.mxu0 %v172
  %1944 = vmatpush1.msra.mxu0 %v171
  %1945 = vmatprep.subr.mxu0 %v180
  %1946 = vmatpush1.msra.mxu0 %v179
  %1947 = vmatprep.subr.mxu0 %v188
  %1948 = vmatpush1.msra.mxu0 %v187
  %1949 = vmatprep.subr.mxu0 %v196
  %1950 = vmatpush1.msra.mxu0 %v195
  %1951 = vmatprep.subr.mxu0 %v204
  %1952 = vmatpush1.msra.mxu0 %v203
  %1953 = vmatprep.subr.mxu0 %v212
  %1954 = vmatpush1.msra.mxu0 %v211
  %1955 = vmatprep.subr.mxu0 %v220
  %1956 = vmatpush1.msra.mxu0 %v219
  %1957 = vmatprep.subr.mxu0 %v228
  %1958 = vmatpush1.msra.mxu0 %v227
  %1959 = vmatprep.subr.mxu0 %v236
  %1960 = vmatpush1.msra.mxu0 %v235
  %1961 = vmatprep.subr.mxu0 %v244
  %1962 = vmatpush1.msra.mxu0 %v243
  %1963 = vmatprep.subr.mxu0 %v252
  %1964 = vmatpush1.msra.mxu0 %v251
  %1965 = vmatprep.subr.mxu0 %v260
  %1966 = vmatpush1.msra.mxu0 %v259
  %1967 = vmatprep.subr.mxu0 %v268
  %1968 = vmatpush1.msra.mxu0 %v267
  %1969 = vmatprep.mubr.f32.mxu0 %v1747
  %1970 = vmatmul.mubr.f32.gmra.mrb[0].mxu0 %v1740
  %v1971 = vpop.f32.mrb[0].mxu0
  %v1972 = vadd.f32 0.0, %v1971
  %v1973 = vpop.f32.mrb[0].mxu0
  %v1974 = vadd.f32 0.0, %v1973
  %1975 = vdwg.mxu0
  %1976 = vmatprep.subr.mxu0 %v22
  %1977 = vmatpush1.msra.mxu0 %v21
  %1978 = vmatprep.subr.mxu0 %v30
  %1979 = vmatpush1.msra.mxu0 %v29
  %1980 = vmatprep.subr.mxu0 %v38
  %1981 = vmatpush1.msra.mxu0 %v37
  %1982 = vmatprep.subr.mxu0 %v46
  %1983 = vmatpush1.msra.mxu0 %v45
  %1984 = vmatprep.subr.mxu0 %v54
  %1985 = vmatpush1.msra.mxu0 %v53
  %1986 = vmatprep.subr.mxu0 %v62
  %1987 = vmatpush1.msra.mxu0 %v61
  %1988 = vmatprep.subr.mxu0 %v70
  %1989 = vmatpush1.msra.mxu0 %v69
  %1990 = vmatprep.subr.mxu0 %v78
  %1991 = vmatpush1.msra.mxu0 %v77
  %1992 = vmatprep.subr.mxu0 %v86
  %1993 = vmatpush1.msra.mxu0 %v85
  %1994 = vmatprep.subr.mxu0 %v94
  %1995 = vmatpush1.msra.mxu0 %v93
  %1996 = vmatprep.subr.mxu0 %v102
  %1997 = vmatpush1.msra.mxu0 %v101
  %1998 = vmatprep.subr.mxu0 %v110
  %1999 = vmatpush1.msra.mxu0 %v109
  %2000 = vmatprep.subr.mxu0 %v118
  %2001 = vmatpush1.msra.mxu0 %v117
  %2002 = vmatprep.subr.mxu0 %v126
  %2003 = vmatpush1.msra.mxu0 %v125
  %2004 = vmatprep.subr.mxu0 %v134
  %2005 = vmatpush1.msra.mxu0 %v133
  %2006 = vmatprep.subr.mxu0 %v142
  %2007 = vmatpush1.msra.mxu0 %v141
  %2008 = vmatprep.subr.mxu0 %v150
  %2009 = vmatpush1.msra.mxu0 %v149
  %2010 = vmatprep.subr.mxu0 %v158
  %2011 = vmatpush1.msra.mxu0 %v157
  %2012 = vmatprep.subr.mxu0 %v166
  %2013 = vmatpush1.msra.mxu0 %v165
  %2014 = vmatprep.subr.mxu0 %v174
  %2015 = vmatpush1.msra.mxu0 %v173
  %2016 = vmatprep.subr.mxu0 %v182
  %2017 = vmatpush1.msra.mxu0 %v181
  %2018 = vmatprep.subr.mxu0 %v190
  %2019 = vmatpush1.msra.mxu0 %v189
  %2020 = vmatprep.subr.mxu0 %v198
  %2021 = vmatpush1.msra.mxu0 %v197
  %2022 = vmatprep.subr.mxu0 %v206
  %2023 = vmatpush1.msra.mxu0 %v205
  %2024 = vmatprep.subr.mxu0 %v214
  %2025 = vmatpush1.msra.mxu0 %v213
  %2026 = vmatprep.subr.mxu0 %v222
  %2027 = vmatpush1.msra.mxu0 %v221
  %2028 = vmatprep.subr.mxu0 %v230
  %2029 = vmatpush1.msra.mxu0 %v229
  %2030 = vmatprep.subr.mxu0 %v238
  %2031 = vmatpush1.msra.mxu0 %v237
  %2032 = vmatprep.subr.mxu0 %v246
  %2033 = vmatpush1.msra.mxu0 %v245
  %2034 = vmatprep.subr.mxu0 %v254
  %2035 = vmatpush1.msra.mxu0 %v253
  %2036 = vmatprep.subr.mxu0 %v262
  %2037 = vmatpush1.msra.mxu0 %v261
  %2038 = vmatprep.subr.mxu0 %v270
  %2039 = vmatpush1.msra.mxu0 %v269
  %2040 = vmatprep.mubr.f32.mxu0 %v1747
  %2041 = vmatmul.mubr.f32.gmra.mrb[0].mxu0 %v1740
  %v2042 = vpop.f32.mrb[0].mxu0
  %v2043 = vadd.f32 0.0, %v2042
  %v2044 = vpop.f32.mrb[0].mxu0
  %v2045 = vadd.f32 0.0, %v2044
  %2046 = vdwg.mxu0
  %v2047 = vadd.f32 %v1755, %v1830
  %v2048 = vadd.f32 %v1756, %v1832
  %v2049 = vadd.f32 %v1757, %v1901
  %v2050 = vadd.f32 %v1758, %v1903
  %v2051 = vxor.u32 %v2047, 2147483648
  %v2052 = vmul.f32 %v2051, 1.442695
  %v2053 = vpow.pop %v2052
  %v2054 = vadd.f32 %v2053, 1.0
  %v2055 = vrcp.pop %v2054
  %v2056 = vmul.f32 1.0, %v2055
  %v2057 = vxor.u32 %v2048, 2147483648
  %v2058 = vmul.f32 %v2057, 1.442695
  %v2059 = vpow.pop %v2058
  %v2060 = vadd.f32 %v2059, 1.0
  %v2061 = vrcp.pop %v2060
  %v2062 = vmul.f32 1.0, %v2061
  %v2063 = vtanh.pop %v2049
  %v2064 = vxor.u32 %v2050, 2147483648
  %v2065 = vmul.f32 %v2064, 1.442695
  %v2066 = vpow.pop %v2065
  %v2067 = vadd.f32 %v2066, 1.0
  %v2068 = vrcp.pop %v2067
  %v2069 = vmul.f32 1.0, %v2068
  %v2070 = vmul.f32 %v2062, %v1741
  %v2071 = vmul.f32 %v2056, %v2063
  %v2072 = vadd.f32 %v2070, %v2071
  %v2073 = vtanh.pop %v2072
  %v2074 = vmul.f32 %v2069, %v2073
  %v2075 = vadd.f32 %v1759, %v1972
  %v2076 = vadd.f32 %v1760, %v1974
  %v2077 = vadd.f32 %v1761, %v2043
  %v2078 = vadd.f32 %v1762, %v2045
  %v2079 = vxor.u32 %v2075, 2147483648
  %v2080 = vmul.f32 %v2079, 1.442695
  %v2081 = vpow.pop %v2080
  %v2082 = vadd.f32 %v2081, 1.0
  %v2083 = vrcp.pop %v2082
  %v2084 = vmul.f32 1.0, %v2083
  %v2085 = vxor.u32 %v2076, 2147483648
  %v2086 = vmul.f32 %v2085, 1.442695
  %v2087 = vpow.pop %v2086
  %v2088 = vadd.f32 %v2087, 1.0
  %v2089 = vrcp.pop %v2088
  %v2090 = vmul.f32 1.0, %v2089
  %v2091 = vtanh.pop %v2077
  %v2092 = vxor.u32 %v2078, 2147483648
  %v2093 = vmul.f32 %v2092, 1.442695
  %v2094 = vpow.pop %v2093
  %v2095 = vadd.f32 %v2094, 1.0
  %v2096 = vrcp.pop %v2095
  %v2097 = vmul.f32 1.0, %v2096
  %v2098 = vmul.f32 %v2090, %v1748
  %v2099 = vmul.f32 %v2084, %v2091
  %v2100 = vadd.f32 %v2098, %v2099
  %v2101 = vtanh.pop %v2100
  %v2102 = vmul.f32 %v2097, %v2101
  %v2103 = vsel %vm1746, %v2074, %v1740
  %v2104 = vsel %vm1746, %v2072, %v1741
  %v2105 = vsel %vm1739, %v2102, %v1747
  %v2106 = vsel %vm1739, %v2100, %v1748
  %v2107 = vsel %vm1746, %v2074, 0.0
  %2108 = vst [vmem:[%s1753] sm:$0xff] %v2107
  %v2109 = vsel %vm1739, %v2102, 0.0
  %2110 = vst [vmem:[%s1750 + $0x8] sm:$0xff] %v2109
  %v2111 = vld [vmem:[%s1016] sm:$0xff]
  %v2112 = vld [vmem:[%s1016 + $0x8] sm:$0xff]
  %v2113 = vld [vmem:[%s1016 + $0x10] sm:$0xff]
  %v2114 = vld [vmem:[%s1016 + $0x18] sm:$0xff]
  %v2115 = vld [vmem:[%s1011 + $0x20] sm:$0xff]
  %v2116 = vld [vmem:[%s1011 + $0x28] sm:$0xff]
  %v2117 = vld [vmem:[%s1011 + $0x30] sm:$0xff]
  %v2118 = vld [vmem:[%s1011 + $0x38] sm:$0xff]
  %2119 = vmatprep.subr.mxu0 %v16
  %2120 = vmatpush1.msra.mxu0 %v15
  %2121 = vmatprep.subr.mxu0 %v24
  %2122 = vmatpush1.msra.mxu0 %v23
  %2123 = vmatprep.subr.mxu0 %v32
  %2124 = vmatpush1.msra.mxu0 %v31
  %2125 = vmatprep.subr.mxu0 %v40
  %2126 = vmatpush1.msra.mxu0 %v39
  %2127 = vmatprep.subr.mxu0 %v48
  %2128 = vmatpush1.msra.mxu0 %v47
  %2129 = vmatprep.subr.mxu0 %v56
  %2130 = vmatpush1.msra.mxu0 %v55
  %2131 = vmatprep.subr.mxu0 %v64
  %2132 = vmatpush1.msra.mxu0 %v63
  %2133 = vmatprep.subr.mxu0 %v72
  %2134 = vmatpush1.msra.mxu0 %v71
  %2135 = vmatprep.subr.mxu0 %v80
  %2136 = vmatpush1.msra.mxu0 %v79
  %2137 = vmatprep.subr.mxu0 %v88
  %2138 = vmatpush1.msra.mxu0 %v87
  %2139 = vmatprep.subr.mxu0 %v96
  %2140 = vmatpush1.msra.mxu0 %v95
  %2141 = vmatprep.subr.mxu0 %v104
  %2142 = vmatpush1.msra.mxu0 %v103
  %2143 = vmatprep.subr.mxu0 %v112
  %2144 = vmatpush1.msra.mxu0 %v111
  %2145 = vmatprep.subr.mxu0 %v120
  %2146 = vmatpush1.msra.mxu0 %v119
  %2147 = vmatprep.subr.mxu0 %v128
  %2148 = vmatpush1.msra.mxu0 %v127
  %2149 = vmatprep.subr.mxu0 %v136
  %2150 = vmatpush1.msra.mxu0 %v135
  %2151 = vmatprep.subr.mxu0 %v144
  %2152 = vmatpush1.msra.mxu0 %v143
  %2153 = vmatprep.subr.mxu0 %v152
  %2154 = vmatpush1.msra.mxu0 %v151
  %2155 = vmatprep.subr.mxu0 %v160
  %2156 = vmatpush1.msra.mxu0 %v159
  %2157 = vmatprep.subr.mxu0 %v168
  %2158 = vmatpush1.msra.mxu0 %v167
  %2159 = vmatprep.subr.mxu0 %v176
  %2160 = vmatpush1.msra.mxu0 %v175
  %2161 = vmatprep.subr.mxu0 %v184
  %2162 = vmatpush1.msra.mxu0 %v183
  %2163 = vmatprep.subr.mxu0 %v192
  %2164 = vmatpush1.msra.mxu0 %v191
  %2165 = vmatprep.subr.mxu0 %v200
  %2166 = vmatpush1.msra.mxu0 %v199
  %2167 = vmatprep.subr.mxu0 %v208
  %2168 = vmatpush1.msra.mxu0 %v207
  %2169 = vmatprep.subr.mxu0 %v216
  %2170 = vmatpush1.msra.mxu0 %v215
  %2171 = vmatprep.subr.mxu0 %v224
  %2172 = vmatpush1.msra.mxu0 %v223
  %2173 = vmatprep.subr.mxu0 %v232
  %2174 = vmatpush1.msra.mxu0 %v231
  %2175 = vmatprep.subr.mxu0 %v240
  %2176 = vmatpush1.msra.mxu0 %v239
  %2177 = vmatprep.subr.mxu0 %v248
  %2178 = vmatpush1.msra.mxu0 %v247
  %2179 = vmatprep.subr.mxu0 %v256
  %2180 = vmatpush1.msra.mxu0 %v255
  %2181 = vmatprep.subr.mxu0 %v264
  %2182 = vmatpush1.msra.mxu0 %v263
  %2183 = vmatprep.mubr.f32.mxu0 %v2105
  %2184 = vmatmul.mubr.f32.gmra.mrb[0].mxu0 %v2103
  %v2185 = vpop.f32.mrb[0].mxu0
  %v2186 = vadd.f32 0.0, %v2185
  %v2187 = vpop.f32.mrb[0].mxu0
  %v2188 = vadd.f32 0.0, %v2187
  %2189 = vdwg.mxu0
  %2190 = vmatprep.subr.mxu0 %v18
  %2191 = vmatpush1.msra.mxu0 %v17
  %2192 = vmatprep.subr.mxu0 %v26
  %2193 = vmatpush1.msra.mxu0 %v25
  %2194 = vmatprep.subr.mxu0 %v34
  %2195 = vmatpush1.msra.mxu0 %v33
  %2196 = vmatprep.subr.mxu0 %v42
  %2197 = vmatpush1.msra.mxu0 %v41
  %2198 = vmatprep.subr.mxu0 %v50
  %2199 = vmatpush1.msra.mxu0 %v49
  %2200 = vmatprep.subr.mxu0 %v58
  %2201 = vmatpush1.msra.mxu0 %v57
  %2202 = vmatprep.subr.mxu0 %v66
  %2203 = vmatpush1.msra.mxu0 %v65
  %2204 = vmatprep.subr.mxu0 %v74
  %2205 = vmatpush1.msra.mxu0 %v73
  %2206 = vmatprep.subr.mxu0 %v82
  %2207 = vmatpush1.msra.mxu0 %v81
  %2208 = vmatprep.subr.mxu0 %v90
  %2209 = vmatpush1.msra.mxu0 %v89
  %2210 = vmatprep.subr.mxu0 %v98
  %2211 = vmatpush1.msra.mxu0 %v97
  %2212 = vmatprep.subr.mxu0 %v106
  %2213 = vmatpush1.msra.mxu0 %v105
  %2214 = vmatprep.subr.mxu0 %v114
  %2215 = vmatpush1.msra.mxu0 %v113
  %2216 = vmatprep.subr.mxu0 %v122
  %2217 = vmatpush1.msra.mxu0 %v121
  %2218 = vmatprep.subr.mxu0 %v130
  %2219 = vmatpush1.msra.mxu0 %v129
  %2220 = vmatprep.subr.mxu0 %v138
  %2221 = vmatpush1.msra.mxu0 %v137
  %2222 = vmatprep.subr.mxu0 %v146
  %2223 = vmatpush1.msra.mxu0 %v145
  %2224 = vmatprep.subr.mxu0 %v154
  %2225 = vmatpush1.msra.mxu0 %v153
  %2226 = vmatprep.subr.mxu0 %v162
  %2227 = vmatpush1.msra.mxu0 %v161
  %2228 = vmatprep.subr.mxu0 %v170
  %2229 = vmatpush1.msra.mxu0 %v169
  %2230 = vmatprep.subr.mxu0 %v178
  %2231 = vmatpush1.msra.mxu0 %v177
  %2232 = vmatprep.subr.mxu0 %v186
  %2233 = vmatpush1.msra.mxu0 %v185
  %2234 = vmatprep.subr.mxu0 %v194
  %2235 = vmatpush1.msra.mxu0 %v193
  %2236 = vmatprep.subr.mxu0 %v202
  %2237 = vmatpush1.msra.mxu0 %v201
  %2238 = vmatprep.subr.mxu0 %v210
  %2239 = vmatpush1.msra.mxu0 %v209
  %2240 = vmatprep.subr.mxu0 %v218
  %2241 = vmatpush1.msra.mxu0 %v217
  %2242 = vmatprep.subr.mxu0 %v226
  %2243 = vmatpush1.msra.mxu0 %v225
  %2244 = vmatprep.subr.mxu0 %v234
  %2245 = vmatpush1.msra.mxu0 %v233
  %2246 = vmatprep.subr.mxu0 %v242
  %2247 = vmatpush1.msra.mxu0 %v241
  %2248 = vmatprep.subr.mxu0 %v250
  %2249 = vmatpush1.msra.mxu0 %v249
  %2250 = vmatprep.subr.mxu0 %v258
  %2251 = vmatpush1.msra.mxu0 %v257
  %2252 = vmatprep.subr.mxu0 %v266
  %2253 = vmatpush1.msra.mxu0 %v265
  %2254 = vmatprep.mubr.f32.mxu0 %v2105
  %2255 = vmatmul.mubr.f32.gmra.mrb[0].mxu0 %v2103
  %v2256 = vpop.f32.mrb[0].mxu0
  %v2257 = vadd.f32 0.0, %v2256
  %v2258 = vpop.f32.mrb[0].mxu0
  %v2259 = vadd.f32 0.0, %v2258
  %2260 = vdwg.mxu0
  %2261 = vmatprep.subr.mxu0 %v20
  %2262 = vmatpush1.msra.mxu0 %v19
  %2263 = vmatprep.subr.mxu0 %v28
  %2264 = vmatpush1.msra.mxu0 %v27
  %2265 = vmatprep.subr.mxu0 %v36
  %2266 = vmatpush1.msra.mxu0 %v35
  %2267 = vmatprep.subr.mxu0 %v44
  %2268 = vmatpush1.msra.mxu0 %v43
  %2269 = vmatprep.subr.mxu0 %v52
  %2270 = vmatpush1.msra.mxu0 %v51
  %2271 = vmatprep.subr.mxu0 %v60
  %2272 = vmatpush1.msra.mxu0 %v59
  %2273 = vmatprep.subr.mxu0 %v68
  %2274 = vmatpush1.msra.mxu0 %v67
  %2275 = vmatprep.subr.mxu0 %v76
  %2276 = vmatpush1.msra.mxu0 %v75
  %2277 = vmatprep.subr.mxu0 %v84
  %2278 = vmatpush1.msra.mxu0 %v83
  %2279 = vmatprep.subr.mxu0 %v92
  %2280 = vmatpush1.msra.mxu0 %v91
  %2281 = vmatprep.subr.mxu0 %v100
  %2282 = vmatpush1.msra.mxu0 %v99
  %2283 = vmatprep.subr.mxu0 %v108
  %2284 = vmatpush1.msra.mxu0 %v107
  %2285 = vmatprep.subr.mxu0 %v116
  %2286 = vmatpush1.msra.mxu0 %v115
  %2287 = vmatprep.subr.mxu0 %v124
  %2288 = vmatpush1.msra.mxu0 %v123
  %2289 = vmatprep.subr.mxu0 %v132
  %2290 = vmatpush1.msra.mxu0 %v131
  %2291 = vmatprep.subr.mxu0 %v140
  %2292 = vmatpush1.msra.mxu0 %v139
  %2293 = vmatprep.subr.mxu0 %v148
  %2294 = vmatpush1.msra.mxu0 %v147
  %2295 = vmatprep.subr.mxu0 %v156
  %2296 = vmatpush1.msra.mxu0 %v155
  %2297 = vmatprep.subr.mxu0 %v164
  %2298 = vmatpush1.msra.mxu0 %v163
  %2299 = vmatprep.subr.mxu0 %v172
  %2300 = vmatpush1.msra.mxu0 %v171
  %2301 = vmatprep.subr.mxu0 %v180
  %2302 = vmatpush1.msra.mxu0 %v179
  %2303 = vmatprep.subr.mxu0 %v188
  %2304 = vmatpush1.msra.mxu0 %v187
  %2305 = vmatprep.subr.mxu0 %v196
  %2306 = vmatpush1.msra.mxu0 %v195
  %2307 = vmatprep.subr.mxu0 %v204
  %2308 = vmatpush1.msra.mxu0 %v203
  %2309 = vmatprep.subr.mxu0 %v212
  %2310 = vmatpush1.msra.mxu0 %v211
  %2311 = vmatprep.subr.mxu0 %v220
  %2312 = vmatpush1.msra.mxu0 %v219
  %2313 = vmatprep.subr.mxu0 %v228
  %2314 = vmatpush1.msra.mxu0 %v227
  %2315 = vmatprep.subr.mxu0 %v236
  %2316 = vmatpush1.msra.mxu0 %v235
  %2317 = vmatprep.subr.mxu0 %v244
  %2318 = vmatpush1.msra.mxu0 %v243
  %2319 = vmatprep.subr.mxu0 %v252
  %2320 = vmatpush1.msra.mxu0 %v251
  %2321 = vmatprep.subr.mxu0 %v260
  %2322 = vmatpush1.msra.mxu0 %v259
  %2323 = vmatprep.subr.mxu0 %v268
  %2324 = vmatpush1.msra.mxu0 %v267
  %2325 = vmatprep.mubr.f32.mxu0 %v2105
  %2326 = vmatmul.mubr.f32.gmra.mrb[0].mxu0 %v2103
  %v2327 = vpop.f32.mrb[0].mxu0
  %v2328 = vadd.f32 0.0, %v2327
  %v2329 = vpop.f32.mrb[0].mxu0
  %v2330 = vadd.f32 0.0, %v2329
  %2331 = vdwg.mxu0
  %2332 = vmatprep.subr.mxu0 %v22
  %2333 = vmatpush1.msra.mxu0 %v21
  %2334 = vmatprep.subr.mxu0 %v30
  %2335 = vmatpush1.msra.mxu0 %v29
  %2336 = vmatprep.subr.mxu0 %v38
  %2337 = vmatpush1.msra.mxu0 %v37
  %2338 = vmatprep.subr.mxu0 %v46
  %2339 = vmatpush1.msra.mxu0 %v45
  %2340 = vmatprep.subr.mxu0 %v54
  %2341 = vmatpush1.msra.mxu0 %v53
  %2342 = vmatprep.subr.mxu0 %v62
  %2343 = vmatpush1.msra.mxu0 %v61
  %2344 = vmatprep.subr.mxu0 %v70
  %2345 = vmatpush1.msra.mxu0 %v69
  %2346 = vmatprep.subr.mxu0 %v78
  %2347 = vmatpush1.msra.mxu0 %v77
  %2348 = vmatprep.subr.mxu0 %v86
  %2349 = vmatpush1.msra.mxu0 %v85
  %2350 = vmatprep.subr.mxu0 %v94
  %2351 = vmatpush1.msra.mxu0 %v93
  %2352 = vmatprep.subr.mxu0 %v102
  %2353 = vmatpush1.msra.mxu0 %v101
  %2354 = vmatprep.subr.mxu0 %v110
  %2355 = vmatpush1.msra.mxu0 %v109
  %2356 = vmatprep.subr.mxu0 %v118
  %2357 = vmatpush1.msra.mxu0 %v117
  %2358 = vmatprep.subr.mxu0 %v126
  %2359 = vmatpush1.msra.mxu0 %v125
  %2360 = vmatprep.subr.mxu0 %v134
  %2361 = vmatpush1.msra.mxu0 %v133
  %2362 = vmatprep.subr.mxu0 %v142
  %2363 = vmatpush1.msra.mxu0 %v141
  %2364 = vmatprep.subr.mxu0 %v150
  %2365 = vmatpush1.msra.mxu0 %v149
  %2366 = vmatprep.subr.mxu0 %v158
  %2367 = vmatpush1.msra.mxu0 %v157
  %2368 = vmatprep.subr.mxu0 %v166
  %2369 = vmatpush1.msra.mxu0 %v165
  %2370 = vmatprep.subr.mxu0 %v174
  %2371 = vmatpush1.msra.mxu0 %v173
  %2372 = vmatprep.subr.mxu0 %v182
  %2373 = vmatpush1.msra.mxu0 %v181
  %2374 = vmatprep.subr.mxu0 %v190
  %2375 = vmatpush1.msra.mxu0 %v189
  %2376 = vmatprep.subr.mxu0 %v198
  %2377 = vmatpush1.msra.mxu0 %v197
  %2378 = vmatprep.subr.mxu0 %v206
  %2379 = vmatpush1.msra.mxu0 %v205
  %2380 = vmatprep.subr.mxu0 %v214
  %2381 = vmatpush1.msra.mxu0 %v213
  %2382 = vmatprep.subr.mxu0 %v222
  %2383 = vmatpush1.msra.mxu0 %v221
  %2384 = vmatprep.subr.mxu0 %v230
  %2385 = vmatpush1.msra.mxu0 %v229
  %2386 = vmatprep.subr.mxu0 %v238
  %2387 = vmatpush1.msra.mxu0 %v237
  %2388 = vmatprep.subr.mxu0 %v246
  %2389 = vmatpush1.msra.mxu0 %v245
  %2390 = vmatprep.subr.mxu0 %v254
  %2391 = vmatpush1.msra.mxu0 %v253
  %2392 = vmatprep.subr.mxu0 %v262
  %2393 = vmatpush1.msra.mxu0 %v261
  %2394 = vmatprep.subr.mxu0 %v270
  %2395 = vmatpush1.msra.mxu0 %v269
  %2396 = vmatprep.mubr.f32.mxu0 %v2105
  %2397 = vmatmul.mubr.f32.gmra.mrb[0].mxu0 %v2103
  %v2398 = vpop.f32.mrb[0].mxu0
  %v2399 = vadd.f32 0.0, %v2398
  %v2400 = vpop.f32.mrb[0].mxu0
  %v2401 = vadd.f32 0.0, %v2400
  %2402 = vdwg.mxu0
  %v2403 = vadd.f32 %v2111, %v2186
  %v2404 = vadd.f32 %v2112, %v2188
  %v2405 = vadd.f32 %v2113, %v2257
  %v2406 = vadd.f32 %v2114, %v2259
  %v2407 = vxor.u32 %v2403, 2147483648
  %v2408 = vmul.f32 %v2407, 1.442695
  %v2409 = vpow.pop %v2408
  %v2410 = vadd.f32 %v2409, 1.0
  %v2411 = vrcp.pop %v2410
  %v2412 = vmul.f32 1.0, %v2411
  %v2413 = vxor.u32 %v2404, 2147483648
  %v2414 = vmul.f32 %v2413, 1.442695
  %v2415 = vpow.pop %v2414
  %v2416 = vadd.f32 %v2415, 1.0
  %v2417 = vrcp.pop %v2416
  %v2418 = vmul.f32 1.0, %v2417
  %v2419 = vtanh.pop %v2405
  %v2420 = vxor.u32 %v2406, 2147483648
  %v2421 = vmul.f32 %v2420, 1.442695
  %v2422 = vpow.pop %v2421
  %v2423 = vadd.f32 %v2422, 1.0
  %v2424 = vrcp.pop %v2423
  %v2425 = vmul.f32 1.0, %v2424
  %v2426 = vmul.f32 %v2418, %v2104
  %v2427 = vmul.f32 %v2412, %v2419
  %v2428 = vadd.f32 %v2426, %v2427
  %v2429 = vtanh.pop %v2428
  %v2430 = vmul.f32 %v2425, %v2429
  %v2431 = vadd.f32 %v2115, %v2328
  %v2432 = vadd.f32 %v2116, %v2330
  %v2433 = vadd.f32 %v2117, %v2399
  %v2434 = vadd.f32 %v2118, %v2401
  %v2435 = vxor.u32 %v2431, 2147483648
  %v2436 = vmul.f32 %v2435, 1.442695
  %v2437 = vpow.pop %v2436
  %v2438 = vadd.f32 %v2437, 1.0
  %v2439 = vrcp.pop %v2438
  %v2440 = vmul.f32 1.0, %v2439
  %v2441 = vxor.u32 %v2432, 2147483648
  %v2442 = vmul.f32 %v2441, 1.442695
  %v2443 = vpow.pop %v2442
  %v2444 = vadd.f32 %v2443, 1.0
  %v2445 = vrcp.pop %v2444
  %v2446 = vmul.f32 1.0, %v2445
  %v2447 = vtanh.pop %v2433
  %v2448 = vxor.u32 %v2434, 2147483648
  %v2449 = vmul.f32 %v2448, 1.442695
  %v2450 = vpow.pop %v2449
  %v2451 = vadd.f32 %v2450, 1.0
  %v2452 = vrcp.pop %v2451
  %v2453 = vmul.f32 1.0, %v2452
  %v2454 = vmul.f32 %v2446, %v2106
  %v2455 = vmul.f32 %v2440, %v2447
  %v2456 = vadd.f32 %v2454, %v2455
  %v2457 = vtanh.pop %v2456
  %v2458 = vmul.f32 %v2453, %v2457
  %v2459 = vsel %vm1374, %v2430, %v2103
  %v2460 = vsel %vm1374, %v2428, %v2104
  %v2461 = vsel %vm1367, %v2458, %v2105
  %v2462 = vsel %vm1367, %v2456, %v2106
  %v2463 = vsel %vm1374, %v2430, 0.0
  %2464 = vst [vmem:[%s1381] sm:$0xff] %v2463
  %v2465 = vsel %vm1367, %v2458, 0.0
  %2466 = vst [vmem:[%s1378 + $0x8] sm:$0xff] %v2465
  %v2467 = vld [vmem:[%s644] sm:$0xff]
  %v2468 = vld [vmem:[%s644 + $0x8] sm:$0xff]
  %v2469 = vld [vmem:[%s644 + $0x10] sm:$0xff]
  %v2470 = vld [vmem:[%s644 + $0x18] sm:$0xff]
  %v2471 = vld [vmem:[%s639 + $0x20] sm:$0xff]
  %v2472 = vld [vmem:[%s639 + $0x28] sm:$0xff]
  %v2473 = vld [vmem:[%s639 + $0x30] sm:$0xff]
  %v2474 = vld [vmem:[%s639 + $0x38] sm:$0xff]
  %2475 = vmatprep.subr.mxu0 %v16
  %2476 = vmatpush1.msra.mxu0 %v15
  %2477 = vmatprep.subr.mxu0 %v24
  %2478 = vmatpush1.msra.mxu0 %v23
  %2479 = vmatprep.subr.mxu0 %v32
  %2480 = vmatpush1.msra.mxu0 %v31
  %2481 = vmatprep.subr.mxu0 %v40
  %2482 = vmatpush1.msra.mxu0 %v39
  %2483 = vmatprep.subr.mxu0 %v48
  %2484 = vmatpush1.msra.mxu0 %v47
  %2485 = vmatprep.subr.mxu0 %v56
  %2486 = vmatpush1.msra.mxu0 %v55
  %2487 = vmatprep.subr.mxu0 %v64
  %2488 = vmatpush1.msra.mxu0 %v63
  %2489 = vmatprep.subr.mxu0 %v72
  %2490 = vmatpush1.msra.mxu0 %v71
  %2491 = vmatprep.subr.mxu0 %v80
  %2492 = vmatpush1.msra.mxu0 %v79
  %2493 = vmatprep.subr.mxu0 %v88
  %2494 = vmatpush1.msra.mxu0 %v87
  %2495 = vmatprep.subr.mxu0 %v96
  %2496 = vmatpush1.msra.mxu0 %v95
  %2497 = vmatprep.subr.mxu0 %v104
  %2498 = vmatpush1.msra.mxu0 %v103
  %2499 = vmatprep.subr.mxu0 %v112
  %2500 = vmatpush1.msra.mxu0 %v111
  %2501 = vmatprep.subr.mxu0 %v120
  %2502 = vmatpush1.msra.mxu0 %v119
  %2503 = vmatprep.subr.mxu0 %v128
  %2504 = vmatpush1.msra.mxu0 %v127
  %2505 = vmatprep.subr.mxu0 %v136
  %2506 = vmatpush1.msra.mxu0 %v135
  %2507 = vmatprep.subr.mxu0 %v144
  %2508 = vmatpush1.msra.mxu0 %v143
  %2509 = vmatprep.subr.mxu0 %v152
  %2510 = vmatpush1.msra.mxu0 %v151
  %2511 = vmatprep.subr.mxu0 %v160
  %2512 = vmatpush1.msra.mxu0 %v159
  %2513 = vmatprep.subr.mxu0 %v168
  %2514 = vmatpush1.msra.mxu0 %v167
  %2515 = vmatprep.subr.mxu0 %v176
  %2516 = vmatpush1.msra.mxu0 %v175
  %2517 = vmatprep.subr.mxu0 %v184
  %2518 = vmatpush1.msra.mxu0 %v183
  %2519 = vmatprep.subr.mxu0 %v192
  %2520 = vmatpush1.msra.mxu0 %v191
  %2521 = vmatprep.subr.mxu0 %v200
  %2522 = vmatpush1.msra.mxu0 %v199
  %2523 = vmatprep.subr.mxu0 %v208
  %2524 = vmatpush1.msra.mxu0 %v207
  %2525 = vmatprep.subr.mxu0 %v216
  %2526 = vmatpush1.msra.mxu0 %v215
  %2527 = vmatprep.subr.mxu0 %v224
  %2528 = vmatpush1.msra.mxu0 %v223
  %2529 = vmatprep.subr.mxu0 %v232
  %2530 = vmatpush1.msra.mxu0 %v231
  %2531 = vmatprep.subr.mxu0 %v240
  %2532 = vmatpush1.msra.mxu0 %v239
  %2533 = vmatprep.subr.mxu0 %v248
  %2534 = vmatpush1.msra.mxu0 %v247
  %2535 = vmatprep.subr.mxu0 %v256
  %2536 = vmatpush1.msra.mxu0 %v255
  %2537 = vmatprep.subr.mxu0 %v264
  %2538 = vmatpush1.msra.mxu0 %v263
  %2539 = vmatprep.mubr.f32.mxu0 %v2461
  %2540 = vmatmul.mubr.f32.gmra.mrb[0].mxu0 %v2459
  %v2541 = vpop.f32.mrb[0].mxu0
  %v2542 = vadd.f32 0.0, %v2541
  %v2543 = vpop.f32.mrb[0].mxu0
  %v2544 = vadd.f32 0.0, %v2543
  %2545 = vdwg.mxu0
  %2546 = vmatprep.subr.mxu0 %v18
  %2547 = vmatpush1.msra.mxu0 %v17
  %2548 = vmatprep.subr.mxu0 %v26
  %2549 = vmatpush1.msra.mxu0 %v25
  %2550 = vmatprep.subr.mxu0 %v34
  %2551 = vmatpush1.msra.mxu0 %v33
  %2552 = vmatprep.subr.mxu0 %v42
  %2553 = vmatpush1.msra.mxu0 %v41
  %2554 = vmatprep.subr.mxu0 %v50
  %2555 = vmatpush1.msra.mxu0 %v49
  %2556 = vmatprep.subr.mxu0 %v58
  %2557 = vmatpush1.msra.mxu0 %v57
  %2558 = vmatprep.subr.mxu0 %v66
  %2559 = vmatpush1.msra.mxu0 %v65
  %2560 = vmatprep.subr.mxu0 %v74
  %2561 = vmatpush1.msra.mxu0 %v73
  %2562 = vmatprep.subr.mxu0 %v82
  %2563 = vmatpush1.msra.mxu0 %v81
  %2564 = vmatprep.subr.mxu0 %v90
  %2565 = vmatpush1.msra.mxu0 %v89
  %2566 = vmatprep.subr.mxu0 %v98
  %2567 = vmatpush1.msra.mxu0 %v97
  %2568 = vmatprep.subr.mxu0 %v106
  %2569 = vmatpush1.msra.mxu0 %v105
  %2570 = vmatprep.subr.mxu0 %v114
  %2571 = vmatpush1.msra.mxu0 %v113
  %2572 = vmatprep.subr.mxu0 %v122
  %2573 = vmatpush1.msra.mxu0 %v121
  %2574 = vmatprep.subr.mxu0 %v130
  %2575 = vmatpush1.msra.mxu0 %v129
  %2576 = vmatprep.subr.mxu0 %v138
  %2577 = vmatpush1.msra.mxu0 %v137
  %2578 = vmatprep.subr.mxu0 %v146
  %2579 = vmatpush1.msra.mxu0 %v145
  %2580 = vmatprep.subr.mxu0 %v154
  %2581 = vmatpush1.msra.mxu0 %v153
  %2582 = vmatprep.subr.mxu0 %v162
  %2583 = vmatpush1.msra.mxu0 %v161
  %2584 = vmatprep.subr.mxu0 %v170
  %2585 = vmatpush1.msra.mxu0 %v169
  %2586 = vmatprep.subr.mxu0 %v178
  %2587 = vmatpush1.msra.mxu0 %v177
  %2588 = vmatprep.subr.mxu0 %v186
  %2589 = vmatpush1.msra.mxu0 %v185
  %2590 = vmatprep.subr.mxu0 %v194
  %2591 = vmatpush1.msra.mxu0 %v193
  %2592 = vmatprep.subr.mxu0 %v202
  %2593 = vmatpush1.msra.mxu0 %v201
  %2594 = vmatprep.subr.mxu0 %v210
  %2595 = vmatpush1.msra.mxu0 %v209
  %2596 = vmatprep.subr.mxu0 %v218
  %2597 = vmatpush1.msra.mxu0 %v217
  %2598 = vmatprep.subr.mxu0 %v226
  %2599 = vmatpush1.msra.mxu0 %v225
  %2600 = vmatprep.subr.mxu0 %v234
  %2601 = vmatpush1.msra.mxu0 %v233
  %2602 = vmatprep.subr.mxu0 %v242
  %2603 = vmatpush1.msra.mxu0 %v241
  %2604 = vmatprep.subr.mxu0 %v250
  %2605 = vmatpush1.msra.mxu0 %v249
  %2606 = vmatprep.subr.mxu0 %v258
  %2607 = vmatpush1.msra.mxu0 %v257
  %2608 = vmatprep.subr.mxu0 %v266
  %2609 = vmatpush1.msra.mxu0 %v265
  %2610 = vmatprep.mubr.f32.mxu0 %v2461
  %2611 = vmatmul.mubr.f32.gmra.mrb[0].mxu0 %v2459
  %v2612 = vpop.f32.mrb[0].mxu0
  %v2613 = vadd.f32 0.0, %v2612
  %v2614 = vpop.f32.mrb[0].mxu0
  %v2615 = vadd.f32 0.0, %v2614
  %2616 = vdwg.mxu0
  %2617 = vmatprep.subr.mxu0 %v20
  %2618 = vmatpush1.msra.mxu0 %v19
  %2619 = vmatprep.subr.mxu0 %v28
  %2620 = vmatpush1.msra.mxu0 %v27
  %2621 = vmatprep.subr.mxu0 %v36
  %2622 = vmatpush1.msra.mxu0 %v35
  %2623 = vmatprep.subr.mxu0 %v44
  %2624 = vmatpush1.msra.mxu0 %v43
  %2625 = vmatprep.subr.mxu0 %v52
  %2626 = vmatpush1.msra.mxu0 %v51
  %2627 = vmatprep.subr.mxu0 %v60
  %2628 = vmatpush1.msra.mxu0 %v59
  %2629 = vmatprep.subr.mxu0 %v68
  %2630 = vmatpush1.msra.mxu0 %v67
  %2631 = vmatprep.subr.mxu0 %v76
  %2632 = vmatpush1.msra.mxu0 %v75
  %2633 = vmatprep.subr.mxu0 %v84
  %2634 = vmatpush1.msra.mxu0 %v83
  %2635 = vmatprep.subr.mxu0 %v92
  %2636 = vmatpush1.msra.mxu0 %v91
  %2637 = vmatprep.subr.mxu0 %v100
  %2638 = vmatpush1.msra.mxu0 %v99
  %2639 = vmatprep.subr.mxu0 %v108
  %2640 = vmatpush1.msra.mxu0 %v107
  %2641 = vmatprep.subr.mxu0 %v116
  %2642 = vmatpush1.msra.mxu0 %v115
  %2643 = vmatprep.subr.mxu0 %v124
  %2644 = vmatpush1.msra.mxu0 %v123
  %2645 = vmatprep.subr.mxu0 %v132
  %2646 = vmatpush1.msra.mxu0 %v131
  %2647 = vmatprep.subr.mxu0 %v140
  %2648 = vmatpush1.msra.mxu0 %v139
  %2649 = vmatprep.subr.mxu0 %v148
  %2650 = vmatpush1.msra.mxu0 %v147
  %2651 = vmatprep.subr.mxu0 %v156
  %2652 = vmatpush1.msra.mxu0 %v155
  %2653 = vmatprep.subr.mxu0 %v164
  %2654 = vmatpush1.msra.mxu0 %v163
  %2655 = vmatprep.subr.mxu0 %v172
  %2656 = vmatpush1.msra.mxu0 %v171
  %2657 = vmatprep.subr.mxu0 %v180
  %2658 = vmatpush1.msra.mxu0 %v179
  %2659 = vmatprep.subr.mxu0 %v188
  %2660 = vmatpush1.msra.mxu0 %v187
  %2661 = vmatprep.subr.mxu0 %v196
  %2662 = vmatpush1.msra.mxu0 %v195
  %2663 = vmatprep.subr.mxu0 %v204
  %2664 = vmatpush1.msra.mxu0 %v203
  %2665 = vmatprep.subr.mxu0 %v212
  %2666 = vmatpush1.msra.mxu0 %v211
  %2667 = vmatprep.subr.mxu0 %v220
  %2668 = vmatpush1.msra.mxu0 %v219
  %2669 = vmatprep.subr.mxu0 %v228
  %2670 = vmatpush1.msra.mxu0 %v227
  %2671 = vmatprep.subr.mxu0 %v236
  %2672 = vmatpush1.msra.mxu0 %v235
  %2673 = vmatprep.subr.mxu0 %v244
  %2674 = vmatpush1.msra.mxu0 %v243
  %2675 = vmatprep.subr.mxu0 %v252
  %2676 = vmatpush1.msra.mxu0 %v251
  %2677 = vmatprep.subr.mxu0 %v260
  %2678 = vmatpush1.msra.mxu0 %v259
  %2679 = vmatprep.subr.mxu0 %v268
  %2680 = vmatpush1.msra.mxu0 %v267
  %2681 = vmatprep.mubr.f32.mxu0 %v2461
  %2682 = vmatmul.mubr.f32.gmra.mrb[0].mxu0 %v2459
  %v2683 = vpop.f32.mrb[0].mxu0
  %v2684 = vadd.f32 0.0, %v2683
  %v2685 = vpop.f32.mrb[0].mxu0
  %v2686 = vadd.f32 0.0, %v2685
  %2687 = vdwg.mxu0
  %2688 = vmatprep.subr.mxu0 %v22
  %2689 = vmatpush1.msra.mxu0 %v21
  %2690 = vmatprep.subr.mxu0 %v30
  %2691 = vmatpush1.msra.mxu0 %v29
  %2692 = vmatprep.subr.mxu0 %v38
  %2693 = vmatpush1.msra.mxu0 %v37
  %2694 = vmatprep.subr.mxu0 %v46
  %2695 = vmatpush1.msra.mxu0 %v45
  %2696 = vmatprep.subr.mxu0 %v54
  %2697 = vmatpush1.msra.mxu0 %v53
  %2698 = vmatprep.subr.mxu0 %v62
  %2699 = vmatpush1.msra.mxu0 %v61
  %2700 = vmatprep.subr.mxu0 %v70
  %2701 = vmatpush1.msra.mxu0 %v69
  %2702 = vmatprep.subr.mxu0 %v78
  %2703 = vmatpush1.msra.mxu0 %v77
  %2704 = vmatprep.subr.mxu0 %v86
  %2705 = vmatpush1.msra.mxu0 %v85
  %2706 = vmatprep.subr.mxu0 %v94
  %2707 = vmatpush1.msra.mxu0 %v93
  %2708 = vmatprep.subr.mxu0 %v102
  %2709 = vmatpush1.msra.mxu0 %v101
  %2710 = vmatprep.subr.mxu0 %v110
  %2711 = vmatpush1.msra.mxu0 %v109
  %2712 = vmatprep.subr.mxu0 %v118
  %2713 = vmatpush1.msra.mxu0 %v117
  %2714 = vmatprep.subr.mxu0 %v126
  %2715 = vmatpush1.msra.mxu0 %v125
  %2716 = vmatprep.subr.mxu0 %v134
  %2717 = vmatpush1.msra.mxu0 %v133
  %2718 = vmatprep.subr.mxu0 %v142
  %2719 = vmatpush1.msra.mxu0 %v141
  %2720 = vmatprep.subr.mxu0 %v150
  %2721 = vmatpush1.msra.mxu0 %v149
  %2722 = vmatprep.subr.mxu0 %v158
  %2723 = vmatpush1.msra.mxu0 %v157
  %2724 = vmatprep.subr.mxu0 %v166
  %2725 = vmatpush1.msra.mxu0 %v165
  %2726 = vmatprep.subr.mxu0 %v174
  %2727 = vmatpush1.msra.mxu0 %v173
  %2728 = vmatprep.subr.mxu0 %v182
  %2729 = vmatpush1.msra.mxu0 %v181
  %2730 = vmatprep.subr.mxu0 %v190
  %2731 = vmatpush1.msra.mxu0 %v189
  %2732 = vmatprep.subr.mxu0 %v198
  %2733 = vmatpush1.msra.mxu0 %v197
  %2734 = vmatprep.subr.mxu0 %v206
  %2735 = vmatpush1.msra.mxu0 %v205
  %2736 = vmatprep.subr.mxu0 %v214
  %2737 = vmatpush1.msra.mxu0 %v213
  %2738 = vmatprep.subr.mxu0 %v222
  %2739 = vmatpush1.msra.mxu0 %v221
  %2740 = vmatprep.subr.mxu0 %v230
  %2741 = vmatpush1.msra.mxu0 %v229
  %2742 = vmatprep.subr.mxu0 %v238
  %2743 = vmatpush1.msra.mxu0 %v237
  %2744 = vmatprep.subr.mxu0 %v246
  %2745 = vmatpush1.msra.mxu0 %v245
  %2746 = vmatprep.subr.mxu0 %v254
  %2747 = vmatpush1.msra.mxu0 %v253
  %2748 = vmatprep.subr.mxu0 %v262
  %2749 = vmatpush1.msra.mxu0 %v261
  %2750 = vmatprep.subr.mxu0 %v270
  %2751 = vmatpush1.msra.mxu0 %v269
  %2752 = vmatprep.mubr.f32.mxu0 %v2461
  %2753 = vmatmul.mubr.f32.gmra.mrb[0].mxu0 %v2459
  %v2754 = vpop.f32.mrb[0].mxu0
  %v2755 = vadd.f32 0.0, %v2754
  %v2756 = vpop.f32.mrb[0].mxu0
  %v2757 = vadd.f32 0.0, %v2756
  %2758 = vdwg.mxu0
  %v2759 = vadd.f32 %v2467, %v2542
  %v2760 = vadd.f32 %v2468, %v2544
  %v2761 = vadd.f32 %v2469, %v2613
  %v2762 = vadd.f32 %v2470, %v2615
  %v2763 = vxor.u32 %v2759, 2147483648
  %v2764 = vmul.f32 %v2763, 1.442695
  %v2765 = vpow.pop %v2764
  %v2766 = vadd.f32 %v2765, 1.0
  %v2767 = vrcp.pop %v2766
  %v2768 = vmul.f32 1.0, %v2767
  %v2769 = vxor.u32 %v2760, 2147483648
  %v2770 = vmul.f32 %v2769, 1.442695
  %v2771 = vpow.pop %v2770
  %v2772 = vadd.f32 %v2771, 1.0
  %v2773 = vrcp.pop %v2772
  %v2774 = vmul.f32 1.0, %v2773
  %v2775 = vtanh.pop %v2761
  %v2776 = vxor.u32 %v2762, 2147483648
  %v2777 = vmul.f32 %v2776, 1.442695
  %v2778 = vpow.pop %v2777
  %v2779 = vadd.f32 %v2778, 1.0
  %v2780 = vrcp.pop %v2779
  %v2781 = vmul.f32 1.0, %v2780
  %v2782 = vmul.f32 %v2774, %v2460
  %v2783 = vmul.f32 %v2768, %v2775
  %v2784 = vadd.f32 %v2782, %v2783
  %v2785 = vtanh.pop %v2784
  %v2786 = vmul.f32 %v2781, %v2785
  %v2787 = vadd.f32 %v2471, %v2684
  %v2788 = vadd.f32 %v2472, %v2686
  %v2789 = vadd.f32 %v2473, %v2755
  %v2790 = vadd.f32 %v2474, %v2757
  %v2791 = vxor.u32 %v2787, 2147483648
  %v2792 = vmul.f32 %v2791, 1.442695
  %v2793 = vpow.pop %v2792
  %v2794 = vadd.f32 %v2793, 1.0
  %v2795 = vrcp.pop %v2794
  %v2796 = vmul.f32 1.0, %v2795
  %v2797 = vxor.u32 %v2788, 2147483648
  %v2798 = vmul.f32 %v2797, 1.442695
  %v2799 = vpow.pop %v2798
  %v2800 = vadd.f32 %v2799, 1.0
  %v2801 = vrcp.pop %v2800
  %v2802 = vmul.f32 1.0, %v2801
  %v2803 = vtanh.pop %v2789
  %v2804 = vxor.u32 %v2790, 2147483648
  %v2805 = vmul.f32 %v2804, 1.442695
  %v2806 = vpow.pop %v2805
  %v2807 = vadd.f32 %v2806, 1.0
  %v2808 = vrcp.pop %v2807
  %v2809 = vmul.f32 1.0, %v2808
  %v2810 = vmul.f32 %v2802, %v2462
  %v2811 = vmul.f32 %v2796, %v2803
  %v2812 = vadd.f32 %v2810, %v2811
  %v2813 = vtanh.pop %v2812
  %v2814 = vmul.f32 %v2809, %v2813
  %v2815 = vsel %vm1002, %v2786, %v2459
  %v2816 = vsel %vm1002, %v2784, %v2460
  %v2817 = vsel %vm995, %v2814, %v2461
  %v2818 = vsel %vm995, %v2812, %v2462
  %v2819 = vsel %vm1002, %v2786, 0.0
  %2820 = vst [vmem:[%s1009] sm:$0xff] %v2819
  %v2821 = vsel %vm995, %v2814, 0.0
  %2822 = vst [vmem:[%s1006 + $0x8] sm:$0xff] %v2821
  %v2823 = vld [vmem:[%s275] sm:$0xff]
  %v2824 = vld [vmem:[%s275 + $0x8] sm:$0xff]
  %v2825 = vld [vmem:[%s275 + $0x10] sm:$0xff]
  %v2826 = vld [vmem:[%s275 + $0x18] sm:$0xff]
  %v2827 = vld [vmem:[%s0 + $0x20] sm:$0xff]
  %v2828 = vld [vmem:[%s0 + $0x28] sm:$0xff]
  %v2829 = vld [vmem:[%s0 + $0x30] sm:$0xff]
  %v2830 = vld [vmem:[%s0 + $0x38] sm:$0xff]
  %2831 = vmatprep.subr.mxu0 %v16
  %2832 = vmatpush1.msra.mxu0 %v15
  %2833 = vmatprep.subr.mxu0 %v24
  %2834 = vmatpush1.msra.mxu0 %v23
  %2835 = vmatprep.subr.mxu0 %v32
  %2836 = vmatpush1.msra.mxu0 %v31
  %2837 = vmatprep.subr.mxu0 %v40
  %2838 = vmatpush1.msra.mxu0 %v39
  %2839 = vmatprep.subr.mxu0 %v48
  %2840 = vmatpush1.msra.mxu0 %v47
  %2841 = vmatprep.subr.mxu0 %v56
  %2842 = vmatpush1.msra.mxu0 %v55
  %2843 = vmatprep.subr.mxu0 %v64
  %2844 = vmatpush1.msra.mxu0 %v63
  %2845 = vmatprep.subr.mxu0 %v72
  %2846 = vmatpush1.msra.mxu0 %v71
  %2847 = vmatprep.subr.mxu0 %v80
  %2848 = vmatpush1.msra.mxu0 %v79
  %2849 = vmatprep.subr.mxu0 %v88
  %2850 = vmatpush1.msra.mxu0 %v87
  %2851 = vmatprep.subr.mxu0 %v96
  %2852 = vmatpush1.msra.mxu0 %v95
  %2853 = vmatprep.subr.mxu0 %v104
  %2854 = vmatpush1.msra.mxu0 %v103
  %2855 = vmatprep.subr.mxu0 %v112
  %2856 = vmatpush1.msra.mxu0 %v111
  %2857 = vmatprep.subr.mxu0 %v120
  %2858 = vmatpush1.msra.mxu0 %v119
  %2859 = vmatprep.subr.mxu0 %v128
  %2860 = vmatpush1.msra.mxu0 %v127
  %2861 = vmatprep.subr.mxu0 %v136
  %2862 = vmatpush1.msra.mxu0 %v135
  %2863 = vmatprep.subr.mxu0 %v144
  %2864 = vmatpush1.msra.mxu0 %v143
  %2865 = vmatprep.subr.mxu0 %v152
  %2866 = vmatpush1.msra.mxu0 %v151
  %2867 = vmatprep.subr.mxu0 %v160
  %2868 = vmatpush1.msra.mxu0 %v159
  %2869 = vmatprep.subr.mxu0 %v168
  %2870 = vmatpush1.msra.mxu0 %v167
  %2871 = vmatprep.subr.mxu0 %v176
  %2872 = vmatpush1.msra.mxu0 %v175
  %2873 = vmatprep.subr.mxu0 %v184
  %2874 = vmatpush1.msra.mxu0 %v183
  %2875 = vmatprep.subr.mxu0 %v192
  %2876 = vmatpush1.msra.mxu0 %v191
  %2877 = vmatprep.subr.mxu0 %v200
  %2878 = vmatpush1.msra.mxu0 %v199
  %2879 = vmatprep.subr.mxu0 %v208
  %2880 = vmatpush1.msra.mxu0 %v207
  %2881 = vmatprep.subr.mxu0 %v216
  %2882 = vmatpush1.msra.mxu0 %v215
  %2883 = vmatprep.subr.mxu0 %v224
  %2884 = vmatpush1.msra.mxu0 %v223
  %2885 = vmatprep.subr.mxu0 %v232
  %2886 = vmatpush1.msra.mxu0 %v231
  %2887 = vmatprep.subr.mxu0 %v240
  %2888 = vmatpush1.msra.mxu0 %v239
  %2889 = vmatprep.subr.mxu0 %v248
  %2890 = vmatpush1.msra.mxu0 %v247
  %2891 = vmatprep.subr.mxu0 %v256
  %2892 = vmatpush1.msra.mxu0 %v255
  %2893 = vmatprep.subr.mxu0 %v264
  %2894 = vmatpush1.msra.mxu0 %v263
  %2895 = vmatprep.mubr.f32.mxu0 %v2817
  %2896 = vmatmul.mubr.f32.gmra.mrb[0].mxu0 %v2815
  %v2897 = vpop.f32.mrb[0].mxu0
  %v2898 = vadd.f32 0.0, %v2897
  %v2899 = vpop.f32.mrb[0].mxu0
  %v2900 = vadd.f32 0.0, %v2899
  %2901 = vdwg.mxu0
  %2902 = vmatprep.subr.mxu0 %v18
  %2903 = vmatpush1.msra.mxu0 %v17
  %2904 = vmatprep.subr.mxu0 %v26
  %2905 = vmatpush1.msra.mxu0 %v25
  %2906 = vmatprep.subr.mxu0 %v34
  %2907 = vmatpush1.msra.mxu0 %v33
  %2908 = vmatprep.subr.mxu0 %v42
  %2909 = vmatpush1.msra.mxu0 %v41
  %2910 = vmatprep.subr.mxu0 %v50
  %2911 = vmatpush1.msra.mxu0 %v49
  %2912 = vmatprep.subr.mxu0 %v58
  %2913 = vmatpush1.msra.mxu0 %v57
  %2914 = vmatprep.subr.mxu0 %v66
  %2915 = vmatpush1.msra.mxu0 %v65
  %2916 = vmatprep.subr.mxu0 %v74
  %2917 = vmatpush1.msra.mxu0 %v73
  %2918 = vmatprep.subr.mxu0 %v82
  %2919 = vmatpush1.msra.mxu0 %v81
  %2920 = vmatprep.subr.mxu0 %v90
  %2921 = vmatpush1.msra.mxu0 %v89
  %2922 = vmatprep.subr.mxu0 %v98
  %2923 = vmatpush1.msra.mxu0 %v97
  %2924 = vmatprep.subr.mxu0 %v106
  %2925 = vmatpush1.msra.mxu0 %v105
  %2926 = vmatprep.subr.mxu0 %v114
  %2927 = vmatpush1.msra.mxu0 %v113
  %2928 = vmatprep.subr.mxu0 %v122
  %2929 = vmatpush1.msra.mxu0 %v121
  %2930 = vmatprep.subr.mxu0 %v130
  %2931 = vmatpush1.msra.mxu0 %v129
  %2932 = vmatprep.subr.mxu0 %v138
  %2933 = vmatpush1.msra.mxu0 %v137
  %2934 = vmatprep.subr.mxu0 %v146
  %2935 = vmatpush1.msra.mxu0 %v145
  %2936 = vmatprep.subr.mxu0 %v154
  %2937 = vmatpush1.msra.mxu0 %v153
  %2938 = vmatprep.subr.mxu0 %v162
  %2939 = vmatpush1.msra.mxu0 %v161
  %2940 = vmatprep.subr.mxu0 %v170
  %2941 = vmatpush1.msra.mxu0 %v169
  %2942 = vmatprep.subr.mxu0 %v178
  %2943 = vmatpush1.msra.mxu0 %v177
  %2944 = vmatprep.subr.mxu0 %v186
  %2945 = vmatpush1.msra.mxu0 %v185
  %2946 = vmatprep.subr.mxu0 %v194
  %2947 = vmatpush1.msra.mxu0 %v193
  %2948 = vmatprep.subr.mxu0 %v202
  %2949 = vmatpush1.msra.mxu0 %v201
  %2950 = vmatprep.subr.mxu0 %v210
  %2951 = vmatpush1.msra.mxu0 %v209
  %2952 = vmatprep.subr.mxu0 %v218
  %2953 = vmatpush1.msra.mxu0 %v217
  %2954 = vmatprep.subr.mxu0 %v226
  %2955 = vmatpush1.msra.mxu0 %v225
  %2956 = vmatprep.subr.mxu0 %v234
  %2957 = vmatpush1.msra.mxu0 %v233
  %2958 = vmatprep.subr.mxu0 %v242
  %2959 = vmatpush1.msra.mxu0 %v241
  %2960 = vmatprep.subr.mxu0 %v250
  %2961 = vmatpush1.msra.mxu0 %v249
  %2962 = vmatprep.subr.mxu0 %v258
  %2963 = vmatpush1.msra.mxu0 %v257
  %2964 = vmatprep.subr.mxu0 %v266
  %2965 = vmatpush1.msra.mxu0 %v265
  %2966 = vmatprep.mubr.f32.mxu0 %v2817
  %2967 = vmatmul.mubr.f32.gmra.mrb[0].mxu0 %v2815
  %v2968 = vpop.f32.mrb[0].mxu0
  %v2969 = vadd.f32 0.0, %v2968
  %v2970 = vpop.f32.mrb[0].mxu0
  %v2971 = vadd.f32 0.0, %v2970
  %2972 = vdwg.mxu0
  %2973 = vmatprep.subr.mxu0 %v20
  %2974 = vmatpush1.msra.mxu0 %v19
  %2975 = vmatprep.subr.mxu0 %v28
  %2976 = vmatpush1.msra.mxu0 %v27
  %2977 = vmatprep.subr.mxu0 %v36
  %2978 = vmatpush1.msra.mxu0 %v35
  %2979 = vmatprep.subr.mxu0 %v44
  %2980 = vmatpush1.msra.mxu0 %v43
  %2981 = vmatprep.subr.mxu0 %v52
  %2982 = vmatpush1.msra.mxu0 %v51
  %2983 = vmatprep.subr.mxu0 %v60
  %2984 = vmatpush1.msra.mxu0 %v59
  %2985 = vmatprep.subr.mxu0 %v68
  %2986 = vmatpush1.msra.mxu0 %v67
  %2987 = vmatprep.subr.mxu0 %v76
  %2988 = vmatpush1.msra.mxu0 %v75
  %2989 = vmatprep.subr.mxu0 %v84
  %2990 = vmatpush1.msra.mxu0 %v83
  %2991 = vmatprep.subr.mxu0 %v92
  %2992 = vmatpush1.msra.mxu0 %v91
  %2993 = vmatprep.subr.mxu0 %v100
  %2994 = vmatpush1.msra.mxu0 %v99
  %2995 = vmatprep.subr.mxu0 %v108
  %2996 = vmatpush1.msra.mxu0 %v107
  %2997 = vmatprep.subr.mxu0 %v116
  %2998 = vmatpush1.msra.mxu0 %v115
  %2999 = vmatprep.subr.mxu0 %v124
  %3000 = vmatpush1.msra.mxu0 %v123
  %3001 = vmatprep.subr.mxu0 %v132
  %3002 = vmatpush1.msra.mxu0 %v131
  %3003 = vmatprep.subr.mxu0 %v140
  %3004 = vmatpush1.msra.mxu0 %v139
  %3005 = vmatprep.subr.mxu0 %v148
  %3006 = vmatpush1.msra.mxu0 %v147
  %3007 = vmatprep.subr.mxu0 %v156
  %3008 = vmatpush1.msra.mxu0 %v155
  %3009 = vmatprep.subr.mxu0 %v164
  %3010 = vmatpush1.msra.mxu0 %v163
  %3011 = vmatprep.subr.mxu0 %v172
  %3012 = vmatpush1.msra.mxu0 %v171
  %3013 = vmatprep.subr.mxu0 %v180
  %3014 = vmatpush1.msra.mxu0 %v179
  %3015 = vmatprep.subr.mxu0 %v188
  %3016 = vmatpush1.msra.mxu0 %v187
  %3017 = vmatprep.subr.mxu0 %v196
  %3018 = vmatpush1.msra.mxu0 %v195
  %3019 = vmatprep.subr.mxu0 %v204
  %3020 = vmatpush1.msra.mxu0 %v203
  %3021 = vmatprep.subr.mxu0 %v212
  %3022 = vmatpush1.msra.mxu0 %v211
  %3023 = vmatprep.subr.mxu0 %v220
  %3024 = vmatpush1.msra.mxu0 %v219
  %3025 = vmatprep.subr.mxu0 %v228
  %3026 = vmatpush1.msra.mxu0 %v227
  %3027 = vmatprep.subr.mxu0 %v236
  %3028 = vmatpush1.msra.mxu0 %v235
  %3029 = vmatprep.subr.mxu0 %v244
  %3030 = vmatpush1.msra.mxu0 %v243
  %3031 = vmatprep.subr.mxu0 %v252
  %3032 = vmatpush1.msra.mxu0 %v251
  %3033 = vmatprep.subr.mxu0 %v260
  %3034 = vmatpush1.msra.mxu0 %v259
  %3035 = vmatprep.subr.mxu0 %v268
  %3036 = vmatpush1.msra.mxu0 %v267
  %3037 = vmatprep.mubr.f32.mxu0 %v2817
  %3038 = vmatmul.mubr.f32.gmra.mrb[0].mxu0 %v2815
  %v3039 = vpop.f32.mrb[0].mxu0
  %v3040 = vadd.f32 0.0, %v3039
  %v3041 = vpop.f32.mrb[0].mxu0
  %v3042 = vadd.f32 0.0, %v3041
  %3043 = vdwg.mxu0
  %3044 = vmatprep.subr.mxu0 %v22
  %3045 = vmatpush1.msra.mxu0 %v21
  %3046 = vmatprep.subr.mxu0 %v30
  %3047 = vmatpush1.msra.mxu0 %v29
  %3048 = vmatprep.subr.mxu0 %v38
  %3049 = vmatpush1.msra.mxu0 %v37
  %3050 = vmatprep.subr.mxu0 %v46
  %3051 = vmatpush1.msra.mxu0 %v45
  %3052 = vmatprep.subr.mxu0 %v54
  %3053 = vmatpush1.msra.mxu0 %v53
  %3054 = vmatprep.subr.mxu0 %v62
  %3055 = vmatpush1.msra.mxu0 %v61
  %3056 = vmatprep.subr.mxu0 %v70
  %3057 = vmatpush1.msra.mxu0 %v69
  %3058 = vmatprep.subr.mxu0 %v78
  %3059 = vmatpush1.msra.mxu0 %v77
  %3060 = vmatprep.subr.mxu0 %v86
  %3061 = vmatpush1.msra.mxu0 %v85
  %3062 = vmatprep.subr.mxu0 %v94
  %3063 = vmatpush1.msra.mxu0 %v93
  %3064 = vmatprep.subr.mxu0 %v102
  %3065 = vmatpush1.msra.mxu0 %v101
  %3066 = vmatprep.subr.mxu0 %v110
  %3067 = vmatpush1.msra.mxu0 %v109
  %3068 = vmatprep.subr.mxu0 %v118
  %3069 = vmatpush1.msra.mxu0 %v117
  %3070 = vmatprep.subr.mxu0 %v126
  %3071 = vmatpush1.msra.mxu0 %v125
  %3072 = vmatprep.subr.mxu0 %v134
  %3073 = vmatpush1.msra.mxu0 %v133
  %3074 = vmatprep.subr.mxu0 %v142
  %3075 = vmatpush1.msra.mxu0 %v141
  %3076 = vmatprep.subr.mxu0 %v150
  %3077 = vmatpush1.msra.mxu0 %v149
  %3078 = vmatprep.subr.mxu0 %v158
  %3079 = vmatpush1.msra.mxu0 %v157
  %3080 = vmatprep.subr.mxu0 %v166
  %3081 = vmatpush1.msra.mxu0 %v165
  %3082 = vmatprep.subr.mxu0 %v174
  %3083 = vmatpush1.msra.mxu0 %v173
  %3084 = vmatprep.subr.mxu0 %v182
  %3085 = vmatpush1.msra.mxu0 %v181
  %3086 = vmatprep.subr.mxu0 %v190
  %3087 = vmatpush1.msra.mxu0 %v189
  %3088 = vmatprep.subr.mxu0 %v198
  %3089 = vmatpush1.msra.mxu0 %v197
  %3090 = vmatprep.subr.mxu0 %v206
  %3091 = vmatpush1.msra.mxu0 %v205
  %3092 = vmatprep.subr.mxu0 %v214
  %3093 = vmatpush1.msra.mxu0 %v213
  %3094 = vmatprep.subr.mxu0 %v222
  %3095 = vmatpush1.msra.mxu0 %v221
  %3096 = vmatprep.subr.mxu0 %v230
  %3097 = vmatpush1.msra.mxu0 %v229
  %3098 = vmatprep.subr.mxu0 %v238
  %3099 = vmatpush1.msra.mxu0 %v237
  %3100 = vmatprep.subr.mxu0 %v246
  %3101 = vmatpush1.msra.mxu0 %v245
  %3102 = vmatprep.subr.mxu0 %v254
  %3103 = vmatpush1.msra.mxu0 %v253
  %3104 = vmatprep.subr.mxu0 %v262
  %3105 = vmatpush1.msra.mxu0 %v261
  %3106 = vmatprep.subr.mxu0 %v270
  %3107 = vmatpush1.msra.mxu0 %v269
  %3108 = vmatprep.mubr.f32.mxu0 %v2817
  %3109 = vmatmul.mubr.f32.gmra.mrb[0].mxu0 %v2815
  %v3110 = vpop.f32.mrb[0].mxu0
  %v3111 = vadd.f32 0.0, %v3110
  %v3112 = vpop.f32.mrb[0].mxu0
  %v3113 = vadd.f32 0.0, %v3112
  %3114 = vdwg.mxu0
  %v3115 = vadd.f32 %v2823, %v2898
  %v3116 = vadd.f32 %v2824, %v2900
  %v3117 = vadd.f32 %v2825, %v2969
  %v3118 = vadd.f32 %v2826, %v2971
  %v3119 = vxor.u32 %v3115, 2147483648
  %v3120 = vmul.f32 %v3119, 1.442695
  %v3121 = vpow.pop %v3120
  %v3122 = vadd.f32 %v3121, 1.0
  %v3123 = vrcp.pop %v3122
  %v3124 = vmul.f32 1.0, %v3123
  %v3125 = vxor.u32 %v3116, 2147483648
  %v3126 = vmul.f32 %v3125, 1.442695
  %v3127 = vpow.pop %v3126
  %v3128 = vadd.f32 %v3127, 1.0
  %v3129 = vrcp.pop %v3128
  %v3130 = vmul.f32 1.0, %v3129
  %v3131 = vtanh.pop %v3117
  %v3132 = vxor.u32 %v3118, 2147483648
  %v3133 = vmul.f32 %v3132, 1.442695
  %v3134 = vpow.pop %v3133
  %v3135 = vadd.f32 %v3134, 1.0
  %v3136 = vrcp.pop %v3135
  %v3137 = vmul.f32 1.0, %v3136
  %v3138 = vmul.f32 %v3130, %v2816
  %v3139 = vmul.f32 %v3124, %v3131
  %v3140 = vadd.f32 %v3138, %v3139
  %v3141 = vtanh.pop %v3140
  %v3142 = vmul.f32 %v3137, %v3141
  %v3143 = vadd.f32 %v2827, %v3040
  %v3144 = vadd.f32 %v2828, %v3042
  %v3145 = vadd.f32 %v2829, %v3111
  %v3146 = vadd.f32 %v2830, %v3113
  %v3147 = vxor.u32 %v3143, 2147483648
  %v3148 = vmul.f32 %v3147, 1.442695
  %v3149 = vpow.pop %v3148
  %v3150 = vadd.f32 %v3149, 1.0
  %v3151 = vrcp.pop %v3150
  %v3152 = vmul.f32 1.0, %v3151
  %v3153 = vxor.u32 %v3144, 2147483648
  %v3154 = vmul.f32 %v3153, 1.442695
  %v3155 = vpow.pop %v3154
  %v3156 = vadd.f32 %v3155, 1.0
  %v3157 = vrcp.pop %v3156
  %v3158 = vmul.f32 1.0, %v3157
  %v3159 = vtanh.pop %v3145
  %v3160 = vxor.u32 %v3146, 2147483648
  %v3161 = vmul.f32 %v3160, 1.442695
  %v3162 = vpow.pop %v3161
  %v3163 = vadd.f32 %v3162, 1.0
  %v3164 = vrcp.pop %v3163
  %v3165 = vmul.f32 1.0, %v3164
  %v3166 = vmul.f32 %v3158, %v2818
  %v3167 = vmul.f32 %v3152, %v3159
  %v3168 = vadd.f32 %v3166, %v3167
  %v3169 = vtanh.pop %v3168
  %v3170 = vmul.f32 %v3165, %v3169
  %v3171 = vsel %vm633, %v3142, 0.0
  %3172 = vst [vmem:[%s637] sm:$0xff] %v3171
  %v3173 = vsel %vm626, %v3170, 0.0
  %3174 = vst [vmem:[%s3 + $0x8] sm:$0xff] %v3173
  // Predicated region
  $region14: #{subword_elmo_forward.6} parent=0 // pred_check
    _
  $region15: #{subword_elmo_forward.6} parent=0 // pred_check_branch
    %3176 = sbr.rel (0) target = $region17
  $region16: #{subword_elmo_forward.6} parent=0 // pred_region
    _
  $region17: #{subword_elmo_forward.6} parent=0 // pred_fallthru
    _
  // Predicated region
  $region18: #{subword_elmo_forward.6} parent=0 // pred_check
    _
  $region19: #{subword_elmo_forward.6} parent=0 // pred_check_branch
    %3178 = sbr.rel (0) target = $region21
  $region20: #{subword_elmo_forward.6} parent=0 // pred_region
    _
  $region21: #{subword_elmo_forward.6} parent=0 // pred_fallthru
    _

</llo_original>
